<compile_context>
chip_gen: v7x
topology: tpu7x:2x2x1
jax: 0.10.0
libtpu: 0.0.40
codegen_flags: <defaults>
</compile_context>

<pallas_src>
import functools

import jax
import jax.numpy as jnp
from jax.experimental import pallas as pl
from jax.experimental.pallas import tpu as pltpu


def _window_attention_kernel(*refs, has_mask):
    """One grid step: `tb` windows, all heads, full attention + both projections."""
    if has_mask:
        (x_ref, wqkv_ref, bqkv_ref, wproj_ref, bproj_ref,
         bias_ref, mask_ref, o_ref) = refs
    else:
        (x_ref, wqkv_ref, bqkv_ref, wproj_ref, bproj_ref,
         bias_ref, o_ref) = refs
        mask_ref = None

    num_heads, n, _ = bias_ref.shape
    rows, c = x_ref.shape
    tb = rows // n
    hd = c // num_heads

    x = x_ref[...].astype(jnp.float32)                               # (tb*N, C)

    # ---- fused, lane-dense QKV projection (qk scale pre-folded into Q) ----
    qkv = jnp.dot(x, wqkv_ref[...].astype(jnp.float32),
                  preferred_element_type=jnp.float32)
    qkv = qkv + bqkv_ref[...].astype(jnp.float32)                    # (tb*N, 3C)
    qkv3 = qkv.reshape(tb, n, 3 * c)                                  # leading split only

    def split_heads(offset):
        # static lane slices + stack on a new leading axis -> (nH*tb, N, hd),
        # batch index = h*tb + t (head-major).
        parts = [qkv3[:, :, offset + h * hd: offset + (h + 1) * hd]
                 for h in range(num_heads)]
        return jnp.stack(parts, axis=0).reshape(num_heads * tb, n, hd)

    q = split_heads(0)          # scale already applied via the fused weight
    k = split_heads(c)
    v = split_heads(2 * c)

    # ---- attention scores for ALL heads in one batched MXU matmul ---------
    s = jnp.einsum("bnd,bmd->bnm", q, k,
                   preferred_element_type=jnp.float32)               # (nH*tb, N, N)
    s4 = s.reshape(num_heads, tb, n, n)
    s4 = s4 + bias_ref[...].astype(jnp.float32)[:, None]             # bias over windows
    if has_mask:
        s4 = s4 + mask_ref[...].astype(jnp.float32)[None]            # mask over heads

    # ---- numerically stable softmax; normalisation folded into PV output --
    s4 = s4 - jnp.max(s4, axis=-1, keepdims=True)
    p = jnp.exp(s4)
    l = jnp.sum(p, axis=-1, keepdims=True)                           # (nH, tb, N, 1)

    o = jnp.einsum("bnm,bmd->bnd", p.reshape(num_heads * tb, n, n), v,
                   preferred_element_type=jnp.float32)               # (nH*tb, N, hd)
    inv_l = pl.reciprocal(l.reshape(num_heads * tb, n, 1), approx=False)
    o = o * inv_l                                                    # multiply, not divide

    # ---- pack heads back onto lanes, single C-deep output projection ------
    o4 = o.reshape(num_heads, tb, n, hd)
    o2 = jnp.concatenate([o4[h] for h in range(num_heads)], axis=-1)  # (tb, N, C)
    out = jnp.dot(o2.reshape(tb * n, c),
                  wproj_ref[...].astype(jnp.float32),
                  preferred_element_type=jnp.float32)
    out = out + bproj_ref[...].astype(jnp.float32)
    o_ref[...] = out.astype(o_ref.dtype)


def _prefer_two_core_split():
    """Only v7x has 2 TensorCores per chip; splitting the grid elsewhere just
    adds per-step pipeline overhead."""
    try:
        kind = jax.devices()[0].device_kind.lower()
    except Exception:
        return False
    return "v7" in kind or "7x" in kind


def _estimate_vmem_bytes(tb, n, c, num_heads):
    rows = tb * n
    tile_io = 2 * 2 * rows * c                                # x + out, double-buffered
    weights = 2 * (c * 3 * c + 3 * c + c * c + c
                   + num_heads * n * n)                       # invariants, double-buffered
    act = rows * 3 * c + 3 * num_heads * tb * n * n           # qkv + score temporaries
    return 4 * (tile_io + weights + act)


def _pick_tile_windows(num_windows, n, c, num_heads, n_mask_windows=None,
                       prefer_even_split=False,
                       vmem_budget_bytes=12 * 1024 * 1024):
    """How many windows each grid step processes."""
    def valid(tb):
        if num_windows % tb:
            return False
        if n_mask_windows is not None and n_mask_windows % tb:
            return False
        # x/out block second-to-last dim must be a multiple of 8 unless it
        # equals the full array dim.
        if (tb * n) % 8 != 0 and tb != num_windows:
            return False
        return True

    divisors = [d for d in range(1, num_windows + 1) if valid(d)]
    if not divisors:
        # TODO(synk): pad the row dim to a multiple of 8 for exotic (N, nW) combos.
        raise NotImplementedError(
            "cannot tile windows into 8-row-aligned blocks for this config")

    fitting = [d for d in divisors
               if d * n <= 1024
               and _estimate_vmem_bytes(d, n, c, num_heads) <= vmem_budget_bytes]
    tb = max(fitting) if fitting else min(divisors)

    if prefer_even_split and num_windows // tb < 2:
        smaller = [d for d in (fitting or divisors) if num_windows // d >= 2]
        if smaller:
            tb = max(smaller)
    return tb


def _relative_position_index(window_size):
    wh, ww = window_size
    coords = jnp.stack(jnp.meshgrid(jnp.arange(wh), jnp.arange(ww), indexing="ij"))
    coords_flatten = coords.reshape(2, -1)                               # (2, N)
    rel = coords_flatten[:, :, None] - coords_flatten[:, None, :]        # (2, N, N)
    rel = rel.transpose(1, 2, 0)                                         # (N, N, 2)
    rel = rel.at[:, :, 0].add(wh - 1)
    rel = rel.at[:, :, 1].add(ww - 1)
    rel = rel.at[:, :, 0].multiply(2 * ww - 1)
    return rel.sum(-1).astype(jnp.int32)                                 # (N, N)


@functools.partial(jax.jit, static_argnames=("num_heads", "qk_scale"))
def window_attention_forward(x, w_qkv, b_qkv, w_proj, b_proj,
                             rel_bias_table, rel_pos_index, mask=None,
                             *, num_heads, qk_scale=None):
    """x: (num_windows*B, N, C) -> (num_windows*B, N, C)."""
    B_, N, C = x.shape
    hd = C // num_heads
    scale = float(qk_scale) if qk_scale is not None else float(hd) ** -0.5

    # ---- fused lane-dense weight layouts (one-time re-layout of torch Linear)
    # torch: qkv = x @ w_qkv.T + b_qkv, columns ordered (qkv, head, d).
    w_fused = jnp.transpose(w_qkv)                                   # (C, 3C)
    scale_vec = jnp.concatenate(
        [jnp.full((C,), scale, w_fused.dtype), jnp.ones((2 * C,), w_fused.dtype)])
    w_fused = w_fused * scale_vec[None, :]                           # fold qk scale into Q
    b_fused = (b_qkv * scale_vec).reshape(1, 3 * C)
    wp = jnp.transpose(w_proj)                                       # (C, C)
    bp = b_proj.reshape(1, C)

    # relative position bias (nH, N, N) -- pure gather, done once outside kernel
    bias = rel_bias_table[rel_pos_index.reshape(-1)].reshape(N, N, num_heads)
    bias = jnp.transpose(bias, (2, 0, 1)).astype(jnp.float32)

    has_mask = mask is not None
    nW = mask.shape[0] if has_mask else None
    tb = _pick_tile_windows(B_, N, C, num_heads, nW,
                            prefer_even_split=_prefer_two_core_split())
    grid = (B_ // tb,)

    x2 = x.reshape(B_ * N, C)

    in_specs = [
        pl.BlockSpec((tb * N, C), lambda i: (i, 0)),                 # x
        pl.BlockSpec((C, 3 * C), lambda i: (0, 0)),                  # fused QKV weight
        pl.BlockSpec((1, 3 * C), lambda i: (0, 0)),                  # fused QKV bias
        pl.BlockSpec((C, C), lambda i: (0, 0)),                      # proj weight (W.T)
        pl.BlockSpec((1, C), lambda i: (0, 0)),                      # proj bias
        pl.BlockSpec((num_heads, N, N), lambda i: (0, 0, 0)),        # rel-pos bias
    ]
    args = [x2, w_fused, b_fused, wp, bp, bias]

    if has_mask:
        # window ordering is batch-major: global window g = b*nW + w, so the
        # mask for grid block i is mask block (i % (nW // tb)).
        assert B_ % nW == 0, "B_ must be a multiple of num_windows"
        assert nW % tb == 0
        n_mask_blocks = nW // tb
        in_specs.append(
            pl.BlockSpec((tb, N, N), lambda i: (i % n_mask_blocks, 0, 0)))
        args.append(mask.astype(jnp.float32))

    kernel = functools.partial(_window_attention_kernel, has_mask=has_mask)
    out = pl.pallas_call(
        kernel,
        out_shape=jax.ShapeDtypeStruct((B_ * N, C), x.dtype),
        grid_spec=pltpu.PrefetchScalarGridSpec(
            num_scalar_prefetch=0,
            grid=grid,
            in_specs=in_specs,
            out_specs=pl.BlockSpec((tb * N, C), lambda i: (i, 0)),
        ),
        compiler_params=pltpu.CompilerParams(
            dimension_semantics=("parallel",),
        ),
    )(*args)

    return out.reshape(B_, N, C)


def _reference(x, w_qkv, b_qkv, w_proj, b_proj, table, index, mask, num_heads):
    """Pure-JAX reference mirroring the torch WindowAttention.forward."""
    B_, N, C = x.shape
    hd = C // num_heads
    scale = hd ** -0.5
    qkv = x @ w_qkv.T + b_qkv
    qkv = qkv.reshape(B_, N, 3, num_heads, hd).transpose(2, 0, 3, 1, 4)
    q, k, v = qkv[0], qkv[1], qkv[2]
    q = q * scale
    attn = jnp.einsum("bhnd,bhmd->bhnm", q, k)
    bias = table[index.reshape(-1)].reshape(N, N, num_heads).transpose(2, 0, 1)
    attn = attn + bias[None]
    if mask is not None:
        nW = mask.shape[0]
        attn = attn.reshape(B_ // nW, nW, num_heads, N, N) + mask[None, :, None]
        attn = attn.reshape(B_, num_heads, N, N)
    attn = jax.nn.softmax(attn, axis=-1)
    out = jnp.einsum("bhnm,bhmd->bhnd", attn, v)
    out = out.transpose(0, 2, 1, 3).reshape(B_, N, C)
    return out @ w_proj.T + b_proj


if __name__ == "__main__":
    # Module config: dim=32, window_size=(4,4) -> N=16, num_heads=4, head_dim=8
    dim, num_heads = 32, 4
    window_size = (4, 4)
    Wh, Ww = window_size
    N = Wh * Ww
    batch, nW = 2, 4
    B_ = batch * nW                                   # num_windows * B = 8

    key = jax.random.PRNGKey(0)
    keys = jax.random.split(key, 8)

    x = jax.random.normal(keys[0], (B_, N, dim), jnp.float32)

    bound = 1.0 / dim ** 0.5
    w_qkv = jax.random.uniform(keys[1], (3 * dim, dim), minval=-bound, maxval=bound)
    b_qkv = jax.random.uniform(keys[2], (3 * dim,), minval=-bound, maxval=bound)
    w_proj = jax.random.uniform(keys[3], (dim, dim), minval=-bound, maxval=bound)
    b_proj = jax.random.uniform(keys[4], (dim,), minval=-bound, maxval=bound)
    table = 0.02 * jax.random.normal(
        keys[5], ((2 * Wh - 1) * (2 * Ww - 1), num_heads), jnp.float32)
    rel_idx = _relative_position_index(window_size)

    # 0 / -100 shift-window mask, shape (nW, N, N)
    mask = jnp.where(jax.random.uniform(keys[6], (nW, N, N)) < 0.8,
                     0.0, -100.0).astype(jnp.float32)

    # ---- no-mask path (non-shifted windows: no mask DMA, no mask adds) ----
    out0 = window_attention_forward(x, w_qkv, b_qkv, w_proj, b_proj,
                                    table, rel_idx, None, num_heads=num_heads)
    out0 = jax.block_until_ready(out0)
    ref0 = _reference(x, w_qkv, b_qkv, w_proj, b_proj, table, rel_idx, None, num_heads)

    # ---- masked (shifted-window) path ----
    out1 = window_attention_forward(x, w_qkv, b_qkv, w_proj, b_proj,
                                    table, rel_idx, mask, num_heads=num_heads)
    out1 = jax.block_until_ready(out1)
    ref1 = _reference(x, w_qkv, b_qkv, w_proj, b_proj, table, rel_idx, mask, num_heads)

    assert out0.shape == (B_, N, dim), out0.shape
    assert jnp.allclose(out0, ref0, atol=1e-4, rtol=1e-4), float(
        jnp.max(jnp.abs(out0 - ref0)))
    assert jnp.allclose(out1, ref1, atol=1e-4, rtol=1e-4), float(
        jnp.max(jnp.abs(out1 - ref1)))
    print("KERNEL_OK")
</pallas_src>

<mosaic_0001>
module attributes {stable_mosaic.version = 11 : i64} {
  func.func @_window_attention_kernel(%arg0: i32, %arg1: memref<128x32xf32, #tpu.memory_space<vmem>>, %arg2: memref<32x96xf32, #tpu.memory_space<vmem>>, %arg3: memref<1x96xf32, #tpu.memory_space<vmem>>, %arg4: memref<32x32xf32, #tpu.memory_space<vmem>>, %arg5: memref<1x32xf32, #tpu.memory_space<vmem>>, %arg6: memref<4x16x16xf32, #tpu.memory_space<vmem>>, %arg7: memref<128x32xf32, #tpu.memory_space<vmem>>) attributes {dimension_semantics = [#tpu.dimension_semantics<parallel>], iteration_bounds = array<i64: 1>, scalar_prefetch = 0 : i64, scratch_operands = 0 : i64, tpu.core_type = #tpu.core_type<tc>, window_params = [{transform_indices = @transform_0, window_bounds = array<i64: 128, 32>}, {pipeline_mode = #tpu.pipeline_mode<synchronous>, transform_indices = @transform_1, window_bounds = array<i64: 32, 96>}, {pipeline_mode = #tpu.pipeline_mode<synchronous>, transform_indices = @transform_2, window_bounds = array<i64: 1, 96>}, {pipeline_mode = #tpu.pipeline_mode<synchronous>, transform_indices = @transform_3, window_bounds = array<i64: 32, 32>}, {pipeline_mode = #tpu.pipeline_mode<synchronous>, transform_indices = @transform_4, window_bounds = array<i64: 1, 32>}, {pipeline_mode = #tpu.pipeline_mode<synchronous>, transform_indices = @transform_5, window_bounds = array<i64: 4, 16, 16>}, {transform_indices = @transform_6, window_bounds = array<i64: 128, 32>}]} {
    %c0 = arith.constant 0 : index
    %c0_0 = arith.constant 0 : index
    %0 = vector.load %arg1[%c0, %c0_0] : memref<128x32xf32, #tpu.memory_space<vmem>>, vector<128x32xf32>
    %c0_1 = arith.constant 0 : index
    %c0_2 = arith.constant 0 : index
    %1 = vector.load %arg2[%c0_1, %c0_2] : memref<32x96xf32, #tpu.memory_space<vmem>>, vector<32x96xf32>
    %cst = arith.constant dense<0.000000e+00> : vector<128x96xf32>
    %2 = tpu.matmul %0, %1, %cst {dimension_numbers = #tpu.dot_dimension_numbers<[1], [0], [0], [1], [0, 0, 1, 1], [], []>} : vector<128x32xf32>, vector<32x96xf32>, vector<128x96xf32> -> vector<128x96xf32>
    %c0_3 = arith.constant 0 : index
    %c0_4 = arith.constant 0 : index
    %3 = vector.load %arg3[%c0_3, %c0_4] : memref<1x96xf32, #tpu.memory_space<vmem>>, vector<1x96xf32>
    %4 = vector.broadcast %3 : vector<1x96xf32> to vector<128x96xf32>
    %5 = arith.addf %2, %4 : vector<128x96xf32>
    %6 = vector.shape_cast %5 : vector<128x96xf32> to vector<8x16x96xf32>
    %7 = vector.extract_strided_slice %6 {offsets = [0, 0, 0], sizes = [8, 16, 8], strides = [1, 1, 1]} : vector<8x16x96xf32> to vector<8x16x8xf32>
    %8 = vector.extract_strided_slice %6 {offsets = [0, 0, 8], sizes = [8, 16, 8], strides = [1, 1, 1]} : vector<8x16x96xf32> to vector<8x16x8xf32>
    %9 = vector.extract_strided_slice %6 {offsets = [0, 0, 16], sizes = [8, 16, 8], strides = [1, 1, 1]} : vector<8x16x96xf32> to vector<8x16x8xf32>
    %10 = vector.extract_strided_slice %6 {offsets = [0, 0, 24], sizes = [8, 16, 8], strides = [1, 1, 1]} : vector<8x16x96xf32> to vector<8x16x8xf32>
    %11 = vector.shape_cast %7 : vector<8x16x8xf32> to vector<1x8x16x8xf32>
    %12 = vector.shape_cast %8 : vector<8x16x8xf32> to vector<1x8x16x8xf32>
    %13 = vector.shape_cast %9 : vector<8x16x8xf32> to vector<1x8x16x8xf32>
    %14 = vector.shape_cast %10 : vector<8x16x8xf32> to vector<1x8x16x8xf32>
    %15 = tpu.concatenate %11, %12, %13, %14 in 0 : vector<1x8x16x8xf32>, vector<1x8x16x8xf32>, vector<1x8x16x8xf32>, vector<1x8x16x8xf32> -> vector<4x8x16x8xf32>
    %16 = vector.shape_cast %15 : vector<4x8x16x8xf32> to vector<32x16x8xf32>
    %17 = vector.extract_strided_slice %6 {offsets = [0, 0, 32], sizes = [8, 16, 8], strides = [1, 1, 1]} : vector<8x16x96xf32> to vector<8x16x8xf32>
    %18 = vector.extract_strided_slice %6 {offsets = [0, 0, 40], sizes = [8, 16, 8], strides = [1, 1, 1]} : vector<8x16x96xf32> to vector<8x16x8xf32>
    %19 = vector.extract_strided_slice %6 {offsets = [0, 0, 48], sizes = [8, 16, 8], strides = [1, 1, 1]} : vector<8x16x96xf32> to vector<8x16x8xf32>
    %20 = vector.extract_strided_slice %6 {offsets = [0, 0, 56], sizes = [8, 16, 8], strides = [1, 1, 1]} : vector<8x16x96xf32> to vector<8x16x8xf32>
    %21 = vector.shape_cast %17 : vector<8x16x8xf32> to vector<1x8x16x8xf32>
    %22 = vector.shape_cast %18 : vector<8x16x8xf32> to vector<1x8x16x8xf32>
    %23 = vector.shape_cast %19 : vector<8x16x8xf32> to vector<1x8x16x8xf32>
    %24 = vector.shape_cast %20 : vector<8x16x8xf32> to vector<1x8x16x8xf32>
    %25 = tpu.concatenate %21, %22, %23, %24 in 0 : vector<1x8x16x8xf32>, vector<1x8x16x8xf32>, vector<1x8x16x8xf32>, vector<1x8x16x8xf32> -> vector<4x8x16x8xf32>
    %26 = vector.shape_cast %25 : vector<4x8x16x8xf32> to vector<32x16x8xf32>
    %27 = vector.extract_strided_slice %6 {offsets = [0, 0, 64], sizes = [8, 16, 8], strides = [1, 1, 1]} : vector<8x16x96xf32> to vector<8x16x8xf32>
    %28 = vector.extract_strided_slice %6 {offsets = [0, 0, 72], sizes = [8, 16, 8], strides = [1, 1, 1]} : vector<8x16x96xf32> to vector<8x16x8xf32>
    %29 = vector.extract_strided_slice %6 {offsets = [0, 0, 80], sizes = [8, 16, 8], strides = [1, 1, 1]} : vector<8x16x96xf32> to vector<8x16x8xf32>
    %30 = vector.extract_strided_slice %6 {offsets = [0, 0, 88], sizes = [8, 16, 8], strides = [1, 1, 1]} : vector<8x16x96xf32> to vector<8x16x8xf32>
    %31 = vector.shape_cast %27 : vector<8x16x8xf32> to vector<1x8x16x8xf32>
    %32 = vector.shape_cast %28 : vector<8x16x8xf32> to vector<1x8x16x8xf32>
    %33 = vector.shape_cast %29 : vector<8x16x8xf32> to vector<1x8x16x8xf32>
    %34 = vector.shape_cast %30 : vector<8x16x8xf32> to vector<1x8x16x8xf32>
    %35 = tpu.concatenate %31, %32, %33, %34 in 0 : vector<1x8x16x8xf32>, vector<1x8x16x8xf32>, vector<1x8x16x8xf32>, vector<1x8x16x8xf32> -> vector<4x8x16x8xf32>
    %36 = vector.shape_cast %35 : vector<4x8x16x8xf32> to vector<32x16x8xf32>
    "tpu.trace_start"() <{level = 10 : i32, message = "bnd,bmd->bnm"}> : () -> ()
    %cst_5 = arith.constant dense<0.000000e+00> : vector<32x16x16xf32>
    %37 = tpu.matmul %16, %26, %cst_5 {dimension_numbers = #tpu.dot_dimension_numbers<[2], [2], [1], [1], [0, 0, 0, 1, 1, 1], [0], [0]>} : vector<32x16x8xf32>, vector<32x16x8xf32>, vector<32x16x16xf32> -> vector<32x16x16xf32>
    "tpu.trace_stop"() : () -> ()
    %38 = vector.shape_cast %37 : vector<32x16x16xf32> to vector<4x8x16x16xf32>
    %c0_6 = arith.constant 0 : index
    %c0_7 = arith.constant 0 : index
    %c0_8 = arith.constant 0 : index
    %39 = vector.load %arg6[%c0_6, %c0_7, %c0_8] : memref<4x16x16xf32, #tpu.memory_space<vmem>>, vector<4x16x16xf32>
    %40 = vector.shape_cast %39 : vector<4x16x16xf32> to vector<4x1x16x16xf32>
    %41 = vector.broadcast %40 : vector<4x1x16x16xf32> to vector<4x8x16x16xf32>
    %42 = arith.addf %38, %41 : vector<4x8x16x16xf32>
    %cst_9 = arith.constant dense<0xFF800000> : vector<4x8x16xf32>
    %43 = vector.multi_reduction <maximumf>, %42, %cst_9 [3] : vector<4x8x16x16xf32> to vector<4x8x16xf32>
    %44 = vector.shape_cast %43 : vector<4x8x16xf32> to vector<4x8x16x1xf32>
    %45 = vector.broadcast %44 : vector<4x8x16x1xf32> to vector<4x8x16x16xf32>
    %46 = arith.subf %42, %45 : vector<4x8x16x16xf32>
    %47 = math.exp %46 : vector<4x8x16x16xf32>
    %cst_10 = arith.constant dense<0.000000e+00> : vector<4x8x16xf32>
    %48 = vector.multi_reduction <add>, %47, %cst_10 [3] : vector<4x8x16x16xf32> to vector<4x8x16xf32>
    %49 = vector.shape_cast %48 : vector<4x8x16xf32> to vector<4x8x16x1xf32>
    %50 = vector.shape_cast %47 : vector<4x8x16x16xf32> to vector<32x16x16xf32>
    "tpu.trace_start"() <{level = 10 : i32, message = "bnm,bmd->bnd"}> : () -> ()
    %cst_11 = arith.constant dense<0.000000e+00> : vector<32x16x8xf32>
    %51 = tpu.matmul %50, %36, %cst_11 {dimension_numbers = #tpu.dot_dimension_numbers<[2], [1], [1], [2], [0, 0, 0, 1, 1, 2], [0], [0]>} : vector<32x16x16xf32>, vector<32x16x8xf32>, vector<32x16x8xf32> -> vector<32x16x8xf32>
    "tpu.trace_stop"() : () -> ()
    %52 = vector.shape_cast %49 : vector<4x8x16x1xf32> to vector<32x16x1xf32>
    %53 = tpu.reciprocal %52 : vector<32x16x1xf32> -> vector<32x16x1xf32>
    %54 = vector.broadcast %53 : vector<32x16x1xf32> to vector<32x16x8xf32>
    %55 = arith.mulf %51, %54 : vector<32x16x8xf32>
    %56 = vector.shape_cast %55 : vector<32x16x8xf32> to vector<4x8x16x8xf32>
    %57 = vector.extract_strided_slice %56 {offsets = [0, 0, 0, 0], sizes = [1, 8, 16, 8], strides = [1, 1, 1, 1]} : vector<4x8x16x8xf32> to vector<1x8x16x8xf32>
    %58 = vector.shape_cast %57 : vector<1x8x16x8xf32> to vector<8x16x8xf32>
    %59 = vector.extract_strided_slice %56 {offsets = [1, 0, 0, 0], sizes = [1, 8, 16, 8], strides = [1, 1, 1, 1]} : vector<4x8x16x8xf32> to vector<1x8x16x8xf32>
    %60 = vector.shape_cast %59 : vector<1x8x16x8xf32> to vector<8x16x8xf32>
    %61 = vector.extract_strided_slice %56 {offsets = [2, 0, 0, 0], sizes = [1, 8, 16, 8], strides = [1, 1, 1, 1]} : vector<4x8x16x8xf32> to vector<1x8x16x8xf32>
    %62 = vector.shape_cast %61 : vector<1x8x16x8xf32> to vector<8x16x8xf32>
    %63 = vector.extract_strided_slice %56 {offsets = [3, 0, 0, 0], sizes = [1, 8, 16, 8], strides = [1, 1, 1, 1]} : vector<4x8x16x8xf32> to vector<1x8x16x8xf32>
    %64 = vector.shape_cast %63 : vector<1x8x16x8xf32> to vector<8x16x8xf32>
    %65 = tpu.concatenate %58, %60, %62, %64 in 2 : vector<8x16x8xf32>, vector<8x16x8xf32>, vector<8x16x8xf32>, vector<8x16x8xf32> -> vector<8x16x32xf32>
    %66 = vector.shape_cast %65 : vector<8x16x32xf32> to vector<128x32xf32>
    %c0_12 = arith.constant 0 : index
    %c0_13 = arith.constant 0 : index
    %67 = vector.load %arg4[%c0_12, %c0_13] : memref<32x32xf32, #tpu.memory_space<vmem>>, vector<32x32xf32>
    %cst_14 = arith.constant dense<0.000000e+00> : vector<128x32xf32>
    %68 = tpu.matmul %66, %67, %cst_14 {dimension_numbers = #tpu.dot_dimension_numbers<[1], [0], [0], [1], [0, 0, 1, 1], [], []>} : vector<128x32xf32>, vector<32x32xf32>, vector<128x32xf32> -> vector<128x32xf32>
    %c0_15 = arith.constant 0 : index
    %c0_16 = arith.constant 0 : index
    %69 = vector.load %arg5[%c0_15, %c0_16] : memref<1x32xf32, #tpu.memory_space<vmem>>, vector<1x32xf32>
    %70 = vector.broadcast %69 : vector<1x32xf32> to vector<128x32xf32>
    %71 = arith.addf %68, %70 : vector<128x32xf32>
    %c0_17 = arith.constant 0 : index
    %c0_18 = arith.constant 0 : index
    %72 = vector.load %arg7[%c0_17, %c0_18] : memref<128x32xf32, #tpu.memory_space<vmem>>, vector<128x32xf32>
    tpu.vector_store %arg7[%c0_17, %c0_18], %71 {strides = array<i32>} : memref<128x32xf32, #tpu.memory_space<vmem>>, vector<128x32xf32>,
    return
  }
  func.func @transform_0(%arg0: i32) -> (i32, i32) {
    %c0_i32 = arith.constant 0 : i32
    %c0_i32_0 = arith.constant 0 : i32
    return %arg0, %c0_i32 : i32, i32
  }
  func.func @transform_1(%arg0: i32) -> (i32, i32) {
    %c0_i32 = arith.constant 0 : i32
    %c0_i32_0 = arith.constant 0 : i32
    %c0_i32_1 = arith.constant 0 : i32
    return %c0_i32, %c0_i32_0 : i32, i32
  }
  func.func @transform_2(%arg0: i32) -> (i32, i32) {
    %c0_i32 = arith.constant 0 : i32
    %c0_i32_0 = arith.constant 0 : i32
    %c0_i32_1 = arith.constant 0 : i32
    return %c0_i32, %c0_i32_0 : i32, i32
  }
  func.func @transform_3(%arg0: i32) -> (i32, i32) {
    %c0_i32 = arith.constant 0 : i32
    %c0_i32_0 = arith.constant 0 : i32
    %c0_i32_1 = arith.constant 0 : i32
    return %c0_i32, %c0_i32_0 : i32, i32
  }
  func.func @transform_4(%arg0: i32) -> (i32, i32) {
    %c0_i32 = arith.constant 0 : i32
    %c0_i32_0 = arith.constant 0 : i32
    %c0_i32_1 = arith.constant 0 : i32
    return %c0_i32, %c0_i32_0 : i32, i32
  }
  func.func @transform_5(%arg0: i32) -> (i32, i32, i32) {
    %c0_i32 = arith.constant 0 : i32
    %c0_i32_0 = arith.constant 0 : i32
    %c0_i32_1 = arith.constant 0 : i32
    %c0_i32_2 = arith.constant 0 : i32
    return %c0_i32, %c0_i32_0, %c0_i32_1 : i32, i32, i32
  }
  func.func @transform_6(%arg0: i32) -> (i32, i32) {
    %c0_i32 = arith.constant 0 : i32
    %c0_i32_0 = arith.constant 0 : i32
    return %arg0, %c0_i32 : i32, i32
  }
}

</mosaic_0001>

<llo_original>
// kernel: window_attention_forward.1
$region0: #{window_attention_forward.1}
  #allocation0 [shape = 'u32[]', space=smem, size = 0x4, offset = 0x4, fixed_abs, tag = 'smem constant byte address 0x4 - core index']
  #allocation1 [shape = 'u32[144,128]{1,0:T(1,128)}', space=vmem, size = 0x12000, scoped, tag = 'internal scratch']
  %s0 = inlined_call_operand.vmem [shape: f32[128,32], index: 0, kind: input, shape index: {}]
  %s1 = inlined_call_operand.vmem [shape: f32[32,96], index: 1, kind: input, shape index: {}]
  %s2 = inlined_call_operand.vmem [shape: f32[1,96], index: 2, kind: input, shape index: {}]
  %s3 = inlined_call_operand.vmem [shape: f32[32,32], index: 3, kind: input, shape index: {}]
  %s4 = inlined_call_operand.vmem [shape: f32[1,32], index: 4, kind: input, shape index: {}]
  %s5 = inlined_call_operand.vmem [shape: f32[4,16,16], index: 5, kind: input, shape index: {}]
  %s6 = inlined_call_operand.hbm [shape: f32[128,32], index: 6, kind: output, shape index: {}]
  %s7 = sld [smem:[#allocation0]]
  $region34: #{window_attention_forward.1} parent=0
    _
  %s9 = ssub.s32 1, %s7
  %s10 = scalar_select 0, %s9, %s7
  $region1: #{window_attention_forward.1} parent=0
    #allocation2 [shape = 'u8[65536]{0}', space=vmem, size = 0x10000, scoped, tag = 'output window, operand 0, single buffered']
    #allocation3 [shape = 's32[1]{0}', space=sflag, size = 0x4, scoped, tag = 'scoped memory for window_attention_forward.1']
    %11 = vsyncpa [#allocation3], 0
    // Predicated region
    $region2: #{window_attention_forward.1} parent=1 // pred_check
      _
    $region3: #{window_attention_forward.1} parent=1 // pred_check_branch
      %13 = sbr.rel (0) target = $region5
    $region4: #{window_attention_forward.1} parent=1 // pred_region
      _
    $region5: #{window_attention_forward.1} parent=1 // pred_fallthru
      _
    // Predicated region
    $region6: #{window_attention_forward.1} parent=1 // pred_check
      _
    $region7: #{window_attention_forward.1} parent=1 // pred_check_branch
      %15 = sbr.rel (0) target = $region9
    $region8: #{window_attention_forward.1} parent=1 // pred_region
      _
    $region9: #{window_attention_forward.1} parent=1 // pred_fallthru
      _
    // Predicated region
    $region10: #{window_attention_forward.1} parent=1 // pred_check
      _
    $region11: #{window_attention_forward.1} parent=1 // pred_check_branch
      %17 = sbr.rel (0) target = $region13
    $region12: #{window_attention_forward.1} parent=1 // pred_region
      _
    $region13: #{window_attention_forward.1} parent=1 // pred_fallthru
      _
    // Predicated region
    $region14: #{window_attention_forward.1} parent=1 // pred_check
      _
    $region15: #{window_attention_forward.1} parent=1 // pred_check_branch
      %19 = sbr.rel (0) target = $region17
    $region16: #{window_attention_forward.1} parent=1 // pred_region
      _
    $region17: #{window_attention_forward.1} parent=1 // pred_fallthru
      _
    // Predicated region
    $region18: #{window_attention_forward.1} parent=1 // pred_check
      _
    $region19: #{window_attention_forward.1} parent=1 // pred_check_branch
      %21 = sbr.rel (0) target = $region21
    $region20: #{window_attention_forward.1} parent=1 // pred_region
      _
    $region21: #{window_attention_forward.1} parent=1 // pred_fallthru
      _
    // Predicated region
    $region22: #{window_attention_forward.1} parent=1 // pred_check
      _
    $region23: #{window_attention_forward.1} parent=1 // pred_check_branch
      %23 = sbr.rel (0) target = $region25
    $region24: #{window_attention_forward.1} parent=1 // pred_region
      _
    $region25: #{window_attention_forward.1} parent=1 // pred_fallthru
      _
    %v24 = vld [vmem:[%s0] sm:$0xff]
    %v25 = vld [vmem:[%s0 + $0x8] sm:$0xff]
    %v26 = vld [vmem:[%s0 + $0x10] sm:$0xff]
    %v27 = vld [vmem:[%s0 + $0x18] sm:$0xff]
    %v28 = vld [vmem:[%s0 + $0x20] sm:$0xff]
    %v29 = vld [vmem:[%s0 + $0x28] sm:$0xff]
    %v30 = vld [vmem:[%s0 + $0x30] sm:$0xff]
    %v31 = vld [vmem:[%s0 + $0x38] sm:$0xff]
    %v32 = vld [vmem:[%s0 + $0x40] sm:$0xff]
    %v33 = vld [vmem:[%s0 + $0x48] sm:$0xff]
    %v34 = vld [vmem:[%s0 + $0x50] sm:$0xff]
    %v35 = vld [vmem:[%s0 + $0x58] sm:$0xff]
    %v36 = vld [vmem:[%s0 + $0x60] sm:$0xff]
    %v37 = vld [vmem:[%s0 + $0x68] sm:$0xff]
    %v38 = vld [vmem:[%s0 + $0x70] sm:$0xff]
    %v39 = vld [vmem:[%s0 + $0x78] sm:$0xff]
    %v40 = vld [vmem:[%s1] sm:$0xff]
    %v41 = vld [vmem:[%s1 + $0x8] sm:$0xff]
    %v42 = vld [vmem:[%s1 + $0x10] sm:$0xff]
    %v43 = vld [vmem:[%s1 + $0x18] sm:$0xff]
    %v44 = vld [vmem:[%s2] sm:$0x1]
    %v46 = vlaneseq
    %v47 = vshrl.u32 %v46, 7
    %v48 = vsub.s32 0, %v47
    %v49 = vrot.slane %v44, %v48
    %vm51 = vcmask 261120
    %v53 = vsel %vm51, %v24, 0
    %v56 = vsel %vm51, %v25, 0
    %v59 = vsel %vm51, %v26, 0
    %v62 = vsel %vm51, %v27, 0
    %v65 = vsel %vm51, %v28, 0
    %v68 = vsel %vm51, %v29, 0
    %v71 = vsel %vm51, %v30, 0
    %v74 = vsel %vm51, %v31, 0
    %v77 = vsel %vm51, %v32, 0
    %v80 = vsel %vm51, %v33, 0
    %v83 = vsel %vm51, %v34, 0
    %v86 = vsel %vm51, %v35, 0
    %v89 = vsel %vm51, %v36, 0
    %v92 = vsel %vm51, %v37, 0
    %v95 = vsel %vm51, %v38, 0
    %v98 = vsel %vm51, %v39, 0
    %100 = vmatprep.subr.mxu0 0.0
    %101 = vmatpush1.msra.mxu0 %v40
    %102 = vmatprep.subr.mxu0 0.0
    %103 = vmatpush1.msra.mxu0 %v41
    %104 = vmatprep.subr.mxu0 0.0
    %105 = vmatpush1.msra.mxu0 %v42
    %106 = vmatprep.subr.mxu0 0.0
    %107 = vmatpush1.msra.mxu0 %v43
    %108 = vmatprep.subr.mxu0 0.0
    %109 = vmatpush1.msra.mxu0 0.0
    %110 = vmatprep.subr.mxu0 0.0
    %111 = vmatpush1.msra.mxu0 0.0
    %112 = vmatprep.subr.mxu0 0.0
    %113 = vmatpush1.msra.mxu0 0.0
    %114 = vmatprep.subr.mxu0 0.0
    %115 = vmatpush1.msra.mxu0 0.0
    %116 = vmatprep.subr.mxu0 0.0
    %117 = vmatpush1.msra.mxu0 0.0
    %118 = vmatprep.subr.mxu0 0.0
    %119 = vmatpush1.msra.mxu0 0.0
    %120 = vmatprep.subr.mxu0 0.0
    %121 = vmatpush1.msra.mxu0 0.0
    %122 = vmatprep.subr.mxu0 0.0
    %123 = vmatpush1.msra.mxu0 0.0
    %124 = vmatprep.subr.mxu0 0.0
    %125 = vmatpush1.msra.mxu0 0.0
    %126 = vmatprep.subr.mxu0 0.0
    %127 = vmatpush1.msra.mxu0 0.0
    %128 = vmatprep.subr.mxu0 0.0
    %129 = vmatpush1.msra.mxu0 0.0
    %130 = vmatprep.subr.mxu0 0.0
    %131 = vmatpush1.msra.mxu0 0.0
    %132 = vmatprep.subr.mxu0 0.0
    %133 = vmatpush1.msra.mxu0 0.0
    %134 = vmatprep.subr.mxu0 0.0
    %135 = vmatpush1.msra.mxu0 0.0
    %136 = vmatprep.subr.mxu0 0.0
    %137 = vmatpush1.msra.mxu0 0.0
    %138 = vmatprep.subr.mxu0 0.0
    %139 = vmatpush1.msra.mxu0 0.0
    %140 = vmatprep.subr.mxu0 0.0
    %141 = vmatpush1.msra.mxu0 0.0
    %142 = vmatprep.subr.mxu0 0.0
    %143 = vmatpush1.msra.mxu0 0.0
    %144 = vmatprep.subr.mxu0 0.0
    %145 = vmatpush1.msra.mxu0 0.0
    %146 = vmatprep.subr.mxu0 0.0
    %147 = vmatpush1.msra.mxu0 0.0
    %148 = vmatprep.subr.mxu0 0.0
    %149 = vmatpush1.msra.mxu0 0.0
    %150 = vmatprep.subr.mxu0 0.0
    %151 = vmatpush1.msra.mxu0 0.0
    %152 = vmatprep.subr.mxu0 0.0
    %153 = vmatpush1.msra.mxu0 0.0
    %154 = vmatprep.subr.mxu0 0.0
    %155 = vmatpush1.msra.mxu0 0.0
    %156 = vmatprep.subr.mxu0 0.0
    %157 = vmatpush1.msra.mxu0 0.0
    %158 = vmatprep.subr.mxu0 0.0
    %159 = vmatpush1.msra.mxu0 0.0
    %160 = vmatprep.subr.mxu0 0.0
    %161 = vmatpush1.msra.mxu0 0.0
    %162 = vmatprep.subr.mxu0 0.0
    %163 = vmatpush1.msra.mxu0 0.0
    %164 = vmatprep.mubr.f32.mxu0 0.0
    %165 = vmatmul.mubr.f32.gmra.mrb[0].mxu0 %v53
    %v166 = vpop.f32.mrb[0].mxu0
    %v167 = vadd.f32 %v49, %v166
    %v168 = vpop.f32.mrb[0].mxu0
    %169 = vmatprep.mubr.f32.mxu0 0.0
    %170 = vmatmul.mubr.f32.gmra.mrb[0].mxu0 %v56
    %v171 = vpop.f32.mrb[0].mxu0
    %v172 = vadd.f32 %v49, %v171
    %v173 = vpop.f32.mrb[0].mxu0
    %174 = vmatprep.mubr.f32.mxu0 0.0
    %175 = vmatmul.mubr.f32.gmra.mrb[0].mxu0 %v59
    %v176 = vpop.f32.mrb[0].mxu0
    %v177 = vadd.f32 %v49, %v176
    %v178 = vpop.f32.mrb[0].mxu0
    %179 = vmatprep.mubr.f32.mxu0 0.0
    %180 = vmatmul.mubr.f32.gmra.mrb[0].mxu0 %v62
    %v181 = vpop.f32.mrb[0].mxu0
    %v182 = vadd.f32 %v49, %v181
    %v183 = vpop.f32.mrb[0].mxu0
    %184 = vmatprep.mubr.f32.mxu0 0.0
    %185 = vmatmul.mubr.f32.gmra.mrb[0].mxu0 %v65
    %v186 = vpop.f32.mrb[0].mxu0
    %v187 = vadd.f32 %v49, %v186
    %v188 = vpop.f32.mrb[0].mxu0
    %189 = vmatprep.mubr.f32.mxu0 0.0
    %190 = vmatmul.mubr.f32.gmra.mrb[0].mxu0 %v68
    %v191 = vpop.f32.mrb[0].mxu0
    %v192 = vadd.f32 %v49, %v191
    %v193 = vpop.f32.mrb[0].mxu0
    %194 = vmatprep.mubr.f32.mxu0 0.0
    %195 = vmatmul.mubr.f32.gmra.mrb[0].mxu0 %v71
    %v196 = vpop.f32.mrb[0].mxu0
    %v197 = vadd.f32 %v49, %v196
    %v198 = vpop.f32.mrb[0].mxu0
    %199 = vmatprep.mubr.f32.mxu0 0.0
    %200 = vmatmul.mubr.f32.gmra.mrb[0].mxu0 %v74
    %v201 = vpop.f32.mrb[0].mxu0
    %v202 = vadd.f32 %v49, %v201
    %v203 = vpop.f32.mrb[0].mxu0
    %204 = vmatprep.mubr.f32.mxu0 0.0
    %205 = vmatmul.mubr.f32.gmra.mrb[0].mxu0 %v77
    %v206 = vpop.f32.mrb[0].mxu0
    %v207 = vadd.f32 %v49, %v206
    %v208 = vpop.f32.mrb[0].mxu0
    %209 = vmatprep.mubr.f32.mxu0 0.0
    %210 = vmatmul.mubr.f32.gmra.mrb[0].mxu0 %v80
    %v211 = vpop.f32.mrb[0].mxu0
    %v212 = vadd.f32 %v49, %v211
    %v213 = vpop.f32.mrb[0].mxu0
    %214 = vmatprep.mubr.f32.mxu0 0.0
    %215 = vmatmul.mubr.f32.gmra.mrb[0].mxu0 %v83
    %v216 = vpop.f32.mrb[0].mxu0
    %v217 = vadd.f32 %v49, %v216
    %v218 = vpop.f32.mrb[0].mxu0
    %219 = vmatprep.mubr.f32.mxu0 0.0
    %220 = vmatmul.mubr.f32.gmra.mrb[0].mxu0 %v86
    %v221 = vpop.f32.mrb[0].mxu0
    %v222 = vadd.f32 %v49, %v221
    %v223 = vpop.f32.mrb[0].mxu0
    %224 = vmatprep.mubr.f32.mxu0 0.0
    %225 = vmatmul.mubr.f32.gmra.mrb[0].mxu0 %v89
    %v226 = vpop.f32.mrb[0].mxu0
    %v227 = vadd.f32 %v49, %v226
    %v228 = vpop.f32.mrb[0].mxu0
    %229 = vmatprep.mubr.f32.mxu0 0.0
    %230 = vmatmul.mubr.f32.gmra.mrb[0].mxu0 %v92
    %v231 = vpop.f32.mrb[0].mxu0
    %v232 = vadd.f32 %v49, %v231
    %v233 = vpop.f32.mrb[0].mxu0
    %234 = vmatprep.mubr.f32.mxu0 0.0
    %235 = vmatmul.mubr.f32.gmra.mrb[0].mxu0 %v95
    %v236 = vpop.f32.mrb[0].mxu0
    %v237 = vadd.f32 %v49, %v236
    %v238 = vpop.f32.mrb[0].mxu0
    %239 = vmatprep.mubr.f32.mxu0 0.0
    %240 = vmatmul.mubr.f32.gmra.mrb[0].mxu0 %v98
    %v241 = vpop.f32.mrb[0].mxu0
    %v242 = vadd.f32 %v49, %v241
    %v243 = vpop.f32.mrb[0].mxu0
    %244 = vdwg.mxu0
    %261 = vrot.lane.b32.xlu0 %v167, 120
    %v262 = vpop.permute.xlu0 %261
    %263 = vrot.lane.b32.xlu0 %v172, 120
    %v264 = vpop.permute.xlu0 %263
    %265 = vrot.lane.b32.xlu0 %v177, 120
    %v266 = vpop.permute.xlu0 %265
    %267 = vrot.lane.b32.xlu0 %v182, 120
    %v268 = vpop.permute.xlu0 %267
    %269 = vrot.lane.b32.xlu0 %v187, 120
    %v270 = vpop.permute.xlu0 %269
    %271 = vrot.lane.b32.xlu0 %v192, 120
    %v272 = vpop.permute.xlu0 %271
    %273 = vrot.lane.b32.xlu0 %v197, 120
    %v274 = vpop.permute.xlu0 %273
    %275 = vrot.lane.b32.xlu0 %v202, 120
    %v276 = vpop.permute.xlu0 %275
    %277 = vrot.lane.b32.xlu0 %v207, 120
    %v278 = vpop.permute.xlu0 %277
    %279 = vrot.lane.b32.xlu0 %v212, 120
    %v280 = vpop.permute.xlu0 %279
    %281 = vrot.lane.b32.xlu0 %v217, 120
    %v282 = vpop.permute.xlu0 %281
    %283 = vrot.lane.b32.xlu0 %v222, 120
    %v284 = vpop.permute.xlu0 %283
    %285 = vrot.lane.b32.xlu0 %v227, 120
    %v286 = vpop.permute.xlu0 %285
    %287 = vrot.lane.b32.xlu0 %v232, 120
    %v288 = vpop.permute.xlu0 %287
    %289 = vrot.lane.b32.xlu0 %v237, 120
    %v290 = vpop.permute.xlu0 %289
    %291 = vrot.lane.b32.xlu0 %v242, 120
    %v292 = vpop.permute.xlu0 %291
    %293 = vrot.lane.b32.xlu0 %v167, 112
    %v294 = vpop.permute.xlu0 %293
    %295 = vrot.lane.b32.xlu0 %v172, 112
    %v296 = vpop.permute.xlu0 %295
    %297 = vrot.lane.b32.xlu0 %v177, 112
    %v298 = vpop.permute.xlu0 %297
    %299 = vrot.lane.b32.xlu0 %v182, 112
    %v300 = vpop.permute.xlu0 %299
    %301 = vrot.lane.b32.xlu0 %v187, 112
    %v302 = vpop.permute.xlu0 %301
    %303 = vrot.lane.b32.xlu0 %v192, 112
    %v304 = vpop.permute.xlu0 %303
    %305 = vrot.lane.b32.xlu0 %v197, 112
    %v306 = vpop.permute.xlu0 %305
    %307 = vrot.lane.b32.xlu0 %v202, 112
    %v308 = vpop.permute.xlu0 %307
    %309 = vrot.lane.b32.xlu0 %v207, 112
    %v310 = vpop.permute.xlu0 %309
    %311 = vrot.lane.b32.xlu0 %v212, 112
    %v312 = vpop.permute.xlu0 %311
    %313 = vrot.lane.b32.xlu0 %v217, 112
    %v314 = vpop.permute.xlu0 %313
    %315 = vrot.lane.b32.xlu0 %v222, 112
    %v316 = vpop.permute.xlu0 %315
    %317 = vrot.lane.b32.xlu0 %v227, 112
    %v318 = vpop.permute.xlu0 %317
    %319 = vrot.lane.b32.xlu0 %v232, 112
    %v320 = vpop.permute.xlu0 %319
    %321 = vrot.lane.b32.xlu0 %v237, 112
    %v322 = vpop.permute.xlu0 %321
    %323 = vrot.lane.b32.xlu0 %v242, 112
    %v324 = vpop.permute.xlu0 %323
    %325 = vrot.lane.b32.xlu0 %v167, 104
    %v326 = vpop.permute.xlu0 %325
    %327 = vrot.lane.b32.xlu0 %v172, 104
    %v328 = vpop.permute.xlu0 %327
    %329 = vrot.lane.b32.xlu0 %v177, 104
    %v330 = vpop.permute.xlu0 %329
    %331 = vrot.lane.b32.xlu0 %v182, 104
    %v332 = vpop.permute.xlu0 %331
    %333 = vrot.lane.b32.xlu0 %v187, 104
    %v334 = vpop.permute.xlu0 %333
    %335 = vrot.lane.b32.xlu0 %v192, 104
    %v336 = vpop.permute.xlu0 %335
    %337 = vrot.lane.b32.xlu0 %v197, 104
    %v338 = vpop.permute.xlu0 %337
    %339 = vrot.lane.b32.xlu0 %v202, 104
    %v340 = vpop.permute.xlu0 %339
    %341 = vrot.lane.b32.xlu0 %v207, 104
    %v342 = vpop.permute.xlu0 %341
    %343 = vrot.lane.b32.xlu0 %v212, 104
    %v344 = vpop.permute.xlu0 %343
    %345 = vrot.lane.b32.xlu0 %v217, 104
    %v346 = vpop.permute.xlu0 %345
    %347 = vrot.lane.b32.xlu0 %v222, 104
    %v348 = vpop.permute.xlu0 %347
    %349 = vrot.lane.b32.xlu0 %v227, 104
    %v350 = vpop.permute.xlu0 %349
    %351 = vrot.lane.b32.xlu0 %v232, 104
    %v352 = vpop.permute.xlu0 %351
    %353 = vrot.lane.b32.xlu0 %v237, 104
    %v354 = vpop.permute.xlu0 %353
    %355 = vrot.lane.b32.xlu0 %v242, 104
    %v356 = vpop.permute.xlu0 %355
    %357 = vrot.lane.b32.xlu0 %v167, 96
    %v358 = vpop.permute.xlu0 %357
    %359 = vrot.lane.b32.xlu0 %v172, 96
    %v360 = vpop.permute.xlu0 %359
    %vm361 = vcmask 64512
    %v362 = vsel %vm361, %v167, 0
    %v364 = vsel %vm361, %v172, 0
    %v366 = vsel %vm361, %v358, 0
    %v368 = vsel %vm361, %v360, 0
    %370 = vmatprep.subr.mxu0 0.0
    %371 = vmatpush1.xpose.msra.mxu0 %v366
    %372 = vmatprep.subr.mxu0 0.0
    %373 = vmatpush1.xpose.msra.mxu0 %v368
    %374 = vmatprep.subr.mxu0 0.0
    %375 = vmatpush1.xpose.msra.mxu0 0.0
    %376 = vmatprep.subr.mxu0 0.0
    %377 = vmatpush1.xpose.msra.mxu0 0.0
    %378 = vmatprep.subr.mxu0 0.0
    %379 = vmatpush1.xpose.msra.mxu0 0.0
    %380 = vmatprep.subr.mxu0 0.0
    %381 = vmatpush1.xpose.msra.mxu0 0.0
    %382 = vmatprep.subr.mxu0 0.0
    %383 = vmatpush1.xpose.msra.mxu0 0.0
    %384 = vmatprep.subr.mxu0 0.0
    %385 = vmatpush1.xpose.msra.mxu0 0.0
    %386 = vmatprep.subr.mxu0 0.0
    %387 = vmatpush1.xpose.msra.mxu0 0.0
    %388 = vmatprep.subr.mxu0 0.0
    %389 = vmatpush1.xpose.msra.mxu0 0.0
    %390 = vmatprep.subr.mxu0 0.0
    %391 = vmatpush1.xpose.msra.mxu0 0.0
    %392 = vmatprep.subr.mxu0 0.0
    %393 = vmatpush1.xpose.msra.mxu0 0.0
    %394 = vmatprep.subr.mxu0 0.0
    %395 = vmatpush1.xpose.msra.mxu0 0.0
    %396 = vmatprep.subr.mxu0 0.0
    %397 = vmatpush1.xpose.msra.mxu0 0.0
    %398 = vmatprep.subr.mxu0 0.0
    %399 = vmatpush1.xpose.msra.mxu0 0.0
    %400 = vmatprep.subr.mxu0 0.0
    %401 = vmatpush1.xpose.msra.mxu0 0.0
    %402 = vmatprep.subr.mxu0 0.0
    %403 = vmatpush1.xpose.msra.mxu0 0.0
    %404 = vmatprep.subr.mxu0 0.0
    %405 = vmatpush1.xpose.msra.mxu0 0.0
    %406 = vmatprep.subr.mxu0 0.0
    %407 = vmatpush1.xpose.msra.mxu0 0.0
    %408 = vmatprep.subr.mxu0 0.0
    %409 = vmatpush1.xpose.msra.mxu0 0.0
    %410 = vmatprep.subr.mxu0 0.0
    %411 = vmatpush1.xpose.msra.mxu0 0.0
    %412 = vmatprep.subr.mxu0 0.0
    %413 = vmatpush1.xpose.msra.mxu0 0.0
    %414 = vmatprep.subr.mxu0 0.0
    %415 = vmatpush1.xpose.msra.mxu0 0.0
    %416 = vmatprep.subr.mxu0 0.0
    %417 = vmatpush1.xpose.msra.mxu0 0.0
    %418 = vmatprep.subr.mxu0 0.0
    %419 = vmatpush1.xpose.msra.mxu0 0.0
    %420 = vmatprep.subr.mxu0 0.0
    %421 = vmatpush1.xpose.msra.mxu0 0.0
    %422 = vmatprep.subr.mxu0 0.0
    %423 = vmatpush1.xpose.msra.mxu0 0.0
    %424 = vmatprep.subr.mxu0 0.0
    %425 = vmatpush1.xpose.msra.mxu0 0.0
    %426 = vmatprep.subr.mxu0 0.0
    %427 = vmatpush1.xpose.msra.mxu0 0.0
    %428 = vmatprep.subr.mxu0 0.0
    %429 = vmatpush1.xpose.msra.mxu0 0.0
    %430 = vmatprep.subr.mxu0 0.0
    %431 = vmatpush1.xpose.msra.mxu0 0.0
    %432 = vmatprep.subr.mxu0 0.0
    %433 = vmatpush1.xpose.msra.mxu0 0.0
    %434 = vmatprep.mubr.f32.mxu0 0.0
    %435 = vmatmul.mubr.f32.gmra.mrb[0].mxu0 %v362
    %v436 = vpop.f32.mrb[0].mxu0
    %v437 = vadd.f32 0.0, %v436
    %v438 = vpop.f32.mrb[0].mxu0
    %439 = vmatprep.mubr.f32.mxu0 0.0
    %440 = vmatmul.mubr.f32.gmra.mrb[0].mxu0 %v364
    %v441 = vpop.f32.mrb[0].mxu0
    %v442 = vadd.f32 0.0, %v441
    %v443 = vpop.f32.mrb[0].mxu0
    %444 = vdwg.mxu0
    %445 = vrot.lane.b32.xlu0 %v177, 96
    %v446 = vpop.permute.xlu0 %445
    %447 = vrot.lane.b32.xlu0 %v182, 96
    %v448 = vpop.permute.xlu0 %447
    %v449 = vsel %vm361, %v177, 0
    %v451 = vsel %vm361, %v182, 0
    %v453 = vsel %vm361, %v446, 0
    %v455 = vsel %vm361, %v448, 0
    %457 = vmatprep.subr.mxu0 0.0
    %458 = vmatpush1.xpose.msra.mxu0 %v453
    %459 = vmatprep.subr.mxu0 0.0
    %460 = vmatpush1.xpose.msra.mxu0 %v455
    %461 = vmatprep.subr.mxu0 0.0
    %462 = vmatpush1.xpose.msra.mxu0 0.0
    %463 = vmatprep.subr.mxu0 0.0
    %464 = vmatpush1.xpose.msra.mxu0 0.0
    %465 = vmatprep.subr.mxu0 0.0
    %466 = vmatpush1.xpose.msra.mxu0 0.0
    %467 = vmatprep.subr.mxu0 0.0
    %468 = vmatpush1.xpose.msra.mxu0 0.0
    %469 = vmatprep.subr.mxu0 0.0
    %470 = vmatpush1.xpose.msra.mxu0 0.0
    %471 = vmatprep.subr.mxu0 0.0
    %472 = vmatpush1.xpose.msra.mxu0 0.0
    %473 = vmatprep.subr.mxu0 0.0
    %474 = vmatpush1.xpose.msra.mxu0 0.0
    %475 = vmatprep.subr.mxu0 0.0
    %476 = vmatpush1.xpose.msra.mxu0 0.0
    %477 = vmatprep.subr.mxu0 0.0
    %478 = vmatpush1.xpose.msra.mxu0 0.0
    %479 = vmatprep.subr.mxu0 0.0
    %480 = vmatpush1.xpose.msra.mxu0 0.0
    %481 = vmatprep.subr.mxu0 0.0
    %482 = vmatpush1.xpose.msra.mxu0 0.0
    %483 = vmatprep.subr.mxu0 0.0
    %484 = vmatpush1.xpose.msra.mxu0 0.0
    %485 = vmatprep.subr.mxu0 0.0
    %486 = vmatpush1.xpose.msra.mxu0 0.0
    %487 = vmatprep.subr.mxu0 0.0
    %488 = vmatpush1.xpose.msra.mxu0 0.0
    %489 = vmatprep.subr.mxu0 0.0
    %490 = vmatpush1.xpose.msra.mxu0 0.0
    %491 = vmatprep.subr.mxu0 0.0
    %492 = vmatpush1.xpose.msra.mxu0 0.0
    %493 = vmatprep.subr.mxu0 0.0
    %494 = vmatpush1.xpose.msra.mxu0 0.0
    %495 = vmatprep.subr.mxu0 0.0
    %496 = vmatpush1.xpose.msra.mxu0 0.0
    %497 = vmatprep.subr.mxu0 0.0
    %498 = vmatpush1.xpose.msra.mxu0 0.0
    %499 = vmatprep.subr.mxu0 0.0
    %500 = vmatpush1.xpose.msra.mxu0 0.0
    %501 = vmatprep.subr.mxu0 0.0
    %502 = vmatpush1.xpose.msra.mxu0 0.0
    %503 = vmatprep.subr.mxu0 0.0
    %504 = vmatpush1.xpose.msra.mxu0 0.0
    %505 = vmatprep.subr.mxu0 0.0
    %506 = vmatpush1.xpose.msra.mxu0 0.0
    %507 = vmatprep.subr.mxu0 0.0
    %508 = vmatpush1.xpose.msra.mxu0 0.0
    %509 = vmatprep.subr.mxu0 0.0
    %510 = vmatpush1.xpose.msra.mxu0 0.0
    %511 = vmatprep.subr.mxu0 0.0
    %512 = vmatpush1.xpose.msra.mxu0 0.0
    %513 = vmatprep.subr.mxu0 0.0
    %514 = vmatpush1.xpose.msra.mxu0 0.0
    %515 = vmatprep.subr.mxu0 0.0
    %516 = vmatpush1.xpose.msra.mxu0 0.0
    %517 = vmatprep.subr.mxu0 0.0
    %518 = vmatpush1.xpose.msra.mxu0 0.0
    %519 = vmatprep.subr.mxu0 0.0
    %520 = vmatpush1.xpose.msra.mxu0 0.0
    %521 = vmatprep.mubr.f32.mxu0 0.0
    %522 = vmatmul.mubr.f32.gmra.mrb[0].mxu0 %v449
    %v523 = vpop.f32.mrb[0].mxu0
    %v524 = vadd.f32 0.0, %v523
    %v525 = vpop.f32.mrb[0].mxu0
    %526 = vmatprep.mubr.f32.mxu0 0.0
    %527 = vmatmul.mubr.f32.gmra.mrb[0].mxu0 %v451
    %v528 = vpop.f32.mrb[0].mxu0
    %v529 = vadd.f32 0.0, %v528
    %v530 = vpop.f32.mrb[0].mxu0
    %531 = vdwg.mxu0
    %532 = vrot.lane.b32.xlu0 %v187, 96
    %v533 = vpop.permute.xlu0 %532
    %534 = vrot.lane.b32.xlu0 %v192, 96
    %v535 = vpop.permute.xlu0 %534
    %v536 = vsel %vm361, %v187, 0
    %v538 = vsel %vm361, %v192, 0
    %v540 = vsel %vm361, %v533, 0
    %v542 = vsel %vm361, %v535, 0
    %544 = vmatprep.subr.mxu0 0.0
    %545 = vmatpush1.xpose.msra.mxu0 %v540
    %546 = vmatprep.subr.mxu0 0.0
    %547 = vmatpush1.xpose.msra.mxu0 %v542
    %548 = vmatprep.subr.mxu0 0.0
    %549 = vmatpush1.xpose.msra.mxu0 0.0
    %550 = vmatprep.subr.mxu0 0.0
    %551 = vmatpush1.xpose.msra.mxu0 0.0
    %552 = vmatprep.subr.mxu0 0.0
    %553 = vmatpush1.xpose.msra.mxu0 0.0
    %554 = vmatprep.subr.mxu0 0.0
    %555 = vmatpush1.xpose.msra.mxu0 0.0
    %556 = vmatprep.subr.mxu0 0.0
    %557 = vmatpush1.xpose.msra.mxu0 0.0
    %558 = vmatprep.subr.mxu0 0.0
    %559 = vmatpush1.xpose.msra.mxu0 0.0
    %560 = vmatprep.subr.mxu0 0.0
    %561 = vmatpush1.xpose.msra.mxu0 0.0
    %562 = vmatprep.subr.mxu0 0.0
    %563 = vmatpush1.xpose.msra.mxu0 0.0
    %564 = vmatprep.subr.mxu0 0.0
    %565 = vmatpush1.xpose.msra.mxu0 0.0
    %566 = vmatprep.subr.mxu0 0.0
    %567 = vmatpush1.xpose.msra.mxu0 0.0
    %568 = vmatprep.subr.mxu0 0.0
    %569 = vmatpush1.xpose.msra.mxu0 0.0
    %570 = vmatprep.subr.mxu0 0.0
    %571 = vmatpush1.xpose.msra.mxu0 0.0
    %572 = vmatprep.subr.mxu0 0.0
    %573 = vmatpush1.xpose.msra.mxu0 0.0
    %574 = vmatprep.subr.mxu0 0.0
    %575 = vmatpush1.xpose.msra.mxu0 0.0
    %576 = vmatprep.subr.mxu0 0.0
    %577 = vmatpush1.xpose.msra.mxu0 0.0
    %578 = vmatprep.subr.mxu0 0.0
    %579 = vmatpush1.xpose.msra.mxu0 0.0
    %580 = vmatprep.subr.mxu0 0.0
    %581 = vmatpush1.xpose.msra.mxu0 0.0
    %582 = vmatprep.subr.mxu0 0.0
    %583 = vmatpush1.xpose.msra.mxu0 0.0
    %584 = vmatprep.subr.mxu0 0.0
    %585 = vmatpush1.xpose.msra.mxu0 0.0
    %586 = vmatprep.subr.mxu0 0.0
    %587 = vmatpush1.xpose.msra.mxu0 0.0
    %588 = vmatprep.subr.mxu0 0.0
    %589 = vmatpush1.xpose.msra.mxu0 0.0
    %590 = vmatprep.subr.mxu0 0.0
    %591 = vmatpush1.xpose.msra.mxu0 0.0
    %592 = vmatprep.subr.mxu0 0.0
    %593 = vmatpush1.xpose.msra.mxu0 0.0
    %594 = vmatprep.subr.mxu0 0.0
    %595 = vmatpush1.xpose.msra.mxu0 0.0
    %596 = vmatprep.subr.mxu0 0.0
    %597 = vmatpush1.xpose.msra.mxu0 0.0
    %598 = vmatprep.subr.mxu0 0.0
    %599 = vmatpush1.xpose.msra.mxu0 0.0
    %600 = vmatprep.subr.mxu0 0.0
    %601 = vmatpush1.xpose.msra.mxu0 0.0
    %602 = vmatprep.subr.mxu0 0.0
    %603 = vmatpush1.xpose.msra.mxu0 0.0
    %604 = vmatprep.subr.mxu0 0.0
    %605 = vmatpush1.xpose.msra.mxu0 0.0
    %606 = vmatprep.subr.mxu0 0.0
    %607 = vmatpush1.xpose.msra.mxu0 0.0
    %608 = vmatprep.mubr.f32.mxu0 0.0
    %609 = vmatmul.mubr.f32.gmra.mrb[0].mxu0 %v536
    %v610 = vpop.f32.mrb[0].mxu0
    %v611 = vadd.f32 0.0, %v610
    %v612 = vpop.f32.mrb[0].mxu0
    %613 = vmatprep.mubr.f32.mxu0 0.0
    %614 = vmatmul.mubr.f32.gmra.mrb[0].mxu0 %v538
    %v615 = vpop.f32.mrb[0].mxu0
    %v616 = vadd.f32 0.0, %v615
    %v617 = vpop.f32.mrb[0].mxu0
    %618 = vdwg.mxu0
    %619 = vrot.lane.b32.xlu0 %v197, 96
    %v620 = vpop.permute.xlu0 %619
    %621 = vrot.lane.b32.xlu0 %v202, 96
    %v622 = vpop.permute.xlu0 %621
    %v623 = vsel %vm361, %v197, 0
    %v625 = vsel %vm361, %v202, 0
    %v627 = vsel %vm361, %v620, 0
    %v629 = vsel %vm361, %v622, 0
    %631 = vmatprep.subr.mxu0 0.0
    %632 = vmatpush1.xpose.msra.mxu0 %v627
    %633 = vmatprep.subr.mxu0 0.0
    %634 = vmatpush1.xpose.msra.mxu0 %v629
    %635 = vmatprep.subr.mxu0 0.0
    %636 = vmatpush1.xpose.msra.mxu0 0.0
    %637 = vmatprep.subr.mxu0 0.0
    %638 = vmatpush1.xpose.msra.mxu0 0.0
    %639 = vmatprep.subr.mxu0 0.0
    %640 = vmatpush1.xpose.msra.mxu0 0.0
    %641 = vmatprep.subr.mxu0 0.0
    %642 = vmatpush1.xpose.msra.mxu0 0.0
    %643 = vmatprep.subr.mxu0 0.0
    %644 = vmatpush1.xpose.msra.mxu0 0.0
    %645 = vmatprep.subr.mxu0 0.0
    %646 = vmatpush1.xpose.msra.mxu0 0.0
    %647 = vmatprep.subr.mxu0 0.0
    %648 = vmatpush1.xpose.msra.mxu0 0.0
    %649 = vmatprep.subr.mxu0 0.0
    %650 = vmatpush1.xpose.msra.mxu0 0.0
    %651 = vmatprep.subr.mxu0 0.0
    %652 = vmatpush1.xpose.msra.mxu0 0.0
    %653 = vmatprep.subr.mxu0 0.0
    %654 = vmatpush1.xpose.msra.mxu0 0.0
    %655 = vmatprep.subr.mxu0 0.0
    %656 = vmatpush1.xpose.msra.mxu0 0.0
    %657 = vmatprep.subr.mxu0 0.0
    %658 = vmatpush1.xpose.msra.mxu0 0.0
    %659 = vmatprep.subr.mxu0 0.0
    %660 = vmatpush1.xpose.msra.mxu0 0.0
    %661 = vmatprep.subr.mxu0 0.0
    %662 = vmatpush1.xpose.msra.mxu0 0.0
    %663 = vmatprep.subr.mxu0 0.0
    %664 = vmatpush1.xpose.msra.mxu0 0.0
    %665 = vmatprep.subr.mxu0 0.0
    %666 = vmatpush1.xpose.msra.mxu0 0.0
    %667 = vmatprep.subr.mxu0 0.0
    %668 = vmatpush1.xpose.msra.mxu0 0.0
    %669 = vmatprep.subr.mxu0 0.0
    %670 = vmatpush1.xpose.msra.mxu0 0.0
    %671 = vmatprep.subr.mxu0 0.0
    %672 = vmatpush1.xpose.msra.mxu0 0.0
    %673 = vmatprep.subr.mxu0 0.0
    %674 = vmatpush1.xpose.msra.mxu0 0.0
    %675 = vmatprep.subr.mxu0 0.0
    %676 = vmatpush1.xpose.msra.mxu0 0.0
    %677 = vmatprep.subr.mxu0 0.0
    %678 = vmatpush1.xpose.msra.mxu0 0.0
    %679 = vmatprep.subr.mxu0 0.0
    %680 = vmatpush1.xpose.msra.mxu0 0.0
    %681 = vmatprep.subr.mxu0 0.0
    %682 = vmatpush1.xpose.msra.mxu0 0.0
    %683 = vmatprep.subr.mxu0 0.0
    %684 = vmatpush1.xpose.msra.mxu0 0.0
    %685 = vmatprep.subr.mxu0 0.0
    %686 = vmatpush1.xpose.msra.mxu0 0.0
    %687 = vmatprep.subr.mxu0 0.0
    %688 = vmatpush1.xpose.msra.mxu0 0.0
    %689 = vmatprep.subr.mxu0 0.0
    %690 = vmatpush1.xpose.msra.mxu0 0.0
    %691 = vmatprep.subr.mxu0 0.0
    %692 = vmatpush1.xpose.msra.mxu0 0.0
    %693 = vmatprep.subr.mxu0 0.0
    %694 = vmatpush1.xpose.msra.mxu0 0.0
    %695 = vmatprep.mubr.f32.mxu0 0.0
    %696 = vmatmul.mubr.f32.gmra.mrb[0].mxu0 %v623
    %v697 = vpop.f32.mrb[0].mxu0
    %v698 = vadd.f32 0.0, %v697
    %v699 = vpop.f32.mrb[0].mxu0
    %700 = vmatprep.mubr.f32.mxu0 0.0
    %701 = vmatmul.mubr.f32.gmra.mrb[0].mxu0 %v625
    %v702 = vpop.f32.mrb[0].mxu0
    %v703 = vadd.f32 0.0, %v702
    %v704 = vpop.f32.mrb[0].mxu0
    %705 = vdwg.mxu0
    %706 = vrot.lane.b32.xlu0 %v207, 96
    %v707 = vpop.permute.xlu0 %706
    %708 = vrot.lane.b32.xlu0 %v212, 96
    %v709 = vpop.permute.xlu0 %708
    %v710 = vsel %vm361, %v207, 0
    %v712 = vsel %vm361, %v212, 0
    %v714 = vsel %vm361, %v707, 0
    %v716 = vsel %vm361, %v709, 0
    %718 = vmatprep.subr.mxu0 0.0
    %719 = vmatpush1.xpose.msra.mxu0 %v714
    %720 = vmatprep.subr.mxu0 0.0
    %721 = vmatpush1.xpose.msra.mxu0 %v716
    %722 = vmatprep.subr.mxu0 0.0
    %723 = vmatpush1.xpose.msra.mxu0 0.0
    %724 = vmatprep.subr.mxu0 0.0
    %725 = vmatpush1.xpose.msra.mxu0 0.0
    %726 = vmatprep.subr.mxu0 0.0
    %727 = vmatpush1.xpose.msra.mxu0 0.0
    %728 = vmatprep.subr.mxu0 0.0
    %729 = vmatpush1.xpose.msra.mxu0 0.0
    %730 = vmatprep.subr.mxu0 0.0
    %731 = vmatpush1.xpose.msra.mxu0 0.0
    %732 = vmatprep.subr.mxu0 0.0
    %733 = vmatpush1.xpose.msra.mxu0 0.0
    %734 = vmatprep.subr.mxu0 0.0
    %735 = vmatpush1.xpose.msra.mxu0 0.0
    %736 = vmatprep.subr.mxu0 0.0
    %737 = vmatpush1.xpose.msra.mxu0 0.0
    %738 = vmatprep.subr.mxu0 0.0
    %739 = vmatpush1.xpose.msra.mxu0 0.0
    %740 = vmatprep.subr.mxu0 0.0
    %741 = vmatpush1.xpose.msra.mxu0 0.0
    %742 = vmatprep.subr.mxu0 0.0
    %743 = vmatpush1.xpose.msra.mxu0 0.0
    %744 = vmatprep.subr.mxu0 0.0
    %745 = vmatpush1.xpose.msra.mxu0 0.0
    %746 = vmatprep.subr.mxu0 0.0
    %747 = vmatpush1.xpose.msra.mxu0 0.0
    %748 = vmatprep.subr.mxu0 0.0
    %749 = vmatpush1.xpose.msra.mxu0 0.0
    %750 = vmatprep.subr.mxu0 0.0
    %751 = vmatpush1.xpose.msra.mxu0 0.0
    %752 = vmatprep.subr.mxu0 0.0
    %753 = vmatpush1.xpose.msra.mxu0 0.0
    %754 = vmatprep.subr.mxu0 0.0
    %755 = vmatpush1.xpose.msra.mxu0 0.0
    %756 = vmatprep.subr.mxu0 0.0
    %757 = vmatpush1.xpose.msra.mxu0 0.0
    %758 = vmatprep.subr.mxu0 0.0
    %759 = vmatpush1.xpose.msra.mxu0 0.0
    %760 = vmatprep.subr.mxu0 0.0
    %761 = vmatpush1.xpose.msra.mxu0 0.0
    %762 = vmatprep.subr.mxu0 0.0
    %763 = vmatpush1.xpose.msra.mxu0 0.0
    %764 = vmatprep.subr.mxu0 0.0
    %765 = vmatpush1.xpose.msra.mxu0 0.0
    %766 = vmatprep.subr.mxu0 0.0
    %767 = vmatpush1.xpose.msra.mxu0 0.0
    %768 = vmatprep.subr.mxu0 0.0
    %769 = vmatpush1.xpose.msra.mxu0 0.0
    %770 = vmatprep.subr.mxu0 0.0
    %771 = vmatpush1.xpose.msra.mxu0 0.0
    %772 = vmatprep.subr.mxu0 0.0
    %773 = vmatpush1.xpose.msra.mxu0 0.0
    %774 = vmatprep.subr.mxu0 0.0
    %775 = vmatpush1.xpose.msra.mxu0 0.0
    %776 = vmatprep.subr.mxu0 0.0
    %777 = vmatpush1.xpose.msra.mxu0 0.0
    %778 = vmatprep.subr.mxu0 0.0
    %779 = vmatpush1.xpose.msra.mxu0 0.0
    %780 = vmatprep.subr.mxu0 0.0
    %781 = vmatpush1.xpose.msra.mxu0 0.0
    %782 = vmatprep.mubr.f32.mxu0 0.0
    %783 = vmatmul.mubr.f32.gmra.mrb[0].mxu0 %v710
    %v784 = vpop.f32.mrb[0].mxu0
    %v785 = vadd.f32 0.0, %v784
    %v786 = vpop.f32.mrb[0].mxu0
    %787 = vmatprep.mubr.f32.mxu0 0.0
    %788 = vmatmul.mubr.f32.gmra.mrb[0].mxu0 %v712
    %v789 = vpop.f32.mrb[0].mxu0
    %v790 = vadd.f32 0.0, %v789
    %v791 = vpop.f32.mrb[0].mxu0
    %792 = vdwg.mxu0
    %793 = vrot.lane.b32.xlu0 %v217, 96
    %v794 = vpop.permute.xlu0 %793
    %795 = vrot.lane.b32.xlu0 %v222, 96
    %v796 = vpop.permute.xlu0 %795
    %v797 = vsel %vm361, %v217, 0
    %v799 = vsel %vm361, %v222, 0
    %v801 = vsel %vm361, %v794, 0
    %v803 = vsel %vm361, %v796, 0
    %805 = vmatprep.subr.mxu0 0.0
    %806 = vmatpush1.xpose.msra.mxu0 %v801
    %807 = vmatprep.subr.mxu0 0.0
    %808 = vmatpush1.xpose.msra.mxu0 %v803
    %809 = vmatprep.subr.mxu0 0.0
    %810 = vmatpush1.xpose.msra.mxu0 0.0
    %811 = vmatprep.subr.mxu0 0.0
    %812 = vmatpush1.xpose.msra.mxu0 0.0
    %813 = vmatprep.subr.mxu0 0.0
    %814 = vmatpush1.xpose.msra.mxu0 0.0
    %815 = vmatprep.subr.mxu0 0.0
    %816 = vmatpush1.xpose.msra.mxu0 0.0
    %817 = vmatprep.subr.mxu0 0.0
    %818 = vmatpush1.xpose.msra.mxu0 0.0
    %819 = vmatprep.subr.mxu0 0.0
    %820 = vmatpush1.xpose.msra.mxu0 0.0
    %821 = vmatprep.subr.mxu0 0.0
    %822 = vmatpush1.xpose.msra.mxu0 0.0
    %823 = vmatprep.subr.mxu0 0.0
    %824 = vmatpush1.xpose.msra.mxu0 0.0
    %825 = vmatprep.subr.mxu0 0.0
    %826 = vmatpush1.xpose.msra.mxu0 0.0
    %827 = vmatprep.subr.mxu0 0.0
    %828 = vmatpush1.xpose.msra.mxu0 0.0
    %829 = vmatprep.subr.mxu0 0.0
    %830 = vmatpush1.xpose.msra.mxu0 0.0
    %831 = vmatprep.subr.mxu0 0.0
    %832 = vmatpush1.xpose.msra.mxu0 0.0
    %833 = vmatprep.subr.mxu0 0.0
    %834 = vmatpush1.xpose.msra.mxu0 0.0
    %835 = vmatprep.subr.mxu0 0.0
    %836 = vmatpush1.xpose.msra.mxu0 0.0
    %837 = vmatprep.subr.mxu0 0.0
    %838 = vmatpush1.xpose.msra.mxu0 0.0
    %839 = vmatprep.subr.mxu0 0.0
    %840 = vmatpush1.xpose.msra.mxu0 0.0
    %841 = vmatprep.subr.mxu0 0.0
    %842 = vmatpush1.xpose.msra.mxu0 0.0
    %843 = vmatprep.subr.mxu0 0.0
    %844 = vmatpush1.xpose.msra.mxu0 0.0
    %845 = vmatprep.subr.mxu0 0.0
    %846 = vmatpush1.xpose.msra.mxu0 0.0
    %847 = vmatprep.subr.mxu0 0.0
    %848 = vmatpush1.xpose.msra.mxu0 0.0
    %849 = vmatprep.subr.mxu0 0.0
    %850 = vmatpush1.xpose.msra.mxu0 0.0
    %851 = vmatprep.subr.mxu0 0.0
    %852 = vmatpush1.xpose.msra.mxu0 0.0
    %853 = vmatprep.subr.mxu0 0.0
    %854 = vmatpush1.xpose.msra.mxu0 0.0
    %855 = vmatprep.subr.mxu0 0.0
    %856 = vmatpush1.xpose.msra.mxu0 0.0
    %857 = vmatprep.subr.mxu0 0.0
    %858 = vmatpush1.xpose.msra.mxu0 0.0
    %859 = vmatprep.subr.mxu0 0.0
    %860 = vmatpush1.xpose.msra.mxu0 0.0
    %861 = vmatprep.subr.mxu0 0.0
    %862 = vmatpush1.xpose.msra.mxu0 0.0
    %863 = vmatprep.subr.mxu0 0.0
    %864 = vmatpush1.xpose.msra.mxu0 0.0
    %865 = vmatprep.subr.mxu0 0.0
    %866 = vmatpush1.xpose.msra.mxu0 0.0
    %867 = vmatprep.subr.mxu0 0.0
    %868 = vmatpush1.xpose.msra.mxu0 0.0
    %869 = vmatprep.mubr.f32.mxu0 0.0
    %870 = vmatmul.mubr.f32.gmra.mrb[0].mxu0 %v797
    %v871 = vpop.f32.mrb[0].mxu0
    %v872 = vadd.f32 0.0, %v871
    %v873 = vpop.f32.mrb[0].mxu0
    %874 = vmatprep.mubr.f32.mxu0 0.0
    %875 = vmatmul.mubr.f32.gmra.mrb[0].mxu0 %v799
    %v876 = vpop.f32.mrb[0].mxu0
    %v877 = vadd.f32 0.0, %v876
    %v878 = vpop.f32.mrb[0].mxu0
    %879 = vdwg.mxu0
    %880 = vrot.lane.b32.xlu0 %v227, 96
    %v881 = vpop.permute.xlu0 %880
    %882 = vrot.lane.b32.xlu0 %v232, 96
    %v883 = vpop.permute.xlu0 %882
    %v884 = vsel %vm361, %v227, 0
    %v886 = vsel %vm361, %v232, 0
    %v888 = vsel %vm361, %v881, 0
    %v890 = vsel %vm361, %v883, 0
    %892 = vmatprep.subr.mxu0 0.0
    %893 = vmatpush1.xpose.msra.mxu0 %v888
    %894 = vmatprep.subr.mxu0 0.0
    %895 = vmatpush1.xpose.msra.mxu0 %v890
    %896 = vmatprep.subr.mxu0 0.0
    %897 = vmatpush1.xpose.msra.mxu0 0.0
    %898 = vmatprep.subr.mxu0 0.0
    %899 = vmatpush1.xpose.msra.mxu0 0.0
    %900 = vmatprep.subr.mxu0 0.0
    %901 = vmatpush1.xpose.msra.mxu0 0.0
    %902 = vmatprep.subr.mxu0 0.0
    %903 = vmatpush1.xpose.msra.mxu0 0.0
    %904 = vmatprep.subr.mxu0 0.0
    %905 = vmatpush1.xpose.msra.mxu0 0.0
    %906 = vmatprep.subr.mxu0 0.0
    %907 = vmatpush1.xpose.msra.mxu0 0.0
    %908 = vmatprep.subr.mxu0 0.0
    %909 = vmatpush1.xpose.msra.mxu0 0.0
    %910 = vmatprep.subr.mxu0 0.0
    %911 = vmatpush1.xpose.msra.mxu0 0.0
    %912 = vmatprep.subr.mxu0 0.0
    %913 = vmatpush1.xpose.msra.mxu0 0.0
    %914 = vmatprep.subr.mxu0 0.0
    %915 = vmatpush1.xpose.msra.mxu0 0.0
    %916 = vmatprep.subr.mxu0 0.0
    %917 = vmatpush1.xpose.msra.mxu0 0.0
    %918 = vmatprep.subr.mxu0 0.0
    %919 = vmatpush1.xpose.msra.mxu0 0.0
    %920 = vmatprep.subr.mxu0 0.0
    %921 = vmatpush1.xpose.msra.mxu0 0.0
    %922 = vmatprep.subr.mxu0 0.0
    %923 = vmatpush1.xpose.msra.mxu0 0.0
    %924 = vmatprep.subr.mxu0 0.0
    %925 = vmatpush1.xpose.msra.mxu0 0.0
    %926 = vmatprep.subr.mxu0 0.0
    %927 = vmatpush1.xpose.msra.mxu0 0.0
    %928 = vmatprep.subr.mxu0 0.0
    %929 = vmatpush1.xpose.msra.mxu0 0.0
    %930 = vmatprep.subr.mxu0 0.0
    %931 = vmatpush1.xpose.msra.mxu0 0.0
    %932 = vmatprep.subr.mxu0 0.0
    %933 = vmatpush1.xpose.msra.mxu0 0.0
    %934 = vmatprep.subr.mxu0 0.0
    %935 = vmatpush1.xpose.msra.mxu0 0.0
    %936 = vmatprep.subr.mxu0 0.0
    %937 = vmatpush1.xpose.msra.mxu0 0.0
    %938 = vmatprep.subr.mxu0 0.0
    %939 = vmatpush1.xpose.msra.mxu0 0.0
    %940 = vmatprep.subr.mxu0 0.0
    %941 = vmatpush1.xpose.msra.mxu0 0.0
    %942 = vmatprep.subr.mxu0 0.0
    %943 = vmatpush1.xpose.msra.mxu0 0.0
    %944 = vmatprep.subr.mxu0 0.0
    %945 = vmatpush1.xpose.msra.mxu0 0.0
    %946 = vmatprep.subr.mxu0 0.0
    %947 = vmatpush1.xpose.msra.mxu0 0.0
    %948 = vmatprep.subr.mxu0 0.0
    %949 = vmatpush1.xpose.msra.mxu0 0.0
    %950 = vmatprep.subr.mxu0 0.0
    %951 = vmatpush1.xpose.msra.mxu0 0.0
    %952 = vmatprep.subr.mxu0 0.0
    %953 = vmatpush1.xpose.msra.mxu0 0.0
    %954 = vmatprep.subr.mxu0 0.0
    %955 = vmatpush1.xpose.msra.mxu0 0.0
    %956 = vmatprep.mubr.f32.mxu0 0.0
    %957 = vmatmul.mubr.f32.gmra.mrb[0].mxu0 %v884
    %v958 = vpop.f32.mrb[0].mxu0
    %v959 = vadd.f32 0.0, %v958
    %v960 = vpop.f32.mrb[0].mxu0
    %961 = vmatprep.mubr.f32.mxu0 0.0
    %962 = vmatmul.mubr.f32.gmra.mrb[0].mxu0 %v886
    %v963 = vpop.f32.mrb[0].mxu0
    %v964 = vadd.f32 0.0, %v963
    %v965 = vpop.f32.mrb[0].mxu0
    %966 = vdwg.mxu0
    %967 = vrot.lane.b32.xlu0 %v237, 96
    %v968 = vpop.permute.xlu0 %967
    %969 = vrot.lane.b32.xlu0 %v242, 96
    %v970 = vpop.permute.xlu0 %969
    %v971 = vsel %vm361, %v237, 0
    %v973 = vsel %vm361, %v242, 0
    %v975 = vsel %vm361, %v968, 0
    %v977 = vsel %vm361, %v970, 0
    %979 = vmatprep.subr.mxu0 0.0
    %980 = vmatpush1.xpose.msra.mxu0 %v975
    %981 = vmatprep.subr.mxu0 0.0
    %982 = vmatpush1.xpose.msra.mxu0 %v977
    %983 = vmatprep.subr.mxu0 0.0
    %984 = vmatpush1.xpose.msra.mxu0 0.0
    %985 = vmatprep.subr.mxu0 0.0
    %986 = vmatpush1.xpose.msra.mxu0 0.0
    %987 = vmatprep.subr.mxu0 0.0
    %988 = vmatpush1.xpose.msra.mxu0 0.0
    %989 = vmatprep.subr.mxu0 0.0
    %990 = vmatpush1.xpose.msra.mxu0 0.0
    %991 = vmatprep.subr.mxu0 0.0
    %992 = vmatpush1.xpose.msra.mxu0 0.0
    %993 = vmatprep.subr.mxu0 0.0
    %994 = vmatpush1.xpose.msra.mxu0 0.0
    %995 = vmatprep.subr.mxu0 0.0
    %996 = vmatpush1.xpose.msra.mxu0 0.0
    %997 = vmatprep.subr.mxu0 0.0
    %998 = vmatpush1.xpose.msra.mxu0 0.0
    %999 = vmatprep.subr.mxu0 0.0
    %1000 = vmatpush1.xpose.msra.mxu0 0.0
    %1001 = vmatprep.subr.mxu0 0.0
    %1002 = vmatpush1.xpose.msra.mxu0 0.0
    %1003 = vmatprep.subr.mxu0 0.0
    %1004 = vmatpush1.xpose.msra.mxu0 0.0
    %1005 = vmatprep.subr.mxu0 0.0
    %1006 = vmatpush1.xpose.msra.mxu0 0.0
    %1007 = vmatprep.subr.mxu0 0.0
    %1008 = vmatpush1.xpose.msra.mxu0 0.0
    %1009 = vmatprep.subr.mxu0 0.0
    %1010 = vmatpush1.xpose.msra.mxu0 0.0
    %1011 = vmatprep.subr.mxu0 0.0
    %1012 = vmatpush1.xpose.msra.mxu0 0.0
    %1013 = vmatprep.subr.mxu0 0.0
    %1014 = vmatpush1.xpose.msra.mxu0 0.0
    %1015 = vmatprep.subr.mxu0 0.0
    %1016 = vmatpush1.xpose.msra.mxu0 0.0
    %1017 = vmatprep.subr.mxu0 0.0
    %1018 = vmatpush1.xpose.msra.mxu0 0.0
    %1019 = vmatprep.subr.mxu0 0.0
    %1020 = vmatpush1.xpose.msra.mxu0 0.0
    %1021 = vmatprep.subr.mxu0 0.0
    %1022 = vmatpush1.xpose.msra.mxu0 0.0
    %1023 = vmatprep.subr.mxu0 0.0
    %1024 = vmatpush1.xpose.msra.mxu0 0.0
    %1025 = vmatprep.subr.mxu0 0.0
    %1026 = vmatpush1.xpose.msra.mxu0 0.0
    %1027 = vmatprep.subr.mxu0 0.0
    %1028 = vmatpush1.xpose.msra.mxu0 0.0
    %1029 = vmatprep.subr.mxu0 0.0
    %1030 = vmatpush1.xpose.msra.mxu0 0.0
    %1031 = vmatprep.subr.mxu0 0.0
    %1032 = vmatpush1.xpose.msra.mxu0 0.0
    %1033 = vmatprep.subr.mxu0 0.0
    %1034 = vmatpush1.xpose.msra.mxu0 0.0
    %1035 = vmatprep.subr.mxu0 0.0
    %1036 = vmatpush1.xpose.msra.mxu0 0.0
    %1037 = vmatprep.subr.mxu0 0.0
    %1038 = vmatpush1.xpose.msra.mxu0 0.0
    %1039 = vmatprep.subr.mxu0 0.0
    %1040 = vmatpush1.xpose.msra.mxu0 0.0
    %1041 = vmatprep.subr.mxu0 0.0
    %1042 = vmatpush1.xpose.msra.mxu0 0.0
    %1043 = vmatprep.mubr.f32.mxu0 0.0
    %1044 = vmatmul.mubr.f32.gmra.mrb[0].mxu0 %v971
    %v1045 = vpop.f32.mrb[0].mxu0
    %v1046 = vadd.f32 0.0, %v1045
    %v1047 = vpop.f32.mrb[0].mxu0
    %1048 = vmatprep.mubr.f32.mxu0 0.0
    %1049 = vmatmul.mubr.f32.gmra.mrb[0].mxu0 %v973
    %v1050 = vpop.f32.mrb[0].mxu0
    %v1051 = vadd.f32 0.0, %v1050
    %v1052 = vpop.f32.mrb[0].mxu0
    %1053 = vdwg.mxu0
    %1054 = vrot.lane.b32.xlu0 %v262, 96
    %v1055 = vpop.permute.xlu0 %1054
    %1056 = vrot.lane.b32.xlu0 %v264, 96
    %v1057 = vpop.permute.xlu0 %1056
    %v1058 = vsel %vm361, %v262, 0
    %v1060 = vsel %vm361, %v264, 0
    %v1062 = vsel %vm361, %v1055, 0
    %v1064 = vsel %vm361, %v1057, 0
    %1066 = vmatprep.subr.mxu0 0.0
    %1067 = vmatpush1.xpose.msra.mxu0 %v1062
    %1068 = vmatprep.subr.mxu0 0.0
    %1069 = vmatpush1.xpose.msra.mxu0 %v1064
    %1070 = vmatprep.subr.mxu0 0.0
    %1071 = vmatpush1.xpose.msra.mxu0 0.0
    %1072 = vmatprep.subr.mxu0 0.0
    %1073 = vmatpush1.xpose.msra.mxu0 0.0
    %1074 = vmatprep.subr.mxu0 0.0
    %1075 = vmatpush1.xpose.msra.mxu0 0.0
    %1076 = vmatprep.subr.mxu0 0.0
    %1077 = vmatpush1.xpose.msra.mxu0 0.0
    %1078 = vmatprep.subr.mxu0 0.0
    %1079 = vmatpush1.xpose.msra.mxu0 0.0
    %1080 = vmatprep.subr.mxu0 0.0
    %1081 = vmatpush1.xpose.msra.mxu0 0.0
    %1082 = vmatprep.subr.mxu0 0.0
    %1083 = vmatpush1.xpose.msra.mxu0 0.0
    %1084 = vmatprep.subr.mxu0 0.0
    %1085 = vmatpush1.xpose.msra.mxu0 0.0
    %1086 = vmatprep.subr.mxu0 0.0
    %1087 = vmatpush1.xpose.msra.mxu0 0.0
    %1088 = vmatprep.subr.mxu0 0.0
    %1089 = vmatpush1.xpose.msra.mxu0 0.0
    %1090 = vmatprep.subr.mxu0 0.0
    %1091 = vmatpush1.xpose.msra.mxu0 0.0
    %1092 = vmatprep.subr.mxu0 0.0
    %1093 = vmatpush1.xpose.msra.mxu0 0.0
    %1094 = vmatprep.subr.mxu0 0.0
    %1095 = vmatpush1.xpose.msra.mxu0 0.0
    %1096 = vmatprep.subr.mxu0 0.0
    %1097 = vmatpush1.xpose.msra.mxu0 0.0
    %1098 = vmatprep.subr.mxu0 0.0
    %1099 = vmatpush1.xpose.msra.mxu0 0.0
    %1100 = vmatprep.subr.mxu0 0.0
    %1101 = vmatpush1.xpose.msra.mxu0 0.0
    %1102 = vmatprep.subr.mxu0 0.0
    %1103 = vmatpush1.xpose.msra.mxu0 0.0
    %1104 = vmatprep.subr.mxu0 0.0
    %1105 = vmatpush1.xpose.msra.mxu0 0.0
    %1106 = vmatprep.subr.mxu0 0.0
    %1107 = vmatpush1.xpose.msra.mxu0 0.0
    %1108 = vmatprep.subr.mxu0 0.0
    %1109 = vmatpush1.xpose.msra.mxu0 0.0
    %1110 = vmatprep.subr.mxu0 0.0
    %1111 = vmatpush1.xpose.msra.mxu0 0.0
    %1112 = vmatprep.subr.mxu0 0.0
    %1113 = vmatpush1.xpose.msra.mxu0 0.0
    %1114 = vmatprep.subr.mxu0 0.0
    %1115 = vmatpush1.xpose.msra.mxu0 0.0
    %1116 = vmatprep.subr.mxu0 0.0
    %1117 = vmatpush1.xpose.msra.mxu0 0.0
    %1118 = vmatprep.subr.mxu0 0.0
    %1119 = vmatpush1.xpose.msra.mxu0 0.0
    %1120 = vmatprep.subr.mxu0 0.0
    %1121 = vmatpush1.xpose.msra.mxu0 0.0
    %1122 = vmatprep.subr.mxu0 0.0
    %1123 = vmatpush1.xpose.msra.mxu0 0.0
    %1124 = vmatprep.subr.mxu0 0.0
    %1125 = vmatpush1.xpose.msra.mxu0 0.0
    %1126 = vmatprep.subr.mxu0 0.0
    %1127 = vmatpush1.xpose.msra.mxu0 0.0
    %1128 = vmatprep.subr.mxu0 0.0
    %1129 = vmatpush1.xpose.msra.mxu0 0.0
    %1130 = vmatprep.mubr.f32.mxu0 0.0
    %1131 = vmatmul.mubr.f32.gmra.mrb[0].mxu0 %v1058
    %v1132 = vpop.f32.mrb[0].mxu0
    %v1133 = vadd.f32 0.0, %v1132
    %v1134 = vpop.f32.mrb[0].mxu0
    %1135 = vmatprep.mubr.f32.mxu0 0.0
    %1136 = vmatmul.mubr.f32.gmra.mrb[0].mxu0 %v1060
    %v1137 = vpop.f32.mrb[0].mxu0
    %v1138 = vadd.f32 0.0, %v1137
    %v1139 = vpop.f32.mrb[0].mxu0
    %1140 = vdwg.mxu0
    %1141 = vrot.lane.b32.xlu0 %v266, 96
    %v1142 = vpop.permute.xlu0 %1141
    %1143 = vrot.lane.b32.xlu0 %v268, 96
    %v1144 = vpop.permute.xlu0 %1143
    %v1145 = vsel %vm361, %v266, 0
    %v1147 = vsel %vm361, %v268, 0
    %v1149 = vsel %vm361, %v1142, 0
    %v1151 = vsel %vm361, %v1144, 0
    %1153 = vmatprep.subr.mxu0 0.0
    %1154 = vmatpush1.xpose.msra.mxu0 %v1149
    %1155 = vmatprep.subr.mxu0 0.0
    %1156 = vmatpush1.xpose.msra.mxu0 %v1151
    %1157 = vmatprep.subr.mxu0 0.0
    %1158 = vmatpush1.xpose.msra.mxu0 0.0
    %1159 = vmatprep.subr.mxu0 0.0
    %1160 = vmatpush1.xpose.msra.mxu0 0.0
    %1161 = vmatprep.subr.mxu0 0.0
    %1162 = vmatpush1.xpose.msra.mxu0 0.0
    %1163 = vmatprep.subr.mxu0 0.0
    %1164 = vmatpush1.xpose.msra.mxu0 0.0
    %1165 = vmatprep.subr.mxu0 0.0
    %1166 = vmatpush1.xpose.msra.mxu0 0.0
    %1167 = vmatprep.subr.mxu0 0.0
    %1168 = vmatpush1.xpose.msra.mxu0 0.0
    %1169 = vmatprep.subr.mxu0 0.0
    %1170 = vmatpush1.xpose.msra.mxu0 0.0
    %1171 = vmatprep.subr.mxu0 0.0
    %1172 = vmatpush1.xpose.msra.mxu0 0.0
    %1173 = vmatprep.subr.mxu0 0.0
    %1174 = vmatpush1.xpose.msra.mxu0 0.0
    %1175 = vmatprep.subr.mxu0 0.0
    %1176 = vmatpush1.xpose.msra.mxu0 0.0
    %1177 = vmatprep.subr.mxu0 0.0
    %1178 = vmatpush1.xpose.msra.mxu0 0.0
    %1179 = vmatprep.subr.mxu0 0.0
    %1180 = vmatpush1.xpose.msra.mxu0 0.0
    %1181 = vmatprep.subr.mxu0 0.0
    %1182 = vmatpush1.xpose.msra.mxu0 0.0
    %1183 = vmatprep.subr.mxu0 0.0
    %1184 = vmatpush1.xpose.msra.mxu0 0.0
    %1185 = vmatprep.subr.mxu0 0.0
    %1186 = vmatpush1.xpose.msra.mxu0 0.0
    %1187 = vmatprep.subr.mxu0 0.0
    %1188 = vmatpush1.xpose.msra.mxu0 0.0
    %1189 = vmatprep.subr.mxu0 0.0
    %1190 = vmatpush1.xpose.msra.mxu0 0.0
    %1191 = vmatprep.subr.mxu0 0.0
    %1192 = vmatpush1.xpose.msra.mxu0 0.0
    %1193 = vmatprep.subr.mxu0 0.0
    %1194 = vmatpush1.xpose.msra.mxu0 0.0
    %1195 = vmatprep.subr.mxu0 0.0
    %1196 = vmatpush1.xpose.msra.mxu0 0.0
    %1197 = vmatprep.subr.mxu0 0.0
    %1198 = vmatpush1.xpose.msra.mxu0 0.0
    %1199 = vmatprep.subr.mxu0 0.0
    %1200 = vmatpush1.xpose.msra.mxu0 0.0
    %1201 = vmatprep.subr.mxu0 0.0
    %1202 = vmatpush1.xpose.msra.mxu0 0.0
    %1203 = vmatprep.subr.mxu0 0.0
    %1204 = vmatpush1.xpose.msra.mxu0 0.0
    %1205 = vmatprep.subr.mxu0 0.0
    %1206 = vmatpush1.xpose.msra.mxu0 0.0
    %1207 = vmatprep.subr.mxu0 0.0
    %1208 = vmatpush1.xpose.msra.mxu0 0.0
    %1209 = vmatprep.subr.mxu0 0.0
    %1210 = vmatpush1.xpose.msra.mxu0 0.0
    %1211 = vmatprep.subr.mxu0 0.0
    %1212 = vmatpush1.xpose.msra.mxu0 0.0
    %1213 = vmatprep.subr.mxu0 0.0
    %1214 = vmatpush1.xpose.msra.mxu0 0.0
    %1215 = vmatprep.subr.mxu0 0.0
    %1216 = vmatpush1.xpose.msra.mxu0 0.0
    %1217 = vmatprep.mubr.f32.mxu0 0.0
    %1218 = vmatmul.mubr.f32.gmra.mrb[0].mxu0 %v1145
    %v1219 = vpop.f32.mrb[0].mxu0
    %v1220 = vadd.f32 0.0, %v1219
    %v1221 = vpop.f32.mrb[0].mxu0
    %1222 = vmatprep.mubr.f32.mxu0 0.0
    %1223 = vmatmul.mubr.f32.gmra.mrb[0].mxu0 %v1147
    %v1224 = vpop.f32.mrb[0].mxu0
    %v1225 = vadd.f32 0.0, %v1224
    %v1226 = vpop.f32.mrb[0].mxu0
    %1227 = vdwg.mxu0
    %1228 = vrot.lane.b32.xlu0 %v270, 96
    %v1229 = vpop.permute.xlu0 %1228
    %1230 = vrot.lane.b32.xlu0 %v272, 96
    %v1231 = vpop.permute.xlu0 %1230
    %v1232 = vsel %vm361, %v270, 0
    %v1234 = vsel %vm361, %v272, 0
    %v1236 = vsel %vm361, %v1229, 0
    %v1238 = vsel %vm361, %v1231, 0
    %1240 = vmatprep.subr.mxu0 0.0
    %1241 = vmatpush1.xpose.msra.mxu0 %v1236
    %1242 = vmatprep.subr.mxu0 0.0
    %1243 = vmatpush1.xpose.msra.mxu0 %v1238
    %1244 = vmatprep.subr.mxu0 0.0
    %1245 = vmatpush1.xpose.msra.mxu0 0.0
    %1246 = vmatprep.subr.mxu0 0.0
    %1247 = vmatpush1.xpose.msra.mxu0 0.0
    %1248 = vmatprep.subr.mxu0 0.0
    %1249 = vmatpush1.xpose.msra.mxu0 0.0
    %1250 = vmatprep.subr.mxu0 0.0
    %1251 = vmatpush1.xpose.msra.mxu0 0.0
    %1252 = vmatprep.subr.mxu0 0.0
    %1253 = vmatpush1.xpose.msra.mxu0 0.0
    %1254 = vmatprep.subr.mxu0 0.0
    %1255 = vmatpush1.xpose.msra.mxu0 0.0
    %1256 = vmatprep.subr.mxu0 0.0
    %1257 = vmatpush1.xpose.msra.mxu0 0.0
    %1258 = vmatprep.subr.mxu0 0.0
    %1259 = vmatpush1.xpose.msra.mxu0 0.0
    %1260 = vmatprep.subr.mxu0 0.0
    %1261 = vmatpush1.xpose.msra.mxu0 0.0
    %1262 = vmatprep.subr.mxu0 0.0
    %1263 = vmatpush1.xpose.msra.mxu0 0.0
    %1264 = vmatprep.subr.mxu0 0.0
    %1265 = vmatpush1.xpose.msra.mxu0 0.0
    %1266 = vmatprep.subr.mxu0 0.0
    %1267 = vmatpush1.xpose.msra.mxu0 0.0
    %1268 = vmatprep.subr.mxu0 0.0
    %1269 = vmatpush1.xpose.msra.mxu0 0.0
    %1270 = vmatprep.subr.mxu0 0.0
    %1271 = vmatpush1.xpose.msra.mxu0 0.0
    %1272 = vmatprep.subr.mxu0 0.0
    %1273 = vmatpush1.xpose.msra.mxu0 0.0
    %1274 = vmatprep.subr.mxu0 0.0
    %1275 = vmatpush1.xpose.msra.mxu0 0.0
    %1276 = vmatprep.subr.mxu0 0.0
    %1277 = vmatpush1.xpose.msra.mxu0 0.0
    %1278 = vmatprep.subr.mxu0 0.0
    %1279 = vmatpush1.xpose.msra.mxu0 0.0
    %1280 = vmatprep.subr.mxu0 0.0
    %1281 = vmatpush1.xpose.msra.mxu0 0.0
    %1282 = vmatprep.subr.mxu0 0.0
    %1283 = vmatpush1.xpose.msra.mxu0 0.0
    %1284 = vmatprep.subr.mxu0 0.0
    %1285 = vmatpush1.xpose.msra.mxu0 0.0
    %1286 = vmatprep.subr.mxu0 0.0
    %1287 = vmatpush1.xpose.msra.mxu0 0.0
    %1288 = vmatprep.subr.mxu0 0.0
    %1289 = vmatpush1.xpose.msra.mxu0 0.0
    %1290 = vmatprep.subr.mxu0 0.0
    %1291 = vmatpush1.xpose.msra.mxu0 0.0
    %1292 = vmatprep.subr.mxu0 0.0
    %1293 = vmatpush1.xpose.msra.mxu0 0.0
    %1294 = vmatprep.subr.mxu0 0.0
    %1295 = vmatpush1.xpose.msra.mxu0 0.0
    %1296 = vmatprep.subr.mxu0 0.0
    %1297 = vmatpush1.xpose.msra.mxu0 0.0
    %1298 = vmatprep.subr.mxu0 0.0
    %1299 = vmatpush1.xpose.msra.mxu0 0.0
    %1300 = vmatprep.subr.mxu0 0.0
    %1301 = vmatpush1.xpose.msra.mxu0 0.0
    %1302 = vmatprep.subr.mxu0 0.0
    %1303 = vmatpush1.xpose.msra.mxu0 0.0
    %1304 = vmatprep.mubr.f32.mxu0 0.0
    %1305 = vmatmul.mubr.f32.gmra.mrb[0].mxu0 %v1232
    %v1306 = vpop.f32.mrb[0].mxu0
    %v1307 = vadd.f32 0.0, %v1306
    %v1308 = vpop.f32.mrb[0].mxu0
    %1309 = vmatprep.mubr.f32.mxu0 0.0
    %1310 = vmatmul.mubr.f32.gmra.mrb[0].mxu0 %v1234
    %v1311 = vpop.f32.mrb[0].mxu0
    %v1312 = vadd.f32 0.0, %v1311
    %v1313 = vpop.f32.mrb[0].mxu0
    %1314 = vdwg.mxu0
    %1315 = vrot.lane.b32.xlu0 %v274, 96
    %v1316 = vpop.permute.xlu0 %1315
    %1317 = vrot.lane.b32.xlu0 %v276, 96
    %v1318 = vpop.permute.xlu0 %1317
    %v1319 = vsel %vm361, %v274, 0
    %v1321 = vsel %vm361, %v276, 0
    %v1323 = vsel %vm361, %v1316, 0
    %v1325 = vsel %vm361, %v1318, 0
    %1327 = vmatprep.subr.mxu0 0.0
    %1328 = vmatpush1.xpose.msra.mxu0 %v1323
    %1329 = vmatprep.subr.mxu0 0.0
    %1330 = vmatpush1.xpose.msra.mxu0 %v1325
    %1331 = vmatprep.subr.mxu0 0.0
    %1332 = vmatpush1.xpose.msra.mxu0 0.0
    %1333 = vmatprep.subr.mxu0 0.0
    %1334 = vmatpush1.xpose.msra.mxu0 0.0
    %1335 = vmatprep.subr.mxu0 0.0
    %1336 = vmatpush1.xpose.msra.mxu0 0.0
    %1337 = vmatprep.subr.mxu0 0.0
    %1338 = vmatpush1.xpose.msra.mxu0 0.0
    %1339 = vmatprep.subr.mxu0 0.0
    %1340 = vmatpush1.xpose.msra.mxu0 0.0
    %1341 = vmatprep.subr.mxu0 0.0
    %1342 = vmatpush1.xpose.msra.mxu0 0.0
    %1343 = vmatprep.subr.mxu0 0.0
    %1344 = vmatpush1.xpose.msra.mxu0 0.0
    %1345 = vmatprep.subr.mxu0 0.0
    %1346 = vmatpush1.xpose.msra.mxu0 0.0
    %1347 = vmatprep.subr.mxu0 0.0
    %1348 = vmatpush1.xpose.msra.mxu0 0.0
    %1349 = vmatprep.subr.mxu0 0.0
    %1350 = vmatpush1.xpose.msra.mxu0 0.0
    %1351 = vmatprep.subr.mxu0 0.0
    %1352 = vmatpush1.xpose.msra.mxu0 0.0
    %1353 = vmatprep.subr.mxu0 0.0
    %1354 = vmatpush1.xpose.msra.mxu0 0.0
    %1355 = vmatprep.subr.mxu0 0.0
    %1356 = vmatpush1.xpose.msra.mxu0 0.0
    %1357 = vmatprep.subr.mxu0 0.0
    %1358 = vmatpush1.xpose.msra.mxu0 0.0
    %1359 = vmatprep.subr.mxu0 0.0
    %1360 = vmatpush1.xpose.msra.mxu0 0.0
    %1361 = vmatprep.subr.mxu0 0.0
    %1362 = vmatpush1.xpose.msra.mxu0 0.0
    %1363 = vmatprep.subr.mxu0 0.0
    %1364 = vmatpush1.xpose.msra.mxu0 0.0
    %1365 = vmatprep.subr.mxu0 0.0
    %1366 = vmatpush1.xpose.msra.mxu0 0.0
    %1367 = vmatprep.subr.mxu0 0.0
    %1368 = vmatpush1.xpose.msra.mxu0 0.0
    %1369 = vmatprep.subr.mxu0 0.0
    %1370 = vmatpush1.xpose.msra.mxu0 0.0
    %1371 = vmatprep.subr.mxu0 0.0
    %1372 = vmatpush1.xpose.msra.mxu0 0.0
    %1373 = vmatprep.subr.mxu0 0.0
    %1374 = vmatpush1.xpose.msra.mxu0 0.0
    %1375 = vmatprep.subr.mxu0 0.0
    %1376 = vmatpush1.xpose.msra.mxu0 0.0
    %1377 = vmatprep.subr.mxu0 0.0
    %1378 = vmatpush1.xpose.msra.mxu0 0.0
    %1379 = vmatprep.subr.mxu0 0.0
    %1380 = vmatpush1.xpose.msra.mxu0 0.0
    %1381 = vmatprep.subr.mxu0 0.0
    %1382 = vmatpush1.xpose.msra.mxu0 0.0
    %1383 = vmatprep.subr.mxu0 0.0
    %1384 = vmatpush1.xpose.msra.mxu0 0.0
    %1385 = vmatprep.subr.mxu0 0.0
    %1386 = vmatpush1.xpose.msra.mxu0 0.0
    %1387 = vmatprep.subr.mxu0 0.0
    %1388 = vmatpush1.xpose.msra.mxu0 0.0
    %1389 = vmatprep.subr.mxu0 0.0
    %1390 = vmatpush1.xpose.msra.mxu0 0.0
    %1391 = vmatprep.mubr.f32.mxu0 0.0
    %1392 = vmatmul.mubr.f32.gmra.mrb[0].mxu0 %v1319
    %v1393 = vpop.f32.mrb[0].mxu0
    %v1394 = vadd.f32 0.0, %v1393
    %v1395 = vpop.f32.mrb[0].mxu0
    %1396 = vmatprep.mubr.f32.mxu0 0.0
    %1397 = vmatmul.mubr.f32.gmra.mrb[0].mxu0 %v1321
    %v1398 = vpop.f32.mrb[0].mxu0
    %v1399 = vadd.f32 0.0, %v1398
    %v1400 = vpop.f32.mrb[0].mxu0
    %1401 = vdwg.mxu0
    %1402 = vrot.lane.b32.xlu0 %v278, 96
    %v1403 = vpop.permute.xlu0 %1402
    %1404 = vrot.lane.b32.xlu0 %v280, 96
    %v1405 = vpop.permute.xlu0 %1404
    %v1406 = vsel %vm361, %v278, 0
    %v1408 = vsel %vm361, %v280, 0
    %v1410 = vsel %vm361, %v1403, 0
    %v1412 = vsel %vm361, %v1405, 0
    %1414 = vmatprep.subr.mxu0 0.0
    %1415 = vmatpush1.xpose.msra.mxu0 %v1410
    %1416 = vmatprep.subr.mxu0 0.0
    %1417 = vmatpush1.xpose.msra.mxu0 %v1412
    %1418 = vmatprep.subr.mxu0 0.0
    %1419 = vmatpush1.xpose.msra.mxu0 0.0
    %1420 = vmatprep.subr.mxu0 0.0
    %1421 = vmatpush1.xpose.msra.mxu0 0.0
    %1422 = vmatprep.subr.mxu0 0.0
    %1423 = vmatpush1.xpose.msra.mxu0 0.0
    %1424 = vmatprep.subr.mxu0 0.0
    %1425 = vmatpush1.xpose.msra.mxu0 0.0
    %1426 = vmatprep.subr.mxu0 0.0
    %1427 = vmatpush1.xpose.msra.mxu0 0.0
    %1428 = vmatprep.subr.mxu0 0.0
    %1429 = vmatpush1.xpose.msra.mxu0 0.0
    %1430 = vmatprep.subr.mxu0 0.0
    %1431 = vmatpush1.xpose.msra.mxu0 0.0
    %1432 = vmatprep.subr.mxu0 0.0
    %1433 = vmatpush1.xpose.msra.mxu0 0.0
    %1434 = vmatprep.subr.mxu0 0.0
    %1435 = vmatpush1.xpose.msra.mxu0 0.0
    %1436 = vmatprep.subr.mxu0 0.0
    %1437 = vmatpush1.xpose.msra.mxu0 0.0
    %1438 = vmatprep.subr.mxu0 0.0
    %1439 = vmatpush1.xpose.msra.mxu0 0.0
    %1440 = vmatprep.subr.mxu0 0.0
    %1441 = vmatpush1.xpose.msra.mxu0 0.0
    %1442 = vmatprep.subr.mxu0 0.0
    %1443 = vmatpush1.xpose.msra.mxu0 0.0
    %1444 = vmatprep.subr.mxu0 0.0
    %1445 = vmatpush1.xpose.msra.mxu0 0.0
    %1446 = vmatprep.subr.mxu0 0.0
    %1447 = vmatpush1.xpose.msra.mxu0 0.0
    %1448 = vmatprep.subr.mxu0 0.0
    %1449 = vmatpush1.xpose.msra.mxu0 0.0
    %1450 = vmatprep.subr.mxu0 0.0
    %1451 = vmatpush1.xpose.msra.mxu0 0.0
    %1452 = vmatprep.subr.mxu0 0.0
    %1453 = vmatpush1.xpose.msra.mxu0 0.0
    %1454 = vmatprep.subr.mxu0 0.0
    %1455 = vmatpush1.xpose.msra.mxu0 0.0
    %1456 = vmatprep.subr.mxu0 0.0
    %1457 = vmatpush1.xpose.msra.mxu0 0.0
    %1458 = vmatprep.subr.mxu0 0.0
    %1459 = vmatpush1.xpose.msra.mxu0 0.0
    %1460 = vmatprep.subr.mxu0 0.0
    %1461 = vmatpush1.xpose.msra.mxu0 0.0
    %1462 = vmatprep.subr.mxu0 0.0
    %1463 = vmatpush1.xpose.msra.mxu0 0.0
    %1464 = vmatprep.subr.mxu0 0.0
    %1465 = vmatpush1.xpose.msra.mxu0 0.0
    %1466 = vmatprep.subr.mxu0 0.0
    %1467 = vmatpush1.xpose.msra.mxu0 0.0
    %1468 = vmatprep.subr.mxu0 0.0
    %1469 = vmatpush1.xpose.msra.mxu0 0.0
    %1470 = vmatprep.subr.mxu0 0.0
    %1471 = vmatpush1.xpose.msra.mxu0 0.0
    %1472 = vmatprep.subr.mxu0 0.0
    %1473 = vmatpush1.xpose.msra.mxu0 0.0
    %1474 = vmatprep.subr.mxu0 0.0
    %1475 = vmatpush1.xpose.msra.mxu0 0.0
    %1476 = vmatprep.subr.mxu0 0.0
    %1477 = vmatpush1.xpose.msra.mxu0 0.0
    %1478 = vmatprep.mubr.f32.mxu0 0.0
    %1479 = vmatmul.mubr.f32.gmra.mrb[0].mxu0 %v1406
    %v1480 = vpop.f32.mrb[0].mxu0
    %v1481 = vadd.f32 0.0, %v1480
    %v1482 = vpop.f32.mrb[0].mxu0
    %1483 = vmatprep.mubr.f32.mxu0 0.0
    %1484 = vmatmul.mubr.f32.gmra.mrb[0].mxu0 %v1408
    %v1485 = vpop.f32.mrb[0].mxu0
    %v1486 = vadd.f32 0.0, %v1485
    %v1487 = vpop.f32.mrb[0].mxu0
    %1488 = vdwg.mxu0
    %1489 = vrot.lane.b32.xlu0 %v282, 96
    %v1490 = vpop.permute.xlu0 %1489
    %1491 = vrot.lane.b32.xlu0 %v284, 96
    %v1492 = vpop.permute.xlu0 %1491
    %v1493 = vsel %vm361, %v282, 0
    %v1495 = vsel %vm361, %v284, 0
    %v1497 = vsel %vm361, %v1490, 0
    %v1499 = vsel %vm361, %v1492, 0
    %1501 = vmatprep.subr.mxu0 0.0
    %1502 = vmatpush1.xpose.msra.mxu0 %v1497
    %1503 = vmatprep.subr.mxu0 0.0
    %1504 = vmatpush1.xpose.msra.mxu0 %v1499
    %1505 = vmatprep.subr.mxu0 0.0
    %1506 = vmatpush1.xpose.msra.mxu0 0.0
    %1507 = vmatprep.subr.mxu0 0.0
    %1508 = vmatpush1.xpose.msra.mxu0 0.0
    %1509 = vmatprep.subr.mxu0 0.0
    %1510 = vmatpush1.xpose.msra.mxu0 0.0
    %1511 = vmatprep.subr.mxu0 0.0
    %1512 = vmatpush1.xpose.msra.mxu0 0.0
    %1513 = vmatprep.subr.mxu0 0.0
    %1514 = vmatpush1.xpose.msra.mxu0 0.0
    %1515 = vmatprep.subr.mxu0 0.0
    %1516 = vmatpush1.xpose.msra.mxu0 0.0
    %1517 = vmatprep.subr.mxu0 0.0
    %1518 = vmatpush1.xpose.msra.mxu0 0.0
    %1519 = vmatprep.subr.mxu0 0.0
    %1520 = vmatpush1.xpose.msra.mxu0 0.0
    %1521 = vmatprep.subr.mxu0 0.0
    %1522 = vmatpush1.xpose.msra.mxu0 0.0
    %1523 = vmatprep.subr.mxu0 0.0
    %1524 = vmatpush1.xpose.msra.mxu0 0.0
    %1525 = vmatprep.subr.mxu0 0.0
    %1526 = vmatpush1.xpose.msra.mxu0 0.0
    %1527 = vmatprep.subr.mxu0 0.0
    %1528 = vmatpush1.xpose.msra.mxu0 0.0
    %1529 = vmatprep.subr.mxu0 0.0
    %1530 = vmatpush1.xpose.msra.mxu0 0.0
    %1531 = vmatprep.subr.mxu0 0.0
    %1532 = vmatpush1.xpose.msra.mxu0 0.0
    %1533 = vmatprep.subr.mxu0 0.0
    %1534 = vmatpush1.xpose.msra.mxu0 0.0
    %1535 = vmatprep.subr.mxu0 0.0
    %1536 = vmatpush1.xpose.msra.mxu0 0.0
    %1537 = vmatprep.subr.mxu0 0.0
    %1538 = vmatpush1.xpose.msra.mxu0 0.0
    %1539 = vmatprep.subr.mxu0 0.0
    %1540 = vmatpush1.xpose.msra.mxu0 0.0
    %1541 = vmatprep.subr.mxu0 0.0
    %1542 = vmatpush1.xpose.msra.mxu0 0.0
    %1543 = vmatprep.subr.mxu0 0.0
    %1544 = vmatpush1.xpose.msra.mxu0 0.0
    %1545 = vmatprep.subr.mxu0 0.0
    %1546 = vmatpush1.xpose.msra.mxu0 0.0
    %1547 = vmatprep.subr.mxu0 0.0
    %1548 = vmatpush1.xpose.msra.mxu0 0.0
    %1549 = vmatprep.subr.mxu0 0.0
    %1550 = vmatpush1.xpose.msra.mxu0 0.0
    %1551 = vmatprep.subr.mxu0 0.0
    %1552 = vmatpush1.xpose.msra.mxu0 0.0
    %1553 = vmatprep.subr.mxu0 0.0
    %1554 = vmatpush1.xpose.msra.mxu0 0.0
    %1555 = vmatprep.subr.mxu0 0.0
    %1556 = vmatpush1.xpose.msra.mxu0 0.0
    %1557 = vmatprep.subr.mxu0 0.0
    %1558 = vmatpush1.xpose.msra.mxu0 0.0
    %1559 = vmatprep.subr.mxu0 0.0
    %1560 = vmatpush1.xpose.msra.mxu0 0.0
    %1561 = vmatprep.subr.mxu0 0.0
    %1562 = vmatpush1.xpose.msra.mxu0 0.0
    %1563 = vmatprep.subr.mxu0 0.0
    %1564 = vmatpush1.xpose.msra.mxu0 0.0
    %1565 = vmatprep.mubr.f32.mxu0 0.0
    %1566 = vmatmul.mubr.f32.gmra.mrb[0].mxu0 %v1493
    %v1567 = vpop.f32.mrb[0].mxu0
    %v1568 = vadd.f32 0.0, %v1567
    %v1569 = vpop.f32.mrb[0].mxu0
    %1570 = vmatprep.mubr.f32.mxu0 0.0
    %1571 = vmatmul.mubr.f32.gmra.mrb[0].mxu0 %v1495
    %v1572 = vpop.f32.mrb[0].mxu0
    %v1573 = vadd.f32 0.0, %v1572
    %v1574 = vpop.f32.mrb[0].mxu0
    %1575 = vdwg.mxu0
    %1576 = vrot.lane.b32.xlu0 %v286, 96
    %v1577 = vpop.permute.xlu0 %1576
    %1578 = vrot.lane.b32.xlu0 %v288, 96
    %v1579 = vpop.permute.xlu0 %1578
    %v1580 = vsel %vm361, %v286, 0
    %v1582 = vsel %vm361, %v288, 0
    %v1584 = vsel %vm361, %v1577, 0
    %v1586 = vsel %vm361, %v1579, 0
    %1588 = vmatprep.subr.mxu0 0.0
    %1589 = vmatpush1.xpose.msra.mxu0 %v1584
    %1590 = vmatprep.subr.mxu0 0.0
    %1591 = vmatpush1.xpose.msra.mxu0 %v1586
    %1592 = vmatprep.subr.mxu0 0.0
    %1593 = vmatpush1.xpose.msra.mxu0 0.0
    %1594 = vmatprep.subr.mxu0 0.0
    %1595 = vmatpush1.xpose.msra.mxu0 0.0
    %1596 = vmatprep.subr.mxu0 0.0
    %1597 = vmatpush1.xpose.msra.mxu0 0.0
    %1598 = vmatprep.subr.mxu0 0.0
    %1599 = vmatpush1.xpose.msra.mxu0 0.0
    %1600 = vmatprep.subr.mxu0 0.0
    %1601 = vmatpush1.xpose.msra.mxu0 0.0
    %1602 = vmatprep.subr.mxu0 0.0
    %1603 = vmatpush1.xpose.msra.mxu0 0.0
    %1604 = vmatprep.subr.mxu0 0.0
    %1605 = vmatpush1.xpose.msra.mxu0 0.0
    %1606 = vmatprep.subr.mxu0 0.0
    %1607 = vmatpush1.xpose.msra.mxu0 0.0
    %1608 = vmatprep.subr.mxu0 0.0
    %1609 = vmatpush1.xpose.msra.mxu0 0.0
    %1610 = vmatprep.subr.mxu0 0.0
    %1611 = vmatpush1.xpose.msra.mxu0 0.0
    %1612 = vmatprep.subr.mxu0 0.0
    %1613 = vmatpush1.xpose.msra.mxu0 0.0
    %1614 = vmatprep.subr.mxu0 0.0
    %1615 = vmatpush1.xpose.msra.mxu0 0.0
    %1616 = vmatprep.subr.mxu0 0.0
    %1617 = vmatpush1.xpose.msra.mxu0 0.0
    %1618 = vmatprep.subr.mxu0 0.0
    %1619 = vmatpush1.xpose.msra.mxu0 0.0
    %1620 = vmatprep.subr.mxu0 0.0
    %1621 = vmatpush1.xpose.msra.mxu0 0.0
    %1622 = vmatprep.subr.mxu0 0.0
    %1623 = vmatpush1.xpose.msra.mxu0 0.0
    %1624 = vmatprep.subr.mxu0 0.0
    %1625 = vmatpush1.xpose.msra.mxu0 0.0
    %1626 = vmatprep.subr.mxu0 0.0
    %1627 = vmatpush1.xpose.msra.mxu0 0.0
    %1628 = vmatprep.subr.mxu0 0.0
    %1629 = vmatpush1.xpose.msra.mxu0 0.0
    %1630 = vmatprep.subr.mxu0 0.0
    %1631 = vmatpush1.xpose.msra.mxu0 0.0
    %1632 = vmatprep.subr.mxu0 0.0
    %1633 = vmatpush1.xpose.msra.mxu0 0.0
    %1634 = vmatprep.subr.mxu0 0.0
    %1635 = vmatpush1.xpose.msra.mxu0 0.0
    %1636 = vmatprep.subr.mxu0 0.0
    %1637 = vmatpush1.xpose.msra.mxu0 0.0
    %1638 = vmatprep.subr.mxu0 0.0
    %1639 = vmatpush1.xpose.msra.mxu0 0.0
    %1640 = vmatprep.subr.mxu0 0.0
    %1641 = vmatpush1.xpose.msra.mxu0 0.0
    %1642 = vmatprep.subr.mxu0 0.0
    %1643 = vmatpush1.xpose.msra.mxu0 0.0
    %1644 = vmatprep.subr.mxu0 0.0
    %1645 = vmatpush1.xpose.msra.mxu0 0.0
    %1646 = vmatprep.subr.mxu0 0.0
    %1647 = vmatpush1.xpose.msra.mxu0 0.0
    %1648 = vmatprep.subr.mxu0 0.0
    %1649 = vmatpush1.xpose.msra.mxu0 0.0
    %1650 = vmatprep.subr.mxu0 0.0
    %1651 = vmatpush1.xpose.msra.mxu0 0.0
    %1652 = vmatprep.mubr.f32.mxu0 0.0
    %1653 = vmatmul.mubr.f32.gmra.mrb[0].mxu0 %v1580
    %v1654 = vpop.f32.mrb[0].mxu0
    %v1655 = vadd.f32 0.0, %v1654
    %v1656 = vpop.f32.mrb[0].mxu0
    %1657 = vmatprep.mubr.f32.mxu0 0.0
    %1658 = vmatmul.mubr.f32.gmra.mrb[0].mxu0 %v1582
    %v1659 = vpop.f32.mrb[0].mxu0
    %v1660 = vadd.f32 0.0, %v1659
    %v1661 = vpop.f32.mrb[0].mxu0
    %1662 = vdwg.mxu0
    %1663 = vrot.lane.b32.xlu0 %v290, 96
    %v1664 = vpop.permute.xlu0 %1663
    %1665 = vrot.lane.b32.xlu0 %v292, 96
    %v1666 = vpop.permute.xlu0 %1665
    %v1667 = vsel %vm361, %v290, 0
    %v1669 = vsel %vm361, %v292, 0
    %v1671 = vsel %vm361, %v1664, 0
    %v1673 = vsel %vm361, %v1666, 0
    %1675 = vmatprep.subr.mxu0 0.0
    %1676 = vmatpush1.xpose.msra.mxu0 %v1671
    %1677 = vmatprep.subr.mxu0 0.0
    %1678 = vmatpush1.xpose.msra.mxu0 %v1673
    %1679 = vmatprep.subr.mxu0 0.0
    %1680 = vmatpush1.xpose.msra.mxu0 0.0
    %1681 = vmatprep.subr.mxu0 0.0
    %1682 = vmatpush1.xpose.msra.mxu0 0.0
    %1683 = vmatprep.subr.mxu0 0.0
    %1684 = vmatpush1.xpose.msra.mxu0 0.0
    %1685 = vmatprep.subr.mxu0 0.0
    %1686 = vmatpush1.xpose.msra.mxu0 0.0
    %1687 = vmatprep.subr.mxu0 0.0
    %1688 = vmatpush1.xpose.msra.mxu0 0.0
    %1689 = vmatprep.subr.mxu0 0.0
    %1690 = vmatpush1.xpose.msra.mxu0 0.0
    %1691 = vmatprep.subr.mxu0 0.0
    %1692 = vmatpush1.xpose.msra.mxu0 0.0
    %1693 = vmatprep.subr.mxu0 0.0
    %1694 = vmatpush1.xpose.msra.mxu0 0.0
    %1695 = vmatprep.subr.mxu0 0.0
    %1696 = vmatpush1.xpose.msra.mxu0 0.0
    %1697 = vmatprep.subr.mxu0 0.0
    %1698 = vmatpush1.xpose.msra.mxu0 0.0
    %1699 = vmatprep.subr.mxu0 0.0
    %1700 = vmatpush1.xpose.msra.mxu0 0.0
    %1701 = vmatprep.subr.mxu0 0.0
    %1702 = vmatpush1.xpose.msra.mxu0 0.0
    %1703 = vmatprep.subr.mxu0 0.0
    %1704 = vmatpush1.xpose.msra.mxu0 0.0
    %1705 = vmatprep.subr.mxu0 0.0
    %1706 = vmatpush1.xpose.msra.mxu0 0.0
    %1707 = vmatprep.subr.mxu0 0.0
    %1708 = vmatpush1.xpose.msra.mxu0 0.0
    %1709 = vmatprep.subr.mxu0 0.0
    %1710 = vmatpush1.xpose.msra.mxu0 0.0
    %1711 = vmatprep.subr.mxu0 0.0
    %1712 = vmatpush1.xpose.msra.mxu0 0.0
    %1713 = vmatprep.subr.mxu0 0.0
    %1714 = vmatpush1.xpose.msra.mxu0 0.0
    %1715 = vmatprep.subr.mxu0 0.0
    %1716 = vmatpush1.xpose.msra.mxu0 0.0
    %1717 = vmatprep.subr.mxu0 0.0
    %1718 = vmatpush1.xpose.msra.mxu0 0.0
    %1719 = vmatprep.subr.mxu0 0.0
    %1720 = vmatpush1.xpose.msra.mxu0 0.0
    %1721 = vmatprep.subr.mxu0 0.0
    %1722 = vmatpush1.xpose.msra.mxu0 0.0
    %1723 = vmatprep.subr.mxu0 0.0
    %1724 = vmatpush1.xpose.msra.mxu0 0.0
    %1725 = vmatprep.subr.mxu0 0.0
    %1726 = vmatpush1.xpose.msra.mxu0 0.0
    %1727 = vmatprep.subr.mxu0 0.0
    %1728 = vmatpush1.xpose.msra.mxu0 0.0
    %1729 = vmatprep.subr.mxu0 0.0
    %1730 = vmatpush1.xpose.msra.mxu0 0.0
    %1731 = vmatprep.subr.mxu0 0.0
    %1732 = vmatpush1.xpose.msra.mxu0 0.0
    %1733 = vmatprep.subr.mxu0 0.0
    %1734 = vmatpush1.xpose.msra.mxu0 0.0
    %1735 = vmatprep.subr.mxu0 0.0
    %1736 = vmatpush1.xpose.msra.mxu0 0.0
    %1737 = vmatprep.subr.mxu0 0.0
    %1738 = vmatpush1.xpose.msra.mxu0 0.0
    %1739 = vmatprep.mubr.f32.mxu0 0.0
    %1740 = vmatmul.mubr.f32.gmra.mrb[0].mxu0 %v1667
    %v1741 = vpop.f32.mrb[0].mxu0
    %v1742 = vadd.f32 0.0, %v1741
    %v1743 = vpop.f32.mrb[0].mxu0
    %1744 = vmatprep.mubr.f32.mxu0 0.0
    %1745 = vmatmul.mubr.f32.gmra.mrb[0].mxu0 %v1669
    %v1746 = vpop.f32.mrb[0].mxu0
    %v1747 = vadd.f32 0.0, %v1746
    %v1748 = vpop.f32.mrb[0].mxu0
    %1749 = vdwg.mxu0
    %1750 = vrot.lane.b32.xlu0 %v294, 96
    %v1751 = vpop.permute.xlu0 %1750
    %1752 = vrot.lane.b32.xlu0 %v296, 96
    %v1753 = vpop.permute.xlu0 %1752
    %v1754 = vsel %vm361, %v294, 0
    %v1756 = vsel %vm361, %v296, 0
    %v1758 = vsel %vm361, %v1751, 0
    %v1760 = vsel %vm361, %v1753, 0
    %1762 = vmatprep.subr.mxu0 0.0
    %1763 = vmatpush1.xpose.msra.mxu0 %v1758
    %1764 = vmatprep.subr.mxu0 0.0
    %1765 = vmatpush1.xpose.msra.mxu0 %v1760
    %1766 = vmatprep.subr.mxu0 0.0
    %1767 = vmatpush1.xpose.msra.mxu0 0.0
    %1768 = vmatprep.subr.mxu0 0.0
    %1769 = vmatpush1.xpose.msra.mxu0 0.0
    %1770 = vmatprep.subr.mxu0 0.0
    %1771 = vmatpush1.xpose.msra.mxu0 0.0
    %1772 = vmatprep.subr.mxu0 0.0
    %1773 = vmatpush1.xpose.msra.mxu0 0.0
    %1774 = vmatprep.subr.mxu0 0.0
    %1775 = vmatpush1.xpose.msra.mxu0 0.0
    %1776 = vmatprep.subr.mxu0 0.0
    %1777 = vmatpush1.xpose.msra.mxu0 0.0
    %1778 = vmatprep.subr.mxu0 0.0
    %1779 = vmatpush1.xpose.msra.mxu0 0.0
    %1780 = vmatprep.subr.mxu0 0.0
    %1781 = vmatpush1.xpose.msra.mxu0 0.0
    %1782 = vmatprep.subr.mxu0 0.0
    %1783 = vmatpush1.xpose.msra.mxu0 0.0
    %1784 = vmatprep.subr.mxu0 0.0
    %1785 = vmatpush1.xpose.msra.mxu0 0.0
    %1786 = vmatprep.subr.mxu0 0.0
    %1787 = vmatpush1.xpose.msra.mxu0 0.0
    %1788 = vmatprep.subr.mxu0 0.0
    %1789 = vmatpush1.xpose.msra.mxu0 0.0
    %1790 = vmatprep.subr.mxu0 0.0
    %1791 = vmatpush1.xpose.msra.mxu0 0.0
    %1792 = vmatprep.subr.mxu0 0.0
    %1793 = vmatpush1.xpose.msra.mxu0 0.0
    %1794 = vmatprep.subr.mxu0 0.0
    %1795 = vmatpush1.xpose.msra.mxu0 0.0
    %1796 = vmatprep.subr.mxu0 0.0
    %1797 = vmatpush1.xpose.msra.mxu0 0.0
    %1798 = vmatprep.subr.mxu0 0.0
    %1799 = vmatpush1.xpose.msra.mxu0 0.0
    %1800 = vmatprep.subr.mxu0 0.0
    %1801 = vmatpush1.xpose.msra.mxu0 0.0
    %1802 = vmatprep.subr.mxu0 0.0
    %1803 = vmatpush1.xpose.msra.mxu0 0.0
    %1804 = vmatprep.subr.mxu0 0.0
    %1805 = vmatpush1.xpose.msra.mxu0 0.0
    %1806 = vmatprep.subr.mxu0 0.0
    %1807 = vmatpush1.xpose.msra.mxu0 0.0
    %1808 = vmatprep.subr.mxu0 0.0
    %1809 = vmatpush1.xpose.msra.mxu0 0.0
    %1810 = vmatprep.subr.mxu0 0.0
    %1811 = vmatpush1.xpose.msra.mxu0 0.0
    %1812 = vmatprep.subr.mxu0 0.0
    %1813 = vmatpush1.xpose.msra.mxu0 0.0
    %1814 = vmatprep.subr.mxu0 0.0
    %1815 = vmatpush1.xpose.msra.mxu0 0.0
    %1816 = vmatprep.subr.mxu0 0.0
    %1817 = vmatpush1.xpose.msra.mxu0 0.0
    %1818 = vmatprep.subr.mxu0 0.0
    %1819 = vmatpush1.xpose.msra.mxu0 0.0
    %1820 = vmatprep.subr.mxu0 0.0
    %1821 = vmatpush1.xpose.msra.mxu0 0.0
    %1822 = vmatprep.subr.mxu0 0.0
    %1823 = vmatpush1.xpose.msra.mxu0 0.0
    %1824 = vmatprep.subr.mxu0 0.0
    %1825 = vmatpush1.xpose.msra.mxu0 0.0
    %1826 = vmatprep.mubr.f32.mxu0 0.0
    %1827 = vmatmul.mubr.f32.gmra.mrb[0].mxu0 %v1754
    %v1828 = vpop.f32.mrb[0].mxu0
    %v1829 = vadd.f32 0.0, %v1828
    %v1830 = vpop.f32.mrb[0].mxu0
    %1831 = vmatprep.mubr.f32.mxu0 0.0
    %1832 = vmatmul.mubr.f32.gmra.mrb[0].mxu0 %v1756
    %v1833 = vpop.f32.mrb[0].mxu0
    %v1834 = vadd.f32 0.0, %v1833
    %v1835 = vpop.f32.mrb[0].mxu0
    %1836 = vdwg.mxu0
    %1837 = vrot.lane.b32.xlu0 %v298, 96
    %v1838 = vpop.permute.xlu0 %1837
    %1839 = vrot.lane.b32.xlu0 %v300, 96
    %v1840 = vpop.permute.xlu0 %1839
    %v1841 = vsel %vm361, %v298, 0
    %v1843 = vsel %vm361, %v300, 0
    %v1845 = vsel %vm361, %v1838, 0
    %v1847 = vsel %vm361, %v1840, 0
    %1849 = vmatprep.subr.mxu0 0.0
    %1850 = vmatpush1.xpose.msra.mxu0 %v1845
    %1851 = vmatprep.subr.mxu0 0.0
    %1852 = vmatpush1.xpose.msra.mxu0 %v1847
    %1853 = vmatprep.subr.mxu0 0.0
    %1854 = vmatpush1.xpose.msra.mxu0 0.0
    %1855 = vmatprep.subr.mxu0 0.0
    %1856 = vmatpush1.xpose.msra.mxu0 0.0
    %1857 = vmatprep.subr.mxu0 0.0
    %1858 = vmatpush1.xpose.msra.mxu0 0.0
    %1859 = vmatprep.subr.mxu0 0.0
    %1860 = vmatpush1.xpose.msra.mxu0 0.0
    %1861 = vmatprep.subr.mxu0 0.0
    %1862 = vmatpush1.xpose.msra.mxu0 0.0
    %1863 = vmatprep.subr.mxu0 0.0
    %1864 = vmatpush1.xpose.msra.mxu0 0.0
    %1865 = vmatprep.subr.mxu0 0.0
    %1866 = vmatpush1.xpose.msra.mxu0 0.0
    %1867 = vmatprep.subr.mxu0 0.0
    %1868 = vmatpush1.xpose.msra.mxu0 0.0
    %1869 = vmatprep.subr.mxu0 0.0
    %1870 = vmatpush1.xpose.msra.mxu0 0.0
    %1871 = vmatprep.subr.mxu0 0.0
    %1872 = vmatpush1.xpose.msra.mxu0 0.0
    %1873 = vmatprep.subr.mxu0 0.0
    %1874 = vmatpush1.xpose.msra.mxu0 0.0
    %1875 = vmatprep.subr.mxu0 0.0
    %1876 = vmatpush1.xpose.msra.mxu0 0.0
    %1877 = vmatprep.subr.mxu0 0.0
    %1878 = vmatpush1.xpose.msra.mxu0 0.0
    %1879 = vmatprep.subr.mxu0 0.0
    %1880 = vmatpush1.xpose.msra.mxu0 0.0
    %1881 = vmatprep.subr.mxu0 0.0
    %1882 = vmatpush1.xpose.msra.mxu0 0.0
    %1883 = vmatprep.subr.mxu0 0.0
    %1884 = vmatpush1.xpose.msra.mxu0 0.0
    %1885 = vmatprep.subr.mxu0 0.0
    %1886 = vmatpush1.xpose.msra.mxu0 0.0
    %1887 = vmatprep.subr.mxu0 0.0
    %1888 = vmatpush1.xpose.msra.mxu0 0.0
    %1889 = vmatprep.subr.mxu0 0.0
    %1890 = vmatpush1.xpose.msra.mxu0 0.0
    %1891 = vmatprep.subr.mxu0 0.0
    %1892 = vmatpush1.xpose.msra.mxu0 0.0
    %1893 = vmatprep.subr.mxu0 0.0
    %1894 = vmatpush1.xpose.msra.mxu0 0.0
    %1895 = vmatprep.subr.mxu0 0.0
    %1896 = vmatpush1.xpose.msra.mxu0 0.0
    %1897 = vmatprep.subr.mxu0 0.0
    %1898 = vmatpush1.xpose.msra.mxu0 0.0
    %1899 = vmatprep.subr.mxu0 0.0
    %1900 = vmatpush1.xpose.msra.mxu0 0.0
    %1901 = vmatprep.subr.mxu0 0.0
    %1902 = vmatpush1.xpose.msra.mxu0 0.0
    %1903 = vmatprep.subr.mxu0 0.0
    %1904 = vmatpush1.xpose.msra.mxu0 0.0
    %1905 = vmatprep.subr.mxu0 0.0
    %1906 = vmatpush1.xpose.msra.mxu0 0.0
    %1907 = vmatprep.subr.mxu0 0.0
    %1908 = vmatpush1.xpose.msra.mxu0 0.0
    %1909 = vmatprep.subr.mxu0 0.0
    %1910 = vmatpush1.xpose.msra.mxu0 0.0
    %1911 = vmatprep.subr.mxu0 0.0
    %1912 = vmatpush1.xpose.msra.mxu0 0.0
    %1913 = vmatprep.mubr.f32.mxu0 0.0
    %1914 = vmatmul.mubr.f32.gmra.mrb[0].mxu0 %v1841
    %v1915 = vpop.f32.mrb[0].mxu0
    %v1916 = vadd.f32 0.0, %v1915
    %v1917 = vpop.f32.mrb[0].mxu0
    %1918 = vmatprep.mubr.f32.mxu0 0.0
    %1919 = vmatmul.mubr.f32.gmra.mrb[0].mxu0 %v1843
    %v1920 = vpop.f32.mrb[0].mxu0
    %v1921 = vadd.f32 0.0, %v1920
    %v1922 = vpop.f32.mrb[0].mxu0
    %1923 = vdwg.mxu0
    %1924 = vrot.lane.b32.xlu0 %v302, 96
    %v1925 = vpop.permute.xlu0 %1924
    %1926 = vrot.lane.b32.xlu0 %v304, 96
    %v1927 = vpop.permute.xlu0 %1926
    %v1928 = vsel %vm361, %v302, 0
    %v1930 = vsel %vm361, %v304, 0
    %v1932 = vsel %vm361, %v1925, 0
    %v1934 = vsel %vm361, %v1927, 0
    %1936 = vmatprep.subr.mxu0 0.0
    %1937 = vmatpush1.xpose.msra.mxu0 %v1932
    %1938 = vmatprep.subr.mxu0 0.0
    %1939 = vmatpush1.xpose.msra.mxu0 %v1934
    %1940 = vmatprep.subr.mxu0 0.0
    %1941 = vmatpush1.xpose.msra.mxu0 0.0
    %1942 = vmatprep.subr.mxu0 0.0
    %1943 = vmatpush1.xpose.msra.mxu0 0.0
    %1944 = vmatprep.subr.mxu0 0.0
    %1945 = vmatpush1.xpose.msra.mxu0 0.0
    %1946 = vmatprep.subr.mxu0 0.0
    %1947 = vmatpush1.xpose.msra.mxu0 0.0
    %1948 = vmatprep.subr.mxu0 0.0
    %1949 = vmatpush1.xpose.msra.mxu0 0.0
    %1950 = vmatprep.subr.mxu0 0.0
    %1951 = vmatpush1.xpose.msra.mxu0 0.0
    %1952 = vmatprep.subr.mxu0 0.0
    %1953 = vmatpush1.xpose.msra.mxu0 0.0
    %1954 = vmatprep.subr.mxu0 0.0
    %1955 = vmatpush1.xpose.msra.mxu0 0.0
    %1956 = vmatprep.subr.mxu0 0.0
    %1957 = vmatpush1.xpose.msra.mxu0 0.0
    %1958 = vmatprep.subr.mxu0 0.0
    %1959 = vmatpush1.xpose.msra.mxu0 0.0
    %1960 = vmatprep.subr.mxu0 0.0
    %1961 = vmatpush1.xpose.msra.mxu0 0.0
    %1962 = vmatprep.subr.mxu0 0.0
    %1963 = vmatpush1.xpose.msra.mxu0 0.0
    %1964 = vmatprep.subr.mxu0 0.0
    %1965 = vmatpush1.xpose.msra.mxu0 0.0
    %1966 = vmatprep.subr.mxu0 0.0
    %1967 = vmatpush1.xpose.msra.mxu0 0.0
    %1968 = vmatprep.subr.mxu0 0.0
    %1969 = vmatpush1.xpose.msra.mxu0 0.0
    %1970 = vmatprep.subr.mxu0 0.0
    %1971 = vmatpush1.xpose.msra.mxu0 0.0
    %1972 = vmatprep.subr.mxu0 0.0
    %1973 = vmatpush1.xpose.msra.mxu0 0.0
    %1974 = vmatprep.subr.mxu0 0.0
    %1975 = vmatpush1.xpose.msra.mxu0 0.0
    %1976 = vmatprep.subr.mxu0 0.0
    %1977 = vmatpush1.xpose.msra.mxu0 0.0
    %1978 = vmatprep.subr.mxu0 0.0
    %1979 = vmatpush1.xpose.msra.mxu0 0.0
    %1980 = vmatprep.subr.mxu0 0.0
    %1981 = vmatpush1.xpose.msra.mxu0 0.0
    %1982 = vmatprep.subr.mxu0 0.0
    %1983 = vmatpush1.xpose.msra.mxu0 0.0
    %1984 = vmatprep.subr.mxu0 0.0
    %1985 = vmatpush1.xpose.msra.mxu0 0.0
    %1986 = vmatprep.subr.mxu0 0.0
    %1987 = vmatpush1.xpose.msra.mxu0 0.0
    %1988 = vmatprep.subr.mxu0 0.0
    %1989 = vmatpush1.xpose.msra.mxu0 0.0
    %1990 = vmatprep.subr.mxu0 0.0
    %1991 = vmatpush1.xpose.msra.mxu0 0.0
    %1992 = vmatprep.subr.mxu0 0.0
    %1993 = vmatpush1.xpose.msra.mxu0 0.0
    %1994 = vmatprep.subr.mxu0 0.0
    %1995 = vmatpush1.xpose.msra.mxu0 0.0
    %1996 = vmatprep.subr.mxu0 0.0
    %1997 = vmatpush1.xpose.msra.mxu0 0.0
    %1998 = vmatprep.subr.mxu0 0.0
    %1999 = vmatpush1.xpose.msra.mxu0 0.0
    %2000 = vmatprep.mubr.f32.mxu0 0.0
    %2001 = vmatmul.mubr.f32.gmra.mrb[0].mxu0 %v1928
    %v2002 = vpop.f32.mrb[0].mxu0
    %v2003 = vadd.f32 0.0, %v2002
    %v2004 = vpop.f32.mrb[0].mxu0
    %2005 = vmatprep.mubr.f32.mxu0 0.0
    %2006 = vmatmul.mubr.f32.gmra.mrb[0].mxu0 %v1930
    %v2007 = vpop.f32.mrb[0].mxu0
    %v2008 = vadd.f32 0.0, %v2007
    %v2009 = vpop.f32.mrb[0].mxu0
    %2010 = vdwg.mxu0
    %2011 = vrot.lane.b32.xlu0 %v306, 96
    %v2012 = vpop.permute.xlu0 %2011
    %2013 = vrot.lane.b32.xlu0 %v308, 96
    %v2014 = vpop.permute.xlu0 %2013
    %v2015 = vsel %vm361, %v306, 0
    %v2017 = vsel %vm361, %v308, 0
    %v2019 = vsel %vm361, %v2012, 0
    %v2021 = vsel %vm361, %v2014, 0
    %2023 = vmatprep.subr.mxu0 0.0
    %2024 = vmatpush1.xpose.msra.mxu0 %v2019
    %2025 = vmatprep.subr.mxu0 0.0
    %2026 = vmatpush1.xpose.msra.mxu0 %v2021
    %2027 = vmatprep.subr.mxu0 0.0
    %2028 = vmatpush1.xpose.msra.mxu0 0.0
    %2029 = vmatprep.subr.mxu0 0.0
    %2030 = vmatpush1.xpose.msra.mxu0 0.0
    %2031 = vmatprep.subr.mxu0 0.0
    %2032 = vmatpush1.xpose.msra.mxu0 0.0
    %2033 = vmatprep.subr.mxu0 0.0
    %2034 = vmatpush1.xpose.msra.mxu0 0.0
    %2035 = vmatprep.subr.mxu0 0.0
    %2036 = vmatpush1.xpose.msra.mxu0 0.0
    %2037 = vmatprep.subr.mxu0 0.0
    %2038 = vmatpush1.xpose.msra.mxu0 0.0
    %2039 = vmatprep.subr.mxu0 0.0
    %2040 = vmatpush1.xpose.msra.mxu0 0.0
    %2041 = vmatprep.subr.mxu0 0.0
    %2042 = vmatpush1.xpose.msra.mxu0 0.0
    %2043 = vmatprep.subr.mxu0 0.0
    %2044 = vmatpush1.xpose.msra.mxu0 0.0
    %2045 = vmatprep.subr.mxu0 0.0
    %2046 = vmatpush1.xpose.msra.mxu0 0.0
    %2047 = vmatprep.subr.mxu0 0.0
    %2048 = vmatpush1.xpose.msra.mxu0 0.0
    %2049 = vmatprep.subr.mxu0 0.0
    %2050 = vmatpush1.xpose.msra.mxu0 0.0
    %2051 = vmatprep.subr.mxu0 0.0
    %2052 = vmatpush1.xpose.msra.mxu0 0.0
    %2053 = vmatprep.subr.mxu0 0.0
    %2054 = vmatpush1.xpose.msra.mxu0 0.0
    %2055 = vmatprep.subr.mxu0 0.0
    %2056 = vmatpush1.xpose.msra.mxu0 0.0
    %2057 = vmatprep.subr.mxu0 0.0
    %2058 = vmatpush1.xpose.msra.mxu0 0.0
    %2059 = vmatprep.subr.mxu0 0.0
    %2060 = vmatpush1.xpose.msra.mxu0 0.0
    %2061 = vmatprep.subr.mxu0 0.0
    %2062 = vmatpush1.xpose.msra.mxu0 0.0
    %2063 = vmatprep.subr.mxu0 0.0
    %2064 = vmatpush1.xpose.msra.mxu0 0.0
    %2065 = vmatprep.subr.mxu0 0.0
    %2066 = vmatpush1.xpose.msra.mxu0 0.0
    %2067 = vmatprep.subr.mxu0 0.0
    %2068 = vmatpush1.xpose.msra.mxu0 0.0
    %2069 = vmatprep.subr.mxu0 0.0
    %2070 = vmatpush1.xpose.msra.mxu0 0.0
    %2071 = vmatprep.subr.mxu0 0.0
    %2072 = vmatpush1.xpose.msra.mxu0 0.0
    %2073 = vmatprep.subr.mxu0 0.0
    %2074 = vmatpush1.xpose.msra.mxu0 0.0
    %2075 = vmatprep.subr.mxu0 0.0
    %2076 = vmatpush1.xpose.msra.mxu0 0.0
    %2077 = vmatprep.subr.mxu0 0.0
    %2078 = vmatpush1.xpose.msra.mxu0 0.0
    %2079 = vmatprep.subr.mxu0 0.0
    %2080 = vmatpush1.xpose.msra.mxu0 0.0
    %2081 = vmatprep.subr.mxu0 0.0
    %2082 = vmatpush1.xpose.msra.mxu0 0.0
    %2083 = vmatprep.subr.mxu0 0.0
    %2084 = vmatpush1.xpose.msra.mxu0 0.0
    %2085 = vmatprep.subr.mxu0 0.0
    %2086 = vmatpush1.xpose.msra.mxu0 0.0
    %2087 = vmatprep.mubr.f32.mxu0 0.0
    %2088 = vmatmul.mubr.f32.gmra.mrb[0].mxu0 %v2015
    %v2089 = vpop.f32.mrb[0].mxu0
    %v2090 = vadd.f32 0.0, %v2089
    %v2091 = vpop.f32.mrb[0].mxu0
    %2092 = vmatprep.mubr.f32.mxu0 0.0
    %2093 = vmatmul.mubr.f32.gmra.mrb[0].mxu0 %v2017
    %v2094 = vpop.f32.mrb[0].mxu0
    %v2095 = vadd.f32 0.0, %v2094
    %v2096 = vpop.f32.mrb[0].mxu0
    %2097 = vdwg.mxu0
    %2098 = vrot.lane.b32.xlu0 %v310, 96
    %v2099 = vpop.permute.xlu0 %2098
    %2100 = vrot.lane.b32.xlu0 %v312, 96
    %v2101 = vpop.permute.xlu0 %2100
    %v2102 = vsel %vm361, %v310, 0
    %v2104 = vsel %vm361, %v312, 0
    %v2106 = vsel %vm361, %v2099, 0
    %v2108 = vsel %vm361, %v2101, 0
    %2110 = vmatprep.subr.mxu0 0.0
    %2111 = vmatpush1.xpose.msra.mxu0 %v2106
    %2112 = vmatprep.subr.mxu0 0.0
    %2113 = vmatpush1.xpose.msra.mxu0 %v2108
    %2114 = vmatprep.subr.mxu0 0.0
    %2115 = vmatpush1.xpose.msra.mxu0 0.0
    %2116 = vmatprep.subr.mxu0 0.0
    %2117 = vmatpush1.xpose.msra.mxu0 0.0
    %2118 = vmatprep.subr.mxu0 0.0
    %2119 = vmatpush1.xpose.msra.mxu0 0.0
    %2120 = vmatprep.subr.mxu0 0.0
    %2121 = vmatpush1.xpose.msra.mxu0 0.0
    %2122 = vmatprep.subr.mxu0 0.0
    %2123 = vmatpush1.xpose.msra.mxu0 0.0
    %2124 = vmatprep.subr.mxu0 0.0
    %2125 = vmatpush1.xpose.msra.mxu0 0.0
    %2126 = vmatprep.subr.mxu0 0.0
    %2127 = vmatpush1.xpose.msra.mxu0 0.0
    %2128 = vmatprep.subr.mxu0 0.0
    %2129 = vmatpush1.xpose.msra.mxu0 0.0
    %2130 = vmatprep.subr.mxu0 0.0
    %2131 = vmatpush1.xpose.msra.mxu0 0.0
    %2132 = vmatprep.subr.mxu0 0.0
    %2133 = vmatpush1.xpose.msra.mxu0 0.0
    %2134 = vmatprep.subr.mxu0 0.0
    %2135 = vmatpush1.xpose.msra.mxu0 0.0
    %2136 = vmatprep.subr.mxu0 0.0
    %2137 = vmatpush1.xpose.msra.mxu0 0.0
    %2138 = vmatprep.subr.mxu0 0.0
    %2139 = vmatpush1.xpose.msra.mxu0 0.0
    %2140 = vmatprep.subr.mxu0 0.0
    %2141 = vmatpush1.xpose.msra.mxu0 0.0
    %2142 = vmatprep.subr.mxu0 0.0
    %2143 = vmatpush1.xpose.msra.mxu0 0.0
    %2144 = vmatprep.subr.mxu0 0.0
    %2145 = vmatpush1.xpose.msra.mxu0 0.0
    %2146 = vmatprep.subr.mxu0 0.0
    %2147 = vmatpush1.xpose.msra.mxu0 0.0
    %2148 = vmatprep.subr.mxu0 0.0
    %2149 = vmatpush1.xpose.msra.mxu0 0.0
    %2150 = vmatprep.subr.mxu0 0.0
    %2151 = vmatpush1.xpose.msra.mxu0 0.0
    %2152 = vmatprep.subr.mxu0 0.0
    %2153 = vmatpush1.xpose.msra.mxu0 0.0
    %2154 = vmatprep.subr.mxu0 0.0
    %2155 = vmatpush1.xpose.msra.mxu0 0.0
    %2156 = vmatprep.subr.mxu0 0.0
    %2157 = vmatpush1.xpose.msra.mxu0 0.0
    %2158 = vmatprep.subr.mxu0 0.0
    %2159 = vmatpush1.xpose.msra.mxu0 0.0
    %2160 = vmatprep.subr.mxu0 0.0
    %2161 = vmatpush1.xpose.msra.mxu0 0.0
    %2162 = vmatprep.subr.mxu0 0.0
    %2163 = vmatpush1.xpose.msra.mxu0 0.0
    %2164 = vmatprep.subr.mxu0 0.0
    %2165 = vmatpush1.xpose.msra.mxu0 0.0
    %2166 = vmatprep.subr.mxu0 0.0
    %2167 = vmatpush1.xpose.msra.mxu0 0.0
    %2168 = vmatprep.subr.mxu0 0.0
    %2169 = vmatpush1.xpose.msra.mxu0 0.0
    %2170 = vmatprep.subr.mxu0 0.0
    %2171 = vmatpush1.xpose.msra.mxu0 0.0
    %2172 = vmatprep.subr.mxu0 0.0
    %2173 = vmatpush1.xpose.msra.mxu0 0.0
    %2174 = vmatprep.mubr.f32.mxu0 0.0
    %2175 = vmatmul.mubr.f32.gmra.mrb[0].mxu0 %v2102
    %v2176 = vpop.f32.mrb[0].mxu0
    %v2177 = vadd.f32 0.0, %v2176
    %v2178 = vpop.f32.mrb[0].mxu0
    %2179 = vmatprep.mubr.f32.mxu0 0.0
    %2180 = vmatmul.mubr.f32.gmra.mrb[0].mxu0 %v2104
    %v2181 = vpop.f32.mrb[0].mxu0
    %v2182 = vadd.f32 0.0, %v2181
    %v2183 = vpop.f32.mrb[0].mxu0
    %2184 = vdwg.mxu0
    %2185 = vrot.lane.b32.xlu0 %v314, 96
    %v2186 = vpop.permute.xlu0 %2185
    %2187 = vrot.lane.b32.xlu0 %v316, 96
    %v2188 = vpop.permute.xlu0 %2187
    %v2189 = vsel %vm361, %v314, 0
    %v2191 = vsel %vm361, %v316, 0
    %v2193 = vsel %vm361, %v2186, 0
    %v2195 = vsel %vm361, %v2188, 0
    %2197 = vmatprep.subr.mxu0 0.0
    %2198 = vmatpush1.xpose.msra.mxu0 %v2193
    %2199 = vmatprep.subr.mxu0 0.0
    %2200 = vmatpush1.xpose.msra.mxu0 %v2195
    %2201 = vmatprep.subr.mxu0 0.0
    %2202 = vmatpush1.xpose.msra.mxu0 0.0
    %2203 = vmatprep.subr.mxu0 0.0
    %2204 = vmatpush1.xpose.msra.mxu0 0.0
    %2205 = vmatprep.subr.mxu0 0.0
    %2206 = vmatpush1.xpose.msra.mxu0 0.0
    %2207 = vmatprep.subr.mxu0 0.0
    %2208 = vmatpush1.xpose.msra.mxu0 0.0
    %2209 = vmatprep.subr.mxu0 0.0
    %2210 = vmatpush1.xpose.msra.mxu0 0.0
    %2211 = vmatprep.subr.mxu0 0.0
    %2212 = vmatpush1.xpose.msra.mxu0 0.0
    %2213 = vmatprep.subr.mxu0 0.0
    %2214 = vmatpush1.xpose.msra.mxu0 0.0
    %2215 = vmatprep.subr.mxu0 0.0
    %2216 = vmatpush1.xpose.msra.mxu0 0.0
    %2217 = vmatprep.subr.mxu0 0.0
    %2218 = vmatpush1.xpose.msra.mxu0 0.0
    %2219 = vmatprep.subr.mxu0 0.0
    %2220 = vmatpush1.xpose.msra.mxu0 0.0
    %2221 = vmatprep.subr.mxu0 0.0
    %2222 = vmatpush1.xpose.msra.mxu0 0.0
    %2223 = vmatprep.subr.mxu0 0.0
    %2224 = vmatpush1.xpose.msra.mxu0 0.0
    %2225 = vmatprep.subr.mxu0 0.0
    %2226 = vmatpush1.xpose.msra.mxu0 0.0
    %2227 = vmatprep.subr.mxu0 0.0
    %2228 = vmatpush1.xpose.msra.mxu0 0.0
    %2229 = vmatprep.subr.mxu0 0.0
    %2230 = vmatpush1.xpose.msra.mxu0 0.0
    %2231 = vmatprep.subr.mxu0 0.0
    %2232 = vmatpush1.xpose.msra.mxu0 0.0
    %2233 = vmatprep.subr.mxu0 0.0
    %2234 = vmatpush1.xpose.msra.mxu0 0.0
    %2235 = vmatprep.subr.mxu0 0.0
    %2236 = vmatpush1.xpose.msra.mxu0 0.0
    %2237 = vmatprep.subr.mxu0 0.0
    %2238 = vmatpush1.xpose.msra.mxu0 0.0
    %2239 = vmatprep.subr.mxu0 0.0
    %2240 = vmatpush1.xpose.msra.mxu0 0.0
    %2241 = vmatprep.subr.mxu0 0.0
    %2242 = vmatpush1.xpose.msra.mxu0 0.0
    %2243 = vmatprep.subr.mxu0 0.0
    %2244 = vmatpush1.xpose.msra.mxu0 0.0
    %2245 = vmatprep.subr.mxu0 0.0
    %2246 = vmatpush1.xpose.msra.mxu0 0.0
    %2247 = vmatprep.subr.mxu0 0.0
    %2248 = vmatpush1.xpose.msra.mxu0 0.0
    %2249 = vmatprep.subr.mxu0 0.0
    %2250 = vmatpush1.xpose.msra.mxu0 0.0
    %2251 = vmatprep.subr.mxu0 0.0
    %2252 = vmatpush1.xpose.msra.mxu0 0.0
    %2253 = vmatprep.subr.mxu0 0.0
    %2254 = vmatpush1.xpose.msra.mxu0 0.0
    %2255 = vmatprep.subr.mxu0 0.0
    %2256 = vmatpush1.xpose.msra.mxu0 0.0
    %2257 = vmatprep.subr.mxu0 0.0
    %2258 = vmatpush1.xpose.msra.mxu0 0.0
    %2259 = vmatprep.subr.mxu0 0.0
    %2260 = vmatpush1.xpose.msra.mxu0 0.0
    %2261 = vmatprep.mubr.f32.mxu0 0.0
    %2262 = vmatmul.mubr.f32.gmra.mrb[0].mxu0 %v2189
    %v2263 = vpop.f32.mrb[0].mxu0
    %v2264 = vadd.f32 0.0, %v2263
    %v2265 = vpop.f32.mrb[0].mxu0
    %2266 = vmatprep.mubr.f32.mxu0 0.0
    %2267 = vmatmul.mubr.f32.gmra.mrb[0].mxu0 %v2191
    %v2268 = vpop.f32.mrb[0].mxu0
    %v2269 = vadd.f32 0.0, %v2268
    %v2270 = vpop.f32.mrb[0].mxu0
    %2271 = vdwg.mxu0
    %2272 = vrot.lane.b32.xlu0 %v318, 96
    %v2273 = vpop.permute.xlu0 %2272
    %2274 = vrot.lane.b32.xlu0 %v320, 96
    %v2275 = vpop.permute.xlu0 %2274
    %v2276 = vsel %vm361, %v318, 0
    %v2278 = vsel %vm361, %v320, 0
    %v2280 = vsel %vm361, %v2273, 0
    %v2282 = vsel %vm361, %v2275, 0
    %2284 = vmatprep.subr.mxu0 0.0
    %2285 = vmatpush1.xpose.msra.mxu0 %v2280
    %2286 = vmatprep.subr.mxu0 0.0
    %2287 = vmatpush1.xpose.msra.mxu0 %v2282
    %2288 = vmatprep.subr.mxu0 0.0
    %2289 = vmatpush1.xpose.msra.mxu0 0.0
    %2290 = vmatprep.subr.mxu0 0.0
    %2291 = vmatpush1.xpose.msra.mxu0 0.0
    %2292 = vmatprep.subr.mxu0 0.0
    %2293 = vmatpush1.xpose.msra.mxu0 0.0
    %2294 = vmatprep.subr.mxu0 0.0
    %2295 = vmatpush1.xpose.msra.mxu0 0.0
    %2296 = vmatprep.subr.mxu0 0.0
    %2297 = vmatpush1.xpose.msra.mxu0 0.0
    %2298 = vmatprep.subr.mxu0 0.0
    %2299 = vmatpush1.xpose.msra.mxu0 0.0
    %2300 = vmatprep.subr.mxu0 0.0
    %2301 = vmatpush1.xpose.msra.mxu0 0.0
    %2302 = vmatprep.subr.mxu0 0.0
    %2303 = vmatpush1.xpose.msra.mxu0 0.0
    %2304 = vmatprep.subr.mxu0 0.0
    %2305 = vmatpush1.xpose.msra.mxu0 0.0
    %2306 = vmatprep.subr.mxu0 0.0
    %2307 = vmatpush1.xpose.msra.mxu0 0.0
    %2308 = vmatprep.subr.mxu0 0.0
    %2309 = vmatpush1.xpose.msra.mxu0 0.0
    %2310 = vmatprep.subr.mxu0 0.0
    %2311 = vmatpush1.xpose.msra.mxu0 0.0
    %2312 = vmatprep.subr.mxu0 0.0
    %2313 = vmatpush1.xpose.msra.mxu0 0.0
    %2314 = vmatprep.subr.mxu0 0.0
    %2315 = vmatpush1.xpose.msra.mxu0 0.0
    %2316 = vmatprep.subr.mxu0 0.0
    %2317 = vmatpush1.xpose.msra.mxu0 0.0
    %2318 = vmatprep.subr.mxu0 0.0
    %2319 = vmatpush1.xpose.msra.mxu0 0.0
    %2320 = vmatprep.subr.mxu0 0.0
    %2321 = vmatpush1.xpose.msra.mxu0 0.0
    %2322 = vmatprep.subr.mxu0 0.0
    %2323 = vmatpush1.xpose.msra.mxu0 0.0
    %2324 = vmatprep.subr.mxu0 0.0
    %2325 = vmatpush1.xpose.msra.mxu0 0.0
    %2326 = vmatprep.subr.mxu0 0.0
    %2327 = vmatpush1.xpose.msra.mxu0 0.0
    %2328 = vmatprep.subr.mxu0 0.0
    %2329 = vmatpush1.xpose.msra.mxu0 0.0
    %2330 = vmatprep.subr.mxu0 0.0
    %2331 = vmatpush1.xpose.msra.mxu0 0.0
    %2332 = vmatprep.subr.mxu0 0.0
    %2333 = vmatpush1.xpose.msra.mxu0 0.0
    %2334 = vmatprep.subr.mxu0 0.0
    %2335 = vmatpush1.xpose.msra.mxu0 0.0
    %2336 = vmatprep.subr.mxu0 0.0
    %2337 = vmatpush1.xpose.msra.mxu0 0.0
    %2338 = vmatprep.subr.mxu0 0.0
    %2339 = vmatpush1.xpose.msra.mxu0 0.0
    %2340 = vmatprep.subr.mxu0 0.0
    %2341 = vmatpush1.xpose.msra.mxu0 0.0
    %2342 = vmatprep.subr.mxu0 0.0
    %2343 = vmatpush1.xpose.msra.mxu0 0.0
    %2344 = vmatprep.subr.mxu0 0.0
    %2345 = vmatpush1.xpose.msra.mxu0 0.0
    %2346 = vmatprep.subr.mxu0 0.0
    %2347 = vmatpush1.xpose.msra.mxu0 0.0
    %2348 = vmatprep.mubr.f32.mxu0 0.0
    %2349 = vmatmul.mubr.f32.gmra.mrb[0].mxu0 %v2276
    %v2350 = vpop.f32.mrb[0].mxu0
    %v2351 = vadd.f32 0.0, %v2350
    %v2352 = vpop.f32.mrb[0].mxu0
    %2353 = vmatprep.mubr.f32.mxu0 0.0
    %2354 = vmatmul.mubr.f32.gmra.mrb[0].mxu0 %v2278
    %v2355 = vpop.f32.mrb[0].mxu0
    %v2356 = vadd.f32 0.0, %v2355
    %v2357 = vpop.f32.mrb[0].mxu0
    %2358 = vdwg.mxu0
    %2359 = vrot.lane.b32.xlu0 %v322, 96
    %v2360 = vpop.permute.xlu0 %2359
    %2361 = vrot.lane.b32.xlu0 %v324, 96
    %v2362 = vpop.permute.xlu0 %2361
    %v2363 = vsel %vm361, %v322, 0
    %v2365 = vsel %vm361, %v324, 0
    %v2367 = vsel %vm361, %v2360, 0
    %v2369 = vsel %vm361, %v2362, 0
    %2371 = vmatprep.subr.mxu0 0.0
    %2372 = vmatpush1.xpose.msra.mxu0 %v2367
    %2373 = vmatprep.subr.mxu0 0.0
    %2374 = vmatpush1.xpose.msra.mxu0 %v2369
    %2375 = vmatprep.subr.mxu0 0.0
    %2376 = vmatpush1.xpose.msra.mxu0 0.0
    %2377 = vmatprep.subr.mxu0 0.0
    %2378 = vmatpush1.xpose.msra.mxu0 0.0
    %2379 = vmatprep.subr.mxu0 0.0
    %2380 = vmatpush1.xpose.msra.mxu0 0.0
    %2381 = vmatprep.subr.mxu0 0.0
    %2382 = vmatpush1.xpose.msra.mxu0 0.0
    %2383 = vmatprep.subr.mxu0 0.0
    %2384 = vmatpush1.xpose.msra.mxu0 0.0
    %2385 = vmatprep.subr.mxu0 0.0
    %2386 = vmatpush1.xpose.msra.mxu0 0.0
    %2387 = vmatprep.subr.mxu0 0.0
    %2388 = vmatpush1.xpose.msra.mxu0 0.0
    %2389 = vmatprep.subr.mxu0 0.0
    %2390 = vmatpush1.xpose.msra.mxu0 0.0
    %2391 = vmatprep.subr.mxu0 0.0
    %2392 = vmatpush1.xpose.msra.mxu0 0.0
    %2393 = vmatprep.subr.mxu0 0.0
    %2394 = vmatpush1.xpose.msra.mxu0 0.0
    %2395 = vmatprep.subr.mxu0 0.0
    %2396 = vmatpush1.xpose.msra.mxu0 0.0
    %2397 = vmatprep.subr.mxu0 0.0
    %2398 = vmatpush1.xpose.msra.mxu0 0.0
    %2399 = vmatprep.subr.mxu0 0.0
    %2400 = vmatpush1.xpose.msra.mxu0 0.0
    %2401 = vmatprep.subr.mxu0 0.0
    %2402 = vmatpush1.xpose.msra.mxu0 0.0
    %2403 = vmatprep.subr.mxu0 0.0
    %2404 = vmatpush1.xpose.msra.mxu0 0.0
    %2405 = vmatprep.subr.mxu0 0.0
    %2406 = vmatpush1.xpose.msra.mxu0 0.0
    %2407 = vmatprep.subr.mxu0 0.0
    %2408 = vmatpush1.xpose.msra.mxu0 0.0
    %2409 = vmatprep.subr.mxu0 0.0
    %2410 = vmatpush1.xpose.msra.mxu0 0.0
    %2411 = vmatprep.subr.mxu0 0.0
    %2412 = vmatpush1.xpose.msra.mxu0 0.0
    %2413 = vmatprep.subr.mxu0 0.0
    %2414 = vmatpush1.xpose.msra.mxu0 0.0
    %2415 = vmatprep.subr.mxu0 0.0
    %2416 = vmatpush1.xpose.msra.mxu0 0.0
    %2417 = vmatprep.subr.mxu0 0.0
    %2418 = vmatpush1.xpose.msra.mxu0 0.0
    %2419 = vmatprep.subr.mxu0 0.0
    %2420 = vmatpush1.xpose.msra.mxu0 0.0
    %2421 = vmatprep.subr.mxu0 0.0
    %2422 = vmatpush1.xpose.msra.mxu0 0.0
    %2423 = vmatprep.subr.mxu0 0.0
    %2424 = vmatpush1.xpose.msra.mxu0 0.0
    %2425 = vmatprep.subr.mxu0 0.0
    %2426 = vmatpush1.xpose.msra.mxu0 0.0
    %2427 = vmatprep.subr.mxu0 0.0
    %2428 = vmatpush1.xpose.msra.mxu0 0.0
    %2429 = vmatprep.subr.mxu0 0.0
    %2430 = vmatpush1.xpose.msra.mxu0 0.0
    %2431 = vmatprep.subr.mxu0 0.0
    %2432 = vmatpush1.xpose.msra.mxu0 0.0
    %2433 = vmatprep.subr.mxu0 0.0
    %2434 = vmatpush1.xpose.msra.mxu0 0.0
    %2435 = vmatprep.mubr.f32.mxu0 0.0
    %2436 = vmatmul.mubr.f32.gmra.mrb[0].mxu0 %v2363
    %v2437 = vpop.f32.mrb[0].mxu0
    %v2438 = vadd.f32 0.0, %v2437
    %v2439 = vpop.f32.mrb[0].mxu0
    %2440 = vmatprep.mubr.f32.mxu0 0.0
    %2441 = vmatmul.mubr.f32.gmra.mrb[0].mxu0 %v2365
    %v2442 = vpop.f32.mrb[0].mxu0
    %v2443 = vadd.f32 0.0, %v2442
    %v2444 = vpop.f32.mrb[0].mxu0
    %2445 = vdwg.mxu0
    %2446 = vrot.lane.b32.xlu0 %v326, 96
    %v2447 = vpop.permute.xlu0 %2446
    %2448 = vrot.lane.b32.xlu0 %v328, 96
    %v2449 = vpop.permute.xlu0 %2448
    %v2450 = vsel %vm361, %v326, 0
    %v2452 = vsel %vm361, %v328, 0
    %v2454 = vsel %vm361, %v2447, 0
    %v2456 = vsel %vm361, %v2449, 0
    %2458 = vmatprep.subr.mxu0 0.0
    %2459 = vmatpush1.xpose.msra.mxu0 %v2454
    %2460 = vmatprep.subr.mxu0 0.0
    %2461 = vmatpush1.xpose.msra.mxu0 %v2456
    %2462 = vmatprep.subr.mxu0 0.0
    %2463 = vmatpush1.xpose.msra.mxu0 0.0
    %2464 = vmatprep.subr.mxu0 0.0
    %2465 = vmatpush1.xpose.msra.mxu0 0.0
    %2466 = vmatprep.subr.mxu0 0.0
    %2467 = vmatpush1.xpose.msra.mxu0 0.0
    %2468 = vmatprep.subr.mxu0 0.0
    %2469 = vmatpush1.xpose.msra.mxu0 0.0
    %2470 = vmatprep.subr.mxu0 0.0
    %2471 = vmatpush1.xpose.msra.mxu0 0.0
    %2472 = vmatprep.subr.mxu0 0.0
    %2473 = vmatpush1.xpose.msra.mxu0 0.0
    %2474 = vmatprep.subr.mxu0 0.0
    %2475 = vmatpush1.xpose.msra.mxu0 0.0
    %2476 = vmatprep.subr.mxu0 0.0
    %2477 = vmatpush1.xpose.msra.mxu0 0.0
    %2478 = vmatprep.subr.mxu0 0.0
    %2479 = vmatpush1.xpose.msra.mxu0 0.0
    %2480 = vmatprep.subr.mxu0 0.0
    %2481 = vmatpush1.xpose.msra.mxu0 0.0
    %2482 = vmatprep.subr.mxu0 0.0
    %2483 = vmatpush1.xpose.msra.mxu0 0.0
    %2484 = vmatprep.subr.mxu0 0.0
    %2485 = vmatpush1.xpose.msra.mxu0 0.0
    %2486 = vmatprep.subr.mxu0 0.0
    %2487 = vmatpush1.xpose.msra.mxu0 0.0
    %2488 = vmatprep.subr.mxu0 0.0
    %2489 = vmatpush1.xpose.msra.mxu0 0.0
    %2490 = vmatprep.subr.mxu0 0.0
    %2491 = vmatpush1.xpose.msra.mxu0 0.0
    %2492 = vmatprep.subr.mxu0 0.0
    %2493 = vmatpush1.xpose.msra.mxu0 0.0
    %2494 = vmatprep.subr.mxu0 0.0
    %2495 = vmatpush1.xpose.msra.mxu0 0.0
    %2496 = vmatprep.subr.mxu0 0.0
    %2497 = vmatpush1.xpose.msra.mxu0 0.0
    %2498 = vmatprep.subr.mxu0 0.0
    %2499 = vmatpush1.xpose.msra.mxu0 0.0
    %2500 = vmatprep.subr.mxu0 0.0
    %2501 = vmatpush1.xpose.msra.mxu0 0.0
    %2502 = vmatprep.subr.mxu0 0.0
    %2503 = vmatpush1.xpose.msra.mxu0 0.0
    %2504 = vmatprep.subr.mxu0 0.0
    %2505 = vmatpush1.xpose.msra.mxu0 0.0
    %2506 = vmatprep.subr.mxu0 0.0
    %2507 = vmatpush1.xpose.msra.mxu0 0.0
    %2508 = vmatprep.subr.mxu0 0.0
    %2509 = vmatpush1.xpose.msra.mxu0 0.0
    %2510 = vmatprep.subr.mxu0 0.0
    %2511 = vmatpush1.xpose.msra.mxu0 0.0
    %2512 = vmatprep.subr.mxu0 0.0
    %2513 = vmatpush1.xpose.msra.mxu0 0.0
    %2514 = vmatprep.subr.mxu0 0.0
    %2515 = vmatpush1.xpose.msra.mxu0 0.0
    %2516 = vmatprep.subr.mxu0 0.0
    %2517 = vmatpush1.xpose.msra.mxu0 0.0
    %2518 = vmatprep.subr.mxu0 0.0
    %2519 = vmatpush1.xpose.msra.mxu0 0.0
    %2520 = vmatprep.subr.mxu0 0.0
    %2521 = vmatpush1.xpose.msra.mxu0 0.0
    %2522 = vmatprep.mubr.f32.mxu0 0.0
    %2523 = vmatmul.mubr.f32.gmra.mrb[0].mxu0 %v2450
    %v2524 = vpop.f32.mrb[0].mxu0
    %v2525 = vadd.f32 0.0, %v2524
    %v2526 = vpop.f32.mrb[0].mxu0
    %2527 = vmatprep.mubr.f32.mxu0 0.0
    %2528 = vmatmul.mubr.f32.gmra.mrb[0].mxu0 %v2452
    %v2529 = vpop.f32.mrb[0].mxu0
    %v2530 = vadd.f32 0.0, %v2529
    %v2531 = vpop.f32.mrb[0].mxu0
    %2532 = vdwg.mxu0
    %2533 = vrot.lane.b32.xlu0 %v330, 96
    %v2534 = vpop.permute.xlu0 %2533
    %2535 = vrot.lane.b32.xlu0 %v332, 96
    %v2536 = vpop.permute.xlu0 %2535
    %v2537 = vsel %vm361, %v330, 0
    %v2539 = vsel %vm361, %v332, 0
    %v2541 = vsel %vm361, %v2534, 0
    %v2543 = vsel %vm361, %v2536, 0
    %2545 = vmatprep.subr.mxu0 0.0
    %2546 = vmatpush1.xpose.msra.mxu0 %v2541
    %2547 = vmatprep.subr.mxu0 0.0
    %2548 = vmatpush1.xpose.msra.mxu0 %v2543
    %2549 = vmatprep.subr.mxu0 0.0
    %2550 = vmatpush1.xpose.msra.mxu0 0.0
    %2551 = vmatprep.subr.mxu0 0.0
    %2552 = vmatpush1.xpose.msra.mxu0 0.0
    %2553 = vmatprep.subr.mxu0 0.0
    %2554 = vmatpush1.xpose.msra.mxu0 0.0
    %2555 = vmatprep.subr.mxu0 0.0
    %2556 = vmatpush1.xpose.msra.mxu0 0.0
    %2557 = vmatprep.subr.mxu0 0.0
    %2558 = vmatpush1.xpose.msra.mxu0 0.0
    %2559 = vmatprep.subr.mxu0 0.0
    %2560 = vmatpush1.xpose.msra.mxu0 0.0
    %2561 = vmatprep.subr.mxu0 0.0
    %2562 = vmatpush1.xpose.msra.mxu0 0.0
    %2563 = vmatprep.subr.mxu0 0.0
    %2564 = vmatpush1.xpose.msra.mxu0 0.0
    %2565 = vmatprep.subr.mxu0 0.0
    %2566 = vmatpush1.xpose.msra.mxu0 0.0
    %2567 = vmatprep.subr.mxu0 0.0
    %2568 = vmatpush1.xpose.msra.mxu0 0.0
    %2569 = vmatprep.subr.mxu0 0.0
    %2570 = vmatpush1.xpose.msra.mxu0 0.0
    %2571 = vmatprep.subr.mxu0 0.0
    %2572 = vmatpush1.xpose.msra.mxu0 0.0
    %2573 = vmatprep.subr.mxu0 0.0
    %2574 = vmatpush1.xpose.msra.mxu0 0.0
    %2575 = vmatprep.subr.mxu0 0.0
    %2576 = vmatpush1.xpose.msra.mxu0 0.0
    %2577 = vmatprep.subr.mxu0 0.0
    %2578 = vmatpush1.xpose.msra.mxu0 0.0
    %2579 = vmatprep.subr.mxu0 0.0
    %2580 = vmatpush1.xpose.msra.mxu0 0.0
    %2581 = vmatprep.subr.mxu0 0.0
    %2582 = vmatpush1.xpose.msra.mxu0 0.0
    %2583 = vmatprep.subr.mxu0 0.0
    %2584 = vmatpush1.xpose.msra.mxu0 0.0
    %2585 = vmatprep.subr.mxu0 0.0
    %2586 = vmatpush1.xpose.msra.mxu0 0.0
    %2587 = vmatprep.subr.mxu0 0.0
    %2588 = vmatpush1.xpose.msra.mxu0 0.0
    %2589 = vmatprep.subr.mxu0 0.0
    %2590 = vmatpush1.xpose.msra.mxu0 0.0
    %2591 = vmatprep.subr.mxu0 0.0
    %2592 = vmatpush1.xpose.msra.mxu0 0.0
    %2593 = vmatprep.subr.mxu0 0.0
    %2594 = vmatpush1.xpose.msra.mxu0 0.0
    %2595 = vmatprep.subr.mxu0 0.0
    %2596 = vmatpush1.xpose.msra.mxu0 0.0
    %2597 = vmatprep.subr.mxu0 0.0
    %2598 = vmatpush1.xpose.msra.mxu0 0.0
    %2599 = vmatprep.subr.mxu0 0.0
    %2600 = vmatpush1.xpose.msra.mxu0 0.0
    %2601 = vmatprep.subr.mxu0 0.0
    %2602 = vmatpush1.xpose.msra.mxu0 0.0
    %2603 = vmatprep.subr.mxu0 0.0
    %2604 = vmatpush1.xpose.msra.mxu0 0.0
    %2605 = vmatprep.subr.mxu0 0.0
    %2606 = vmatpush1.xpose.msra.mxu0 0.0
    %2607 = vmatprep.subr.mxu0 0.0
    %2608 = vmatpush1.xpose.msra.mxu0 0.0
    %2609 = vmatprep.mubr.f32.mxu0 0.0
    %2610 = vmatmul.mubr.f32.gmra.mrb[0].mxu0 %v2537
    %v2611 = vpop.f32.mrb[0].mxu0
    %v2612 = vadd.f32 0.0, %v2611
    %v2613 = vpop.f32.mrb[0].mxu0
    %2614 = vmatprep.mubr.f32.mxu0 0.0
    %2615 = vmatmul.mubr.f32.gmra.mrb[0].mxu0 %v2539
    %v2616 = vpop.f32.mrb[0].mxu0
    %v2617 = vadd.f32 0.0, %v2616
    %v2618 = vpop.f32.mrb[0].mxu0
    %2619 = vdwg.mxu0
    %2620 = vrot.lane.b32.xlu0 %v334, 96
    %v2621 = vpop.permute.xlu0 %2620
    %2622 = vrot.lane.b32.xlu0 %v336, 96
    %v2623 = vpop.permute.xlu0 %2622
    %v2624 = vsel %vm361, %v334, 0
    %v2626 = vsel %vm361, %v336, 0
    %v2628 = vsel %vm361, %v2621, 0
    %v2630 = vsel %vm361, %v2623, 0
    %2632 = vmatprep.subr.mxu0 0.0
    %2633 = vmatpush1.xpose.msra.mxu0 %v2628
    %2634 = vmatprep.subr.mxu0 0.0
    %2635 = vmatpush1.xpose.msra.mxu0 %v2630
    %2636 = vmatprep.subr.mxu0 0.0
    %2637 = vmatpush1.xpose.msra.mxu0 0.0
    %2638 = vmatprep.subr.mxu0 0.0
    %2639 = vmatpush1.xpose.msra.mxu0 0.0
    %2640 = vmatprep.subr.mxu0 0.0
    %2641 = vmatpush1.xpose.msra.mxu0 0.0
    %2642 = vmatprep.subr.mxu0 0.0
    %2643 = vmatpush1.xpose.msra.mxu0 0.0
    %2644 = vmatprep.subr.mxu0 0.0
    %2645 = vmatpush1.xpose.msra.mxu0 0.0
    %2646 = vmatprep.subr.mxu0 0.0
    %2647 = vmatpush1.xpose.msra.mxu0 0.0
    %2648 = vmatprep.subr.mxu0 0.0
    %2649 = vmatpush1.xpose.msra.mxu0 0.0
    %2650 = vmatprep.subr.mxu0 0.0
    %2651 = vmatpush1.xpose.msra.mxu0 0.0
    %2652 = vmatprep.subr.mxu0 0.0
    %2653 = vmatpush1.xpose.msra.mxu0 0.0
    %2654 = vmatprep.subr.mxu0 0.0
    %2655 = vmatpush1.xpose.msra.mxu0 0.0
    %2656 = vmatprep.subr.mxu0 0.0
    %2657 = vmatpush1.xpose.msra.mxu0 0.0
    %2658 = vmatprep.subr.mxu0 0.0
    %2659 = vmatpush1.xpose.msra.mxu0 0.0
    %2660 = vmatprep.subr.mxu0 0.0
    %2661 = vmatpush1.xpose.msra.mxu0 0.0
    %2662 = vmatprep.subr.mxu0 0.0
    %2663 = vmatpush1.xpose.msra.mxu0 0.0
    %2664 = vmatprep.subr.mxu0 0.0
    %2665 = vmatpush1.xpose.msra.mxu0 0.0
    %2666 = vmatprep.subr.mxu0 0.0
    %2667 = vmatpush1.xpose.msra.mxu0 0.0
    %2668 = vmatprep.subr.mxu0 0.0
    %2669 = vmatpush1.xpose.msra.mxu0 0.0
    %2670 = vmatprep.subr.mxu0 0.0
    %2671 = vmatpush1.xpose.msra.mxu0 0.0
    %2672 = vmatprep.subr.mxu0 0.0
    %2673 = vmatpush1.xpose.msra.mxu0 0.0
    %2674 = vmatprep.subr.mxu0 0.0
    %2675 = vmatpush1.xpose.msra.mxu0 0.0
    %2676 = vmatprep.subr.mxu0 0.0
    %2677 = vmatpush1.xpose.msra.mxu0 0.0
    %2678 = vmatprep.subr.mxu0 0.0
    %2679 = vmatpush1.xpose.msra.mxu0 0.0
    %2680 = vmatprep.subr.mxu0 0.0
    %2681 = vmatpush1.xpose.msra.mxu0 0.0
    %2682 = vmatprep.subr.mxu0 0.0
    %2683 = vmatpush1.xpose.msra.mxu0 0.0
    %2684 = vmatprep.subr.mxu0 0.0
    %2685 = vmatpush1.xpose.msra.mxu0 0.0
    %2686 = vmatprep.subr.mxu0 0.0
    %2687 = vmatpush1.xpose.msra.mxu0 0.0
    %2688 = vmatprep.subr.mxu0 0.0
    %2689 = vmatpush1.xpose.msra.mxu0 0.0
    %2690 = vmatprep.subr.mxu0 0.0
    %2691 = vmatpush1.xpose.msra.mxu0 0.0
    %2692 = vmatprep.subr.mxu0 0.0
    %2693 = vmatpush1.xpose.msra.mxu0 0.0
    %2694 = vmatprep.subr.mxu0 0.0
    %2695 = vmatpush1.xpose.msra.mxu0 0.0
    %2696 = vmatprep.mubr.f32.mxu0 0.0
    %2697 = vmatmul.mubr.f32.gmra.mrb[0].mxu0 %v2624
    %v2698 = vpop.f32.mrb[0].mxu0
    %v2699 = vadd.f32 0.0, %v2698
    %v2700 = vpop.f32.mrb[0].mxu0
    %2701 = vmatprep.mubr.f32.mxu0 0.0
    %2702 = vmatmul.mubr.f32.gmra.mrb[0].mxu0 %v2626
    %v2703 = vpop.f32.mrb[0].mxu0
    %v2704 = vadd.f32 0.0, %v2703
    %v2705 = vpop.f32.mrb[0].mxu0
    %2706 = vdwg.mxu0
    %2707 = vrot.lane.b32.xlu0 %v338, 96
    %v2708 = vpop.permute.xlu0 %2707
    %2709 = vrot.lane.b32.xlu0 %v340, 96
    %v2710 = vpop.permute.xlu0 %2709
    %v2711 = vsel %vm361, %v338, 0
    %v2713 = vsel %vm361, %v340, 0
    %v2715 = vsel %vm361, %v2708, 0
    %v2717 = vsel %vm361, %v2710, 0
    %2719 = vmatprep.subr.mxu0 0.0
    %2720 = vmatpush1.xpose.msra.mxu0 %v2715
    %2721 = vmatprep.subr.mxu0 0.0
    %2722 = vmatpush1.xpose.msra.mxu0 %v2717
    %2723 = vmatprep.subr.mxu0 0.0
    %2724 = vmatpush1.xpose.msra.mxu0 0.0
    %2725 = vmatprep.subr.mxu0 0.0
    %2726 = vmatpush1.xpose.msra.mxu0 0.0
    %2727 = vmatprep.subr.mxu0 0.0
    %2728 = vmatpush1.xpose.msra.mxu0 0.0
    %2729 = vmatprep.subr.mxu0 0.0
    %2730 = vmatpush1.xpose.msra.mxu0 0.0
    %2731 = vmatprep.subr.mxu0 0.0
    %2732 = vmatpush1.xpose.msra.mxu0 0.0
    %2733 = vmatprep.subr.mxu0 0.0
    %2734 = vmatpush1.xpose.msra.mxu0 0.0
    %2735 = vmatprep.subr.mxu0 0.0
    %2736 = vmatpush1.xpose.msra.mxu0 0.0
    %2737 = vmatprep.subr.mxu0 0.0
    %2738 = vmatpush1.xpose.msra.mxu0 0.0
    %2739 = vmatprep.subr.mxu0 0.0
    %2740 = vmatpush1.xpose.msra.mxu0 0.0
    %2741 = vmatprep.subr.mxu0 0.0
    %2742 = vmatpush1.xpose.msra.mxu0 0.0
    %2743 = vmatprep.subr.mxu0 0.0
    %2744 = vmatpush1.xpose.msra.mxu0 0.0
    %2745 = vmatprep.subr.mxu0 0.0
    %2746 = vmatpush1.xpose.msra.mxu0 0.0
    %2747 = vmatprep.subr.mxu0 0.0
    %2748 = vmatpush1.xpose.msra.mxu0 0.0
    %2749 = vmatprep.subr.mxu0 0.0
    %2750 = vmatpush1.xpose.msra.mxu0 0.0
    %2751 = vmatprep.subr.mxu0 0.0
    %2752 = vmatpush1.xpose.msra.mxu0 0.0
    %2753 = vmatprep.subr.mxu0 0.0
    %2754 = vmatpush1.xpose.msra.mxu0 0.0
    %2755 = vmatprep.subr.mxu0 0.0
    %2756 = vmatpush1.xpose.msra.mxu0 0.0
    %2757 = vmatprep.subr.mxu0 0.0
    %2758 = vmatpush1.xpose.msra.mxu0 0.0
    %2759 = vmatprep.subr.mxu0 0.0
    %2760 = vmatpush1.xpose.msra.mxu0 0.0
    %2761 = vmatprep.subr.mxu0 0.0
    %2762 = vmatpush1.xpose.msra.mxu0 0.0
    %2763 = vmatprep.subr.mxu0 0.0
    %2764 = vmatpush1.xpose.msra.mxu0 0.0
    %2765 = vmatprep.subr.mxu0 0.0
    %2766 = vmatpush1.xpose.msra.mxu0 0.0
    %2767 = vmatprep.subr.mxu0 0.0
    %2768 = vmatpush1.xpose.msra.mxu0 0.0
    %2769 = vmatprep.subr.mxu0 0.0
    %2770 = vmatpush1.xpose.msra.mxu0 0.0
    %2771 = vmatprep.subr.mxu0 0.0
    %2772 = vmatpush1.xpose.msra.mxu0 0.0
    %2773 = vmatprep.subr.mxu0 0.0
    %2774 = vmatpush1.xpose.msra.mxu0 0.0
    %2775 = vmatprep.subr.mxu0 0.0
    %2776 = vmatpush1.xpose.msra.mxu0 0.0
    %2777 = vmatprep.subr.mxu0 0.0
    %2778 = vmatpush1.xpose.msra.mxu0 0.0
    %2779 = vmatprep.subr.mxu0 0.0
    %2780 = vmatpush1.xpose.msra.mxu0 0.0
    %2781 = vmatprep.subr.mxu0 0.0
    %2782 = vmatpush1.xpose.msra.mxu0 0.0
    %2783 = vmatprep.mubr.f32.mxu0 0.0
    %2784 = vmatmul.mubr.f32.gmra.mrb[0].mxu0 %v2711
    %v2785 = vpop.f32.mrb[0].mxu0
    %v2786 = vadd.f32 0.0, %v2785
    %v2787 = vpop.f32.mrb[0].mxu0
    %2788 = vmatprep.mubr.f32.mxu0 0.0
    %2789 = vmatmul.mubr.f32.gmra.mrb[0].mxu0 %v2713
    %v2790 = vpop.f32.mrb[0].mxu0
    %v2791 = vadd.f32 0.0, %v2790
    %v2792 = vpop.f32.mrb[0].mxu0
    %2793 = vdwg.mxu0
    %2794 = vrot.lane.b32.xlu0 %v342, 96
    %v2795 = vpop.permute.xlu0 %2794
    %2796 = vrot.lane.b32.xlu0 %v344, 96
    %v2797 = vpop.permute.xlu0 %2796
    %v2798 = vsel %vm361, %v342, 0
    %v2800 = vsel %vm361, %v344, 0
    %v2802 = vsel %vm361, %v2795, 0
    %v2804 = vsel %vm361, %v2797, 0
    %2806 = vmatprep.subr.mxu0 0.0
    %2807 = vmatpush1.xpose.msra.mxu0 %v2802
    %2808 = vmatprep.subr.mxu0 0.0
    %2809 = vmatpush1.xpose.msra.mxu0 %v2804
    %2810 = vmatprep.subr.mxu0 0.0
    %2811 = vmatpush1.xpose.msra.mxu0 0.0
    %2812 = vmatprep.subr.mxu0 0.0
    %2813 = vmatpush1.xpose.msra.mxu0 0.0
    %2814 = vmatprep.subr.mxu0 0.0
    %2815 = vmatpush1.xpose.msra.mxu0 0.0
    %2816 = vmatprep.subr.mxu0 0.0
    %2817 = vmatpush1.xpose.msra.mxu0 0.0
    %2818 = vmatprep.subr.mxu0 0.0
    %2819 = vmatpush1.xpose.msra.mxu0 0.0
    %2820 = vmatprep.subr.mxu0 0.0
    %2821 = vmatpush1.xpose.msra.mxu0 0.0
    %2822 = vmatprep.subr.mxu0 0.0
    %2823 = vmatpush1.xpose.msra.mxu0 0.0
    %2824 = vmatprep.subr.mxu0 0.0
    %2825 = vmatpush1.xpose.msra.mxu0 0.0
    %2826 = vmatprep.subr.mxu0 0.0
    %2827 = vmatpush1.xpose.msra.mxu0 0.0
    %2828 = vmatprep.subr.mxu0 0.0
    %2829 = vmatpush1.xpose.msra.mxu0 0.0
    %2830 = vmatprep.subr.mxu0 0.0
    %2831 = vmatpush1.xpose.msra.mxu0 0.0
    %2832 = vmatprep.subr.mxu0 0.0
    %2833 = vmatpush1.xpose.msra.mxu0 0.0
    %2834 = vmatprep.subr.mxu0 0.0
    %2835 = vmatpush1.xpose.msra.mxu0 0.0
    %2836 = vmatprep.subr.mxu0 0.0
    %2837 = vmatpush1.xpose.msra.mxu0 0.0
    %2838 = vmatprep.subr.mxu0 0.0
    %2839 = vmatpush1.xpose.msra.mxu0 0.0
    %2840 = vmatprep.subr.mxu0 0.0
    %2841 = vmatpush1.xpose.msra.mxu0 0.0
    %2842 = vmatprep.subr.mxu0 0.0
    %2843 = vmatpush1.xpose.msra.mxu0 0.0
    %2844 = vmatprep.subr.mxu0 0.0
    %2845 = vmatpush1.xpose.msra.mxu0 0.0
    %2846 = vmatprep.subr.mxu0 0.0
    %2847 = vmatpush1.xpose.msra.mxu0 0.0
    %2848 = vmatprep.subr.mxu0 0.0
    %2849 = vmatpush1.xpose.msra.mxu0 0.0
    %2850 = vmatprep.subr.mxu0 0.0
    %2851 = vmatpush1.xpose.msra.mxu0 0.0
    %2852 = vmatprep.subr.mxu0 0.0
    %2853 = vmatpush1.xpose.msra.mxu0 0.0
    %2854 = vmatprep.subr.mxu0 0.0
    %2855 = vmatpush1.xpose.msra.mxu0 0.0
    %2856 = vmatprep.subr.mxu0 0.0
    %2857 = vmatpush1.xpose.msra.mxu0 0.0
    %2858 = vmatprep.subr.mxu0 0.0
    %2859 = vmatpush1.xpose.msra.mxu0 0.0
    %2860 = vmatprep.subr.mxu0 0.0
    %2861 = vmatpush1.xpose.msra.mxu0 0.0
    %2862 = vmatprep.subr.mxu0 0.0
    %2863 = vmatpush1.xpose.msra.mxu0 0.0
    %2864 = vmatprep.subr.mxu0 0.0
    %2865 = vmatpush1.xpose.msra.mxu0 0.0
    %2866 = vmatprep.subr.mxu0 0.0
    %2867 = vmatpush1.xpose.msra.mxu0 0.0
    %2868 = vmatprep.subr.mxu0 0.0
    %2869 = vmatpush1.xpose.msra.mxu0 0.0
    %2870 = vmatprep.mubr.f32.mxu0 0.0
    %2871 = vmatmul.mubr.f32.gmra.mrb[0].mxu0 %v2798
    %v2872 = vpop.f32.mrb[0].mxu0
    %v2873 = vadd.f32 0.0, %v2872
    %v2874 = vpop.f32.mrb[0].mxu0
    %2875 = vmatprep.mubr.f32.mxu0 0.0
    %2876 = vmatmul.mubr.f32.gmra.mrb[0].mxu0 %v2800
    %v2877 = vpop.f32.mrb[0].mxu0
    %v2878 = vadd.f32 0.0, %v2877
    %v2879 = vpop.f32.mrb[0].mxu0
    %2880 = vdwg.mxu0
    %2881 = vrot.lane.b32.xlu0 %v346, 96
    %v2882 = vpop.permute.xlu0 %2881
    %2883 = vrot.lane.b32.xlu0 %v348, 96
    %v2884 = vpop.permute.xlu0 %2883
    %v2885 = vsel %vm361, %v346, 0
    %v2887 = vsel %vm361, %v348, 0
    %v2889 = vsel %vm361, %v2882, 0
    %v2891 = vsel %vm361, %v2884, 0
    %2893 = vmatprep.subr.mxu0 0.0
    %2894 = vmatpush1.xpose.msra.mxu0 %v2889
    %2895 = vmatprep.subr.mxu0 0.0
    %2896 = vmatpush1.xpose.msra.mxu0 %v2891
    %2897 = vmatprep.subr.mxu0 0.0
    %2898 = vmatpush1.xpose.msra.mxu0 0.0
    %2899 = vmatprep.subr.mxu0 0.0
    %2900 = vmatpush1.xpose.msra.mxu0 0.0
    %2901 = vmatprep.subr.mxu0 0.0
    %2902 = vmatpush1.xpose.msra.mxu0 0.0
    %2903 = vmatprep.subr.mxu0 0.0
    %2904 = vmatpush1.xpose.msra.mxu0 0.0
    %2905 = vmatprep.subr.mxu0 0.0
    %2906 = vmatpush1.xpose.msra.mxu0 0.0
    %2907 = vmatprep.subr.mxu0 0.0
    %2908 = vmatpush1.xpose.msra.mxu0 0.0
    %2909 = vmatprep.subr.mxu0 0.0
    %2910 = vmatpush1.xpose.msra.mxu0 0.0
    %2911 = vmatprep.subr.mxu0 0.0
    %2912 = vmatpush1.xpose.msra.mxu0 0.0
    %2913 = vmatprep.subr.mxu0 0.0
    %2914 = vmatpush1.xpose.msra.mxu0 0.0
    %2915 = vmatprep.subr.mxu0 0.0
    %2916 = vmatpush1.xpose.msra.mxu0 0.0
    %2917 = vmatprep.subr.mxu0 0.0
    %2918 = vmatpush1.xpose.msra.mxu0 0.0
    %2919 = vmatprep.subr.mxu0 0.0
    %2920 = vmatpush1.xpose.msra.mxu0 0.0
    %2921 = vmatprep.subr.mxu0 0.0
    %2922 = vmatpush1.xpose.msra.mxu0 0.0
    %2923 = vmatprep.subr.mxu0 0.0
    %2924 = vmatpush1.xpose.msra.mxu0 0.0
    %2925 = vmatprep.subr.mxu0 0.0
    %2926 = vmatpush1.xpose.msra.mxu0 0.0
    %2927 = vmatprep.subr.mxu0 0.0
    %2928 = vmatpush1.xpose.msra.mxu0 0.0
    %2929 = vmatprep.subr.mxu0 0.0
    %2930 = vmatpush1.xpose.msra.mxu0 0.0
    %2931 = vmatprep.subr.mxu0 0.0
    %2932 = vmatpush1.xpose.msra.mxu0 0.0
    %2933 = vmatprep.subr.mxu0 0.0
    %2934 = vmatpush1.xpose.msra.mxu0 0.0
    %2935 = vmatprep.subr.mxu0 0.0
    %2936 = vmatpush1.xpose.msra.mxu0 0.0
    %2937 = vmatprep.subr.mxu0 0.0
    %2938 = vmatpush1.xpose.msra.mxu0 0.0
    %2939 = vmatprep.subr.mxu0 0.0
    %2940 = vmatpush1.xpose.msra.mxu0 0.0
    %2941 = vmatprep.subr.mxu0 0.0
    %2942 = vmatpush1.xpose.msra.mxu0 0.0
    %2943 = vmatprep.subr.mxu0 0.0
    %2944 = vmatpush1.xpose.msra.mxu0 0.0
    %2945 = vmatprep.subr.mxu0 0.0
    %2946 = vmatpush1.xpose.msra.mxu0 0.0
    %2947 = vmatprep.subr.mxu0 0.0
    %2948 = vmatpush1.xpose.msra.mxu0 0.0
    %2949 = vmatprep.subr.mxu0 0.0
    %2950 = vmatpush1.xpose.msra.mxu0 0.0
    %2951 = vmatprep.subr.mxu0 0.0
    %2952 = vmatpush1.xpose.msra.mxu0 0.0
    %2953 = vmatprep.subr.mxu0 0.0
    %2954 = vmatpush1.xpose.msra.mxu0 0.0
    %2955 = vmatprep.subr.mxu0 0.0
    %2956 = vmatpush1.xpose.msra.mxu0 0.0
    %2957 = vmatprep.mubr.f32.mxu0 0.0
    %2958 = vmatmul.mubr.f32.gmra.mrb[0].mxu0 %v2885
    %v2959 = vpop.f32.mrb[0].mxu0
    %v2960 = vadd.f32 0.0, %v2959
    %v2961 = vpop.f32.mrb[0].mxu0
    %2962 = vmatprep.mubr.f32.mxu0 0.0
    %2963 = vmatmul.mubr.f32.gmra.mrb[0].mxu0 %v2887
    %v2964 = vpop.f32.mrb[0].mxu0
    %v2965 = vadd.f32 0.0, %v2964
    %v2966 = vpop.f32.mrb[0].mxu0
    %2967 = vdwg.mxu0
    %2968 = vrot.lane.b32.xlu0 %v350, 96
    %v2969 = vpop.permute.xlu0 %2968
    %2970 = vrot.lane.b32.xlu0 %v352, 96
    %v2971 = vpop.permute.xlu0 %2970
    %v2972 = vsel %vm361, %v350, 0
    %v2974 = vsel %vm361, %v352, 0
    %v2976 = vsel %vm361, %v2969, 0
    %v2978 = vsel %vm361, %v2971, 0
    %2980 = vmatprep.subr.mxu0 0.0
    %2981 = vmatpush1.xpose.msra.mxu0 %v2976
    %2982 = vmatprep.subr.mxu0 0.0
    %2983 = vmatpush1.xpose.msra.mxu0 %v2978
    %2984 = vmatprep.subr.mxu0 0.0
    %2985 = vmatpush1.xpose.msra.mxu0 0.0
    %2986 = vmatprep.subr.mxu0 0.0
    %2987 = vmatpush1.xpose.msra.mxu0 0.0
    %2988 = vmatprep.subr.mxu0 0.0
    %2989 = vmatpush1.xpose.msra.mxu0 0.0
    %2990 = vmatprep.subr.mxu0 0.0
    %2991 = vmatpush1.xpose.msra.mxu0 0.0
    %2992 = vmatprep.subr.mxu0 0.0
    %2993 = vmatpush1.xpose.msra.mxu0 0.0
    %2994 = vmatprep.subr.mxu0 0.0
    %2995 = vmatpush1.xpose.msra.mxu0 0.0
    %2996 = vmatprep.subr.mxu0 0.0
    %2997 = vmatpush1.xpose.msra.mxu0 0.0
    %2998 = vmatprep.subr.mxu0 0.0
    %2999 = vmatpush1.xpose.msra.mxu0 0.0
    %3000 = vmatprep.subr.mxu0 0.0
    %3001 = vmatpush1.xpose.msra.mxu0 0.0
    %3002 = vmatprep.subr.mxu0 0.0
    %3003 = vmatpush1.xpose.msra.mxu0 0.0
    %3004 = vmatprep.subr.mxu0 0.0
    %3005 = vmatpush1.xpose.msra.mxu0 0.0
    %3006 = vmatprep.subr.mxu0 0.0
    %3007 = vmatpush1.xpose.msra.mxu0 0.0
    %3008 = vmatprep.subr.mxu0 0.0
    %3009 = vmatpush1.xpose.msra.mxu0 0.0
    %3010 = vmatprep.subr.mxu0 0.0
    %3011 = vmatpush1.xpose.msra.mxu0 0.0
    %3012 = vmatprep.subr.mxu0 0.0
    %3013 = vmatpush1.xpose.msra.mxu0 0.0
    %3014 = vmatprep.subr.mxu0 0.0
    %3015 = vmatpush1.xpose.msra.mxu0 0.0
    %3016 = vmatprep.subr.mxu0 0.0
    %3017 = vmatpush1.xpose.msra.mxu0 0.0
    %3018 = vmatprep.subr.mxu0 0.0
    %3019 = vmatpush1.xpose.msra.mxu0 0.0
    %3020 = vmatprep.subr.mxu0 0.0
    %3021 = vmatpush1.xpose.msra.mxu0 0.0
    %3022 = vmatprep.subr.mxu0 0.0
    %3023 = vmatpush1.xpose.msra.mxu0 0.0
    %3024 = vmatprep.subr.mxu0 0.0
    %3025 = vmatpush1.xpose.msra.mxu0 0.0
    %3026 = vmatprep.subr.mxu0 0.0
    %3027 = vmatpush1.xpose.msra.mxu0 0.0
    %3028 = vmatprep.subr.mxu0 0.0
    %3029 = vmatpush1.xpose.msra.mxu0 0.0
    %3030 = vmatprep.subr.mxu0 0.0
    %3031 = vmatpush1.xpose.msra.mxu0 0.0
    %3032 = vmatprep.subr.mxu0 0.0
    %3033 = vmatpush1.xpose.msra.mxu0 0.0
    %3034 = vmatprep.subr.mxu0 0.0
    %3035 = vmatpush1.xpose.msra.mxu0 0.0
    %3036 = vmatprep.subr.mxu0 0.0
    %3037 = vmatpush1.xpose.msra.mxu0 0.0
    %3038 = vmatprep.subr.mxu0 0.0
    %3039 = vmatpush1.xpose.msra.mxu0 0.0
    %3040 = vmatprep.subr.mxu0 0.0
    %3041 = vmatpush1.xpose.msra.mxu0 0.0
    %3042 = vmatprep.subr.mxu0 0.0
    %3043 = vmatpush1.xpose.msra.mxu0 0.0
    %3044 = vmatprep.mubr.f32.mxu0 0.0
    %3045 = vmatmul.mubr.f32.gmra.mrb[0].mxu0 %v2972
    %v3046 = vpop.f32.mrb[0].mxu0
    %v3047 = vadd.f32 0.0, %v3046
    %v3048 = vpop.f32.mrb[0].mxu0
    %3049 = vmatprep.mubr.f32.mxu0 0.0
    %3050 = vmatmul.mubr.f32.gmra.mrb[0].mxu0 %v2974
    %v3051 = vpop.f32.mrb[0].mxu0
    %v3052 = vadd.f32 0.0, %v3051
    %v3053 = vpop.f32.mrb[0].mxu0
    %3054 = vdwg.mxu0
    %3055 = vrot.lane.b32.xlu0 %v354, 96
    %v3056 = vpop.permute.xlu0 %3055
    %3057 = vrot.lane.b32.xlu0 %v356, 96
    %v3058 = vpop.permute.xlu0 %3057
    %v3059 = vsel %vm361, %v354, 0
    %v3061 = vsel %vm361, %v356, 0
    %v3063 = vsel %vm361, %v3056, 0
    %v3065 = vsel %vm361, %v3058, 0
    %3067 = vmatprep.subr.mxu0 0.0
    %3068 = vmatpush1.xpose.msra.mxu0 %v3063
    %3069 = vmatprep.subr.mxu0 0.0
    %3070 = vmatpush1.xpose.msra.mxu0 %v3065
    %3071 = vmatprep.subr.mxu0 0.0
    %3072 = vmatpush1.xpose.msra.mxu0 0.0
    %3073 = vmatprep.subr.mxu0 0.0
    %3074 = vmatpush1.xpose.msra.mxu0 0.0
    %3075 = vmatprep.subr.mxu0 0.0
    %3076 = vmatpush1.xpose.msra.mxu0 0.0
    %3077 = vmatprep.subr.mxu0 0.0
    %3078 = vmatpush1.xpose.msra.mxu0 0.0
    %3079 = vmatprep.subr.mxu0 0.0
    %3080 = vmatpush1.xpose.msra.mxu0 0.0
    %3081 = vmatprep.subr.mxu0 0.0
    %3082 = vmatpush1.xpose.msra.mxu0 0.0
    %3083 = vmatprep.subr.mxu0 0.0
    %3084 = vmatpush1.xpose.msra.mxu0 0.0
    %3085 = vmatprep.subr.mxu0 0.0
    %3086 = vmatpush1.xpose.msra.mxu0 0.0
    %3087 = vmatprep.subr.mxu0 0.0
    %3088 = vmatpush1.xpose.msra.mxu0 0.0
    %3089 = vmatprep.subr.mxu0 0.0
    %3090 = vmatpush1.xpose.msra.mxu0 0.0
    %3091 = vmatprep.subr.mxu0 0.0
    %3092 = vmatpush1.xpose.msra.mxu0 0.0
    %3093 = vmatprep.subr.mxu0 0.0
    %3094 = vmatpush1.xpose.msra.mxu0 0.0
    %3095 = vmatprep.subr.mxu0 0.0
    %3096 = vmatpush1.xpose.msra.mxu0 0.0
    %3097 = vmatprep.subr.mxu0 0.0
    %3098 = vmatpush1.xpose.msra.mxu0 0.0
    %3099 = vmatprep.subr.mxu0 0.0
    %3100 = vmatpush1.xpose.msra.mxu0 0.0
    %3101 = vmatprep.subr.mxu0 0.0
    %3102 = vmatpush1.xpose.msra.mxu0 0.0
    %3103 = vmatprep.subr.mxu0 0.0
    %3104 = vmatpush1.xpose.msra.mxu0 0.0
    %3105 = vmatprep.subr.mxu0 0.0
    %3106 = vmatpush1.xpose.msra.mxu0 0.0
    %3107 = vmatprep.subr.mxu0 0.0
    %3108 = vmatpush1.xpose.msra.mxu0 0.0
    %3109 = vmatprep.subr.mxu0 0.0
    %3110 = vmatpush1.xpose.msra.mxu0 0.0
    %3111 = vmatprep.subr.mxu0 0.0
    %3112 = vmatpush1.xpose.msra.mxu0 0.0
    %3113 = vmatprep.subr.mxu0 0.0
    %3114 = vmatpush1.xpose.msra.mxu0 0.0
    %3115 = vmatprep.subr.mxu0 0.0
    %3116 = vmatpush1.xpose.msra.mxu0 0.0
    %3117 = vmatprep.subr.mxu0 0.0
    %3118 = vmatpush1.xpose.msra.mxu0 0.0
    %3119 = vmatprep.subr.mxu0 0.0
    %3120 = vmatpush1.xpose.msra.mxu0 0.0
    %3121 = vmatprep.subr.mxu0 0.0
    %3122 = vmatpush1.xpose.msra.mxu0 0.0
    %3123 = vmatprep.subr.mxu0 0.0
    %3124 = vmatpush1.xpose.msra.mxu0 0.0
    %3125 = vmatprep.subr.mxu0 0.0
    %3126 = vmatpush1.xpose.msra.mxu0 0.0
    %3127 = vmatprep.subr.mxu0 0.0
    %3128 = vmatpush1.xpose.msra.mxu0 0.0
    %3129 = vmatprep.subr.mxu0 0.0
    %3130 = vmatpush1.xpose.msra.mxu0 0.0
    %3131 = vmatprep.mubr.f32.mxu0 0.0
    %3132 = vmatmul.mubr.f32.gmra.mrb[0].mxu0 %v3059
    %v3133 = vpop.f32.mrb[0].mxu0
    %v3134 = vadd.f32 0.0, %v3133
    %v3135 = vpop.f32.mrb[0].mxu0
    %3136 = vmatprep.mubr.f32.mxu0 0.0
    %3137 = vmatmul.mubr.f32.gmra.mrb[0].mxu0 %v3061
    %v3138 = vpop.f32.mrb[0].mxu0
    %v3139 = vadd.f32 0.0, %v3138
    %v3140 = vpop.f32.mrb[0].mxu0
    %3141 = vdwg.mxu0
    %v3142 = vld [vmem:[%s5] sm:$0xff]
    %v3143 = vld [vmem:[%s5 + $0x8] sm:$0xff]
    %v3144 = vld [vmem:[%s5 + $0x10] sm:$0xff]
    %v3145 = vld [vmem:[%s5 + $0x18] sm:$0xff]
    %v3146 = vld [vmem:[%s5 + $0x20] sm:$0xff]
    %v3147 = vld [vmem:[%s5 + $0x28] sm:$0xff]
    %v3148 = vld [vmem:[%s5 + $0x30] sm:$0xff]
    %v3149 = vld [vmem:[%s5 + $0x38] sm:$0xff]
    %v3150 = vadd.f32 %v437, %v3142
    %v3151 = vadd.f32 %v442, %v3143
    %v3152 = vadd.f32 %v524, %v3142
    %v3153 = vadd.f32 %v529, %v3143
    %v3154 = vadd.f32 %v611, %v3142
    %v3155 = vadd.f32 %v616, %v3143
    %v3156 = vadd.f32 %v698, %v3142
    %v3157 = vadd.f32 %v703, %v3143
    %v3158 = vadd.f32 %v785, %v3142
    %v3159 = vadd.f32 %v790, %v3143
    %v3160 = vadd.f32 %v872, %v3142
    %v3161 = vadd.f32 %v877, %v3143
    %v3162 = vadd.f32 %v959, %v3142
    %v3163 = vadd.f32 %v964, %v3143
    %v3164 = vadd.f32 %v1046, %v3142
    %v3165 = vadd.f32 %v1051, %v3143
    %v3166 = vadd.f32 %v1133, %v3144
    %v3167 = vadd.f32 %v1138, %v3145
    %v3168 = vadd.f32 %v1220, %v3144
    %v3169 = vadd.f32 %v1225, %v3145
    %v3170 = vadd.f32 %v1307, %v3144
    %v3171 = vadd.f32 %v1312, %v3145
    %v3172 = vadd.f32 %v1394, %v3144
    %v3173 = vadd.f32 %v1399, %v3145
    %v3174 = vadd.f32 %v1481, %v3144
    %v3175 = vadd.f32 %v1486, %v3145
    %v3176 = vadd.f32 %v1568, %v3144
    %v3177 = vadd.f32 %v1573, %v3145
    %v3178 = vadd.f32 %v1655, %v3144
    %v3179 = vadd.f32 %v1660, %v3145
    %v3180 = vadd.f32 %v1742, %v3144
    %v3181 = vadd.f32 %v1747, %v3145
    %v3182 = vadd.f32 %v1829, %v3146
    %v3183 = vadd.f32 %v1834, %v3147
    %v3184 = vadd.f32 %v1916, %v3146
    %v3185 = vadd.f32 %v1921, %v3147
    %v3186 = vadd.f32 %v2003, %v3146
    %v3187 = vadd.f32 %v2008, %v3147
    %v3188 = vadd.f32 %v2090, %v3146
    %v3189 = vadd.f32 %v2095, %v3147
    %v3190 = vadd.f32 %v2177, %v3146
    %v3191 = vadd.f32 %v2182, %v3147
    %v3192 = vadd.f32 %v2264, %v3146
    %v3193 = vadd.f32 %v2269, %v3147
    %v3194 = vadd.f32 %v2351, %v3146
    %v3195 = vadd.f32 %v2356, %v3147
    %v3196 = vadd.f32 %v2438, %v3146
    %v3197 = vadd.f32 %v2443, %v3147
    %v3198 = vadd.f32 %v2525, %v3148
    %v3199 = vadd.f32 %v2530, %v3149
    %v3200 = vadd.f32 %v2612, %v3148
    %v3201 = vadd.f32 %v2617, %v3149
    %v3202 = vadd.f32 %v2699, %v3148
    %v3203 = vadd.f32 %v2704, %v3149
    %v3204 = vadd.f32 %v2786, %v3148
    %v3205 = vadd.f32 %v2791, %v3149
    %v3206 = vadd.f32 %v2873, %v3148
    %v3207 = vadd.f32 %v2878, %v3149
    %v3208 = vadd.f32 %v2960, %v3148
    %v3209 = vadd.f32 %v2965, %v3149
    %v3210 = vadd.f32 %v3047, %v3148
    %v3211 = vadd.f32 %v3052, %v3149
    %v3212 = vadd.f32 %v3134, %v3148
    %v3213 = vadd.f32 %v3139, %v3149
    %vm3214 = vcmask 130048
    %v3215 = vsel %vm3214, %v3150, -inf
    %3216 = vmax.xlane.f32.xlu0 %v3215
    %v3217 = vpop.xlane.xlu0 %3216
    %v3218 = vsel %vm3214, %v3151, -inf
    %3219 = vmax.xlane.f32.xlu0 %v3218
    %v3220 = vpop.xlane.xlu0 %3219
    %v3221 = vsel %vm3214, %v3152, -inf
    %3222 = vmax.xlane.f32.xlu0 %v3221
    %v3223 = vpop.xlane.xlu0 %3222
    %v3224 = vsel %vm3214, %v3153, -inf
    %3225 = vmax.xlane.f32.xlu0 %v3224
    %v3226 = vpop.xlane.xlu0 %3225
    %v3227 = vsel %vm3214, %v3154, -inf
    %3228 = vmax.xlane.f32.xlu0 %v3227
    %v3229 = vpop.xlane.xlu0 %3228
    %v3230 = vsel %vm3214, %v3155, -inf
    %3231 = vmax.xlane.f32.xlu0 %v3230
    %v3232 = vpop.xlane.xlu0 %3231
    %v3233 = vsel %vm3214, %v3156, -inf
    %3234 = vmax.xlane.f32.xlu0 %v3233
    %v3235 = vpop.xlane.xlu0 %3234
    %v3236 = vsel %vm3214, %v3157, -inf
    %3237 = vmax.xlane.f32.xlu0 %v3236
    %v3238 = vpop.xlane.xlu0 %3237
    %v3239 = vsel %vm3214, %v3158, -inf
    %3240 = vmax.xlane.f32.xlu0 %v3239
    %v3241 = vpop.xlane.xlu0 %3240
    %v3242 = vsel %vm3214, %v3159, -inf
    %3243 = vmax.xlane.f32.xlu0 %v3242
    %v3244 = vpop.xlane.xlu0 %3243
    %v3245 = vsel %vm3214, %v3160, -inf
    %3246 = vmax.xlane.f32.xlu0 %v3245
    %v3247 = vpop.xlane.xlu0 %3246
    %v3248 = vsel %vm3214, %v3161, -inf
    %3249 = vmax.xlane.f32.xlu0 %v3248
    %v3250 = vpop.xlane.xlu0 %3249
    %v3251 = vsel %vm3214, %v3162, -inf
    %3252 = vmax.xlane.f32.xlu0 %v3251
    %v3253 = vpop.xlane.xlu0 %3252
    %v3254 = vsel %vm3214, %v3163, -inf
    %3255 = vmax.xlane.f32.xlu0 %v3254
    %v3256 = vpop.xlane.xlu0 %3255
    %v3257 = vsel %vm3214, %v3164, -inf
    %3258 = vmax.xlane.f32.xlu0 %v3257
    %v3259 = vpop.xlane.xlu0 %3258
    %v3260 = vsel %vm3214, %v3165, -inf
    %3261 = vmax.xlane.f32.xlu0 %v3260
    %v3262 = vpop.xlane.xlu0 %3261
    %v3263 = vsel %vm3214, %v3166, -inf
    %3264 = vmax.xlane.f32.xlu0 %v3263
    %v3265 = vpop.xlane.xlu0 %3264
    %v3266 = vsel %vm3214, %v3167, -inf
    %3267 = vmax.xlane.f32.xlu0 %v3266
    %v3268 = vpop.xlane.xlu0 %3267
    %v3269 = vsel %vm3214, %v3168, -inf
    %3270 = vmax.xlane.f32.xlu0 %v3269
    %v3271 = vpop.xlane.xlu0 %3270
    %v3272 = vsel %vm3214, %v3169, -inf
    %3273 = vmax.xlane.f32.xlu0 %v3272
    %v3274 = vpop.xlane.xlu0 %3273
    %v3275 = vsel %vm3214, %v3170, -inf
    %3276 = vmax.xlane.f32.xlu0 %v3275
    %v3277 = vpop.xlane.xlu0 %3276
    %v3278 = vsel %vm3214, %v3171, -inf
    %3279 = vmax.xlane.f32.xlu0 %v3278
    %v3280 = vpop.xlane.xlu0 %3279
    %v3281 = vsel %vm3214, %v3172, -inf
    %3282 = vmax.xlane.f32.xlu0 %v3281
    %v3283 = vpop.xlane.xlu0 %3282
    %v3284 = vsel %vm3214, %v3173, -inf
    %3285 = vmax.xlane.f32.xlu0 %v3284
    %v3286 = vpop.xlane.xlu0 %3285
    %v3287 = vsel %vm3214, %v3174, -inf
    %3288 = vmax.xlane.f32.xlu0 %v3287
    %v3289 = vpop.xlane.xlu0 %3288
    %v3290 = vsel %vm3214, %v3175, -inf
    %3291 = vmax.xlane.f32.xlu0 %v3290
    %v3292 = vpop.xlane.xlu0 %3291
    %v3293 = vsel %vm3214, %v3176, -inf
    %3294 = vmax.xlane.f32.xlu0 %v3293
    %v3295 = vpop.xlane.xlu0 %3294
    %v3296 = vsel %vm3214, %v3177, -inf
    %3297 = vmax.xlane.f32.xlu0 %v3296
    %v3298 = vpop.xlane.xlu0 %3297
    %v3299 = vsel %vm3214, %v3178, -inf
    %3300 = vmax.xlane.f32.xlu0 %v3299
    %v3301 = vpop.xlane.xlu0 %3300
    %v3302 = vsel %vm3214, %v3179, -inf
    %3303 = vmax.xlane.f32.xlu0 %v3302
    %v3304 = vpop.xlane.xlu0 %3303
    %v3305 = vsel %vm3214, %v3180, -inf
    %3306 = vmax.xlane.f32.xlu0 %v3305
    %v3307 = vpop.xlane.xlu0 %3306
    %v3308 = vsel %vm3214, %v3181, -inf
    %3309 = vmax.xlane.f32.xlu0 %v3308
    %v3310 = vpop.xlane.xlu0 %3309
    %v3311 = vsel %vm3214, %v3182, -inf
    %3312 = vmax.xlane.f32.xlu0 %v3311
    %v3313 = vpop.xlane.xlu0 %3312
    %v3314 = vsel %vm3214, %v3183, -inf
    %3315 = vmax.xlane.f32.xlu0 %v3314
    %v3316 = vpop.xlane.xlu0 %3315
    %v3317 = vsel %vm3214, %v3184, -inf
    %3318 = vmax.xlane.f32.xlu0 %v3317
    %v3319 = vpop.xlane.xlu0 %3318
    %v3320 = vsel %vm3214, %v3185, -inf
    %3321 = vmax.xlane.f32.xlu0 %v3320
    %v3322 = vpop.xlane.xlu0 %3321
    %v3323 = vsel %vm3214, %v3186, -inf
    %3324 = vmax.xlane.f32.xlu0 %v3323
    %v3325 = vpop.xlane.xlu0 %3324
    %v3326 = vsel %vm3214, %v3187, -inf
    %3327 = vmax.xlane.f32.xlu0 %v3326
    %v3328 = vpop.xlane.xlu0 %3327
    %v3329 = vsel %vm3214, %v3188, -inf
    %3330 = vmax.xlane.f32.xlu0 %v3329
    %v3331 = vpop.xlane.xlu0 %3330
    %v3332 = vsel %vm3214, %v3189, -inf
    %3333 = vmax.xlane.f32.xlu0 %v3332
    %v3334 = vpop.xlane.xlu0 %3333
    %v3335 = vsel %vm3214, %v3190, -inf
    %3336 = vmax.xlane.f32.xlu0 %v3335
    %v3337 = vpop.xlane.xlu0 %3336
    %v3338 = vsel %vm3214, %v3191, -inf
    %3339 = vmax.xlane.f32.xlu0 %v3338
    %v3340 = vpop.xlane.xlu0 %3339
    %v3341 = vsel %vm3214, %v3192, -inf
    %3342 = vmax.xlane.f32.xlu0 %v3341
    %v3343 = vpop.xlane.xlu0 %3342
    %v3344 = vsel %vm3214, %v3193, -inf
    %3345 = vmax.xlane.f32.xlu0 %v3344
    %v3346 = vpop.xlane.xlu0 %3345
    %v3347 = vsel %vm3214, %v3194, -inf
    %3348 = vmax.xlane.f32.xlu0 %v3347
    %v3349 = vpop.xlane.xlu0 %3348
    %v3350 = vsel %vm3214, %v3195, -inf
    %3351 = vmax.xlane.f32.xlu0 %v3350
    %v3352 = vpop.xlane.xlu0 %3351
    %v3353 = vsel %vm3214, %v3196, -inf
    %3354 = vmax.xlane.f32.xlu0 %v3353
    %v3355 = vpop.xlane.xlu0 %3354
    %v3356 = vsel %vm3214, %v3197, -inf
    %3357 = vmax.xlane.f32.xlu0 %v3356
    %v3358 = vpop.xlane.xlu0 %3357
    %v3359 = vsel %vm3214, %v3198, -inf
    %3360 = vmax.xlane.f32.xlu0 %v3359
    %v3361 = vpop.xlane.xlu0 %3360
    %v3362 = vsel %vm3214, %v3199, -inf
    %3363 = vmax.xlane.f32.xlu0 %v3362
    %v3364 = vpop.xlane.xlu0 %3363
    %v3365 = vsel %vm3214, %v3200, -inf
    %3366 = vmax.xlane.f32.xlu0 %v3365
    %v3367 = vpop.xlane.xlu0 %3366
    %v3368 = vsel %vm3214, %v3201, -inf
    %3369 = vmax.xlane.f32.xlu0 %v3368
    %v3370 = vpop.xlane.xlu0 %3369
    %v3371 = vsel %vm3214, %v3202, -inf
    %3372 = vmax.xlane.f32.xlu0 %v3371
    %v3373 = vpop.xlane.xlu0 %3372
    %v3374 = vsel %vm3214, %v3203, -inf
    %3375 = vmax.xlane.f32.xlu0 %v3374
    %v3376 = vpop.xlane.xlu0 %3375
    %v3377 = vsel %vm3214, %v3204, -inf
    %3378 = vmax.xlane.f32.xlu0 %v3377
    %v3379 = vpop.xlane.xlu0 %3378
    %v3380 = vsel %vm3214, %v3205, -inf
    %3381 = vmax.xlane.f32.xlu0 %v3380
    %v3382 = vpop.xlane.xlu0 %3381
    %v3383 = vsel %vm3214, %v3206, -inf
    %3384 = vmax.xlane.f32.xlu0 %v3383
    %v3385 = vpop.xlane.xlu0 %3384
    %v3386 = vsel %vm3214, %v3207, -inf
    %3387 = vmax.xlane.f32.xlu0 %v3386
    %v3388 = vpop.xlane.xlu0 %3387
    %v3389 = vsel %vm3214, %v3208, -inf
    %3390 = vmax.xlane.f32.xlu0 %v3389
    %v3391 = vpop.xlane.xlu0 %3390
    %v3392 = vsel %vm3214, %v3209, -inf
    %3393 = vmax.xlane.f32.xlu0 %v3392
    %v3394 = vpop.xlane.xlu0 %3393
    %v3395 = vsel %vm3214, %v3210, -inf
    %3396 = vmax.xlane.f32.xlu0 %v3395
    %v3397 = vpop.xlane.xlu0 %3396
    %v3398 = vsel %vm3214, %v3211, -inf
    %3399 = vmax.xlane.f32.xlu0 %v3398
    %v3400 = vpop.xlane.xlu0 %3399
    %v3401 = vsel %vm3214, %v3212, -inf
    %3402 = vmax.xlane.f32.xlu0 %v3401
    %v3403 = vpop.xlane.xlu0 %3402
    %v3404 = vsel %vm3214, %v3213, -inf
    %3405 = vmax.xlane.f32.xlu0 %v3404
    %v3406 = vpop.xlane.xlu0 %3405
    %v3407 = vsub.f32 %v3150, %v3217
    %v3408 = vsub.f32 %v3151, %v3220
    %v3409 = vsub.f32 %v3152, %v3223
    %v3410 = vsub.f32 %v3153, %v3226
    %v3411 = vsub.f32 %v3154, %v3229
    %v3412 = vsub.f32 %v3155, %v3232
    %v3413 = vsub.f32 %v3156, %v3235
    %v3414 = vsub.f32 %v3157, %v3238
    %v3415 = vsub.f32 %v3158, %v3241
    %v3416 = vsub.f32 %v3159, %v3244
    %v3417 = vsub.f32 %v3160, %v3247
    %v3418 = vsub.f32 %v3161, %v3250
    %v3419 = vsub.f32 %v3162, %v3253
    %v3420 = vsub.f32 %v3163, %v3256
    %v3421 = vsub.f32 %v3164, %v3259
    %v3422 = vsub.f32 %v3165, %v3262
    %v3423 = vsub.f32 %v3166, %v3265
    %v3424 = vsub.f32 %v3167, %v3268
    %v3425 = vsub.f32 %v3168, %v3271
    %v3426 = vsub.f32 %v3169, %v3274
    %v3427 = vsub.f32 %v3170, %v3277
    %v3428 = vsub.f32 %v3171, %v3280
    %v3429 = vsub.f32 %v3172, %v3283
    %v3430 = vsub.f32 %v3173, %v3286
    %v3431 = vsub.f32 %v3174, %v3289
    %v3432 = vsub.f32 %v3175, %v3292
    %v3433 = vsub.f32 %v3176, %v3295
    %v3434 = vsub.f32 %v3177, %v3298
    %v3435 = vsub.f32 %v3178, %v3301
    %v3436 = vsub.f32 %v3179, %v3304
    %v3437 = vsub.f32 %v3180, %v3307
    %v3438 = vsub.f32 %v3181, %v3310
    %v3439 = vsub.f32 %v3182, %v3313
    %v3440 = vsub.f32 %v3183, %v3316
    %v3441 = vsub.f32 %v3184, %v3319
    %v3442 = vsub.f32 %v3185, %v3322
    %v3443 = vsub.f32 %v3186, %v3325
    %v3444 = vsub.f32 %v3187, %v3328
    %v3445 = vsub.f32 %v3188, %v3331
    %v3446 = vsub.f32 %v3189, %v3334
    %v3447 = vsub.f32 %v3190, %v3337
    %v3448 = vsub.f32 %v3191, %v3340
    %v3449 = vsub.f32 %v3192, %v3343
    %v3450 = vsub.f32 %v3193, %v3346
    %v3451 = vsub.f32 %v3194, %v3349
    %v3452 = vsub.f32 %v3195, %v3352
    %v3453 = vsub.f32 %v3196, %v3355
    %v3454 = vsub.f32 %v3197, %v3358
    %v3455 = vsub.f32 %v3198, %v3361
    %v3456 = vsub.f32 %v3199, %v3364
    %v3457 = vsub.f32 %v3200, %v3367
    %v3458 = vsub.f32 %v3201, %v3370
    %v3459 = vsub.f32 %v3202, %v3373
    %v3460 = vsub.f32 %v3203, %v3376
    %v3461 = vsub.f32 %v3204, %v3379
    %v3462 = vsub.f32 %v3205, %v3382
    %v3463 = vsub.f32 %v3206, %v3385
    %v3464 = vsub.f32 %v3207, %v3388
    %v3465 = vsub.f32 %v3208, %v3391
    %v3466 = vsub.f32 %v3209, %v3394
    %v3467 = vsub.f32 %v3210, %v3397
    %v3468 = vsub.f32 %v3211, %v3400
    %v3469 = vsub.f32 %v3212, %v3403
    %v3470 = vsub.f32 %v3213, %v3406
    %v3471 = vmul.f32 %v3407, 1.442695
    %v3472 = vpow.pop %v3471
    %v3473 = vmul.f32 %v3408, 1.442695
    %v3474 = vpow.pop %v3473
    %v3475 = vmul.f32 %v3409, 1.442695
    %v3476 = vpow.pop %v3475
    %v3477 = vmul.f32 %v3410, 1.442695
    %v3478 = vpow.pop %v3477
    %v3479 = vmul.f32 %v3411, 1.442695
    %v3480 = vpow.pop %v3479
    %v3481 = vmul.f32 %v3412, 1.442695
    %v3482 = vpow.pop %v3481
    %v3483 = vmul.f32 %v3413, 1.442695
    %v3484 = vpow.pop %v3483
    %v3485 = vmul.f32 %v3414, 1.442695
    %v3486 = vpow.pop %v3485
    %v3487 = vmul.f32 %v3415, 1.442695
    %v3488 = vpow.pop %v3487
    %v3489 = vmul.f32 %v3416, 1.442695
    %v3490 = vpow.pop %v3489
    %v3491 = vmul.f32 %v3417, 1.442695
    %v3492 = vpow.pop %v3491
    %v3493 = vmul.f32 %v3418, 1.442695
    %v3494 = vpow.pop %v3493
    %v3495 = vmul.f32 %v3419, 1.442695
    %v3496 = vpow.pop %v3495
    %v3497 = vmul.f32 %v3420, 1.442695
    %v3498 = vpow.pop %v3497
    %v3499 = vmul.f32 %v3421, 1.442695
    %v3500 = vpow.pop %v3499
    %v3501 = vmul.f32 %v3422, 1.442695
    %v3502 = vpow.pop %v3501
    %v3503 = vmul.f32 %v3423, 1.442695
    %v3504 = vpow.pop %v3503
    %v3505 = vmul.f32 %v3424, 1.442695
    %v3506 = vpow.pop %v3505
    %v3507 = vmul.f32 %v3425, 1.442695
    %v3508 = vpow.pop %v3507
    %v3509 = vmul.f32 %v3426, 1.442695
    %v3510 = vpow.pop %v3509
    %v3511 = vmul.f32 %v3427, 1.442695
    %v3512 = vpow.pop %v3511
    %v3513 = vmul.f32 %v3428, 1.442695
    %v3514 = vpow.pop %v3513
    %v3515 = vmul.f32 %v3429, 1.442695
    %v3516 = vpow.pop %v3515
    %v3517 = vmul.f32 %v3430, 1.442695
    %v3518 = vpow.pop %v3517
    %v3519 = vmul.f32 %v3431, 1.442695
    %v3520 = vpow.pop %v3519
    %v3521 = vmul.f32 %v3432, 1.442695
    %v3522 = vpow.pop %v3521
    %v3523 = vmul.f32 %v3433, 1.442695
    %v3524 = vpow.pop %v3523
    %v3525 = vmul.f32 %v3434, 1.442695
    %v3526 = vpow.pop %v3525
    %v3527 = vmul.f32 %v3435, 1.442695
    %v3528 = vpow.pop %v3527
    %v3529 = vmul.f32 %v3436, 1.442695
    %v3530 = vpow.pop %v3529
    %v3531 = vmul.f32 %v3437, 1.442695
    %v3532 = vpow.pop %v3531
    %v3533 = vmul.f32 %v3438, 1.442695
    %v3534 = vpow.pop %v3533
    %v3535 = vmul.f32 %v3439, 1.442695
    %v3536 = vpow.pop %v3535
    %v3537 = vmul.f32 %v3440, 1.442695
    %v3538 = vpow.pop %v3537
    %v3539 = vmul.f32 %v3441, 1.442695
    %v3540 = vpow.pop %v3539
    %v3541 = vmul.f32 %v3442, 1.442695
    %v3542 = vpow.pop %v3541
    %v3543 = vmul.f32 %v3443, 1.442695
    %v3544 = vpow.pop %v3543
    %v3545 = vmul.f32 %v3444, 1.442695
    %v3546 = vpow.pop %v3545
    %v3547 = vmul.f32 %v3445, 1.442695
    %v3548 = vpow.pop %v3547
    %v3549 = vmul.f32 %v3446, 1.442695
    %v3550 = vpow.pop %v3549
    %v3551 = vmul.f32 %v3447, 1.442695
    %v3552 = vpow.pop %v3551
    %v3553 = vmul.f32 %v3448, 1.442695
    %v3554 = vpow.pop %v3553
    %v3555 = vmul.f32 %v3449, 1.442695
    %v3556 = vpow.pop %v3555
    %v3557 = vmul.f32 %v3450, 1.442695
    %v3558 = vpow.pop %v3557
    %v3559 = vmul.f32 %v3451, 1.442695
    %v3560 = vpow.pop %v3559
    %v3561 = vmul.f32 %v3452, 1.442695
    %v3562 = vpow.pop %v3561
    %v3563 = vmul.f32 %v3453, 1.442695
    %v3564 = vpow.pop %v3563
    %v3565 = vmul.f32 %v3454, 1.442695
    %v3566 = vpow.pop %v3565
    %v3567 = vmul.f32 %v3455, 1.442695
    %v3568 = vpow.pop %v3567
    %v3569 = vmul.f32 %v3456, 1.442695
    %v3570 = vpow.pop %v3569
    %v3571 = vmul.f32 %v3457, 1.442695
    %v3572 = vpow.pop %v3571
    %v3573 = vmul.f32 %v3458, 1.442695
    %v3574 = vpow.pop %v3573
    %v3575 = vmul.f32 %v3459, 1.442695
    %v3576 = vpow.pop %v3575
    %v3577 = vmul.f32 %v3460, 1.442695
    %v3578 = vpow.pop %v3577
    %v3579 = vmul.f32 %v3461, 1.442695
    %v3580 = vpow.pop %v3579
    %v3581 = vmul.f32 %v3462, 1.442695
    %v3582 = vpow.pop %v3581
    %v3583 = vmul.f32 %v3463, 1.442695
    %v3584 = vpow.pop %v3583
    %v3585 = vmul.f32 %v3464, 1.442695
    %v3586 = vpow.pop %v3585
    %v3587 = vmul.f32 %v3465, 1.442695
    %v3588 = vpow.pop %v3587
    %v3589 = vmul.f32 %v3466, 1.442695
    %v3590 = vpow.pop %v3589
    %v3591 = vmul.f32 %v3467, 1.442695
    %v3592 = vpow.pop %v3591
    %v3593 = vmul.f32 %v3468, 1.442695
    %v3594 = vpow.pop %v3593
    %v3595 = vmul.f32 %v3469, 1.442695
    %v3596 = vpow.pop %v3595
    %v3597 = vmul.f32 %v3470, 1.442695
    %v3598 = vpow.pop %v3597
    %v3599 = vsel %vm3214, %v3472, 0.0
    %3600 = vadd.xlane.f32.xlu0 %v3599
    %v3601 = vpop.xlane.xlu0 %3600
    %v3602 = vsel %vm3214, %v3474, 0.0
    %3603 = vadd.xlane.f32.xlu0 %v3602
    %v3604 = vpop.xlane.xlu0 %3603
    %v3605 = vsel %vm3214, %v3476, 0.0
    %3606 = vadd.xlane.f32.xlu0 %v3605
    %v3607 = vpop.xlane.xlu0 %3606
    %v3608 = vsel %vm3214, %v3478, 0.0
    %3609 = vadd.xlane.f32.xlu0 %v3608
    %v3610 = vpop.xlane.xlu0 %3609
    %v3611 = vsel %vm3214, %v3480, 0.0
    %3612 = vadd.xlane.f32.xlu0 %v3611
    %v3613 = vpop.xlane.xlu0 %3612
    %v3614 = vsel %vm3214, %v3482, 0.0
    %3615 = vadd.xlane.f32.xlu0 %v3614
    %v3616 = vpop.xlane.xlu0 %3615
    %v3617 = vsel %vm3214, %v3484, 0.0
    %3618 = vadd.xlane.f32.xlu0 %v3617
    %v3619 = vpop.xlane.xlu0 %3618
    %v3620 = vsel %vm3214, %v3486, 0.0
    %3621 = vadd.xlane.f32.xlu0 %v3620
    %v3622 = vpop.xlane.xlu0 %3621
    %v3623 = vsel %vm3214, %v3488, 0.0
    %3624 = vadd.xlane.f32.xlu0 %v3623
    %v3625 = vpop.xlane.xlu0 %3624
    %v3626 = vsel %vm3214, %v3490, 0.0
    %3627 = vadd.xlane.f32.xlu0 %v3626
    %v3628 = vpop.xlane.xlu0 %3627
    %v3629 = vsel %vm3214, %v3492, 0.0
    %3630 = vadd.xlane.f32.xlu0 %v3629
    %v3631 = vpop.xlane.xlu0 %3630
    %v3632 = vsel %vm3214, %v3494, 0.0
    %3633 = vadd.xlane.f32.xlu0 %v3632
    %v3634 = vpop.xlane.xlu0 %3633
    %v3635 = vsel %vm3214, %v3496, 0.0
    %3636 = vadd.xlane.f32.xlu0 %v3635
    %v3637 = vpop.xlane.xlu0 %3636
    %v3638 = vsel %vm3214, %v3498, 0.0
    %3639 = vadd.xlane.f32.xlu0 %v3638
    %v3640 = vpop.xlane.xlu0 %3639
    %v3641 = vsel %vm3214, %v3500, 0.0
    %3642 = vadd.xlane.f32.xlu0 %v3641
    %v3643 = vpop.xlane.xlu0 %3642
    %v3644 = vsel %vm3214, %v3502, 0.0
    %3645 = vadd.xlane.f32.xlu0 %v3644
    %v3646 = vpop.xlane.xlu0 %3645
    %v3647 = vsel %vm3214, %v3504, 0.0
    %3648 = vadd.xlane.f32.xlu0 %v3647
    %v3649 = vpop.xlane.xlu0 %3648
    %v3650 = vsel %vm3214, %v3506, 0.0
    %3651 = vadd.xlane.f32.xlu0 %v3650
    %v3652 = vpop.xlane.xlu0 %3651
    %v3653 = vsel %vm3214, %v3508, 0.0
    %3654 = vadd.xlane.f32.xlu0 %v3653
    %v3655 = vpop.xlane.xlu0 %3654
    %v3656 = vsel %vm3214, %v3510, 0.0
    %3657 = vadd.xlane.f32.xlu0 %v3656
    %v3658 = vpop.xlane.xlu0 %3657
    %v3659 = vsel %vm3214, %v3512, 0.0
    %3660 = vadd.xlane.f32.xlu0 %v3659
    %v3661 = vpop.xlane.xlu0 %3660
    %v3662 = vsel %vm3214, %v3514, 0.0
    %3663 = vadd.xlane.f32.xlu0 %v3662
    %v3664 = vpop.xlane.xlu0 %3663
    %v3665 = vsel %vm3214, %v3516, 0.0
    %3666 = vadd.xlane.f32.xlu0 %v3665
    %v3667 = vpop.xlane.xlu0 %3666
    %v3668 = vsel %vm3214, %v3518, 0.0
    %3669 = vadd.xlane.f32.xlu0 %v3668
    %v3670 = vpop.xlane.xlu0 %3669
    %v3671 = vsel %vm3214, %v3520, 0.0
    %3672 = vadd.xlane.f32.xlu0 %v3671
    %v3673 = vpop.xlane.xlu0 %3672
    %v3674 = vsel %vm3214, %v3522, 0.0
    %3675 = vadd.xlane.f32.xlu0 %v3674
    %v3676 = vpop.xlane.xlu0 %3675
    %v3677 = vsel %vm3214, %v3524, 0.0
    %3678 = vadd.xlane.f32.xlu0 %v3677
    %v3679 = vpop.xlane.xlu0 %3678
    %v3680 = vsel %vm3214, %v3526, 0.0
    %3681 = vadd.xlane.f32.xlu0 %v3680
    %v3682 = vpop.xlane.xlu0 %3681
    %v3683 = vsel %vm3214, %v3528, 0.0
    %3684 = vadd.xlane.f32.xlu0 %v3683
    %v3685 = vpop.xlane.xlu0 %3684
    %v3686 = vsel %vm3214, %v3530, 0.0
    %3687 = vadd.xlane.f32.xlu0 %v3686
    %v3688 = vpop.xlane.xlu0 %3687
    %v3689 = vsel %vm3214, %v3532, 0.0
    %3690 = vadd.xlane.f32.xlu0 %v3689
    %v3691 = vpop.xlane.xlu0 %3690
    %v3692 = vsel %vm3214, %v3534, 0.0
    %3693 = vadd.xlane.f32.xlu0 %v3692
    %v3694 = vpop.xlane.xlu0 %3693
    %v3695 = vsel %vm3214, %v3536, 0.0
    %3696 = vadd.xlane.f32.xlu0 %v3695
    %v3697 = vpop.xlane.xlu0 %3696
    %v3698 = vsel %vm3214, %v3538, 0.0
    %3699 = vadd.xlane.f32.xlu0 %v3698
    %v3700 = vpop.xlane.xlu0 %3699
    %v3701 = vsel %vm3214, %v3540, 0.0
    %3702 = vadd.xlane.f32.xlu0 %v3701
    %v3703 = vpop.xlane.xlu0 %3702
    %v3704 = vsel %vm3214, %v3542, 0.0
    %3705 = vadd.xlane.f32.xlu0 %v3704
    %v3706 = vpop.xlane.xlu0 %3705
    %v3707 = vsel %vm3214, %v3544, 0.0
    %3708 = vadd.xlane.f32.xlu0 %v3707
    %v3709 = vpop.xlane.xlu0 %3708
    %v3710 = vsel %vm3214, %v3546, 0.0
    %3711 = vadd.xlane.f32.xlu0 %v3710
    %v3712 = vpop.xlane.xlu0 %3711
    %v3713 = vsel %vm3214, %v3548, 0.0
    %3714 = vadd.xlane.f32.xlu0 %v3713
    %v3715 = vpop.xlane.xlu0 %3714
    %v3716 = vsel %vm3214, %v3550, 0.0
    %3717 = vadd.xlane.f32.xlu0 %v3716
    %v3718 = vpop.xlane.xlu0 %3717
    %v3719 = vsel %vm3214, %v3552, 0.0
    %3720 = vadd.xlane.f32.xlu0 %v3719
    %v3721 = vpop.xlane.xlu0 %3720
    %v3722 = vsel %vm3214, %v3554, 0.0
    %3723 = vadd.xlane.f32.xlu0 %v3722
    %v3724 = vpop.xlane.xlu0 %3723
    %v3725 = vsel %vm3214, %v3556, 0.0
    %3726 = vadd.xlane.f32.xlu0 %v3725
    %v3727 = vpop.xlane.xlu0 %3726
    %v3728 = vsel %vm3214, %v3558, 0.0
    %3729 = vadd.xlane.f32.xlu0 %v3728
    %v3730 = vpop.xlane.xlu0 %3729
    %v3731 = vsel %vm3214, %v3560, 0.0
    %3732 = vadd.xlane.f32.xlu0 %v3731
    %v3733 = vpop.xlane.xlu0 %3732
    %v3734 = vsel %vm3214, %v3562, 0.0
    %3735 = vadd.xlane.f32.xlu0 %v3734
    %v3736 = vpop.xlane.xlu0 %3735
    %v3737 = vsel %vm3214, %v3564, 0.0
    %3738 = vadd.xlane.f32.xlu0 %v3737
    %v3739 = vpop.xlane.xlu0 %3738
    %v3740 = vsel %vm3214, %v3566, 0.0
    %3741 = vadd.xlane.f32.xlu0 %v3740
    %v3742 = vpop.xlane.xlu0 %3741
    %v3743 = vsel %vm3214, %v3568, 0.0
    %3744 = vadd.xlane.f32.xlu0 %v3743
    %v3745 = vpop.xlane.xlu0 %3744
    %v3746 = vsel %vm3214, %v3570, 0.0
    %3747 = vadd.xlane.f32.xlu0 %v3746
    %v3748 = vpop.xlane.xlu0 %3747
    %v3749 = vsel %vm3214, %v3572, 0.0
    %3750 = vadd.xlane.f32.xlu0 %v3749
    %v3751 = vpop.xlane.xlu0 %3750
    %v3752 = vsel %vm3214, %v3574, 0.0
    %3753 = vadd.xlane.f32.xlu0 %v3752
    %v3754 = vpop.xlane.xlu0 %3753
    %v3755 = vsel %vm3214, %v3576, 0.0
    %3756 = vadd.xlane.f32.xlu0 %v3755
    %v3757 = vpop.xlane.xlu0 %3756
    %v3758 = vsel %vm3214, %v3578, 0.0
    %3759 = vadd.xlane.f32.xlu0 %v3758
    %v3760 = vpop.xlane.xlu0 %3759
    %v3761 = vsel %vm3214, %v3580, 0.0
    %3762 = vadd.xlane.f32.xlu0 %v3761
    %v3763 = vpop.xlane.xlu0 %3762
    %v3764 = vsel %vm3214, %v3582, 0.0
    %3765 = vadd.xlane.f32.xlu0 %v3764
    %v3766 = vpop.xlane.xlu0 %3765
    %v3767 = vsel %vm3214, %v3584, 0.0
    %3768 = vadd.xlane.f32.xlu0 %v3767
    %v3769 = vpop.xlane.xlu0 %3768
    %v3770 = vsel %vm3214, %v3586, 0.0
    %3771 = vadd.xlane.f32.xlu0 %v3770
    %v3772 = vpop.xlane.xlu0 %3771
    %v3773 = vsel %vm3214, %v3588, 0.0
    %3774 = vadd.xlane.f32.xlu0 %v3773
    %v3775 = vpop.xlane.xlu0 %3774
    %v3776 = vsel %vm3214, %v3590, 0.0
    %3777 = vadd.xlane.f32.xlu0 %v3776
    %v3778 = vpop.xlane.xlu0 %3777
    %v3779 = vsel %vm3214, %v3592, 0.0
    %3780 = vadd.xlane.f32.xlu0 %v3779
    %v3781 = vpop.xlane.xlu0 %3780
    %v3782 = vsel %vm3214, %v3594, 0.0
    %3783 = vadd.xlane.f32.xlu0 %v3782
    %v3784 = vpop.xlane.xlu0 %3783
    %v3785 = vsel %vm3214, %v3596, 0.0
    %3786 = vadd.xlane.f32.xlu0 %v3785
    %v3787 = vpop.xlane.xlu0 %3786
    %v3788 = vsel %vm3214, %v3598, 0.0
    %3789 = vadd.xlane.f32.xlu0 %v3788
    %v3790 = vpop.xlane.xlu0 %3789
    %3791 = vrot.lane.b32.xlu0 %v167, 64
    %v3792 = vpop.permute.xlu0 %3791
    %3793 = vrot.lane.b32.xlu0 %v172, 64
    %v3794 = vpop.permute.xlu0 %3793
    %v3798 = vsel %vm3214, %v3472, 0
    %v3801 = vsel %vm3214, %v3474, 0
    %3803 = vmatprep.subr.mxu0 0.0
    %3804 = vmatpush1.msra.mxu0 %v3792
    %3805 = vmatprep.subr.mxu0 0.0
    %3806 = vmatpush1.msra.mxu0 %v3794
    %3807 = vmatprep.subr.mxu0 0.0
    %3808 = vmatpush1.msra.mxu0 0.0
    %3809 = vmatprep.subr.mxu0 0.0
    %3810 = vmatpush1.msra.mxu0 0.0
    %3811 = vmatprep.subr.mxu0 0.0
    %3812 = vmatpush1.msra.mxu0 0.0
    %3813 = vmatprep.subr.mxu0 0.0
    %3814 = vmatpush1.msra.mxu0 0.0
    %3815 = vmatprep.subr.mxu0 0.0
    %3816 = vmatpush1.msra.mxu0 0.0
    %3817 = vmatprep.subr.mxu0 0.0
    %3818 = vmatpush1.msra.mxu0 0.0
    %3819 = vmatprep.subr.mxu0 0.0
    %3820 = vmatpush1.msra.mxu0 0.0
    %3821 = vmatprep.subr.mxu0 0.0
    %3822 = vmatpush1.msra.mxu0 0.0
    %3823 = vmatprep.subr.mxu0 0.0
    %3824 = vmatpush1.msra.mxu0 0.0
    %3825 = vmatprep.subr.mxu0 0.0
    %3826 = vmatpush1.msra.mxu0 0.0
    %3827 = vmatprep.subr.mxu0 0.0
    %3828 = vmatpush1.msra.mxu0 0.0
    %3829 = vmatprep.subr.mxu0 0.0
    %3830 = vmatpush1.msra.mxu0 0.0
    %3831 = vmatprep.subr.mxu0 0.0
    %3832 = vmatpush1.msra.mxu0 0.0
    %3833 = vmatprep.subr.mxu0 0.0
    %3834 = vmatpush1.msra.mxu0 0.0
    %3835 = vmatprep.subr.mxu0 0.0
    %3836 = vmatpush1.msra.mxu0 0.0
    %3837 = vmatprep.subr.mxu0 0.0
    %3838 = vmatpush1.msra.mxu0 0.0
    %3839 = vmatprep.subr.mxu0 0.0
    %3840 = vmatpush1.msra.mxu0 0.0
    %3841 = vmatprep.subr.mxu0 0.0
    %3842 = vmatpush1.msra.mxu0 0.0
    %3843 = vmatprep.subr.mxu0 0.0
    %3844 = vmatpush1.msra.mxu0 0.0
    %3845 = vmatprep.subr.mxu0 0.0
    %3846 = vmatpush1.msra.mxu0 0.0
    %3847 = vmatprep.subr.mxu0 0.0
    %3848 = vmatpush1.msra.mxu0 0.0
    %3849 = vmatprep.subr.mxu0 0.0
    %3850 = vmatpush1.msra.mxu0 0.0
    %3851 = vmatprep.subr.mxu0 0.0
    %3852 = vmatpush1.msra.mxu0 0.0
    %3853 = vmatprep.subr.mxu0 0.0
    %3854 = vmatpush1.msra.mxu0 0.0
    %3855 = vmatprep.subr.mxu0 0.0
    %3856 = vmatpush1.msra.mxu0 0.0
    %3857 = vmatprep.subr.mxu0 0.0
    %3858 = vmatpush1.msra.mxu0 0.0
    %3859 = vmatprep.subr.mxu0 0.0
    %3860 = vmatpush1.msra.mxu0 0.0
    %3861 = vmatprep.subr.mxu0 0.0
    %3862 = vmatpush1.msra.mxu0 0.0
    %3863 = vmatprep.subr.mxu0 0.0
    %3864 = vmatpush1.msra.mxu0 0.0
    %3865 = vmatprep.subr.mxu0 0.0
    %3866 = vmatpush1.msra.mxu0 0.0
    %3867 = vmatprep.mubr.f32.mxu0 0.0
    %3868 = vmatmul.mubr.f32.gmra.mrb[0].mxu0 %v3798
    %v3869 = vpop.f32.mrb[0].mxu0
    %v3870 = vadd.f32 0.0, %v3869
    %v3871 = vpop.f32.mrb[0].mxu0
    %3872 = vmatprep.mubr.f32.mxu0 0.0
    %3873 = vmatmul.mubr.f32.gmra.mrb[0].mxu0 %v3801
    %v3874 = vpop.f32.mrb[0].mxu0
    %v3875 = vadd.f32 0.0, %v3874
    %v3876 = vpop.f32.mrb[0].mxu0
    %3877 = vdwg.mxu0
    %3878 = vrot.lane.b32.xlu0 %v177, 64
    %v3879 = vpop.permute.xlu0 %3878
    %3880 = vrot.lane.b32.xlu0 %v182, 64
    %v3881 = vpop.permute.xlu0 %3880
    %v3885 = vsel %vm3214, %v3476, 0
    %v3888 = vsel %vm3214, %v3478, 0
    %3890 = vmatprep.subr.mxu0 0.0
    %3891 = vmatpush1.msra.mxu0 %v3879
    %3892 = vmatprep.subr.mxu0 0.0
    %3893 = vmatpush1.msra.mxu0 %v3881
    %3894 = vmatprep.subr.mxu0 0.0
    %3895 = vmatpush1.msra.mxu0 0.0
    %3896 = vmatprep.subr.mxu0 0.0
    %3897 = vmatpush1.msra.mxu0 0.0
    %3898 = vmatprep.subr.mxu0 0.0
    %3899 = vmatpush1.msra.mxu0 0.0
    %3900 = vmatprep.subr.mxu0 0.0
    %3901 = vmatpush1.msra.mxu0 0.0
    %3902 = vmatprep.subr.mxu0 0.0
    %3903 = vmatpush1.msra.mxu0 0.0
    %3904 = vmatprep.subr.mxu0 0.0
    %3905 = vmatpush1.msra.mxu0 0.0
    %3906 = vmatprep.subr.mxu0 0.0
    %3907 = vmatpush1.msra.mxu0 0.0
    %3908 = vmatprep.subr.mxu0 0.0
    %3909 = vmatpush1.msra.mxu0 0.0
    %3910 = vmatprep.subr.mxu0 0.0
    %3911 = vmatpush1.msra.mxu0 0.0
    %3912 = vmatprep.subr.mxu0 0.0
    %3913 = vmatpush1.msra.mxu0 0.0
    %3914 = vmatprep.subr.mxu0 0.0
    %3915 = vmatpush1.msra.mxu0 0.0
    %3916 = vmatprep.subr.mxu0 0.0
    %3917 = vmatpush1.msra.mxu0 0.0
    %3918 = vmatprep.subr.mxu0 0.0
    %3919 = vmatpush1.msra.mxu0 0.0
    %3920 = vmatprep.subr.mxu0 0.0
    %3921 = vmatpush1.msra.mxu0 0.0
    %3922 = vmatprep.subr.mxu0 0.0
    %3923 = vmatpush1.msra.mxu0 0.0
    %3924 = vmatprep.subr.mxu0 0.0
    %3925 = vmatpush1.msra.mxu0 0.0
    %3926 = vmatprep.subr.mxu0 0.0
    %3927 = vmatpush1.msra.mxu0 0.0
    %3928 = vmatprep.subr.mxu0 0.0
    %3929 = vmatpush1.msra.mxu0 0.0
    %3930 = vmatprep.subr.mxu0 0.0
    %3931 = vmatpush1.msra.mxu0 0.0
    %3932 = vmatprep.subr.mxu0 0.0
    %3933 = vmatpush1.msra.mxu0 0.0
    %3934 = vmatprep.subr.mxu0 0.0
    %3935 = vmatpush1.msra.mxu0 0.0
    %3936 = vmatprep.subr.mxu0 0.0
    %3937 = vmatpush1.msra.mxu0 0.0
    %3938 = vmatprep.subr.mxu0 0.0
    %3939 = vmatpush1.msra.mxu0 0.0
    %3940 = vmatprep.subr.mxu0 0.0
    %3941 = vmatpush1.msra.mxu0 0.0
    %3942 = vmatprep.subr.mxu0 0.0
    %3943 = vmatpush1.msra.mxu0 0.0
    %3944 = vmatprep.subr.mxu0 0.0
    %3945 = vmatpush1.msra.mxu0 0.0
    %3946 = vmatprep.subr.mxu0 0.0
    %3947 = vmatpush1.msra.mxu0 0.0
    %3948 = vmatprep.subr.mxu0 0.0
    %3949 = vmatpush1.msra.mxu0 0.0
    %3950 = vmatprep.subr.mxu0 0.0
    %3951 = vmatpush1.msra.mxu0 0.0
    %3952 = vmatprep.subr.mxu0 0.0
    %3953 = vmatpush1.msra.mxu0 0.0
    %3954 = vmatprep.mubr.f32.mxu0 0.0
    %3955 = vmatmul.mubr.f32.gmra.mrb[0].mxu0 %v3885
    %v3956 = vpop.f32.mrb[0].mxu0
    %v3957 = vadd.f32 0.0, %v3956
    %v3958 = vpop.f32.mrb[0].mxu0
    %3959 = vmatprep.mubr.f32.mxu0 0.0
    %3960 = vmatmul.mubr.f32.gmra.mrb[0].mxu0 %v3888
    %v3961 = vpop.f32.mrb[0].mxu0
    %v3962 = vadd.f32 0.0, %v3961
    %v3963 = vpop.f32.mrb[0].mxu0
    %3964 = vdwg.mxu0
    %3965 = vrot.lane.b32.xlu0 %v187, 64
    %v3966 = vpop.permute.xlu0 %3965
    %3967 = vrot.lane.b32.xlu0 %v192, 64
    %v3968 = vpop.permute.xlu0 %3967
    %v3972 = vsel %vm3214, %v3480, 0
    %v3975 = vsel %vm3214, %v3482, 0
    %3977 = vmatprep.subr.mxu0 0.0
    %3978 = vmatpush1.msra.mxu0 %v3966
    %3979 = vmatprep.subr.mxu0 0.0
    %3980 = vmatpush1.msra.mxu0 %v3968
    %3981 = vmatprep.subr.mxu0 0.0
    %3982 = vmatpush1.msra.mxu0 0.0
    %3983 = vmatprep.subr.mxu0 0.0
    %3984 = vmatpush1.msra.mxu0 0.0
    %3985 = vmatprep.subr.mxu0 0.0
    %3986 = vmatpush1.msra.mxu0 0.0
    %3987 = vmatprep.subr.mxu0 0.0
    %3988 = vmatpush1.msra.mxu0 0.0
    %3989 = vmatprep.subr.mxu0 0.0
    %3990 = vmatpush1.msra.mxu0 0.0
    %3991 = vmatprep.subr.mxu0 0.0
    %3992 = vmatpush1.msra.mxu0 0.0
    %3993 = vmatprep.subr.mxu0 0.0
    %3994 = vmatpush1.msra.mxu0 0.0
    %3995 = vmatprep.subr.mxu0 0.0
    %3996 = vmatpush1.msra.mxu0 0.0
    %3997 = vmatprep.subr.mxu0 0.0
    %3998 = vmatpush1.msra.mxu0 0.0
    %3999 = vmatprep.subr.mxu0 0.0
    %4000 = vmatpush1.msra.mxu0 0.0
    %4001 = vmatprep.subr.mxu0 0.0
    %4002 = vmatpush1.msra.mxu0 0.0
    %4003 = vmatprep.subr.mxu0 0.0
    %4004 = vmatpush1.msra.mxu0 0.0
    %4005 = vmatprep.subr.mxu0 0.0
    %4006 = vmatpush1.msra.mxu0 0.0
    %4007 = vmatprep.subr.mxu0 0.0
    %4008 = vmatpush1.msra.mxu0 0.0
    %4009 = vmatprep.subr.mxu0 0.0
    %4010 = vmatpush1.msra.mxu0 0.0
    %4011 = vmatprep.subr.mxu0 0.0
    %4012 = vmatpush1.msra.mxu0 0.0
    %4013 = vmatprep.subr.mxu0 0.0
    %4014 = vmatpush1.msra.mxu0 0.0
    %4015 = vmatprep.subr.mxu0 0.0
    %4016 = vmatpush1.msra.mxu0 0.0
    %4017 = vmatprep.subr.mxu0 0.0
    %4018 = vmatpush1.msra.mxu0 0.0
    %4019 = vmatprep.subr.mxu0 0.0
    %4020 = vmatpush1.msra.mxu0 0.0
    %4021 = vmatprep.subr.mxu0 0.0
    %4022 = vmatpush1.msra.mxu0 0.0
    %4023 = vmatprep.subr.mxu0 0.0
    %4024 = vmatpush1.msra.mxu0 0.0
    %4025 = vmatprep.subr.mxu0 0.0
    %4026 = vmatpush1.msra.mxu0 0.0
    %4027 = vmatprep.subr.mxu0 0.0
    %4028 = vmatpush1.msra.mxu0 0.0
    %4029 = vmatprep.subr.mxu0 0.0
    %4030 = vmatpush1.msra.mxu0 0.0
    %4031 = vmatprep.subr.mxu0 0.0
    %4032 = vmatpush1.msra.mxu0 0.0
    %4033 = vmatprep.subr.mxu0 0.0
    %4034 = vmatpush1.msra.mxu0 0.0
    %4035 = vmatprep.subr.mxu0 0.0
    %4036 = vmatpush1.msra.mxu0 0.0
    %4037 = vmatprep.subr.mxu0 0.0
    %4038 = vmatpush1.msra.mxu0 0.0
    %4039 = vmatprep.subr.mxu0 0.0
    %4040 = vmatpush1.msra.mxu0 0.0
    %4041 = vmatprep.mubr.f32.mxu0 0.0
    %4042 = vmatmul.mubr.f32.gmra.mrb[0].mxu0 %v3972
    %v4043 = vpop.f32.mrb[0].mxu0
    %v4044 = vadd.f32 0.0, %v4043
    %v4045 = vpop.f32.mrb[0].mxu0
    %4046 = vmatprep.mubr.f32.mxu0 0.0
    %4047 = vmatmul.mubr.f32.gmra.mrb[0].mxu0 %v3975
    %v4048 = vpop.f32.mrb[0].mxu0
    %v4049 = vadd.f32 0.0, %v4048
    %v4050 = vpop.f32.mrb[0].mxu0
    %4051 = vdwg.mxu0
    %4052 = vrot.lane.b32.xlu0 %v197, 64
    %v4053 = vpop.permute.xlu0 %4052
    %4054 = vrot.lane.b32.xlu0 %v202, 64
    %v4055 = vpop.permute.xlu0 %4054
    %v4059 = vsel %vm3214, %v3484, 0
    %v4062 = vsel %vm3214, %v3486, 0
    %4064 = vmatprep.subr.mxu0 0.0
    %4065 = vmatpush1.msra.mxu0 %v4053
    %4066 = vmatprep.subr.mxu0 0.0
    %4067 = vmatpush1.msra.mxu0 %v4055
    %4068 = vmatprep.subr.mxu0 0.0
    %4069 = vmatpush1.msra.mxu0 0.0
    %4070 = vmatprep.subr.mxu0 0.0
    %4071 = vmatpush1.msra.mxu0 0.0
    %4072 = vmatprep.subr.mxu0 0.0
    %4073 = vmatpush1.msra.mxu0 0.0
    %4074 = vmatprep.subr.mxu0 0.0
    %4075 = vmatpush1.msra.mxu0 0.0
    %4076 = vmatprep.subr.mxu0 0.0
    %4077 = vmatpush1.msra.mxu0 0.0
    %4078 = vmatprep.subr.mxu0 0.0
    %4079 = vmatpush1.msra.mxu0 0.0
    %4080 = vmatprep.subr.mxu0 0.0
    %4081 = vmatpush1.msra.mxu0 0.0
    %4082 = vmatprep.subr.mxu0 0.0
    %4083 = vmatpush1.msra.mxu0 0.0
    %4084 = vmatprep.subr.mxu0 0.0
    %4085 = vmatpush1.msra.mxu0 0.0
    %4086 = vmatprep.subr.mxu0 0.0
    %4087 = vmatpush1.msra.mxu0 0.0
    %4088 = vmatprep.subr.mxu0 0.0
    %4089 = vmatpush1.msra.mxu0 0.0
    %4090 = vmatprep.subr.mxu0 0.0
    %4091 = vmatpush1.msra.mxu0 0.0
    %4092 = vmatprep.subr.mxu0 0.0
    %4093 = vmatpush1.msra.mxu0 0.0
    %4094 = vmatprep.subr.mxu0 0.0
    %4095 = vmatpush1.msra.mxu0 0.0
    %4096 = vmatprep.subr.mxu0 0.0
    %4097 = vmatpush1.msra.mxu0 0.0
    %4098 = vmatprep.subr.mxu0 0.0
    %4099 = vmatpush1.msra.mxu0 0.0
    %4100 = vmatprep.subr.mxu0 0.0
    %4101 = vmatpush1.msra.mxu0 0.0
    %4102 = vmatprep.subr.mxu0 0.0
    %4103 = vmatpush1.msra.mxu0 0.0
    %4104 = vmatprep.subr.mxu0 0.0
    %4105 = vmatpush1.msra.mxu0 0.0
    %4106 = vmatprep.subr.mxu0 0.0
    %4107 = vmatpush1.msra.mxu0 0.0
    %4108 = vmatprep.subr.mxu0 0.0
    %4109 = vmatpush1.msra.mxu0 0.0
    %4110 = vmatprep.subr.mxu0 0.0
    %4111 = vmatpush1.msra.mxu0 0.0
    %4112 = vmatprep.subr.mxu0 0.0
    %4113 = vmatpush1.msra.mxu0 0.0
    %4114 = vmatprep.subr.mxu0 0.0
    %4115 = vmatpush1.msra.mxu0 0.0
    %4116 = vmatprep.subr.mxu0 0.0
    %4117 = vmatpush1.msra.mxu0 0.0
    %4118 = vmatprep.subr.mxu0 0.0
    %4119 = vmatpush1.msra.mxu0 0.0
    %4120 = vmatprep.subr.mxu0 0.0
    %4121 = vmatpush1.msra.mxu0 0.0
    %4122 = vmatprep.subr.mxu0 0.0
    %4123 = vmatpush1.msra.mxu0 0.0
    %4124 = vmatprep.subr.mxu0 0.0
    %4125 = vmatpush1.msra.mxu0 0.0
    %4126 = vmatprep.subr.mxu0 0.0
    %4127 = vmatpush1.msra.mxu0 0.0
    %4128 = vmatprep.mubr.f32.mxu0 0.0
    %4129 = vmatmul.mubr.f32.gmra.mrb[0].mxu0 %v4059
    %v4130 = vpop.f32.mrb[0].mxu0
    %v4131 = vadd.f32 0.0, %v4130
    %v4132 = vpop.f32.mrb[0].mxu0
    %4133 = vmatprep.mubr.f32.mxu0 0.0
    %4134 = vmatmul.mubr.f32.gmra.mrb[0].mxu0 %v4062
    %v4135 = vpop.f32.mrb[0].mxu0
    %v4136 = vadd.f32 0.0, %v4135
    %v4137 = vpop.f32.mrb[0].mxu0
    %4138 = vdwg.mxu0
    %4139 = vrot.lane.b32.xlu0 %v207, 64
    %v4140 = vpop.permute.xlu0 %4139
    %4141 = vrot.lane.b32.xlu0 %v212, 64
    %v4142 = vpop.permute.xlu0 %4141
    %v4146 = vsel %vm3214, %v3488, 0
    %v4149 = vsel %vm3214, %v3490, 0
    %4151 = vmatprep.subr.mxu0 0.0
    %4152 = vmatpush1.msra.mxu0 %v4140
    %4153 = vmatprep.subr.mxu0 0.0
    %4154 = vmatpush1.msra.mxu0 %v4142
    %4155 = vmatprep.subr.mxu0 0.0
    %4156 = vmatpush1.msra.mxu0 0.0
    %4157 = vmatprep.subr.mxu0 0.0
    %4158 = vmatpush1.msra.mxu0 0.0
    %4159 = vmatprep.subr.mxu0 0.0
    %4160 = vmatpush1.msra.mxu0 0.0
    %4161 = vmatprep.subr.mxu0 0.0
    %4162 = vmatpush1.msra.mxu0 0.0
    %4163 = vmatprep.subr.mxu0 0.0
    %4164 = vmatpush1.msra.mxu0 0.0
    %4165 = vmatprep.subr.mxu0 0.0
    %4166 = vmatpush1.msra.mxu0 0.0
    %4167 = vmatprep.subr.mxu0 0.0
    %4168 = vmatpush1.msra.mxu0 0.0
    %4169 = vmatprep.subr.mxu0 0.0
    %4170 = vmatpush1.msra.mxu0 0.0
    %4171 = vmatprep.subr.mxu0 0.0
    %4172 = vmatpush1.msra.mxu0 0.0
    %4173 = vmatprep.subr.mxu0 0.0
    %4174 = vmatpush1.msra.mxu0 0.0
    %4175 = vmatprep.subr.mxu0 0.0
    %4176 = vmatpush1.msra.mxu0 0.0
    %4177 = vmatprep.subr.mxu0 0.0
    %4178 = vmatpush1.msra.mxu0 0.0
    %4179 = vmatprep.subr.mxu0 0.0
    %4180 = vmatpush1.msra.mxu0 0.0
    %4181 = vmatprep.subr.mxu0 0.0
    %4182 = vmatpush1.msra.mxu0 0.0
    %4183 = vmatprep.subr.mxu0 0.0
    %4184 = vmatpush1.msra.mxu0 0.0
    %4185 = vmatprep.subr.mxu0 0.0
    %4186 = vmatpush1.msra.mxu0 0.0
    %4187 = vmatprep.subr.mxu0 0.0
    %4188 = vmatpush1.msra.mxu0 0.0
    %4189 = vmatprep.subr.mxu0 0.0
    %4190 = vmatpush1.msra.mxu0 0.0
    %4191 = vmatprep.subr.mxu0 0.0
    %4192 = vmatpush1.msra.mxu0 0.0
    %4193 = vmatprep.subr.mxu0 0.0
    %4194 = vmatpush1.msra.mxu0 0.0
    %4195 = vmatprep.subr.mxu0 0.0
    %4196 = vmatpush1.msra.mxu0 0.0
    %4197 = vmatprep.subr.mxu0 0.0
    %4198 = vmatpush1.msra.mxu0 0.0
    %4199 = vmatprep.subr.mxu0 0.0
    %4200 = vmatpush1.msra.mxu0 0.0
    %4201 = vmatprep.subr.mxu0 0.0
    %4202 = vmatpush1.msra.mxu0 0.0
    %4203 = vmatprep.subr.mxu0 0.0
    %4204 = vmatpush1.msra.mxu0 0.0
    %4205 = vmatprep.subr.mxu0 0.0
    %4206 = vmatpush1.msra.mxu0 0.0
    %4207 = vmatprep.subr.mxu0 0.0
    %4208 = vmatpush1.msra.mxu0 0.0
    %4209 = vmatprep.subr.mxu0 0.0
    %4210 = vmatpush1.msra.mxu0 0.0
    %4211 = vmatprep.subr.mxu0 0.0
    %4212 = vmatpush1.msra.mxu0 0.0
    %4213 = vmatprep.subr.mxu0 0.0
    %4214 = vmatpush1.msra.mxu0 0.0
    %4215 = vmatprep.mubr.f32.mxu0 0.0
    %4216 = vmatmul.mubr.f32.gmra.mrb[0].mxu0 %v4146
    %v4217 = vpop.f32.mrb[0].mxu0
    %v4218 = vadd.f32 0.0, %v4217
    %v4219 = vpop.f32.mrb[0].mxu0
    %4220 = vmatprep.mubr.f32.mxu0 0.0
    %4221 = vmatmul.mubr.f32.gmra.mrb[0].mxu0 %v4149
    %v4222 = vpop.f32.mrb[0].mxu0
    %v4223 = vadd.f32 0.0, %v4222
    %v4224 = vpop.f32.mrb[0].mxu0
    %4225 = vdwg.mxu0
    %4226 = vrot.lane.b32.xlu0 %v217, 64
    %v4227 = vpop.permute.xlu0 %4226
    %4228 = vrot.lane.b32.xlu0 %v222, 64
    %v4229 = vpop.permute.xlu0 %4228
    %v4233 = vsel %vm3214, %v3492, 0
    %v4236 = vsel %vm3214, %v3494, 0
    %4238 = vmatprep.subr.mxu0 0.0
    %4239 = vmatpush1.msra.mxu0 %v4227
    %4240 = vmatprep.subr.mxu0 0.0
    %4241 = vmatpush1.msra.mxu0 %v4229
    %4242 = vmatprep.subr.mxu0 0.0
    %4243 = vmatpush1.msra.mxu0 0.0
    %4244 = vmatprep.subr.mxu0 0.0
    %4245 = vmatpush1.msra.mxu0 0.0
    %4246 = vmatprep.subr.mxu0 0.0
    %4247 = vmatpush1.msra.mxu0 0.0
    %4248 = vmatprep.subr.mxu0 0.0
    %4249 = vmatpush1.msra.mxu0 0.0
    %4250 = vmatprep.subr.mxu0 0.0
    %4251 = vmatpush1.msra.mxu0 0.0
    %4252 = vmatprep.subr.mxu0 0.0
    %4253 = vmatpush1.msra.mxu0 0.0
    %4254 = vmatprep.subr.mxu0 0.0
    %4255 = vmatpush1.msra.mxu0 0.0
    %4256 = vmatprep.subr.mxu0 0.0
    %4257 = vmatpush1.msra.mxu0 0.0
    %4258 = vmatprep.subr.mxu0 0.0
    %4259 = vmatpush1.msra.mxu0 0.0
    %4260 = vmatprep.subr.mxu0 0.0
    %4261 = vmatpush1.msra.mxu0 0.0
    %4262 = vmatprep.subr.mxu0 0.0
    %4263 = vmatpush1.msra.mxu0 0.0
    %4264 = vmatprep.subr.mxu0 0.0
    %4265 = vmatpush1.msra.mxu0 0.0
    %4266 = vmatprep.subr.mxu0 0.0
    %4267 = vmatpush1.msra.mxu0 0.0
    %4268 = vmatprep.subr.mxu0 0.0
    %4269 = vmatpush1.msra.mxu0 0.0
    %4270 = vmatprep.subr.mxu0 0.0
    %4271 = vmatpush1.msra.mxu0 0.0
    %4272 = vmatprep.subr.mxu0 0.0
    %4273 = vmatpush1.msra.mxu0 0.0
    %4274 = vmatprep.subr.mxu0 0.0
    %4275 = vmatpush1.msra.mxu0 0.0
    %4276 = vmatprep.subr.mxu0 0.0
    %4277 = vmatpush1.msra.mxu0 0.0
    %4278 = vmatprep.subr.mxu0 0.0
    %4279 = vmatpush1.msra.mxu0 0.0
    %4280 = vmatprep.subr.mxu0 0.0
    %4281 = vmatpush1.msra.mxu0 0.0
    %4282 = vmatprep.subr.mxu0 0.0
    %4283 = vmatpush1.msra.mxu0 0.0
    %4284 = vmatprep.subr.mxu0 0.0
    %4285 = vmatpush1.msra.mxu0 0.0
    %4286 = vmatprep.subr.mxu0 0.0
    %4287 = vmatpush1.msra.mxu0 0.0
    %4288 = vmatprep.subr.mxu0 0.0
    %4289 = vmatpush1.msra.mxu0 0.0
    %4290 = vmatprep.subr.mxu0 0.0
    %4291 = vmatpush1.msra.mxu0 0.0
    %4292 = vmatprep.subr.mxu0 0.0
    %4293 = vmatpush1.msra.mxu0 0.0
    %4294 = vmatprep.subr.mxu0 0.0
    %4295 = vmatpush1.msra.mxu0 0.0
    %4296 = vmatprep.subr.mxu0 0.0
    %4297 = vmatpush1.msra.mxu0 0.0
    %4298 = vmatprep.subr.mxu0 0.0
    %4299 = vmatpush1.msra.mxu0 0.0
    %4300 = vmatprep.subr.mxu0 0.0
    %4301 = vmatpush1.msra.mxu0 0.0
    %4302 = vmatprep.mubr.f32.mxu0 0.0
    %4303 = vmatmul.mubr.f32.gmra.mrb[0].mxu0 %v4233
    %v4304 = vpop.f32.mrb[0].mxu0
    %v4305 = vadd.f32 0.0, %v4304
    %v4306 = vpop.f32.mrb[0].mxu0
    %4307 = vmatprep.mubr.f32.mxu0 0.0
    %4308 = vmatmul.mubr.f32.gmra.mrb[0].mxu0 %v4236
    %v4309 = vpop.f32.mrb[0].mxu0
    %v4310 = vadd.f32 0.0, %v4309
    %v4311 = vpop.f32.mrb[0].mxu0
    %4312 = vdwg.mxu0
    %4313 = vrot.lane.b32.xlu0 %v227, 64
    %v4314 = vpop.permute.xlu0 %4313
    %4315 = vrot.lane.b32.xlu0 %v232, 64
    %v4316 = vpop.permute.xlu0 %4315
    %v4320 = vsel %vm3214, %v3496, 0
    %v4323 = vsel %vm3214, %v3498, 0
    %4325 = vmatprep.subr.mxu0 0.0
    %4326 = vmatpush1.msra.mxu0 %v4314
    %4327 = vmatprep.subr.mxu0 0.0
    %4328 = vmatpush1.msra.mxu0 %v4316
    %4329 = vmatprep.subr.mxu0 0.0
    %4330 = vmatpush1.msra.mxu0 0.0
    %4331 = vmatprep.subr.mxu0 0.0
    %4332 = vmatpush1.msra.mxu0 0.0
    %4333 = vmatprep.subr.mxu0 0.0
    %4334 = vmatpush1.msra.mxu0 0.0
    %4335 = vmatprep.subr.mxu0 0.0
    %4336 = vmatpush1.msra.mxu0 0.0
    %4337 = vmatprep.subr.mxu0 0.0
    %4338 = vmatpush1.msra.mxu0 0.0
    %4339 = vmatprep.subr.mxu0 0.0
    %4340 = vmatpush1.msra.mxu0 0.0
    %4341 = vmatprep.subr.mxu0 0.0
    %4342 = vmatpush1.msra.mxu0 0.0
    %4343 = vmatprep.subr.mxu0 0.0
    %4344 = vmatpush1.msra.mxu0 0.0
    %4345 = vmatprep.subr.mxu0 0.0
    %4346 = vmatpush1.msra.mxu0 0.0
    %4347 = vmatprep.subr.mxu0 0.0
    %4348 = vmatpush1.msra.mxu0 0.0
    %4349 = vmatprep.subr.mxu0 0.0
    %4350 = vmatpush1.msra.mxu0 0.0
    %4351 = vmatprep.subr.mxu0 0.0
    %4352 = vmatpush1.msra.mxu0 0.0
    %4353 = vmatprep.subr.mxu0 0.0
    %4354 = vmatpush1.msra.mxu0 0.0
    %4355 = vmatprep.subr.mxu0 0.0
    %4356 = vmatpush1.msra.mxu0 0.0
    %4357 = vmatprep.subr.mxu0 0.0
    %4358 = vmatpush1.msra.mxu0 0.0
    %4359 = vmatprep.subr.mxu0 0.0
    %4360 = vmatpush1.msra.mxu0 0.0
    %4361 = vmatprep.subr.mxu0 0.0
    %4362 = vmatpush1.msra.mxu0 0.0
    %4363 = vmatprep.subr.mxu0 0.0
    %4364 = vmatpush1.msra.mxu0 0.0
    %4365 = vmatprep.subr.mxu0 0.0
    %4366 = vmatpush1.msra.mxu0 0.0
    %4367 = vmatprep.subr.mxu0 0.0
    %4368 = vmatpush1.msra.mxu0 0.0
    %4369 = vmatprep.subr.mxu0 0.0
    %4370 = vmatpush1.msra.mxu0 0.0
    %4371 = vmatprep.subr.mxu0 0.0
    %4372 = vmatpush1.msra.mxu0 0.0
    %4373 = vmatprep.subr.mxu0 0.0
    %4374 = vmatpush1.msra.mxu0 0.0
    %4375 = vmatprep.subr.mxu0 0.0
    %4376 = vmatpush1.msra.mxu0 0.0
    %4377 = vmatprep.subr.mxu0 0.0
    %4378 = vmatpush1.msra.mxu0 0.0
    %4379 = vmatprep.subr.mxu0 0.0
    %4380 = vmatpush1.msra.mxu0 0.0
    %4381 = vmatprep.subr.mxu0 0.0
    %4382 = vmatpush1.msra.mxu0 0.0
    %4383 = vmatprep.subr.mxu0 0.0
    %4384 = vmatpush1.msra.mxu0 0.0
    %4385 = vmatprep.subr.mxu0 0.0
    %4386 = vmatpush1.msra.mxu0 0.0
    %4387 = vmatprep.subr.mxu0 0.0
    %4388 = vmatpush1.msra.mxu0 0.0
    %4389 = vmatprep.mubr.f32.mxu0 0.0
    %4390 = vmatmul.mubr.f32.gmra.mrb[0].mxu0 %v4320
    %v4391 = vpop.f32.mrb[0].mxu0
    %v4392 = vadd.f32 0.0, %v4391
    %v4393 = vpop.f32.mrb[0].mxu0
    %4394 = vmatprep.mubr.f32.mxu0 0.0
    %4395 = vmatmul.mubr.f32.gmra.mrb[0].mxu0 %v4323
    %v4396 = vpop.f32.mrb[0].mxu0
    %v4397 = vadd.f32 0.0, %v4396
    %v4398 = vpop.f32.mrb[0].mxu0
    %4399 = vdwg.mxu0
    %4400 = vrot.lane.b32.xlu0 %v237, 64
    %v4401 = vpop.permute.xlu0 %4400
    %4402 = vrot.lane.b32.xlu0 %v242, 64
    %v4403 = vpop.permute.xlu0 %4402
    %v4407 = vsel %vm3214, %v3500, 0
    %v4410 = vsel %vm3214, %v3502, 0
    %4412 = vmatprep.subr.mxu0 0.0
    %4413 = vmatpush1.msra.mxu0 %v4401
    %4414 = vmatprep.subr.mxu0 0.0
    %4415 = vmatpush1.msra.mxu0 %v4403
    %4416 = vmatprep.subr.mxu0 0.0
    %4417 = vmatpush1.msra.mxu0 0.0
    %4418 = vmatprep.subr.mxu0 0.0
    %4419 = vmatpush1.msra.mxu0 0.0
    %4420 = vmatprep.subr.mxu0 0.0
    %4421 = vmatpush1.msra.mxu0 0.0
    %4422 = vmatprep.subr.mxu0 0.0
    %4423 = vmatpush1.msra.mxu0 0.0
    %4424 = vmatprep.subr.mxu0 0.0
    %4425 = vmatpush1.msra.mxu0 0.0
    %4426 = vmatprep.subr.mxu0 0.0
    %4427 = vmatpush1.msra.mxu0 0.0
    %4428 = vmatprep.subr.mxu0 0.0
    %4429 = vmatpush1.msra.mxu0 0.0
    %4430 = vmatprep.subr.mxu0 0.0
    %4431 = vmatpush1.msra.mxu0 0.0
    %4432 = vmatprep.subr.mxu0 0.0
    %4433 = vmatpush1.msra.mxu0 0.0
    %4434 = vmatprep.subr.mxu0 0.0
    %4435 = vmatpush1.msra.mxu0 0.0
    %4436 = vmatprep.subr.mxu0 0.0
    %4437 = vmatpush1.msra.mxu0 0.0
    %4438 = vmatprep.subr.mxu0 0.0
    %4439 = vmatpush1.msra.mxu0 0.0
    %4440 = vmatprep.subr.mxu0 0.0
    %4441 = vmatpush1.msra.mxu0 0.0
    %4442 = vmatprep.subr.mxu0 0.0
    %4443 = vmatpush1.msra.mxu0 0.0
    %4444 = vmatprep.subr.mxu0 0.0
    %4445 = vmatpush1.msra.mxu0 0.0
    %4446 = vmatprep.subr.mxu0 0.0
    %4447 = vmatpush1.msra.mxu0 0.0
    %4448 = vmatprep.subr.mxu0 0.0
    %4449 = vmatpush1.msra.mxu0 0.0
    %4450 = vmatprep.subr.mxu0 0.0
    %4451 = vmatpush1.msra.mxu0 0.0
    %4452 = vmatprep.subr.mxu0 0.0
    %4453 = vmatpush1.msra.mxu0 0.0
    %4454 = vmatprep.subr.mxu0 0.0
    %4455 = vmatpush1.msra.mxu0 0.0
    %4456 = vmatprep.subr.mxu0 0.0
    %4457 = vmatpush1.msra.mxu0 0.0
    %4458 = vmatprep.subr.mxu0 0.0
    %4459 = vmatpush1.msra.mxu0 0.0
    %4460 = vmatprep.subr.mxu0 0.0
    %4461 = vmatpush1.msra.mxu0 0.0
    %4462 = vmatprep.subr.mxu0 0.0
    %4463 = vmatpush1.msra.mxu0 0.0
    %4464 = vmatprep.subr.mxu0 0.0
    %4465 = vmatpush1.msra.mxu0 0.0
    %4466 = vmatprep.subr.mxu0 0.0
    %4467 = vmatpush1.msra.mxu0 0.0
    %4468 = vmatprep.subr.mxu0 0.0
    %4469 = vmatpush1.msra.mxu0 0.0
    %4470 = vmatprep.subr.mxu0 0.0
    %4471 = vmatpush1.msra.mxu0 0.0
    %4472 = vmatprep.subr.mxu0 0.0
    %4473 = vmatpush1.msra.mxu0 0.0
    %4474 = vmatprep.subr.mxu0 0.0
    %4475 = vmatpush1.msra.mxu0 0.0
    %4476 = vmatprep.mubr.f32.mxu0 0.0
    %4477 = vmatmul.mubr.f32.gmra.mrb[0].mxu0 %v4407
    %v4478 = vpop.f32.mrb[0].mxu0
    %v4479 = vadd.f32 0.0, %v4478
    %v4480 = vpop.f32.mrb[0].mxu0
    %4481 = vmatprep.mubr.f32.mxu0 0.0
    %4482 = vmatmul.mubr.f32.gmra.mrb[0].mxu0 %v4410
    %v4483 = vpop.f32.mrb[0].mxu0
    %v4484 = vadd.f32 0.0, %v4483
    %v4485 = vpop.f32.mrb[0].mxu0
    %4486 = vdwg.mxu0
    %4487 = vrot.lane.b32.xlu0 %v262, 64
    %v4488 = vpop.permute.xlu0 %4487
    %4489 = vrot.lane.b32.xlu0 %v264, 64
    %v4490 = vpop.permute.xlu0 %4489
    %v4494 = vsel %vm3214, %v3504, 0
    %v4497 = vsel %vm3214, %v3506, 0
    %4499 = vmatprep.subr.mxu0 0.0
    %4500 = vmatpush1.msra.mxu0 %v4488
    %4501 = vmatprep.subr.mxu0 0.0
    %4502 = vmatpush1.msra.mxu0 %v4490
    %4503 = vmatprep.subr.mxu0 0.0
    %4504 = vmatpush1.msra.mxu0 0.0
    %4505 = vmatprep.subr.mxu0 0.0
    %4506 = vmatpush1.msra.mxu0 0.0
    %4507 = vmatprep.subr.mxu0 0.0
    %4508 = vmatpush1.msra.mxu0 0.0
    %4509 = vmatprep.subr.mxu0 0.0
    %4510 = vmatpush1.msra.mxu0 0.0
    %4511 = vmatprep.subr.mxu0 0.0
    %4512 = vmatpush1.msra.mxu0 0.0
    %4513 = vmatprep.subr.mxu0 0.0
    %4514 = vmatpush1.msra.mxu0 0.0
    %4515 = vmatprep.subr.mxu0 0.0
    %4516 = vmatpush1.msra.mxu0 0.0
    %4517 = vmatprep.subr.mxu0 0.0
    %4518 = vmatpush1.msra.mxu0 0.0
    %4519 = vmatprep.subr.mxu0 0.0
    %4520 = vmatpush1.msra.mxu0 0.0
    %4521 = vmatprep.subr.mxu0 0.0
    %4522 = vmatpush1.msra.mxu0 0.0
    %4523 = vmatprep.subr.mxu0 0.0
    %4524 = vmatpush1.msra.mxu0 0.0
    %4525 = vmatprep.subr.mxu0 0.0
    %4526 = vmatpush1.msra.mxu0 0.0
    %4527 = vmatprep.subr.mxu0 0.0
    %4528 = vmatpush1.msra.mxu0 0.0
    %4529 = vmatprep.subr.mxu0 0.0
    %4530 = vmatpush1.msra.mxu0 0.0
    %4531 = vmatprep.subr.mxu0 0.0
    %4532 = vmatpush1.msra.mxu0 0.0
    %4533 = vmatprep.subr.mxu0 0.0
    %4534 = vmatpush1.msra.mxu0 0.0
    %4535 = vmatprep.subr.mxu0 0.0
    %4536 = vmatpush1.msra.mxu0 0.0
    %4537 = vmatprep.subr.mxu0 0.0
    %4538 = vmatpush1.msra.mxu0 0.0
    %4539 = vmatprep.subr.mxu0 0.0
    %4540 = vmatpush1.msra.mxu0 0.0
    %4541 = vmatprep.subr.mxu0 0.0
    %4542 = vmatpush1.msra.mxu0 0.0
    %4543 = vmatprep.subr.mxu0 0.0
    %4544 = vmatpush1.msra.mxu0 0.0
    %4545 = vmatprep.subr.mxu0 0.0
    %4546 = vmatpush1.msra.mxu0 0.0
    %4547 = vmatprep.subr.mxu0 0.0
    %4548 = vmatpush1.msra.mxu0 0.0
    %4549 = vmatprep.subr.mxu0 0.0
    %4550 = vmatpush1.msra.mxu0 0.0
    %4551 = vmatprep.subr.mxu0 0.0
    %4552 = vmatpush1.msra.mxu0 0.0
    %4553 = vmatprep.subr.mxu0 0.0
    %4554 = vmatpush1.msra.mxu0 0.0
    %4555 = vmatprep.subr.mxu0 0.0
    %4556 = vmatpush1.msra.mxu0 0.0
    %4557 = vmatprep.subr.mxu0 0.0
    %4558 = vmatpush1.msra.mxu0 0.0
    %4559 = vmatprep.subr.mxu0 0.0
    %4560 = vmatpush1.msra.mxu0 0.0
    %4561 = vmatprep.subr.mxu0 0.0
    %4562 = vmatpush1.msra.mxu0 0.0
    %4563 = vmatprep.mubr.f32.mxu0 0.0
    %4564 = vmatmul.mubr.f32.gmra.mrb[0].mxu0 %v4494
    %v4565 = vpop.f32.mrb[0].mxu0
    %v4566 = vadd.f32 0.0, %v4565
    %v4567 = vpop.f32.mrb[0].mxu0
    %4568 = vmatprep.mubr.f32.mxu0 0.0
    %4569 = vmatmul.mubr.f32.gmra.mrb[0].mxu0 %v4497
    %v4570 = vpop.f32.mrb[0].mxu0
    %v4571 = vadd.f32 0.0, %v4570
    %v4572 = vpop.f32.mrb[0].mxu0
    %4573 = vdwg.mxu0
    %4574 = vrot.lane.b32.xlu0 %v266, 64
    %v4575 = vpop.permute.xlu0 %4574
    %4576 = vrot.lane.b32.xlu0 %v268, 64
    %v4577 = vpop.permute.xlu0 %4576
    %v4581 = vsel %vm3214, %v3508, 0
    %v4584 = vsel %vm3214, %v3510, 0
    %4586 = vmatprep.subr.mxu0 0.0
    %4587 = vmatpush1.msra.mxu0 %v4575
    %4588 = vmatprep.subr.mxu0 0.0
    %4589 = vmatpush1.msra.mxu0 %v4577
    %4590 = vmatprep.subr.mxu0 0.0
    %4591 = vmatpush1.msra.mxu0 0.0
    %4592 = vmatprep.subr.mxu0 0.0
    %4593 = vmatpush1.msra.mxu0 0.0
    %4594 = vmatprep.subr.mxu0 0.0
    %4595 = vmatpush1.msra.mxu0 0.0
    %4596 = vmatprep.subr.mxu0 0.0
    %4597 = vmatpush1.msra.mxu0 0.0
    %4598 = vmatprep.subr.mxu0 0.0
    %4599 = vmatpush1.msra.mxu0 0.0
    %4600 = vmatprep.subr.mxu0 0.0
    %4601 = vmatpush1.msra.mxu0 0.0
    %4602 = vmatprep.subr.mxu0 0.0
    %4603 = vmatpush1.msra.mxu0 0.0
    %4604 = vmatprep.subr.mxu0 0.0
    %4605 = vmatpush1.msra.mxu0 0.0
    %4606 = vmatprep.subr.mxu0 0.0
    %4607 = vmatpush1.msra.mxu0 0.0
    %4608 = vmatprep.subr.mxu0 0.0
    %4609 = vmatpush1.msra.mxu0 0.0
    %4610 = vmatprep.subr.mxu0 0.0
    %4611 = vmatpush1.msra.mxu0 0.0
    %4612 = vmatprep.subr.mxu0 0.0
    %4613 = vmatpush1.msra.mxu0 0.0
    %4614 = vmatprep.subr.mxu0 0.0
    %4615 = vmatpush1.msra.mxu0 0.0
    %4616 = vmatprep.subr.mxu0 0.0
    %4617 = vmatpush1.msra.mxu0 0.0
    %4618 = vmatprep.subr.mxu0 0.0
    %4619 = vmatpush1.msra.mxu0 0.0
    %4620 = vmatprep.subr.mxu0 0.0
    %4621 = vmatpush1.msra.mxu0 0.0
    %4622 = vmatprep.subr.mxu0 0.0
    %4623 = vmatpush1.msra.mxu0 0.0
    %4624 = vmatprep.subr.mxu0 0.0
    %4625 = vmatpush1.msra.mxu0 0.0
    %4626 = vmatprep.subr.mxu0 0.0
    %4627 = vmatpush1.msra.mxu0 0.0
    %4628 = vmatprep.subr.mxu0 0.0
    %4629 = vmatpush1.msra.mxu0 0.0
    %4630 = vmatprep.subr.mxu0 0.0
    %4631 = vmatpush1.msra.mxu0 0.0
    %4632 = vmatprep.subr.mxu0 0.0
    %4633 = vmatpush1.msra.mxu0 0.0
    %4634 = vmatprep.subr.mxu0 0.0
    %4635 = vmatpush1.msra.mxu0 0.0
    %4636 = vmatprep.subr.mxu0 0.0
    %4637 = vmatpush1.msra.mxu0 0.0
    %4638 = vmatprep.subr.mxu0 0.0
    %4639 = vmatpush1.msra.mxu0 0.0
    %4640 = vmatprep.subr.mxu0 0.0
    %4641 = vmatpush1.msra.mxu0 0.0
    %4642 = vmatprep.subr.mxu0 0.0
    %4643 = vmatpush1.msra.mxu0 0.0
    %4644 = vmatprep.subr.mxu0 0.0
    %4645 = vmatpush1.msra.mxu0 0.0
    %4646 = vmatprep.subr.mxu0 0.0
    %4647 = vmatpush1.msra.mxu0 0.0
    %4648 = vmatprep.subr.mxu0 0.0
    %4649 = vmatpush1.msra.mxu0 0.0
    %4650 = vmatprep.mubr.f32.mxu0 0.0
    %4651 = vmatmul.mubr.f32.gmra.mrb[0].mxu0 %v4581
    %v4652 = vpop.f32.mrb[0].mxu0
    %v4653 = vadd.f32 0.0, %v4652
    %v4654 = vpop.f32.mrb[0].mxu0
    %4655 = vmatprep.mubr.f32.mxu0 0.0
    %4656 = vmatmul.mubr.f32.gmra.mrb[0].mxu0 %v4584
    %v4657 = vpop.f32.mrb[0].mxu0
    %v4658 = vadd.f32 0.0, %v4657
    %v4659 = vpop.f32.mrb[0].mxu0
    %4660 = vdwg.mxu0
    %4661 = vrot.lane.b32.xlu0 %v270, 64
    %v4662 = vpop.permute.xlu0 %4661
    %4663 = vrot.lane.b32.xlu0 %v272, 64
    %v4664 = vpop.permute.xlu0 %4663
    %v4668 = vsel %vm3214, %v3512, 0
    %v4671 = vsel %vm3214, %v3514, 0
    %4673 = vmatprep.subr.mxu0 0.0
    %4674 = vmatpush1.msra.mxu0 %v4662
    %4675 = vmatprep.subr.mxu0 0.0
    %4676 = vmatpush1.msra.mxu0 %v4664
    %4677 = vmatprep.subr.mxu0 0.0
    %4678 = vmatpush1.msra.mxu0 0.0
    %4679 = vmatprep.subr.mxu0 0.0
    %4680 = vmatpush1.msra.mxu0 0.0
    %4681 = vmatprep.subr.mxu0 0.0
    %4682 = vmatpush1.msra.mxu0 0.0
    %4683 = vmatprep.subr.mxu0 0.0
    %4684 = vmatpush1.msra.mxu0 0.0
    %4685 = vmatprep.subr.mxu0 0.0
    %4686 = vmatpush1.msra.mxu0 0.0
    %4687 = vmatprep.subr.mxu0 0.0
    %4688 = vmatpush1.msra.mxu0 0.0
    %4689 = vmatprep.subr.mxu0 0.0
    %4690 = vmatpush1.msra.mxu0 0.0
    %4691 = vmatprep.subr.mxu0 0.0
    %4692 = vmatpush1.msra.mxu0 0.0
    %4693 = vmatprep.subr.mxu0 0.0
    %4694 = vmatpush1.msra.mxu0 0.0
    %4695 = vmatprep.subr.mxu0 0.0
    %4696 = vmatpush1.msra.mxu0 0.0
    %4697 = vmatprep.subr.mxu0 0.0
    %4698 = vmatpush1.msra.mxu0 0.0
    %4699 = vmatprep.subr.mxu0 0.0
    %4700 = vmatpush1.msra.mxu0 0.0
    %4701 = vmatprep.subr.mxu0 0.0
    %4702 = vmatpush1.msra.mxu0 0.0
    %4703 = vmatprep.subr.mxu0 0.0
    %4704 = vmatpush1.msra.mxu0 0.0
    %4705 = vmatprep.subr.mxu0 0.0
    %4706 = vmatpush1.msra.mxu0 0.0
    %4707 = vmatprep.subr.mxu0 0.0
    %4708 = vmatpush1.msra.mxu0 0.0
    %4709 = vmatprep.subr.mxu0 0.0
    %4710 = vmatpush1.msra.mxu0 0.0
    %4711 = vmatprep.subr.mxu0 0.0
    %4712 = vmatpush1.msra.mxu0 0.0
    %4713 = vmatprep.subr.mxu0 0.0
    %4714 = vmatpush1.msra.mxu0 0.0
    %4715 = vmatprep.subr.mxu0 0.0
    %4716 = vmatpush1.msra.mxu0 0.0
    %4717 = vmatprep.subr.mxu0 0.0
    %4718 = vmatpush1.msra.mxu0 0.0
    %4719 = vmatprep.subr.mxu0 0.0
    %4720 = vmatpush1.msra.mxu0 0.0
    %4721 = vmatprep.subr.mxu0 0.0
    %4722 = vmatpush1.msra.mxu0 0.0
    %4723 = vmatprep.subr.mxu0 0.0
    %4724 = vmatpush1.msra.mxu0 0.0
    %4725 = vmatprep.subr.mxu0 0.0
    %4726 = vmatpush1.msra.mxu0 0.0
    %4727 = vmatprep.subr.mxu0 0.0
    %4728 = vmatpush1.msra.mxu0 0.0
    %4729 = vmatprep.subr.mxu0 0.0
    %4730 = vmatpush1.msra.mxu0 0.0
    %4731 = vmatprep.subr.mxu0 0.0
    %4732 = vmatpush1.msra.mxu0 0.0
    %4733 = vmatprep.subr.mxu0 0.0
    %4734 = vmatpush1.msra.mxu0 0.0
    %4735 = vmatprep.subr.mxu0 0.0
    %4736 = vmatpush1.msra.mxu0 0.0
    %4737 = vmatprep.mubr.f32.mxu0 0.0
    %4738 = vmatmul.mubr.f32.gmra.mrb[0].mxu0 %v4668
    %v4739 = vpop.f32.mrb[0].mxu0
    %v4740 = vadd.f32 0.0, %v4739
    %v4741 = vpop.f32.mrb[0].mxu0
    %4742 = vmatprep.mubr.f32.mxu0 0.0
    %4743 = vmatmul.mubr.f32.gmra.mrb[0].mxu0 %v4671
    %v4744 = vpop.f32.mrb[0].mxu0
    %v4745 = vadd.f32 0.0, %v4744
    %v4746 = vpop.f32.mrb[0].mxu0
    %4747 = vdwg.mxu0
    %4748 = vrot.lane.b32.xlu0 %v274, 64
    %v4749 = vpop.permute.xlu0 %4748
    %4750 = vrot.lane.b32.xlu0 %v276, 64
    %v4751 = vpop.permute.xlu0 %4750
    %v4755 = vsel %vm3214, %v3516, 0
    %v4758 = vsel %vm3214, %v3518, 0
    %4760 = vmatprep.subr.mxu0 0.0
    %4761 = vmatpush1.msra.mxu0 %v4749
    %4762 = vmatprep.subr.mxu0 0.0
    %4763 = vmatpush1.msra.mxu0 %v4751
    %4764 = vmatprep.subr.mxu0 0.0
    %4765 = vmatpush1.msra.mxu0 0.0
    %4766 = vmatprep.subr.mxu0 0.0
    %4767 = vmatpush1.msra.mxu0 0.0
    %4768 = vmatprep.subr.mxu0 0.0
    %4769 = vmatpush1.msra.mxu0 0.0
    %4770 = vmatprep.subr.mxu0 0.0
    %4771 = vmatpush1.msra.mxu0 0.0
    %4772 = vmatprep.subr.mxu0 0.0
    %4773 = vmatpush1.msra.mxu0 0.0
    %4774 = vmatprep.subr.mxu0 0.0
    %4775 = vmatpush1.msra.mxu0 0.0
    %4776 = vmatprep.subr.mxu0 0.0
    %4777 = vmatpush1.msra.mxu0 0.0
    %4778 = vmatprep.subr.mxu0 0.0
    %4779 = vmatpush1.msra.mxu0 0.0
    %4780 = vmatprep.subr.mxu0 0.0
    %4781 = vmatpush1.msra.mxu0 0.0
    %4782 = vmatprep.subr.mxu0 0.0
    %4783 = vmatpush1.msra.mxu0 0.0
    %4784 = vmatprep.subr.mxu0 0.0
    %4785 = vmatpush1.msra.mxu0 0.0
    %4786 = vmatprep.subr.mxu0 0.0
    %4787 = vmatpush1.msra.mxu0 0.0
    %4788 = vmatprep.subr.mxu0 0.0
    %4789 = vmatpush1.msra.mxu0 0.0
    %4790 = vmatprep.subr.mxu0 0.0
    %4791 = vmatpush1.msra.mxu0 0.0
    %4792 = vmatprep.subr.mxu0 0.0
    %4793 = vmatpush1.msra.mxu0 0.0
    %4794 = vmatprep.subr.mxu0 0.0
    %4795 = vmatpush1.msra.mxu0 0.0
    %4796 = vmatprep.subr.mxu0 0.0
    %4797 = vmatpush1.msra.mxu0 0.0
    %4798 = vmatprep.subr.mxu0 0.0
    %4799 = vmatpush1.msra.mxu0 0.0
    %4800 = vmatprep.subr.mxu0 0.0
    %4801 = vmatpush1.msra.mxu0 0.0
    %4802 = vmatprep.subr.mxu0 0.0
    %4803 = vmatpush1.msra.mxu0 0.0
    %4804 = vmatprep.subr.mxu0 0.0
    %4805 = vmatpush1.msra.mxu0 0.0
    %4806 = vmatprep.subr.mxu0 0.0
    %4807 = vmatpush1.msra.mxu0 0.0
    %4808 = vmatprep.subr.mxu0 0.0
    %4809 = vmatpush1.msra.mxu0 0.0
    %4810 = vmatprep.subr.mxu0 0.0
    %4811 = vmatpush1.msra.mxu0 0.0
    %4812 = vmatprep.subr.mxu0 0.0
    %4813 = vmatpush1.msra.mxu0 0.0
    %4814 = vmatprep.subr.mxu0 0.0
    %4815 = vmatpush1.msra.mxu0 0.0
    %4816 = vmatprep.subr.mxu0 0.0
    %4817 = vmatpush1.msra.mxu0 0.0
    %4818 = vmatprep.subr.mxu0 0.0
    %4819 = vmatpush1.msra.mxu0 0.0
    %4820 = vmatprep.subr.mxu0 0.0
    %4821 = vmatpush1.msra.mxu0 0.0
    %4822 = vmatprep.subr.mxu0 0.0
    %4823 = vmatpush1.msra.mxu0 0.0
    %4824 = vmatprep.mubr.f32.mxu0 0.0
    %4825 = vmatmul.mubr.f32.gmra.mrb[0].mxu0 %v4755
    %v4826 = vpop.f32.mrb[0].mxu0
    %v4827 = vadd.f32 0.0, %v4826
    %v4828 = vpop.f32.mrb[0].mxu0
    %4829 = vmatprep.mubr.f32.mxu0 0.0
    %4830 = vmatmul.mubr.f32.gmra.mrb[0].mxu0 %v4758
    %v4831 = vpop.f32.mrb[0].mxu0
    %v4832 = vadd.f32 0.0, %v4831
    %v4833 = vpop.f32.mrb[0].mxu0
    %4834 = vdwg.mxu0
    %4835 = vrot.lane.b32.xlu0 %v278, 64
    %v4836 = vpop.permute.xlu0 %4835
    %4837 = vrot.lane.b32.xlu0 %v280, 64
    %v4838 = vpop.permute.xlu0 %4837
    %v4842 = vsel %vm3214, %v3520, 0
    %v4845 = vsel %vm3214, %v3522, 0
    %4847 = vmatprep.subr.mxu0 0.0
    %4848 = vmatpush1.msra.mxu0 %v4836
    %4849 = vmatprep.subr.mxu0 0.0
    %4850 = vmatpush1.msra.mxu0 %v4838
    %4851 = vmatprep.subr.mxu0 0.0
    %4852 = vmatpush1.msra.mxu0 0.0
    %4853 = vmatprep.subr.mxu0 0.0
    %4854 = vmatpush1.msra.mxu0 0.0
    %4855 = vmatprep.subr.mxu0 0.0
    %4856 = vmatpush1.msra.mxu0 0.0
    %4857 = vmatprep.subr.mxu0 0.0
    %4858 = vmatpush1.msra.mxu0 0.0
    %4859 = vmatprep.subr.mxu0 0.0
    %4860 = vmatpush1.msra.mxu0 0.0
    %4861 = vmatprep.subr.mxu0 0.0
    %4862 = vmatpush1.msra.mxu0 0.0
    %4863 = vmatprep.subr.mxu0 0.0
    %4864 = vmatpush1.msra.mxu0 0.0
    %4865 = vmatprep.subr.mxu0 0.0
    %4866 = vmatpush1.msra.mxu0 0.0
    %4867 = vmatprep.subr.mxu0 0.0
    %4868 = vmatpush1.msra.mxu0 0.0
    %4869 = vmatprep.subr.mxu0 0.0
    %4870 = vmatpush1.msra.mxu0 0.0
    %4871 = vmatprep.subr.mxu0 0.0
    %4872 = vmatpush1.msra.mxu0 0.0
    %4873 = vmatprep.subr.mxu0 0.0
    %4874 = vmatpush1.msra.mxu0 0.0
    %4875 = vmatprep.subr.mxu0 0.0
    %4876 = vmatpush1.msra.mxu0 0.0
    %4877 = vmatprep.subr.mxu0 0.0
    %4878 = vmatpush1.msra.mxu0 0.0
    %4879 = vmatprep.subr.mxu0 0.0
    %4880 = vmatpush1.msra.mxu0 0.0
    %4881 = vmatprep.subr.mxu0 0.0
    %4882 = vmatpush1.msra.mxu0 0.0
    %4883 = vmatprep.subr.mxu0 0.0
    %4884 = vmatpush1.msra.mxu0 0.0
    %4885 = vmatprep.subr.mxu0 0.0
    %4886 = vmatpush1.msra.mxu0 0.0
    %4887 = vmatprep.subr.mxu0 0.0
    %4888 = vmatpush1.msra.mxu0 0.0
    %4889 = vmatprep.subr.mxu0 0.0
    %4890 = vmatpush1.msra.mxu0 0.0
    %4891 = vmatprep.subr.mxu0 0.0
    %4892 = vmatpush1.msra.mxu0 0.0
    %4893 = vmatprep.subr.mxu0 0.0
    %4894 = vmatpush1.msra.mxu0 0.0
    %4895 = vmatprep.subr.mxu0 0.0
    %4896 = vmatpush1.msra.mxu0 0.0
    %4897 = vmatprep.subr.mxu0 0.0
    %4898 = vmatpush1.msra.mxu0 0.0
    %4899 = vmatprep.subr.mxu0 0.0
    %4900 = vmatpush1.msra.mxu0 0.0
    %4901 = vmatprep.subr.mxu0 0.0
    %4902 = vmatpush1.msra.mxu0 0.0
    %4903 = vmatprep.subr.mxu0 0.0
    %4904 = vmatpush1.msra.mxu0 0.0
    %4905 = vmatprep.subr.mxu0 0.0
    %4906 = vmatpush1.msra.mxu0 0.0
    %4907 = vmatprep.subr.mxu0 0.0
    %4908 = vmatpush1.msra.mxu0 0.0
    %4909 = vmatprep.subr.mxu0 0.0
    %4910 = vmatpush1.msra.mxu0 0.0
    %4911 = vmatprep.mubr.f32.mxu0 0.0
    %4912 = vmatmul.mubr.f32.gmra.mrb[0].mxu0 %v4842
    %v4913 = vpop.f32.mrb[0].mxu0
    %v4914 = vadd.f32 0.0, %v4913
    %v4915 = vpop.f32.mrb[0].mxu0
    %4916 = vmatprep.mubr.f32.mxu0 0.0
    %4917 = vmatmul.mubr.f32.gmra.mrb[0].mxu0 %v4845
    %v4918 = vpop.f32.mrb[0].mxu0
    %v4919 = vadd.f32 0.0, %v4918
    %v4920 = vpop.f32.mrb[0].mxu0
    %4921 = vdwg.mxu0
    %4922 = vrot.lane.b32.xlu0 %v282, 64
    %v4923 = vpop.permute.xlu0 %4922
    %4924 = vrot.lane.b32.xlu0 %v284, 64
    %v4925 = vpop.permute.xlu0 %4924
    %v4929 = vsel %vm3214, %v3524, 0
    %v4932 = vsel %vm3214, %v3526, 0
    %4934 = vmatprep.subr.mxu0 0.0
    %4935 = vmatpush1.msra.mxu0 %v4923
    %4936 = vmatprep.subr.mxu0 0.0
    %4937 = vmatpush1.msra.mxu0 %v4925
    %4938 = vmatprep.subr.mxu0 0.0
    %4939 = vmatpush1.msra.mxu0 0.0
    %4940 = vmatprep.subr.mxu0 0.0
    %4941 = vmatpush1.msra.mxu0 0.0
    %4942 = vmatprep.subr.mxu0 0.0
    %4943 = vmatpush1.msra.mxu0 0.0
    %4944 = vmatprep.subr.mxu0 0.0
    %4945 = vmatpush1.msra.mxu0 0.0
    %4946 = vmatprep.subr.mxu0 0.0
    %4947 = vmatpush1.msra.mxu0 0.0
    %4948 = vmatprep.subr.mxu0 0.0
    %4949 = vmatpush1.msra.mxu0 0.0
    %4950 = vmatprep.subr.mxu0 0.0
    %4951 = vmatpush1.msra.mxu0 0.0
    %4952 = vmatprep.subr.mxu0 0.0
    %4953 = vmatpush1.msra.mxu0 0.0
    %4954 = vmatprep.subr.mxu0 0.0
    %4955 = vmatpush1.msra.mxu0 0.0
    %4956 = vmatprep.subr.mxu0 0.0
    %4957 = vmatpush1.msra.mxu0 0.0
    %4958 = vmatprep.subr.mxu0 0.0
    %4959 = vmatpush1.msra.mxu0 0.0
    %4960 = vmatprep.subr.mxu0 0.0
    %4961 = vmatpush1.msra.mxu0 0.0
    %4962 = vmatprep.subr.mxu0 0.0
    %4963 = vmatpush1.msra.mxu0 0.0
    %4964 = vmatprep.subr.mxu0 0.0
    %4965 = vmatpush1.msra.mxu0 0.0
    %4966 = vmatprep.subr.mxu0 0.0
    %4967 = vmatpush1.msra.mxu0 0.0
    %4968 = vmatprep.subr.mxu0 0.0
    %4969 = vmatpush1.msra.mxu0 0.0
    %4970 = vmatprep.subr.mxu0 0.0
    %4971 = vmatpush1.msra.mxu0 0.0
    %4972 = vmatprep.subr.mxu0 0.0
    %4973 = vmatpush1.msra.mxu0 0.0
    %4974 = vmatprep.subr.mxu0 0.0
    %4975 = vmatpush1.msra.mxu0 0.0
    %4976 = vmatprep.subr.mxu0 0.0
    %4977 = vmatpush1.msra.mxu0 0.0
    %4978 = vmatprep.subr.mxu0 0.0
    %4979 = vmatpush1.msra.mxu0 0.0
    %4980 = vmatprep.subr.mxu0 0.0
    %4981 = vmatpush1.msra.mxu0 0.0
    %4982 = vmatprep.subr.mxu0 0.0
    %4983 = vmatpush1.msra.mxu0 0.0
    %4984 = vmatprep.subr.mxu0 0.0
    %4985 = vmatpush1.msra.mxu0 0.0
    %4986 = vmatprep.subr.mxu0 0.0
    %4987 = vmatpush1.msra.mxu0 0.0
    %4988 = vmatprep.subr.mxu0 0.0
    %4989 = vmatpush1.msra.mxu0 0.0
    %4990 = vmatprep.subr.mxu0 0.0
    %4991 = vmatpush1.msra.mxu0 0.0
    %4992 = vmatprep.subr.mxu0 0.0
    %4993 = vmatpush1.msra.mxu0 0.0
    %4994 = vmatprep.subr.mxu0 0.0
    %4995 = vmatpush1.msra.mxu0 0.0
    %4996 = vmatprep.subr.mxu0 0.0
    %4997 = vmatpush1.msra.mxu0 0.0
    %4998 = vmatprep.mubr.f32.mxu0 0.0
    %4999 = vmatmul.mubr.f32.gmra.mrb[0].mxu0 %v4929
    %v5000 = vpop.f32.mrb[0].mxu0
    %v5001 = vadd.f32 0.0, %v5000
    %v5002 = vpop.f32.mrb[0].mxu0
    %5003 = vmatprep.mubr.f32.mxu0 0.0
    %5004 = vmatmul.mubr.f32.gmra.mrb[0].mxu0 %v4932
    %v5005 = vpop.f32.mrb[0].mxu0
    %v5006 = vadd.f32 0.0, %v5005
    %v5007 = vpop.f32.mrb[0].mxu0
    %5008 = vdwg.mxu0
    %5009 = vrot.lane.b32.xlu0 %v286, 64
    %v5010 = vpop.permute.xlu0 %5009
    %5011 = vrot.lane.b32.xlu0 %v288, 64
    %v5012 = vpop.permute.xlu0 %5011
    %v5016 = vsel %vm3214, %v3528, 0
    %v5019 = vsel %vm3214, %v3530, 0
    %5021 = vmatprep.subr.mxu0 0.0
    %5022 = vmatpush1.msra.mxu0 %v5010
    %5023 = vmatprep.subr.mxu0 0.0
    %5024 = vmatpush1.msra.mxu0 %v5012
    %5025 = vmatprep.subr.mxu0 0.0
    %5026 = vmatpush1.msra.mxu0 0.0
    %5027 = vmatprep.subr.mxu0 0.0
    %5028 = vmatpush1.msra.mxu0 0.0
    %5029 = vmatprep.subr.mxu0 0.0
    %5030 = vmatpush1.msra.mxu0 0.0
    %5031 = vmatprep.subr.mxu0 0.0
    %5032 = vmatpush1.msra.mxu0 0.0
    %5033 = vmatprep.subr.mxu0 0.0
    %5034 = vmatpush1.msra.mxu0 0.0
    %5035 = vmatprep.subr.mxu0 0.0
    %5036 = vmatpush1.msra.mxu0 0.0
    %5037 = vmatprep.subr.mxu0 0.0
    %5038 = vmatpush1.msra.mxu0 0.0
    %5039 = vmatprep.subr.mxu0 0.0
    %5040 = vmatpush1.msra.mxu0 0.0
    %5041 = vmatprep.subr.mxu0 0.0
    %5042 = vmatpush1.msra.mxu0 0.0
    %5043 = vmatprep.subr.mxu0 0.0
    %5044 = vmatpush1.msra.mxu0 0.0
    %5045 = vmatprep.subr.mxu0 0.0
    %5046 = vmatpush1.msra.mxu0 0.0
    %5047 = vmatprep.subr.mxu0 0.0
    %5048 = vmatpush1.msra.mxu0 0.0
    %5049 = vmatprep.subr.mxu0 0.0
    %5050 = vmatpush1.msra.mxu0 0.0
    %5051 = vmatprep.subr.mxu0 0.0
    %5052 = vmatpush1.msra.mxu0 0.0
    %5053 = vmatprep.subr.mxu0 0.0
    %5054 = vmatpush1.msra.mxu0 0.0
    %5055 = vmatprep.subr.mxu0 0.0
    %5056 = vmatpush1.msra.mxu0 0.0
    %5057 = vmatprep.subr.mxu0 0.0
    %5058 = vmatpush1.msra.mxu0 0.0
    %5059 = vmatprep.subr.mxu0 0.0
    %5060 = vmatpush1.msra.mxu0 0.0
    %5061 = vmatprep.subr.mxu0 0.0
    %5062 = vmatpush1.msra.mxu0 0.0
    %5063 = vmatprep.subr.mxu0 0.0
    %5064 = vmatpush1.msra.mxu0 0.0
    %5065 = vmatprep.subr.mxu0 0.0
    %5066 = vmatpush1.msra.mxu0 0.0
    %5067 = vmatprep.subr.mxu0 0.0
    %5068 = vmatpush1.msra.mxu0 0.0
    %5069 = vmatprep.subr.mxu0 0.0
    %5070 = vmatpush1.msra.mxu0 0.0
    %5071 = vmatprep.subr.mxu0 0.0
    %5072 = vmatpush1.msra.mxu0 0.0
    %5073 = vmatprep.subr.mxu0 0.0
    %5074 = vmatpush1.msra.mxu0 0.0
    %5075 = vmatprep.subr.mxu0 0.0
    %5076 = vmatpush1.msra.mxu0 0.0
    %5077 = vmatprep.subr.mxu0 0.0
    %5078 = vmatpush1.msra.mxu0 0.0
    %5079 = vmatprep.subr.mxu0 0.0
    %5080 = vmatpush1.msra.mxu0 0.0
    %5081 = vmatprep.subr.mxu0 0.0
    %5082 = vmatpush1.msra.mxu0 0.0
    %5083 = vmatprep.subr.mxu0 0.0
    %5084 = vmatpush1.msra.mxu0 0.0
    %5085 = vmatprep.mubr.f32.mxu0 0.0
    %5086 = vmatmul.mubr.f32.gmra.mrb[0].mxu0 %v5016
    %v5087 = vpop.f32.mrb[0].mxu0
    %v5088 = vadd.f32 0.0, %v5087
    %v5089 = vpop.f32.mrb[0].mxu0
    %5090 = vmatprep.mubr.f32.mxu0 0.0
    %5091 = vmatmul.mubr.f32.gmra.mrb[0].mxu0 %v5019
    %v5092 = vpop.f32.mrb[0].mxu0
    %v5093 = vadd.f32 0.0, %v5092
    %v5094 = vpop.f32.mrb[0].mxu0
    %5095 = vdwg.mxu0
    %5096 = vrot.lane.b32.xlu0 %v290, 64
    %v5097 = vpop.permute.xlu0 %5096
    %5098 = vrot.lane.b32.xlu0 %v292, 64
    %v5099 = vpop.permute.xlu0 %5098
    %v5103 = vsel %vm3214, %v3532, 0
    %v5106 = vsel %vm3214, %v3534, 0
    %5108 = vmatprep.subr.mxu0 0.0
    %5109 = vmatpush1.msra.mxu0 %v5097
    %5110 = vmatprep.subr.mxu0 0.0
    %5111 = vmatpush1.msra.mxu0 %v5099
    %5112 = vmatprep.subr.mxu0 0.0
    %5113 = vmatpush1.msra.mxu0 0.0
    %5114 = vmatprep.subr.mxu0 0.0
    %5115 = vmatpush1.msra.mxu0 0.0
    %5116 = vmatprep.subr.mxu0 0.0
    %5117 = vmatpush1.msra.mxu0 0.0
    %5118 = vmatprep.subr.mxu0 0.0
    %5119 = vmatpush1.msra.mxu0 0.0
    %5120 = vmatprep.subr.mxu0 0.0
    %5121 = vmatpush1.msra.mxu0 0.0
    %5122 = vmatprep.subr.mxu0 0.0
    %5123 = vmatpush1.msra.mxu0 0.0
    %5124 = vmatprep.subr.mxu0 0.0
    %5125 = vmatpush1.msra.mxu0 0.0
    %5126 = vmatprep.subr.mxu0 0.0
    %5127 = vmatpush1.msra.mxu0 0.0
    %5128 = vmatprep.subr.mxu0 0.0
    %5129 = vmatpush1.msra.mxu0 0.0
    %5130 = vmatprep.subr.mxu0 0.0
    %5131 = vmatpush1.msra.mxu0 0.0
    %5132 = vmatprep.subr.mxu0 0.0
    %5133 = vmatpush1.msra.mxu0 0.0
    %5134 = vmatprep.subr.mxu0 0.0
    %5135 = vmatpush1.msra.mxu0 0.0
    %5136 = vmatprep.subr.mxu0 0.0
    %5137 = vmatpush1.msra.mxu0 0.0
    %5138 = vmatprep.subr.mxu0 0.0
    %5139 = vmatpush1.msra.mxu0 0.0
    %5140 = vmatprep.subr.mxu0 0.0
    %5141 = vmatpush1.msra.mxu0 0.0
    %5142 = vmatprep.subr.mxu0 0.0
    %5143 = vmatpush1.msra.mxu0 0.0
    %5144 = vmatprep.subr.mxu0 0.0
    %5145 = vmatpush1.msra.mxu0 0.0
    %5146 = vmatprep.subr.mxu0 0.0
    %5147 = vmatpush1.msra.mxu0 0.0
    %5148 = vmatprep.subr.mxu0 0.0
    %5149 = vmatpush1.msra.mxu0 0.0
    %5150 = vmatprep.subr.mxu0 0.0
    %5151 = vmatpush1.msra.mxu0 0.0
    %5152 = vmatprep.subr.mxu0 0.0
    %5153 = vmatpush1.msra.mxu0 0.0
    %5154 = vmatprep.subr.mxu0 0.0
    %5155 = vmatpush1.msra.mxu0 0.0
    %5156 = vmatprep.subr.mxu0 0.0
    %5157 = vmatpush1.msra.mxu0 0.0
    %5158 = vmatprep.subr.mxu0 0.0
    %5159 = vmatpush1.msra.mxu0 0.0
    %5160 = vmatprep.subr.mxu0 0.0
    %5161 = vmatpush1.msra.mxu0 0.0
    %5162 = vmatprep.subr.mxu0 0.0
    %5163 = vmatpush1.msra.mxu0 0.0
    %5164 = vmatprep.subr.mxu0 0.0
    %5165 = vmatpush1.msra.mxu0 0.0
    %5166 = vmatprep.subr.mxu0 0.0
    %5167 = vmatpush1.msra.mxu0 0.0
    %5168 = vmatprep.subr.mxu0 0.0
    %5169 = vmatpush1.msra.mxu0 0.0
    %5170 = vmatprep.subr.mxu0 0.0
    %5171 = vmatpush1.msra.mxu0 0.0
    %5172 = vmatprep.mubr.f32.mxu0 0.0
    %5173 = vmatmul.mubr.f32.gmra.mrb[0].mxu0 %v5103
    %v5174 = vpop.f32.mrb[0].mxu0
    %v5175 = vadd.f32 0.0, %v5174
    %v5176 = vpop.f32.mrb[0].mxu0
    %5177 = vmatprep.mubr.f32.mxu0 0.0
    %5178 = vmatmul.mubr.f32.gmra.mrb[0].mxu0 %v5106
    %v5179 = vpop.f32.mrb[0].mxu0
    %v5180 = vadd.f32 0.0, %v5179
    %v5181 = vpop.f32.mrb[0].mxu0
    %5182 = vdwg.mxu0
    %5183 = vrot.lane.b32.xlu0 %v294, 64
    %v5184 = vpop.permute.xlu0 %5183
    %5185 = vrot.lane.b32.xlu0 %v296, 64
    %v5186 = vpop.permute.xlu0 %5185
    %v5190 = vsel %vm3214, %v3536, 0
    %v5193 = vsel %vm3214, %v3538, 0
    %5195 = vmatprep.subr.mxu0 0.0
    %5196 = vmatpush1.msra.mxu0 %v5184
    %5197 = vmatprep.subr.mxu0 0.0
    %5198 = vmatpush1.msra.mxu0 %v5186
    %5199 = vmatprep.subr.mxu0 0.0
    %5200 = vmatpush1.msra.mxu0 0.0
    %5201 = vmatprep.subr.mxu0 0.0
    %5202 = vmatpush1.msra.mxu0 0.0
    %5203 = vmatprep.subr.mxu0 0.0
    %5204 = vmatpush1.msra.mxu0 0.0
    %5205 = vmatprep.subr.mxu0 0.0
    %5206 = vmatpush1.msra.mxu0 0.0
    %5207 = vmatprep.subr.mxu0 0.0
    %5208 = vmatpush1.msra.mxu0 0.0
    %5209 = vmatprep.subr.mxu0 0.0
    %5210 = vmatpush1.msra.mxu0 0.0
    %5211 = vmatprep.subr.mxu0 0.0
    %5212 = vmatpush1.msra.mxu0 0.0
    %5213 = vmatprep.subr.mxu0 0.0
    %5214 = vmatpush1.msra.mxu0 0.0
    %5215 = vmatprep.subr.mxu0 0.0
    %5216 = vmatpush1.msra.mxu0 0.0
    %5217 = vmatprep.subr.mxu0 0.0
    %5218 = vmatpush1.msra.mxu0 0.0
    %5219 = vmatprep.subr.mxu0 0.0
    %5220 = vmatpush1.msra.mxu0 0.0
    %5221 = vmatprep.subr.mxu0 0.0
    %5222 = vmatpush1.msra.mxu0 0.0
    %5223 = vmatprep.subr.mxu0 0.0
    %5224 = vmatpush1.msra.mxu0 0.0
    %5225 = vmatprep.subr.mxu0 0.0
    %5226 = vmatpush1.msra.mxu0 0.0
    %5227 = vmatprep.subr.mxu0 0.0
    %5228 = vmatpush1.msra.mxu0 0.0
    %5229 = vmatprep.subr.mxu0 0.0
    %5230 = vmatpush1.msra.mxu0 0.0
    %5231 = vmatprep.subr.mxu0 0.0
    %5232 = vmatpush1.msra.mxu0 0.0
    %5233 = vmatprep.subr.mxu0 0.0
    %5234 = vmatpush1.msra.mxu0 0.0
    %5235 = vmatprep.subr.mxu0 0.0
    %5236 = vmatpush1.msra.mxu0 0.0
    %5237 = vmatprep.subr.mxu0 0.0
    %5238 = vmatpush1.msra.mxu0 0.0
    %5239 = vmatprep.subr.mxu0 0.0
    %5240 = vmatpush1.msra.mxu0 0.0
    %5241 = vmatprep.subr.mxu0 0.0
    %5242 = vmatpush1.msra.mxu0 0.0
    %5243 = vmatprep.subr.mxu0 0.0
    %5244 = vmatpush1.msra.mxu0 0.0
    %5245 = vmatprep.subr.mxu0 0.0
    %5246 = vmatpush1.msra.mxu0 0.0
    %5247 = vmatprep.subr.mxu0 0.0
    %5248 = vmatpush1.msra.mxu0 0.0
    %5249 = vmatprep.subr.mxu0 0.0
    %5250 = vmatpush1.msra.mxu0 0.0
    %5251 = vmatprep.subr.mxu0 0.0
    %5252 = vmatpush1.msra.mxu0 0.0
    %5253 = vmatprep.subr.mxu0 0.0
    %5254 = vmatpush1.msra.mxu0 0.0
    %5255 = vmatprep.subr.mxu0 0.0
    %5256 = vmatpush1.msra.mxu0 0.0
    %5257 = vmatprep.subr.mxu0 0.0
    %5258 = vmatpush1.msra.mxu0 0.0
    %5259 = vmatprep.mubr.f32.mxu0 0.0
    %5260 = vmatmul.mubr.f32.gmra.mrb[0].mxu0 %v5190
    %v5261 = vpop.f32.mrb[0].mxu0
    %v5262 = vadd.f32 0.0, %v5261
    %v5263 = vpop.f32.mrb[0].mxu0
    %5264 = vmatprep.mubr.f32.mxu0 0.0
    %5265 = vmatmul.mubr.f32.gmra.mrb[0].mxu0 %v5193
    %v5266 = vpop.f32.mrb[0].mxu0
    %v5267 = vadd.f32 0.0, %v5266
    %v5268 = vpop.f32.mrb[0].mxu0
    %5269 = vdwg.mxu0
    %5270 = vrot.lane.b32.xlu0 %v298, 64
    %v5271 = vpop.permute.xlu0 %5270
    %5272 = vrot.lane.b32.xlu0 %v300, 64
    %v5273 = vpop.permute.xlu0 %5272
    %v5277 = vsel %vm3214, %v3540, 0
    %v5280 = vsel %vm3214, %v3542, 0
    %5282 = vmatprep.subr.mxu0 0.0
    %5283 = vmatpush1.msra.mxu0 %v5271
    %5284 = vmatprep.subr.mxu0 0.0
    %5285 = vmatpush1.msra.mxu0 %v5273
    %5286 = vmatprep.subr.mxu0 0.0
    %5287 = vmatpush1.msra.mxu0 0.0
    %5288 = vmatprep.subr.mxu0 0.0
    %5289 = vmatpush1.msra.mxu0 0.0
    %5290 = vmatprep.subr.mxu0 0.0
    %5291 = vmatpush1.msra.mxu0 0.0
    %5292 = vmatprep.subr.mxu0 0.0
    %5293 = vmatpush1.msra.mxu0 0.0
    %5294 = vmatprep.subr.mxu0 0.0
    %5295 = vmatpush1.msra.mxu0 0.0
    %5296 = vmatprep.subr.mxu0 0.0
    %5297 = vmatpush1.msra.mxu0 0.0
    %5298 = vmatprep.subr.mxu0 0.0
    %5299 = vmatpush1.msra.mxu0 0.0
    %5300 = vmatprep.subr.mxu0 0.0
    %5301 = vmatpush1.msra.mxu0 0.0
    %5302 = vmatprep.subr.mxu0 0.0
    %5303 = vmatpush1.msra.mxu0 0.0
    %5304 = vmatprep.subr.mxu0 0.0
    %5305 = vmatpush1.msra.mxu0 0.0
    %5306 = vmatprep.subr.mxu0 0.0
    %5307 = vmatpush1.msra.mxu0 0.0
    %5308 = vmatprep.subr.mxu0 0.0
    %5309 = vmatpush1.msra.mxu0 0.0
    %5310 = vmatprep.subr.mxu0 0.0
    %5311 = vmatpush1.msra.mxu0 0.0
    %5312 = vmatprep.subr.mxu0 0.0
    %5313 = vmatpush1.msra.mxu0 0.0
    %5314 = vmatprep.subr.mxu0 0.0
    %5315 = vmatpush1.msra.mxu0 0.0
    %5316 = vmatprep.subr.mxu0 0.0
    %5317 = vmatpush1.msra.mxu0 0.0
    %5318 = vmatprep.subr.mxu0 0.0
    %5319 = vmatpush1.msra.mxu0 0.0
    %5320 = vmatprep.subr.mxu0 0.0
    %5321 = vmatpush1.msra.mxu0 0.0
    %5322 = vmatprep.subr.mxu0 0.0
    %5323 = vmatpush1.msra.mxu0 0.0
    %5324 = vmatprep.subr.mxu0 0.0
    %5325 = vmatpush1.msra.mxu0 0.0
    %5326 = vmatprep.subr.mxu0 0.0
    %5327 = vmatpush1.msra.mxu0 0.0
    %5328 = vmatprep.subr.mxu0 0.0
    %5329 = vmatpush1.msra.mxu0 0.0
    %5330 = vmatprep.subr.mxu0 0.0
    %5331 = vmatpush1.msra.mxu0 0.0
    %5332 = vmatprep.subr.mxu0 0.0
    %5333 = vmatpush1.msra.mxu0 0.0
    %5334 = vmatprep.subr.mxu0 0.0
    %5335 = vmatpush1.msra.mxu0 0.0
    %5336 = vmatprep.subr.mxu0 0.0
    %5337 = vmatpush1.msra.mxu0 0.0
    %5338 = vmatprep.subr.mxu0 0.0
    %5339 = vmatpush1.msra.mxu0 0.0
    %5340 = vmatprep.subr.mxu0 0.0
    %5341 = vmatpush1.msra.mxu0 0.0
    %5342 = vmatprep.subr.mxu0 0.0
    %5343 = vmatpush1.msra.mxu0 0.0
    %5344 = vmatprep.subr.mxu0 0.0
    %5345 = vmatpush1.msra.mxu0 0.0
    %5346 = vmatprep.mubr.f32.mxu0 0.0
    %5347 = vmatmul.mubr.f32.gmra.mrb[0].mxu0 %v5277
    %v5348 = vpop.f32.mrb[0].mxu0
    %v5349 = vadd.f32 0.0, %v5348
    %v5350 = vpop.f32.mrb[0].mxu0
    %5351 = vmatprep.mubr.f32.mxu0 0.0
    %5352 = vmatmul.mubr.f32.gmra.mrb[0].mxu0 %v5280
    %v5353 = vpop.f32.mrb[0].mxu0
    %v5354 = vadd.f32 0.0, %v5353
    %v5355 = vpop.f32.mrb[0].mxu0
    %5356 = vdwg.mxu0
    %5357 = vrot.lane.b32.xlu0 %v302, 64
    %v5358 = vpop.permute.xlu0 %5357
    %5359 = vrot.lane.b32.xlu0 %v304, 64
    %v5360 = vpop.permute.xlu0 %5359
    %v5364 = vsel %vm3214, %v3544, 0
    %v5367 = vsel %vm3214, %v3546, 0
    %5369 = vmatprep.subr.mxu0 0.0
    %5370 = vmatpush1.msra.mxu0 %v5358
    %5371 = vmatprep.subr.mxu0 0.0
    %5372 = vmatpush1.msra.mxu0 %v5360
    %5373 = vmatprep.subr.mxu0 0.0
    %5374 = vmatpush1.msra.mxu0 0.0
    %5375 = vmatprep.subr.mxu0 0.0
    %5376 = vmatpush1.msra.mxu0 0.0
    %5377 = vmatprep.subr.mxu0 0.0
    %5378 = vmatpush1.msra.mxu0 0.0
    %5379 = vmatprep.subr.mxu0 0.0
    %5380 = vmatpush1.msra.mxu0 0.0
    %5381 = vmatprep.subr.mxu0 0.0
    %5382 = vmatpush1.msra.mxu0 0.0
    %5383 = vmatprep.subr.mxu0 0.0
    %5384 = vmatpush1.msra.mxu0 0.0
    %5385 = vmatprep.subr.mxu0 0.0
    %5386 = vmatpush1.msra.mxu0 0.0
    %5387 = vmatprep.subr.mxu0 0.0
    %5388 = vmatpush1.msra.mxu0 0.0
    %5389 = vmatprep.subr.mxu0 0.0
    %5390 = vmatpush1.msra.mxu0 0.0
    %5391 = vmatprep.subr.mxu0 0.0
    %5392 = vmatpush1.msra.mxu0 0.0
    %5393 = vmatprep.subr.mxu0 0.0
    %5394 = vmatpush1.msra.mxu0 0.0
    %5395 = vmatprep.subr.mxu0 0.0
    %5396 = vmatpush1.msra.mxu0 0.0
    %5397 = vmatprep.subr.mxu0 0.0
    %5398 = vmatpush1.msra.mxu0 0.0
    %5399 = vmatprep.subr.mxu0 0.0
    %5400 = vmatpush1.msra.mxu0 0.0
    %5401 = vmatprep.subr.mxu0 0.0
    %5402 = vmatpush1.msra.mxu0 0.0
    %5403 = vmatprep.subr.mxu0 0.0
    %5404 = vmatpush1.msra.mxu0 0.0
    %5405 = vmatprep.subr.mxu0 0.0
    %5406 = vmatpush1.msra.mxu0 0.0
    %5407 = vmatprep.subr.mxu0 0.0
    %5408 = vmatpush1.msra.mxu0 0.0
    %5409 = vmatprep.subr.mxu0 0.0
    %5410 = vmatpush1.msra.mxu0 0.0
    %5411 = vmatprep.subr.mxu0 0.0
    %5412 = vmatpush1.msra.mxu0 0.0
    %5413 = vmatprep.subr.mxu0 0.0
    %5414 = vmatpush1.msra.mxu0 0.0
    %5415 = vmatprep.subr.mxu0 0.0
    %5416 = vmatpush1.msra.mxu0 0.0
    %5417 = vmatprep.subr.mxu0 0.0
    %5418 = vmatpush1.msra.mxu0 0.0
    %5419 = vmatprep.subr.mxu0 0.0
    %5420 = vmatpush1.msra.mxu0 0.0
    %5421 = vmatprep.subr.mxu0 0.0
    %5422 = vmatpush1.msra.mxu0 0.0
    %5423 = vmatprep.subr.mxu0 0.0
    %5424 = vmatpush1.msra.mxu0 0.0
    %5425 = vmatprep.subr.mxu0 0.0
    %5426 = vmatpush1.msra.mxu0 0.0
    %5427 = vmatprep.subr.mxu0 0.0
    %5428 = vmatpush1.msra.mxu0 0.0
    %5429 = vmatprep.subr.mxu0 0.0
    %5430 = vmatpush1.msra.mxu0 0.0
    %5431 = vmatprep.subr.mxu0 0.0
    %5432 = vmatpush1.msra.mxu0 0.0
    %5433 = vmatprep.mubr.f32.mxu0 0.0
    %5434 = vmatmul.mubr.f32.gmra.mrb[0].mxu0 %v5364
    %v5435 = vpop.f32.mrb[0].mxu0
    %v5436 = vadd.f32 0.0, %v5435
    %v5437 = vpop.f32.mrb[0].mxu0
    %5438 = vmatprep.mubr.f32.mxu0 0.0
    %5439 = vmatmul.mubr.f32.gmra.mrb[0].mxu0 %v5367
    %v5440 = vpop.f32.mrb[0].mxu0
    %v5441 = vadd.f32 0.0, %v5440
    %v5442 = vpop.f32.mrb[0].mxu0
    %5443 = vdwg.mxu0
    %5444 = vrot.lane.b32.xlu0 %v306, 64
    %v5445 = vpop.permute.xlu0 %5444
    %5446 = vrot.lane.b32.xlu0 %v308, 64
    %v5447 = vpop.permute.xlu0 %5446
    %v5451 = vsel %vm3214, %v3548, 0
    %v5454 = vsel %vm3214, %v3550, 0
    %5456 = vmatprep.subr.mxu0 0.0
    %5457 = vmatpush1.msra.mxu0 %v5445
    %5458 = vmatprep.subr.mxu0 0.0
    %5459 = vmatpush1.msra.mxu0 %v5447
    %5460 = vmatprep.subr.mxu0 0.0
    %5461 = vmatpush1.msra.mxu0 0.0
    %5462 = vmatprep.subr.mxu0 0.0
    %5463 = vmatpush1.msra.mxu0 0.0
    %5464 = vmatprep.subr.mxu0 0.0
    %5465 = vmatpush1.msra.mxu0 0.0
    %5466 = vmatprep.subr.mxu0 0.0
    %5467 = vmatpush1.msra.mxu0 0.0
    %5468 = vmatprep.subr.mxu0 0.0
    %5469 = vmatpush1.msra.mxu0 0.0
    %5470 = vmatprep.subr.mxu0 0.0
    %5471 = vmatpush1.msra.mxu0 0.0
    %5472 = vmatprep.subr.mxu0 0.0
    %5473 = vmatpush1.msra.mxu0 0.0
    %5474 = vmatprep.subr.mxu0 0.0
    %5475 = vmatpush1.msra.mxu0 0.0
    %5476 = vmatprep.subr.mxu0 0.0
    %5477 = vmatpush1.msra.mxu0 0.0
    %5478 = vmatprep.subr.mxu0 0.0
    %5479 = vmatpush1.msra.mxu0 0.0
    %5480 = vmatprep.subr.mxu0 0.0
    %5481 = vmatpush1.msra.mxu0 0.0
    %5482 = vmatprep.subr.mxu0 0.0
    %5483 = vmatpush1.msra.mxu0 0.0
    %5484 = vmatprep.subr.mxu0 0.0
    %5485 = vmatpush1.msra.mxu0 0.0
    %5486 = vmatprep.subr.mxu0 0.0
    %5487 = vmatpush1.msra.mxu0 0.0
    %5488 = vmatprep.subr.mxu0 0.0
    %5489 = vmatpush1.msra.mxu0 0.0
    %5490 = vmatprep.subr.mxu0 0.0
    %5491 = vmatpush1.msra.mxu0 0.0
    %5492 = vmatprep.subr.mxu0 0.0
    %5493 = vmatpush1.msra.mxu0 0.0
    %5494 = vmatprep.subr.mxu0 0.0
    %5495 = vmatpush1.msra.mxu0 0.0
    %5496 = vmatprep.subr.mxu0 0.0
    %5497 = vmatpush1.msra.mxu0 0.0
    %5498 = vmatprep.subr.mxu0 0.0
    %5499 = vmatpush1.msra.mxu0 0.0
    %5500 = vmatprep.subr.mxu0 0.0
    %5501 = vmatpush1.msra.mxu0 0.0
    %5502 = vmatprep.subr.mxu0 0.0
    %5503 = vmatpush1.msra.mxu0 0.0
    %5504 = vmatprep.subr.mxu0 0.0
    %5505 = vmatpush1.msra.mxu0 0.0
    %5506 = vmatprep.subr.mxu0 0.0
    %5507 = vmatpush1.msra.mxu0 0.0
    %5508 = vmatprep.subr.mxu0 0.0
    %5509 = vmatpush1.msra.mxu0 0.0
    %5510 = vmatprep.subr.mxu0 0.0
    %5511 = vmatpush1.msra.mxu0 0.0
    %5512 = vmatprep.subr.mxu0 0.0
    %5513 = vmatpush1.msra.mxu0 0.0
    %5514 = vmatprep.subr.mxu0 0.0
    %5515 = vmatpush1.msra.mxu0 0.0
    %5516 = vmatprep.subr.mxu0 0.0
    %5517 = vmatpush1.msra.mxu0 0.0
    %5518 = vmatprep.subr.mxu0 0.0
    %5519 = vmatpush1.msra.mxu0 0.0
    %5520 = vmatprep.mubr.f32.mxu0 0.0
    %5521 = vmatmul.mubr.f32.gmra.mrb[0].mxu0 %v5451
    %v5522 = vpop.f32.mrb[0].mxu0
    %v5523 = vadd.f32 0.0, %v5522
    %v5524 = vpop.f32.mrb[0].mxu0
    %5525 = vmatprep.mubr.f32.mxu0 0.0
    %5526 = vmatmul.mubr.f32.gmra.mrb[0].mxu0 %v5454
    %v5527 = vpop.f32.mrb[0].mxu0
    %v5528 = vadd.f32 0.0, %v5527
    %v5529 = vpop.f32.mrb[0].mxu0
    %5530 = vdwg.mxu0
    %5531 = vrot.lane.b32.xlu0 %v310, 64
    %v5532 = vpop.permute.xlu0 %5531
    %5533 = vrot.lane.b32.xlu0 %v312, 64
    %v5534 = vpop.permute.xlu0 %5533
    %v5538 = vsel %vm3214, %v3552, 0
    %v5541 = vsel %vm3214, %v3554, 0
    %5543 = vmatprep.subr.mxu0 0.0
    %5544 = vmatpush1.msra.mxu0 %v5532
    %5545 = vmatprep.subr.mxu0 0.0
    %5546 = vmatpush1.msra.mxu0 %v5534
    %5547 = vmatprep.subr.mxu0 0.0
    %5548 = vmatpush1.msra.mxu0 0.0
    %5549 = vmatprep.subr.mxu0 0.0
    %5550 = vmatpush1.msra.mxu0 0.0
    %5551 = vmatprep.subr.mxu0 0.0
    %5552 = vmatpush1.msra.mxu0 0.0
    %5553 = vmatprep.subr.mxu0 0.0
    %5554 = vmatpush1.msra.mxu0 0.0
    %5555 = vmatprep.subr.mxu0 0.0
    %5556 = vmatpush1.msra.mxu0 0.0
    %5557 = vmatprep.subr.mxu0 0.0
    %5558 = vmatpush1.msra.mxu0 0.0
    %5559 = vmatprep.subr.mxu0 0.0
    %5560 = vmatpush1.msra.mxu0 0.0
    %5561 = vmatprep.subr.mxu0 0.0
    %5562 = vmatpush1.msra.mxu0 0.0
    %5563 = vmatprep.subr.mxu0 0.0
    %5564 = vmatpush1.msra.mxu0 0.0
    %5565 = vmatprep.subr.mxu0 0.0
    %5566 = vmatpush1.msra.mxu0 0.0
    %5567 = vmatprep.subr.mxu0 0.0
    %5568 = vmatpush1.msra.mxu0 0.0
    %5569 = vmatprep.subr.mxu0 0.0
    %5570 = vmatpush1.msra.mxu0 0.0
    %5571 = vmatprep.subr.mxu0 0.0
    %5572 = vmatpush1.msra.mxu0 0.0
    %5573 = vmatprep.subr.mxu0 0.0
    %5574 = vmatpush1.msra.mxu0 0.0
    %5575 = vmatprep.subr.mxu0 0.0
    %5576 = vmatpush1.msra.mxu0 0.0
    %5577 = vmatprep.subr.mxu0 0.0
    %5578 = vmatpush1.msra.mxu0 0.0
    %5579 = vmatprep.subr.mxu0 0.0
    %5580 = vmatpush1.msra.mxu0 0.0
    %5581 = vmatprep.subr.mxu0 0.0
    %5582 = vmatpush1.msra.mxu0 0.0
    %5583 = vmatprep.subr.mxu0 0.0
    %5584 = vmatpush1.msra.mxu0 0.0
    %5585 = vmatprep.subr.mxu0 0.0
    %5586 = vmatpush1.msra.mxu0 0.0
    %5587 = vmatprep.subr.mxu0 0.0
    %5588 = vmatpush1.msra.mxu0 0.0
    %5589 = vmatprep.subr.mxu0 0.0
    %5590 = vmatpush1.msra.mxu0 0.0
    %5591 = vmatprep.subr.mxu0 0.0
    %5592 = vmatpush1.msra.mxu0 0.0
    %5593 = vmatprep.subr.mxu0 0.0
    %5594 = vmatpush1.msra.mxu0 0.0
    %5595 = vmatprep.subr.mxu0 0.0
    %5596 = vmatpush1.msra.mxu0 0.0
    %5597 = vmatprep.subr.mxu0 0.0
    %5598 = vmatpush1.msra.mxu0 0.0
    %5599 = vmatprep.subr.mxu0 0.0
    %5600 = vmatpush1.msra.mxu0 0.0
    %5601 = vmatprep.subr.mxu0 0.0
    %5602 = vmatpush1.msra.mxu0 0.0
    %5603 = vmatprep.subr.mxu0 0.0
    %5604 = vmatpush1.msra.mxu0 0.0
    %5605 = vmatprep.subr.mxu0 0.0
    %5606 = vmatpush1.msra.mxu0 0.0
    %5607 = vmatprep.mubr.f32.mxu0 0.0
    %5608 = vmatmul.mubr.f32.gmra.mrb[0].mxu0 %v5538
    %v5609 = vpop.f32.mrb[0].mxu0
    %v5610 = vadd.f32 0.0, %v5609
    %v5611 = vpop.f32.mrb[0].mxu0
    %5612 = vmatprep.mubr.f32.mxu0 0.0
    %5613 = vmatmul.mubr.f32.gmra.mrb[0].mxu0 %v5541
    %v5614 = vpop.f32.mrb[0].mxu0
    %v5615 = vadd.f32 0.0, %v5614
    %v5616 = vpop.f32.mrb[0].mxu0
    %5617 = vdwg.mxu0
    %5618 = vrot.lane.b32.xlu0 %v314, 64
    %v5619 = vpop.permute.xlu0 %5618
    %5620 = vrot.lane.b32.xlu0 %v316, 64
    %v5621 = vpop.permute.xlu0 %5620
    %v5625 = vsel %vm3214, %v3556, 0
    %v5628 = vsel %vm3214, %v3558, 0
    %5630 = vmatprep.subr.mxu0 0.0
    %5631 = vmatpush1.msra.mxu0 %v5619
    %5632 = vmatprep.subr.mxu0 0.0
    %5633 = vmatpush1.msra.mxu0 %v5621
    %5634 = vmatprep.subr.mxu0 0.0
    %5635 = vmatpush1.msra.mxu0 0.0
    %5636 = vmatprep.subr.mxu0 0.0
    %5637 = vmatpush1.msra.mxu0 0.0
    %5638 = vmatprep.subr.mxu0 0.0
    %5639 = vmatpush1.msra.mxu0 0.0
    %5640 = vmatprep.subr.mxu0 0.0
    %5641 = vmatpush1.msra.mxu0 0.0
    %5642 = vmatprep.subr.mxu0 0.0
    %5643 = vmatpush1.msra.mxu0 0.0
    %5644 = vmatprep.subr.mxu0 0.0
    %5645 = vmatpush1.msra.mxu0 0.0
    %5646 = vmatprep.subr.mxu0 0.0
    %5647 = vmatpush1.msra.mxu0 0.0
    %5648 = vmatprep.subr.mxu0 0.0
    %5649 = vmatpush1.msra.mxu0 0.0
    %5650 = vmatprep.subr.mxu0 0.0
    %5651 = vmatpush1.msra.mxu0 0.0
    %5652 = vmatprep.subr.mxu0 0.0
    %5653 = vmatpush1.msra.mxu0 0.0
    %5654 = vmatprep.subr.mxu0 0.0
    %5655 = vmatpush1.msra.mxu0 0.0
    %5656 = vmatprep.subr.mxu0 0.0
    %5657 = vmatpush1.msra.mxu0 0.0
    %5658 = vmatprep.subr.mxu0 0.0
    %5659 = vmatpush1.msra.mxu0 0.0
    %5660 = vmatprep.subr.mxu0 0.0
    %5661 = vmatpush1.msra.mxu0 0.0
    %5662 = vmatprep.subr.mxu0 0.0
    %5663 = vmatpush1.msra.mxu0 0.0
    %5664 = vmatprep.subr.mxu0 0.0
    %5665 = vmatpush1.msra.mxu0 0.0
    %5666 = vmatprep.subr.mxu0 0.0
    %5667 = vmatpush1.msra.mxu0 0.0
    %5668 = vmatprep.subr.mxu0 0.0
    %5669 = vmatpush1.msra.mxu0 0.0
    %5670 = vmatprep.subr.mxu0 0.0
    %5671 = vmatpush1.msra.mxu0 0.0
    %5672 = vmatprep.subr.mxu0 0.0
    %5673 = vmatpush1.msra.mxu0 0.0
    %5674 = vmatprep.subr.mxu0 0.0
    %5675 = vmatpush1.msra.mxu0 0.0
    %5676 = vmatprep.subr.mxu0 0.0
    %5677 = vmatpush1.msra.mxu0 0.0
    %5678 = vmatprep.subr.mxu0 0.0
    %5679 = vmatpush1.msra.mxu0 0.0
    %5680 = vmatprep.subr.mxu0 0.0
    %5681 = vmatpush1.msra.mxu0 0.0
    %5682 = vmatprep.subr.mxu0 0.0
    %5683 = vmatpush1.msra.mxu0 0.0
    %5684 = vmatprep.subr.mxu0 0.0
    %5685 = vmatpush1.msra.mxu0 0.0
    %5686 = vmatprep.subr.mxu0 0.0
    %5687 = vmatpush1.msra.mxu0 0.0
    %5688 = vmatprep.subr.mxu0 0.0
    %5689 = vmatpush1.msra.mxu0 0.0
    %5690 = vmatprep.subr.mxu0 0.0
    %5691 = vmatpush1.msra.mxu0 0.0
    %5692 = vmatprep.subr.mxu0 0.0
    %5693 = vmatpush1.msra.mxu0 0.0
    %5694 = vmatprep.mubr.f32.mxu0 0.0
    %5695 = vmatmul.mubr.f32.gmra.mrb[0].mxu0 %v5625
    %v5696 = vpop.f32.mrb[0].mxu0
    %v5697 = vadd.f32 0.0, %v5696
    %v5698 = vpop.f32.mrb[0].mxu0
    %5699 = vmatprep.mubr.f32.mxu0 0.0
    %5700 = vmatmul.mubr.f32.gmra.mrb[0].mxu0 %v5628
    %v5701 = vpop.f32.mrb[0].mxu0
    %v5702 = vadd.f32 0.0, %v5701
    %v5703 = vpop.f32.mrb[0].mxu0
    %5704 = vdwg.mxu0
    %5705 = vrot.lane.b32.xlu0 %v318, 64
    %v5706 = vpop.permute.xlu0 %5705
    %5707 = vrot.lane.b32.xlu0 %v320, 64
    %v5708 = vpop.permute.xlu0 %5707
    %v5712 = vsel %vm3214, %v3560, 0
    %v5715 = vsel %vm3214, %v3562, 0
    %5717 = vmatprep.subr.mxu0 0.0
    %5718 = vmatpush1.msra.mxu0 %v5706
    %5719 = vmatprep.subr.mxu0 0.0
    %5720 = vmatpush1.msra.mxu0 %v5708
    %5721 = vmatprep.subr.mxu0 0.0
    %5722 = vmatpush1.msra.mxu0 0.0
    %5723 = vmatprep.subr.mxu0 0.0
    %5724 = vmatpush1.msra.mxu0 0.0
    %5725 = vmatprep.subr.mxu0 0.0
    %5726 = vmatpush1.msra.mxu0 0.0
    %5727 = vmatprep.subr.mxu0 0.0
    %5728 = vmatpush1.msra.mxu0 0.0
    %5729 = vmatprep.subr.mxu0 0.0
    %5730 = vmatpush1.msra.mxu0 0.0
    %5731 = vmatprep.subr.mxu0 0.0
    %5732 = vmatpush1.msra.mxu0 0.0
    %5733 = vmatprep.subr.mxu0 0.0
    %5734 = vmatpush1.msra.mxu0 0.0
    %5735 = vmatprep.subr.mxu0 0.0
    %5736 = vmatpush1.msra.mxu0 0.0
    %5737 = vmatprep.subr.mxu0 0.0
    %5738 = vmatpush1.msra.mxu0 0.0
    %5739 = vmatprep.subr.mxu0 0.0
    %5740 = vmatpush1.msra.mxu0 0.0
    %5741 = vmatprep.subr.mxu0 0.0
    %5742 = vmatpush1.msra.mxu0 0.0
    %5743 = vmatprep.subr.mxu0 0.0
    %5744 = vmatpush1.msra.mxu0 0.0
    %5745 = vmatprep.subr.mxu0 0.0
    %5746 = vmatpush1.msra.mxu0 0.0
    %5747 = vmatprep.subr.mxu0 0.0
    %5748 = vmatpush1.msra.mxu0 0.0
    %5749 = vmatprep.subr.mxu0 0.0
    %5750 = vmatpush1.msra.mxu0 0.0
    %5751 = vmatprep.subr.mxu0 0.0
    %5752 = vmatpush1.msra.mxu0 0.0
    %5753 = vmatprep.subr.mxu0 0.0
    %5754 = vmatpush1.msra.mxu0 0.0
    %5755 = vmatprep.subr.mxu0 0.0
    %5756 = vmatpush1.msra.mxu0 0.0
    %5757 = vmatprep.subr.mxu0 0.0
    %5758 = vmatpush1.msra.mxu0 0.0
    %5759 = vmatprep.subr.mxu0 0.0
    %5760 = vmatpush1.msra.mxu0 0.0
    %5761 = vmatprep.subr.mxu0 0.0
    %5762 = vmatpush1.msra.mxu0 0.0
    %5763 = vmatprep.subr.mxu0 0.0
    %5764 = vmatpush1.msra.mxu0 0.0
    %5765 = vmatprep.subr.mxu0 0.0
    %5766 = vmatpush1.msra.mxu0 0.0
    %5767 = vmatprep.subr.mxu0 0.0
    %5768 = vmatpush1.msra.mxu0 0.0
    %5769 = vmatprep.subr.mxu0 0.0
    %5770 = vmatpush1.msra.mxu0 0.0
    %5771 = vmatprep.subr.mxu0 0.0
    %5772 = vmatpush1.msra.mxu0 0.0
    %5773 = vmatprep.subr.mxu0 0.0
    %5774 = vmatpush1.msra.mxu0 0.0
    %5775 = vmatprep.subr.mxu0 0.0
    %5776 = vmatpush1.msra.mxu0 0.0
    %5777 = vmatprep.subr.mxu0 0.0
    %5778 = vmatpush1.msra.mxu0 0.0
    %5779 = vmatprep.subr.mxu0 0.0
    %5780 = vmatpush1.msra.mxu0 0.0
    %5781 = vmatprep.mubr.f32.mxu0 0.0
    %5782 = vmatmul.mubr.f32.gmra.mrb[0].mxu0 %v5712
    %v5783 = vpop.f32.mrb[0].mxu0
    %v5784 = vadd.f32 0.0, %v5783
    %v5785 = vpop.f32.mrb[0].mxu0
    %5786 = vmatprep.mubr.f32.mxu0 0.0
    %5787 = vmatmul.mubr.f32.gmra.mrb[0].mxu0 %v5715
    %v5788 = vpop.f32.mrb[0].mxu0
    %v5789 = vadd.f32 0.0, %v5788
    %v5790 = vpop.f32.mrb[0].mxu0
    %5791 = vdwg.mxu0
    %5792 = vrot.lane.b32.xlu0 %v322, 64
    %v5793 = vpop.permute.xlu0 %5792
    %5794 = vrot.lane.b32.xlu0 %v324, 64
    %v5795 = vpop.permute.xlu0 %5794
    %v5799 = vsel %vm3214, %v3564, 0
    %v5802 = vsel %vm3214, %v3566, 0
    %5804 = vmatprep.subr.mxu0 0.0
    %5805 = vmatpush1.msra.mxu0 %v5793
    %5806 = vmatprep.subr.mxu0 0.0
    %5807 = vmatpush1.msra.mxu0 %v5795
    %5808 = vmatprep.subr.mxu0 0.0
    %5809 = vmatpush1.msra.mxu0 0.0
    %5810 = vmatprep.subr.mxu0 0.0
    %5811 = vmatpush1.msra.mxu0 0.0
    %5812 = vmatprep.subr.mxu0 0.0
    %5813 = vmatpush1.msra.mxu0 0.0
    %5814 = vmatprep.subr.mxu0 0.0
    %5815 = vmatpush1.msra.mxu0 0.0
    %5816 = vmatprep.subr.mxu0 0.0
    %5817 = vmatpush1.msra.mxu0 0.0
    %5818 = vmatprep.subr.mxu0 0.0
    %5819 = vmatpush1.msra.mxu0 0.0
    %5820 = vmatprep.subr.mxu0 0.0
    %5821 = vmatpush1.msra.mxu0 0.0
    %5822 = vmatprep.subr.mxu0 0.0
    %5823 = vmatpush1.msra.mxu0 0.0
    %5824 = vmatprep.subr.mxu0 0.0
    %5825 = vmatpush1.msra.mxu0 0.0
    %5826 = vmatprep.subr.mxu0 0.0
    %5827 = vmatpush1.msra.mxu0 0.0
    %5828 = vmatprep.subr.mxu0 0.0
    %5829 = vmatpush1.msra.mxu0 0.0
    %5830 = vmatprep.subr.mxu0 0.0
    %5831 = vmatpush1.msra.mxu0 0.0
    %5832 = vmatprep.subr.mxu0 0.0
    %5833 = vmatpush1.msra.mxu0 0.0
    %5834 = vmatprep.subr.mxu0 0.0
    %5835 = vmatpush1.msra.mxu0 0.0
    %5836 = vmatprep.subr.mxu0 0.0
    %5837 = vmatpush1.msra.mxu0 0.0
    %5838 = vmatprep.subr.mxu0 0.0
    %5839 = vmatpush1.msra.mxu0 0.0
    %5840 = vmatprep.subr.mxu0 0.0
    %5841 = vmatpush1.msra.mxu0 0.0
    %5842 = vmatprep.subr.mxu0 0.0
    %5843 = vmatpush1.msra.mxu0 0.0
    %5844 = vmatprep.subr.mxu0 0.0
    %5845 = vmatpush1.msra.mxu0 0.0
    %5846 = vmatprep.subr.mxu0 0.0
    %5847 = vmatpush1.msra.mxu0 0.0
    %5848 = vmatprep.subr.mxu0 0.0
    %5849 = vmatpush1.msra.mxu0 0.0
    %5850 = vmatprep.subr.mxu0 0.0
    %5851 = vmatpush1.msra.mxu0 0.0
    %5852 = vmatprep.subr.mxu0 0.0
    %5853 = vmatpush1.msra.mxu0 0.0
    %5854 = vmatprep.subr.mxu0 0.0
    %5855 = vmatpush1.msra.mxu0 0.0
    %5856 = vmatprep.subr.mxu0 0.0
    %5857 = vmatpush1.msra.mxu0 0.0
    %5858 = vmatprep.subr.mxu0 0.0
    %5859 = vmatpush1.msra.mxu0 0.0
    %5860 = vmatprep.subr.mxu0 0.0
    %5861 = vmatpush1.msra.mxu0 0.0
    %5862 = vmatprep.subr.mxu0 0.0
    %5863 = vmatpush1.msra.mxu0 0.0
    %5864 = vmatprep.subr.mxu0 0.0
    %5865 = vmatpush1.msra.mxu0 0.0
    %5866 = vmatprep.subr.mxu0 0.0
    %5867 = vmatpush1.msra.mxu0 0.0
    %5868 = vmatprep.mubr.f32.mxu0 0.0
    %5869 = vmatmul.mubr.f32.gmra.mrb[0].mxu0 %v5799
    %v5870 = vpop.f32.mrb[0].mxu0
    %v5871 = vadd.f32 0.0, %v5870
    %v5872 = vpop.f32.mrb[0].mxu0
    %5873 = vmatprep.mubr.f32.mxu0 0.0
    %5874 = vmatmul.mubr.f32.gmra.mrb[0].mxu0 %v5802
    %v5875 = vpop.f32.mrb[0].mxu0
    %v5876 = vadd.f32 0.0, %v5875
    %v5877 = vpop.f32.mrb[0].mxu0
    %5878 = vdwg.mxu0
    %5879 = vrot.lane.b32.xlu0 %v326, 64
    %v5880 = vpop.permute.xlu0 %5879
    %5881 = vrot.lane.b32.xlu0 %v328, 64
    %v5882 = vpop.permute.xlu0 %5881
    %v5886 = vsel %vm3214, %v3568, 0
    %v5889 = vsel %vm3214, %v3570, 0
    %5891 = vmatprep.subr.mxu0 0.0
    %5892 = vmatpush1.msra.mxu0 %v5880
    %5893 = vmatprep.subr.mxu0 0.0
    %5894 = vmatpush1.msra.mxu0 %v5882
    %5895 = vmatprep.subr.mxu0 0.0
    %5896 = vmatpush1.msra.mxu0 0.0
    %5897 = vmatprep.subr.mxu0 0.0
    %5898 = vmatpush1.msra.mxu0 0.0
    %5899 = vmatprep.subr.mxu0 0.0
    %5900 = vmatpush1.msra.mxu0 0.0
    %5901 = vmatprep.subr.mxu0 0.0
    %5902 = vmatpush1.msra.mxu0 0.0
    %5903 = vmatprep.subr.mxu0 0.0
    %5904 = vmatpush1.msra.mxu0 0.0
    %5905 = vmatprep.subr.mxu0 0.0
    %5906 = vmatpush1.msra.mxu0 0.0
    %5907 = vmatprep.subr.mxu0 0.0
    %5908 = vmatpush1.msra.mxu0 0.0
    %5909 = vmatprep.subr.mxu0 0.0
    %5910 = vmatpush1.msra.mxu0 0.0
    %5911 = vmatprep.subr.mxu0 0.0
    %5912 = vmatpush1.msra.mxu0 0.0
    %5913 = vmatprep.subr.mxu0 0.0
    %5914 = vmatpush1.msra.mxu0 0.0
    %5915 = vmatprep.subr.mxu0 0.0
    %5916 = vmatpush1.msra.mxu0 0.0
    %5917 = vmatprep.subr.mxu0 0.0
    %5918 = vmatpush1.msra.mxu0 0.0
    %5919 = vmatprep.subr.mxu0 0.0
    %5920 = vmatpush1.msra.mxu0 0.0
    %5921 = vmatprep.subr.mxu0 0.0
    %5922 = vmatpush1.msra.mxu0 0.0
    %5923 = vmatprep.subr.mxu0 0.0
    %5924 = vmatpush1.msra.mxu0 0.0
    %5925 = vmatprep.subr.mxu0 0.0
    %5926 = vmatpush1.msra.mxu0 0.0
    %5927 = vmatprep.subr.mxu0 0.0
    %5928 = vmatpush1.msra.mxu0 0.0
    %5929 = vmatprep.subr.mxu0 0.0
    %5930 = vmatpush1.msra.mxu0 0.0
    %5931 = vmatprep.subr.mxu0 0.0
    %5932 = vmatpush1.msra.mxu0 0.0
    %5933 = vmatprep.subr.mxu0 0.0
    %5934 = vmatpush1.msra.mxu0 0.0
    %5935 = vmatprep.subr.mxu0 0.0
    %5936 = vmatpush1.msra.mxu0 0.0
    %5937 = vmatprep.subr.mxu0 0.0
    %5938 = vmatpush1.msra.mxu0 0.0
    %5939 = vmatprep.subr.mxu0 0.0
    %5940 = vmatpush1.msra.mxu0 0.0
    %5941 = vmatprep.subr.mxu0 0.0
    %5942 = vmatpush1.msra.mxu0 0.0
    %5943 = vmatprep.subr.mxu0 0.0
    %5944 = vmatpush1.msra.mxu0 0.0
    %5945 = vmatprep.subr.mxu0 0.0
    %5946 = vmatpush1.msra.mxu0 0.0
    %5947 = vmatprep.subr.mxu0 0.0
    %5948 = vmatpush1.msra.mxu0 0.0
    %5949 = vmatprep.subr.mxu0 0.0
    %5950 = vmatpush1.msra.mxu0 0.0
    %5951 = vmatprep.subr.mxu0 0.0
    %5952 = vmatpush1.msra.mxu0 0.0
    %5953 = vmatprep.subr.mxu0 0.0
    %5954 = vmatpush1.msra.mxu0 0.0
    %5955 = vmatprep.mubr.f32.mxu0 0.0
    %5956 = vmatmul.mubr.f32.gmra.mrb[0].mxu0 %v5886
    %v5957 = vpop.f32.mrb[0].mxu0
    %v5958 = vadd.f32 0.0, %v5957
    %v5959 = vpop.f32.mrb[0].mxu0
    %5960 = vmatprep.mubr.f32.mxu0 0.0
    %5961 = vmatmul.mubr.f32.gmra.mrb[0].mxu0 %v5889
    %v5962 = vpop.f32.mrb[0].mxu0
    %v5963 = vadd.f32 0.0, %v5962
    %v5964 = vpop.f32.mrb[0].mxu0
    %5965 = vdwg.mxu0
    %5966 = vrot.lane.b32.xlu0 %v330, 64
    %v5967 = vpop.permute.xlu0 %5966
    %5968 = vrot.lane.b32.xlu0 %v332, 64
    %v5969 = vpop.permute.xlu0 %5968
    %v5973 = vsel %vm3214, %v3572, 0
    %v5976 = vsel %vm3214, %v3574, 0
    %5978 = vmatprep.subr.mxu0 0.0
    %5979 = vmatpush1.msra.mxu0 %v5967
    %5980 = vmatprep.subr.mxu0 0.0
    %5981 = vmatpush1.msra.mxu0 %v5969
    %5982 = vmatprep.subr.mxu0 0.0
    %5983 = vmatpush1.msra.mxu0 0.0
    %5984 = vmatprep.subr.mxu0 0.0
    %5985 = vmatpush1.msra.mxu0 0.0
    %5986 = vmatprep.subr.mxu0 0.0
    %5987 = vmatpush1.msra.mxu0 0.0
    %5988 = vmatprep.subr.mxu0 0.0
    %5989 = vmatpush1.msra.mxu0 0.0
    %5990 = vmatprep.subr.mxu0 0.0
    %5991 = vmatpush1.msra.mxu0 0.0
    %5992 = vmatprep.subr.mxu0 0.0
    %5993 = vmatpush1.msra.mxu0 0.0
    %5994 = vmatprep.subr.mxu0 0.0
    %5995 = vmatpush1.msra.mxu0 0.0
    %5996 = vmatprep.subr.mxu0 0.0
    %5997 = vmatpush1.msra.mxu0 0.0
    %5998 = vmatprep.subr.mxu0 0.0
    %5999 = vmatpush1.msra.mxu0 0.0
    %6000 = vmatprep.subr.mxu0 0.0
    %6001 = vmatpush1.msra.mxu0 0.0
    %6002 = vmatprep.subr.mxu0 0.0
    %6003 = vmatpush1.msra.mxu0 0.0
    %6004 = vmatprep.subr.mxu0 0.0
    %6005 = vmatpush1.msra.mxu0 0.0
    %6006 = vmatprep.subr.mxu0 0.0
    %6007 = vmatpush1.msra.mxu0 0.0
    %6008 = vmatprep.subr.mxu0 0.0
    %6009 = vmatpush1.msra.mxu0 0.0
    %6010 = vmatprep.subr.mxu0 0.0
    %6011 = vmatpush1.msra.mxu0 0.0
    %6012 = vmatprep.subr.mxu0 0.0
    %6013 = vmatpush1.msra.mxu0 0.0
    %6014 = vmatprep.subr.mxu0 0.0
    %6015 = vmatpush1.msra.mxu0 0.0
    %6016 = vmatprep.subr.mxu0 0.0
    %6017 = vmatpush1.msra.mxu0 0.0
    %6018 = vmatprep.subr.mxu0 0.0
    %6019 = vmatpush1.msra.mxu0 0.0
    %6020 = vmatprep.subr.mxu0 0.0
    %6021 = vmatpush1.msra.mxu0 0.0
    %6022 = vmatprep.subr.mxu0 0.0
    %6023 = vmatpush1.msra.mxu0 0.0
    %6024 = vmatprep.subr.mxu0 0.0
    %6025 = vmatpush1.msra.mxu0 0.0
    %6026 = vmatprep.subr.mxu0 0.0
    %6027 = vmatpush1.msra.mxu0 0.0
    %6028 = vmatprep.subr.mxu0 0.0
    %6029 = vmatpush1.msra.mxu0 0.0
    %6030 = vmatprep.subr.mxu0 0.0
    %6031 = vmatpush1.msra.mxu0 0.0
    %6032 = vmatprep.subr.mxu0 0.0
    %6033 = vmatpush1.msra.mxu0 0.0
    %6034 = vmatprep.subr.mxu0 0.0
    %6035 = vmatpush1.msra.mxu0 0.0
    %6036 = vmatprep.subr.mxu0 0.0
    %6037 = vmatpush1.msra.mxu0 0.0
    %6038 = vmatprep.subr.mxu0 0.0
    %6039 = vmatpush1.msra.mxu0 0.0
    %6040 = vmatprep.subr.mxu0 0.0
    %6041 = vmatpush1.msra.mxu0 0.0
    %6042 = vmatprep.mubr.f32.mxu0 0.0
    %6043 = vmatmul.mubr.f32.gmra.mrb[0].mxu0 %v5973
    %v6044 = vpop.f32.mrb[0].mxu0
    %v6045 = vadd.f32 0.0, %v6044
    %v6046 = vpop.f32.mrb[0].mxu0
    %6047 = vmatprep.mubr.f32.mxu0 0.0
    %6048 = vmatmul.mubr.f32.gmra.mrb[0].mxu0 %v5976
    %v6049 = vpop.f32.mrb[0].mxu0
    %v6050 = vadd.f32 0.0, %v6049
    %v6051 = vpop.f32.mrb[0].mxu0
    %6052 = vdwg.mxu0
    %6053 = vrot.lane.b32.xlu0 %v334, 64
    %v6054 = vpop.permute.xlu0 %6053
    %6055 = vrot.lane.b32.xlu0 %v336, 64
    %v6056 = vpop.permute.xlu0 %6055
    %v6060 = vsel %vm3214, %v3576, 0
    %v6063 = vsel %vm3214, %v3578, 0
    %6065 = vmatprep.subr.mxu0 0.0
    %6066 = vmatpush1.msra.mxu0 %v6054
    %6067 = vmatprep.subr.mxu0 0.0
    %6068 = vmatpush1.msra.mxu0 %v6056
    %6069 = vmatprep.subr.mxu0 0.0
    %6070 = vmatpush1.msra.mxu0 0.0
    %6071 = vmatprep.subr.mxu0 0.0
    %6072 = vmatpush1.msra.mxu0 0.0
    %6073 = vmatprep.subr.mxu0 0.0
    %6074 = vmatpush1.msra.mxu0 0.0
    %6075 = vmatprep.subr.mxu0 0.0
    %6076 = vmatpush1.msra.mxu0 0.0
    %6077 = vmatprep.subr.mxu0 0.0
    %6078 = vmatpush1.msra.mxu0 0.0
    %6079 = vmatprep.subr.mxu0 0.0
    %6080 = vmatpush1.msra.mxu0 0.0
    %6081 = vmatprep.subr.mxu0 0.0
    %6082 = vmatpush1.msra.mxu0 0.0
    %6083 = vmatprep.subr.mxu0 0.0
    %6084 = vmatpush1.msra.mxu0 0.0
    %6085 = vmatprep.subr.mxu0 0.0
    %6086 = vmatpush1.msra.mxu0 0.0
    %6087 = vmatprep.subr.mxu0 0.0
    %6088 = vmatpush1.msra.mxu0 0.0
    %6089 = vmatprep.subr.mxu0 0.0
    %6090 = vmatpush1.msra.mxu0 0.0
    %6091 = vmatprep.subr.mxu0 0.0
    %6092 = vmatpush1.msra.mxu0 0.0
    %6093 = vmatprep.subr.mxu0 0.0
    %6094 = vmatpush1.msra.mxu0 0.0
    %6095 = vmatprep.subr.mxu0 0.0
    %6096 = vmatpush1.msra.mxu0 0.0
    %6097 = vmatprep.subr.mxu0 0.0
    %6098 = vmatpush1.msra.mxu0 0.0
    %6099 = vmatprep.subr.mxu0 0.0
    %6100 = vmatpush1.msra.mxu0 0.0
    %6101 = vmatprep.subr.mxu0 0.0
    %6102 = vmatpush1.msra.mxu0 0.0
    %6103 = vmatprep.subr.mxu0 0.0
    %6104 = vmatpush1.msra.mxu0 0.0
    %6105 = vmatprep.subr.mxu0 0.0
    %6106 = vmatpush1.msra.mxu0 0.0
    %6107 = vmatprep.subr.mxu0 0.0
    %6108 = vmatpush1.msra.mxu0 0.0
    %6109 = vmatprep.subr.mxu0 0.0
    %6110 = vmatpush1.msra.mxu0 0.0
    %6111 = vmatprep.subr.mxu0 0.0
    %6112 = vmatpush1.msra.mxu0 0.0
    %6113 = vmatprep.subr.mxu0 0.0
    %6114 = vmatpush1.msra.mxu0 0.0
    %6115 = vmatprep.subr.mxu0 0.0
    %6116 = vmatpush1.msra.mxu0 0.0
    %6117 = vmatprep.subr.mxu0 0.0
    %6118 = vmatpush1.msra.mxu0 0.0
    %6119 = vmatprep.subr.mxu0 0.0
    %6120 = vmatpush1.msra.mxu0 0.0
    %6121 = vmatprep.subr.mxu0 0.0
    %6122 = vmatpush1.msra.mxu0 0.0
    %6123 = vmatprep.subr.mxu0 0.0
    %6124 = vmatpush1.msra.mxu0 0.0
    %6125 = vmatprep.subr.mxu0 0.0
    %6126 = vmatpush1.msra.mxu0 0.0
    %6127 = vmatprep.subr.mxu0 0.0
    %6128 = vmatpush1.msra.mxu0 0.0
    %6129 = vmatprep.mubr.f32.mxu0 0.0
    %6130 = vmatmul.mubr.f32.gmra.mrb[0].mxu0 %v6060
    %v6131 = vpop.f32.mrb[0].mxu0
    %v6132 = vadd.f32 0.0, %v6131
    %v6133 = vpop.f32.mrb[0].mxu0
    %6134 = vmatprep.mubr.f32.mxu0 0.0
    %6135 = vmatmul.mubr.f32.gmra.mrb[0].mxu0 %v6063
    %v6136 = vpop.f32.mrb[0].mxu0
    %v6137 = vadd.f32 0.0, %v6136
    %v6138 = vpop.f32.mrb[0].mxu0
    %6139 = vdwg.mxu0
    %6140 = vrot.lane.b32.xlu0 %v338, 64
    %v6141 = vpop.permute.xlu0 %6140
    %6142 = vrot.lane.b32.xlu0 %v340, 64
    %v6143 = vpop.permute.xlu0 %6142
    %v6147 = vsel %vm3214, %v3580, 0
    %v6150 = vsel %vm3214, %v3582, 0
    %6152 = vmatprep.subr.mxu0 0.0
    %6153 = vmatpush1.msra.mxu0 %v6141
    %6154 = vmatprep.subr.mxu0 0.0
    %6155 = vmatpush1.msra.mxu0 %v6143
    %6156 = vmatprep.subr.mxu0 0.0
    %6157 = vmatpush1.msra.mxu0 0.0
    %6158 = vmatprep.subr.mxu0 0.0
    %6159 = vmatpush1.msra.mxu0 0.0
    %6160 = vmatprep.subr.mxu0 0.0
    %6161 = vmatpush1.msra.mxu0 0.0
    %6162 = vmatprep.subr.mxu0 0.0
    %6163 = vmatpush1.msra.mxu0 0.0
    %6164 = vmatprep.subr.mxu0 0.0
    %6165 = vmatpush1.msra.mxu0 0.0
    %6166 = vmatprep.subr.mxu0 0.0
    %6167 = vmatpush1.msra.mxu0 0.0
    %6168 = vmatprep.subr.mxu0 0.0
    %6169 = vmatpush1.msra.mxu0 0.0
    %6170 = vmatprep.subr.mxu0 0.0
    %6171 = vmatpush1.msra.mxu0 0.0
    %6172 = vmatprep.subr.mxu0 0.0
    %6173 = vmatpush1.msra.mxu0 0.0
    %6174 = vmatprep.subr.mxu0 0.0
    %6175 = vmatpush1.msra.mxu0 0.0
    %6176 = vmatprep.subr.mxu0 0.0
    %6177 = vmatpush1.msra.mxu0 0.0
    %6178 = vmatprep.subr.mxu0 0.0
    %6179 = vmatpush1.msra.mxu0 0.0
    %6180 = vmatprep.subr.mxu0 0.0
    %6181 = vmatpush1.msra.mxu0 0.0
    %6182 = vmatprep.subr.mxu0 0.0
    %6183 = vmatpush1.msra.mxu0 0.0
    %6184 = vmatprep.subr.mxu0 0.0
    %6185 = vmatpush1.msra.mxu0 0.0
    %6186 = vmatprep.subr.mxu0 0.0
    %6187 = vmatpush1.msra.mxu0 0.0
    %6188 = vmatprep.subr.mxu0 0.0
    %6189 = vmatpush1.msra.mxu0 0.0
    %6190 = vmatprep.subr.mxu0 0.0
    %6191 = vmatpush1.msra.mxu0 0.0
    %6192 = vmatprep.subr.mxu0 0.0
    %6193 = vmatpush1.msra.mxu0 0.0
    %6194 = vmatprep.subr.mxu0 0.0
    %6195 = vmatpush1.msra.mxu0 0.0
    %6196 = vmatprep.subr.mxu0 0.0
    %6197 = vmatpush1.msra.mxu0 0.0
    %6198 = vmatprep.subr.mxu0 0.0
    %6199 = vmatpush1.msra.mxu0 0.0
    %6200 = vmatprep.subr.mxu0 0.0
    %6201 = vmatpush1.msra.mxu0 0.0
    %6202 = vmatprep.subr.mxu0 0.0
    %6203 = vmatpush1.msra.mxu0 0.0
    %6204 = vmatprep.subr.mxu0 0.0
    %6205 = vmatpush1.msra.mxu0 0.0
    %6206 = vmatprep.subr.mxu0 0.0
    %6207 = vmatpush1.msra.mxu0 0.0
    %6208 = vmatprep.subr.mxu0 0.0
    %6209 = vmatpush1.msra.mxu0 0.0
    %6210 = vmatprep.subr.mxu0 0.0
    %6211 = vmatpush1.msra.mxu0 0.0
    %6212 = vmatprep.subr.mxu0 0.0
    %6213 = vmatpush1.msra.mxu0 0.0
    %6214 = vmatprep.subr.mxu0 0.0
    %6215 = vmatpush1.msra.mxu0 0.0
    %6216 = vmatprep.mubr.f32.mxu0 0.0
    %6217 = vmatmul.mubr.f32.gmra.mrb[0].mxu0 %v6147
    %v6218 = vpop.f32.mrb[0].mxu0
    %v6219 = vadd.f32 0.0, %v6218
    %v6220 = vpop.f32.mrb[0].mxu0
    %6221 = vmatprep.mubr.f32.mxu0 0.0
    %6222 = vmatmul.mubr.f32.gmra.mrb[0].mxu0 %v6150
    %v6223 = vpop.f32.mrb[0].mxu0
    %v6224 = vadd.f32 0.0, %v6223
    %v6225 = vpop.f32.mrb[0].mxu0
    %6226 = vdwg.mxu0
    %6227 = vrot.lane.b32.xlu0 %v342, 64
    %v6228 = vpop.permute.xlu0 %6227
    %6229 = vrot.lane.b32.xlu0 %v344, 64
    %v6230 = vpop.permute.xlu0 %6229
    %v6234 = vsel %vm3214, %v3584, 0
    %v6237 = vsel %vm3214, %v3586, 0
    %6239 = vmatprep.subr.mxu0 0.0
    %6240 = vmatpush1.msra.mxu0 %v6228
    %6241 = vmatprep.subr.mxu0 0.0
    %6242 = vmatpush1.msra.mxu0 %v6230
    %6243 = vmatprep.subr.mxu0 0.0
    %6244 = vmatpush1.msra.mxu0 0.0
    %6245 = vmatprep.subr.mxu0 0.0
    %6246 = vmatpush1.msra.mxu0 0.0
    %6247 = vmatprep.subr.mxu0 0.0
    %6248 = vmatpush1.msra.mxu0 0.0
    %6249 = vmatprep.subr.mxu0 0.0
    %6250 = vmatpush1.msra.mxu0 0.0
    %6251 = vmatprep.subr.mxu0 0.0
    %6252 = vmatpush1.msra.mxu0 0.0
    %6253 = vmatprep.subr.mxu0 0.0
    %6254 = vmatpush1.msra.mxu0 0.0
    %6255 = vmatprep.subr.mxu0 0.0
    %6256 = vmatpush1.msra.mxu0 0.0
    %6257 = vmatprep.subr.mxu0 0.0
    %6258 = vmatpush1.msra.mxu0 0.0
    %6259 = vmatprep.subr.mxu0 0.0
    %6260 = vmatpush1.msra.mxu0 0.0
    %6261 = vmatprep.subr.mxu0 0.0
    %6262 = vmatpush1.msra.mxu0 0.0
    %6263 = vmatprep.subr.mxu0 0.0
    %6264 = vmatpush1.msra.mxu0 0.0
    %6265 = vmatprep.subr.mxu0 0.0
    %6266 = vmatpush1.msra.mxu0 0.0
    %6267 = vmatprep.subr.mxu0 0.0
    %6268 = vmatpush1.msra.mxu0 0.0
    %6269 = vmatprep.subr.mxu0 0.0
    %6270 = vmatpush1.msra.mxu0 0.0
    %6271 = vmatprep.subr.mxu0 0.0
    %6272 = vmatpush1.msra.mxu0 0.0
    %6273 = vmatprep.subr.mxu0 0.0
    %6274 = vmatpush1.msra.mxu0 0.0
    %6275 = vmatprep.subr.mxu0 0.0
    %6276 = vmatpush1.msra.mxu0 0.0
    %6277 = vmatprep.subr.mxu0 0.0
    %6278 = vmatpush1.msra.mxu0 0.0
    %6279 = vmatprep.subr.mxu0 0.0
    %6280 = vmatpush1.msra.mxu0 0.0
    %6281 = vmatprep.subr.mxu0 0.0
    %6282 = vmatpush1.msra.mxu0 0.0
    %6283 = vmatprep.subr.mxu0 0.0
    %6284 = vmatpush1.msra.mxu0 0.0
    %6285 = vmatprep.subr.mxu0 0.0
    %6286 = vmatpush1.msra.mxu0 0.0
    %6287 = vmatprep.subr.mxu0 0.0
    %6288 = vmatpush1.msra.mxu0 0.0
    %6289 = vmatprep.subr.mxu0 0.0
    %6290 = vmatpush1.msra.mxu0 0.0
    %6291 = vmatprep.subr.mxu0 0.0
    %6292 = vmatpush1.msra.mxu0 0.0
    %6293 = vmatprep.subr.mxu0 0.0
    %6294 = vmatpush1.msra.mxu0 0.0
    %6295 = vmatprep.subr.mxu0 0.0
    %6296 = vmatpush1.msra.mxu0 0.0
    %6297 = vmatprep.subr.mxu0 0.0
    %6298 = vmatpush1.msra.mxu0 0.0
    %6299 = vmatprep.subr.mxu0 0.0
    %6300 = vmatpush1.msra.mxu0 0.0
    %6301 = vmatprep.subr.mxu0 0.0
    %6302 = vmatpush1.msra.mxu0 0.0
    %6303 = vmatprep.mubr.f32.mxu0 0.0
    %6304 = vmatmul.mubr.f32.gmra.mrb[0].mxu0 %v6234
    %v6305 = vpop.f32.mrb[0].mxu0
    %v6306 = vadd.f32 0.0, %v6305
    %v6307 = vpop.f32.mrb[0].mxu0
    %6308 = vmatprep.mubr.f32.mxu0 0.0
    %6309 = vmatmul.mubr.f32.gmra.mrb[0].mxu0 %v6237
    %v6310 = vpop.f32.mrb[0].mxu0
    %v6311 = vadd.f32 0.0, %v6310
    %v6312 = vpop.f32.mrb[0].mxu0
    %6313 = vdwg.mxu0
    %6314 = vrot.lane.b32.xlu0 %v346, 64
    %v6315 = vpop.permute.xlu0 %6314
    %6316 = vrot.lane.b32.xlu0 %v348, 64
    %v6317 = vpop.permute.xlu0 %6316
    %v6321 = vsel %vm3214, %v3588, 0
    %v6324 = vsel %vm3214, %v3590, 0
    %6326 = vmatprep.subr.mxu0 0.0
    %6327 = vmatpush1.msra.mxu0 %v6315
    %6328 = vmatprep.subr.mxu0 0.0
    %6329 = vmatpush1.msra.mxu0 %v6317
    %6330 = vmatprep.subr.mxu0 0.0
    %6331 = vmatpush1.msra.mxu0 0.0
    %6332 = vmatprep.subr.mxu0 0.0
    %6333 = vmatpush1.msra.mxu0 0.0
    %6334 = vmatprep.subr.mxu0 0.0
    %6335 = vmatpush1.msra.mxu0 0.0
    %6336 = vmatprep.subr.mxu0 0.0
    %6337 = vmatpush1.msra.mxu0 0.0
    %6338 = vmatprep.subr.mxu0 0.0
    %6339 = vmatpush1.msra.mxu0 0.0
    %6340 = vmatprep.subr.mxu0 0.0
    %6341 = vmatpush1.msra.mxu0 0.0
    %6342 = vmatprep.subr.mxu0 0.0
    %6343 = vmatpush1.msra.mxu0 0.0
    %6344 = vmatprep.subr.mxu0 0.0
    %6345 = vmatpush1.msra.mxu0 0.0
    %6346 = vmatprep.subr.mxu0 0.0
    %6347 = vmatpush1.msra.mxu0 0.0
    %6348 = vmatprep.subr.mxu0 0.0
    %6349 = vmatpush1.msra.mxu0 0.0
    %6350 = vmatprep.subr.mxu0 0.0
    %6351 = vmatpush1.msra.mxu0 0.0
    %6352 = vmatprep.subr.mxu0 0.0
    %6353 = vmatpush1.msra.mxu0 0.0
    %6354 = vmatprep.subr.mxu0 0.0
    %6355 = vmatpush1.msra.mxu0 0.0
    %6356 = vmatprep.subr.mxu0 0.0
    %6357 = vmatpush1.msra.mxu0 0.0
    %6358 = vmatprep.subr.mxu0 0.0
    %6359 = vmatpush1.msra.mxu0 0.0
    %6360 = vmatprep.subr.mxu0 0.0
    %6361 = vmatpush1.msra.mxu0 0.0
    %6362 = vmatprep.subr.mxu0 0.0
    %6363 = vmatpush1.msra.mxu0 0.0
    %6364 = vmatprep.subr.mxu0 0.0
    %6365 = vmatpush1.msra.mxu0 0.0
    %6366 = vmatprep.subr.mxu0 0.0
    %6367 = vmatpush1.msra.mxu0 0.0
    %6368 = vmatprep.subr.mxu0 0.0
    %6369 = vmatpush1.msra.mxu0 0.0
    %6370 = vmatprep.subr.mxu0 0.0
    %6371 = vmatpush1.msra.mxu0 0.0
    %6372 = vmatprep.subr.mxu0 0.0
    %6373 = vmatpush1.msra.mxu0 0.0
    %6374 = vmatprep.subr.mxu0 0.0
    %6375 = vmatpush1.msra.mxu0 0.0
    %6376 = vmatprep.subr.mxu0 0.0
    %6377 = vmatpush1.msra.mxu0 0.0
    %6378 = vmatprep.subr.mxu0 0.0
    %6379 = vmatpush1.msra.mxu0 0.0
    %6380 = vmatprep.subr.mxu0 0.0
    %6381 = vmatpush1.msra.mxu0 0.0
    %6382 = vmatprep.subr.mxu0 0.0
    %6383 = vmatpush1.msra.mxu0 0.0
    %6384 = vmatprep.subr.mxu0 0.0
    %6385 = vmatpush1.msra.mxu0 0.0
    %6386 = vmatprep.subr.mxu0 0.0
    %6387 = vmatpush1.msra.mxu0 0.0
    %6388 = vmatprep.subr.mxu0 0.0
    %6389 = vmatpush1.msra.mxu0 0.0
    %6390 = vmatprep.mubr.f32.mxu0 0.0
    %6391 = vmatmul.mubr.f32.gmra.mrb[0].mxu0 %v6321
    %v6392 = vpop.f32.mrb[0].mxu0
    %v6393 = vadd.f32 0.0, %v6392
    %v6394 = vpop.f32.mrb[0].mxu0
    %6395 = vmatprep.mubr.f32.mxu0 0.0
    %6396 = vmatmul.mubr.f32.gmra.mrb[0].mxu0 %v6324
    %v6397 = vpop.f32.mrb[0].mxu0
    %v6398 = vadd.f32 0.0, %v6397
    %v6399 = vpop.f32.mrb[0].mxu0
    %6400 = vdwg.mxu0
    %6401 = vrot.lane.b32.xlu0 %v350, 64
    %v6402 = vpop.permute.xlu0 %6401
    %6403 = vrot.lane.b32.xlu0 %v352, 64
    %v6404 = vpop.permute.xlu0 %6403
    %v6408 = vsel %vm3214, %v3592, 0
    %v6411 = vsel %vm3214, %v3594, 0
    %6413 = vmatprep.subr.mxu0 0.0
    %6414 = vmatpush1.msra.mxu0 %v6402
    %6415 = vmatprep.subr.mxu0 0.0
    %6416 = vmatpush1.msra.mxu0 %v6404
    %6417 = vmatprep.subr.mxu0 0.0
    %6418 = vmatpush1.msra.mxu0 0.0
    %6419 = vmatprep.subr.mxu0 0.0
    %6420 = vmatpush1.msra.mxu0 0.0
    %6421 = vmatprep.subr.mxu0 0.0
    %6422 = vmatpush1.msra.mxu0 0.0
    %6423 = vmatprep.subr.mxu0 0.0
    %6424 = vmatpush1.msra.mxu0 0.0
    %6425 = vmatprep.subr.mxu0 0.0
    %6426 = vmatpush1.msra.mxu0 0.0
    %6427 = vmatprep.subr.mxu0 0.0
    %6428 = vmatpush1.msra.mxu0 0.0
    %6429 = vmatprep.subr.mxu0 0.0
    %6430 = vmatpush1.msra.mxu0 0.0
    %6431 = vmatprep.subr.mxu0 0.0
    %6432 = vmatpush1.msra.mxu0 0.0
    %6433 = vmatprep.subr.mxu0 0.0
    %6434 = vmatpush1.msra.mxu0 0.0
    %6435 = vmatprep.subr.mxu0 0.0
    %6436 = vmatpush1.msra.mxu0 0.0
    %6437 = vmatprep.subr.mxu0 0.0
    %6438 = vmatpush1.msra.mxu0 0.0
    %6439 = vmatprep.subr.mxu0 0.0
    %6440 = vmatpush1.msra.mxu0 0.0
    %6441 = vmatprep.subr.mxu0 0.0
    %6442 = vmatpush1.msra.mxu0 0.0
    %6443 = vmatprep.subr.mxu0 0.0
    %6444 = vmatpush1.msra.mxu0 0.0
    %6445 = vmatprep.subr.mxu0 0.0
    %6446 = vmatpush1.msra.mxu0 0.0
    %6447 = vmatprep.subr.mxu0 0.0
    %6448 = vmatpush1.msra.mxu0 0.0
    %6449 = vmatprep.subr.mxu0 0.0
    %6450 = vmatpush1.msra.mxu0 0.0
    %6451 = vmatprep.subr.mxu0 0.0
    %6452 = vmatpush1.msra.mxu0 0.0
    %6453 = vmatprep.subr.mxu0 0.0
    %6454 = vmatpush1.msra.mxu0 0.0
    %6455 = vmatprep.subr.mxu0 0.0
    %6456 = vmatpush1.msra.mxu0 0.0
    %6457 = vmatprep.subr.mxu0 0.0
    %6458 = vmatpush1.msra.mxu0 0.0
    %6459 = vmatprep.subr.mxu0 0.0
    %6460 = vmatpush1.msra.mxu0 0.0
    %6461 = vmatprep.subr.mxu0 0.0
    %6462 = vmatpush1.msra.mxu0 0.0
    %6463 = vmatprep.subr.mxu0 0.0
    %6464 = vmatpush1.msra.mxu0 0.0
    %6465 = vmatprep.subr.mxu0 0.0
    %6466 = vmatpush1.msra.mxu0 0.0
    %6467 = vmatprep.subr.mxu0 0.0
    %6468 = vmatpush1.msra.mxu0 0.0
    %6469 = vmatprep.subr.mxu0 0.0
    %6470 = vmatpush1.msra.mxu0 0.0
    %6471 = vmatprep.subr.mxu0 0.0
    %6472 = vmatpush1.msra.mxu0 0.0
    %6473 = vmatprep.subr.mxu0 0.0
    %6474 = vmatpush1.msra.mxu0 0.0
    %6475 = vmatprep.subr.mxu0 0.0
    %6476 = vmatpush1.msra.mxu0 0.0
    %6477 = vmatprep.mubr.f32.mxu0 0.0
    %6478 = vmatmul.mubr.f32.gmra.mrb[0].mxu0 %v6408
    %v6479 = vpop.f32.mrb[0].mxu0
    %v6480 = vadd.f32 0.0, %v6479
    %v6481 = vpop.f32.mrb[0].mxu0
    %6482 = vmatprep.mubr.f32.mxu0 0.0
    %6483 = vmatmul.mubr.f32.gmra.mrb[0].mxu0 %v6411
    %v6484 = vpop.f32.mrb[0].mxu0
    %v6485 = vadd.f32 0.0, %v6484
    %v6486 = vpop.f32.mrb[0].mxu0
    %6487 = vdwg.mxu0
    %6488 = vrot.lane.b32.xlu0 %v354, 64
    %v6489 = vpop.permute.xlu0 %6488
    %6490 = vrot.lane.b32.xlu0 %v356, 64
    %v6491 = vpop.permute.xlu0 %6490
    %v6495 = vsel %vm3214, %v3596, 0
    %v6498 = vsel %vm3214, %v3598, 0
    %6500 = vmatprep.subr.mxu0 0.0
    %6501 = vmatpush1.msra.mxu0 %v6489
    %6502 = vmatprep.subr.mxu0 0.0
    %6503 = vmatpush1.msra.mxu0 %v6491
    %6504 = vmatprep.subr.mxu0 0.0
    %6505 = vmatpush1.msra.mxu0 0.0
    %6506 = vmatprep.subr.mxu0 0.0
    %6507 = vmatpush1.msra.mxu0 0.0
    %6508 = vmatprep.subr.mxu0 0.0
    %6509 = vmatpush1.msra.mxu0 0.0
    %6510 = vmatprep.subr.mxu0 0.0
    %6511 = vmatpush1.msra.mxu0 0.0
    %6512 = vmatprep.subr.mxu0 0.0
    %6513 = vmatpush1.msra.mxu0 0.0
    %6514 = vmatprep.subr.mxu0 0.0
    %6515 = vmatpush1.msra.mxu0 0.0
    %6516 = vmatprep.subr.mxu0 0.0
    %6517 = vmatpush1.msra.mxu0 0.0
    %6518 = vmatprep.subr.mxu0 0.0
    %6519 = vmatpush1.msra.mxu0 0.0
    %6520 = vmatprep.subr.mxu0 0.0
    %6521 = vmatpush1.msra.mxu0 0.0
    %6522 = vmatprep.subr.mxu0 0.0
    %6523 = vmatpush1.msra.mxu0 0.0
    %6524 = vmatprep.subr.mxu0 0.0
    %6525 = vmatpush1.msra.mxu0 0.0
    %6526 = vmatprep.subr.mxu0 0.0
    %6527 = vmatpush1.msra.mxu0 0.0
    %6528 = vmatprep.subr.mxu0 0.0
    %6529 = vmatpush1.msra.mxu0 0.0
    %6530 = vmatprep.subr.mxu0 0.0
    %6531 = vmatpush1.msra.mxu0 0.0
    %6532 = vmatprep.subr.mxu0 0.0
    %6533 = vmatpush1.msra.mxu0 0.0
    %6534 = vmatprep.subr.mxu0 0.0
    %6535 = vmatpush1.msra.mxu0 0.0
    %6536 = vmatprep.subr.mxu0 0.0
    %6537 = vmatpush1.msra.mxu0 0.0
    %6538 = vmatprep.subr.mxu0 0.0
    %6539 = vmatpush1.msra.mxu0 0.0
    %6540 = vmatprep.subr.mxu0 0.0
    %6541 = vmatpush1.msra.mxu0 0.0
    %6542 = vmatprep.subr.mxu0 0.0
    %6543 = vmatpush1.msra.mxu0 0.0
    %6544 = vmatprep.subr.mxu0 0.0
    %6545 = vmatpush1.msra.mxu0 0.0
    %6546 = vmatprep.subr.mxu0 0.0
    %6547 = vmatpush1.msra.mxu0 0.0
    %6548 = vmatprep.subr.mxu0 0.0
    %6549 = vmatpush1.msra.mxu0 0.0
    %6550 = vmatprep.subr.mxu0 0.0
    %6551 = vmatpush1.msra.mxu0 0.0
    %6552 = vmatprep.subr.mxu0 0.0
    %6553 = vmatpush1.msra.mxu0 0.0
    %6554 = vmatprep.subr.mxu0 0.0
    %6555 = vmatpush1.msra.mxu0 0.0
    %6556 = vmatprep.subr.mxu0 0.0
    %6557 = vmatpush1.msra.mxu0 0.0
    %6558 = vmatprep.subr.mxu0 0.0
    %6559 = vmatpush1.msra.mxu0 0.0
    %6560 = vmatprep.subr.mxu0 0.0
    %6561 = vmatpush1.msra.mxu0 0.0
    %6562 = vmatprep.subr.mxu0 0.0
    %6563 = vmatpush1.msra.mxu0 0.0
    %6564 = vmatprep.mubr.f32.mxu0 0.0
    %6565 = vmatmul.mubr.f32.gmra.mrb[0].mxu0 %v6495
    %v6566 = vpop.f32.mrb[0].mxu0
    %v6567 = vadd.f32 0.0, %v6566
    %v6568 = vpop.f32.mrb[0].mxu0
    %6569 = vmatprep.mubr.f32.mxu0 0.0
    %6570 = vmatmul.mubr.f32.gmra.mrb[0].mxu0 %v6498
    %v6571 = vpop.f32.mrb[0].mxu0
    %v6572 = vadd.f32 0.0, %v6571
    %v6573 = vpop.f32.mrb[0].mxu0
    %6574 = vdwg.mxu0
    %v6575 = vrcp.pop %v3601
    %v6576 = vrcp.pop %v3604
    %v6577 = vrcp.pop %v3607
    %v6578 = vrcp.pop %v3610
    %v6579 = vrcp.pop %v3613
    %v6580 = vrcp.pop %v3616
    %v6581 = vrcp.pop %v3619
    %v6582 = vrcp.pop %v3622
    %v6583 = vrcp.pop %v3625
    %v6584 = vrcp.pop %v3628
    %v6585 = vrcp.pop %v3631
    %v6586 = vrcp.pop %v3634
    %v6587 = vrcp.pop %v3637
    %v6588 = vrcp.pop %v3640
    %v6589 = vrcp.pop %v3643
    %v6590 = vrcp.pop %v3646
    %v6591 = vrcp.pop %v3649
    %v6592 = vrcp.pop %v3652
    %v6593 = vrcp.pop %v3655
    %v6594 = vrcp.pop %v3658
    %v6595 = vrcp.pop %v3661
    %v6596 = vrcp.pop %v3664
    %v6597 = vrcp.pop %v3667
    %v6598 = vrcp.pop %v3670
    %v6599 = vrcp.pop %v3673
    %v6600 = vrcp.pop %v3676
    %v6601 = vrcp.pop %v3679
    %v6602 = vrcp.pop %v3682
    %v6603 = vrcp.pop %v3685
    %v6604 = vrcp.pop %v3688
    %v6605 = vrcp.pop %v3691
    %v6606 = vrcp.pop %v3694
    %v6607 = vrcp.pop %v3697
    %v6608 = vrcp.pop %v3700
    %v6609 = vrcp.pop %v3703
    %v6610 = vrcp.pop %v3706
    %v6611 = vrcp.pop %v3709
    %v6612 = vrcp.pop %v3712
    %v6613 = vrcp.pop %v3715
    %v6614 = vrcp.pop %v3718
    %v6615 = vrcp.pop %v3721
    %v6616 = vrcp.pop %v3724
    %v6617 = vrcp.pop %v3727
    %v6618 = vrcp.pop %v3730
    %v6619 = vrcp.pop %v3733
    %v6620 = vrcp.pop %v3736
    %v6621 = vrcp.pop %v3739
    %v6622 = vrcp.pop %v3742
    %v6623 = vrcp.pop %v3745
    %v6624 = vrcp.pop %v3748
    %v6625 = vrcp.pop %v3751
    %v6626 = vrcp.pop %v3754
    %v6627 = vrcp.pop %v3757
    %v6628 = vrcp.pop %v3760
    %v6629 = vrcp.pop %v3763
    %v6630 = vrcp.pop %v3766
    %v6631 = vrcp.pop %v3769
    %v6632 = vrcp.pop %v3772
    %v6633 = vrcp.pop %v3775
    %v6634 = vrcp.pop %v3778
    %v6635 = vrcp.pop %v3781
    %v6636 = vrcp.pop %v3784
    %v6637 = vrcp.pop %v3787
    %v6638 = vrcp.pop %v3790
    %v6639 = vmul.f32 %v3870, %v6575
    %v6640 = vmul.f32 %v3875, %v6576
    %v6641 = vmul.f32 %v3957, %v6577
    %v6642 = vmul.f32 %v3962, %v6578
    %v6643 = vmul.f32 %v4044, %v6579
    %v6644 = vmul.f32 %v4049, %v6580
    %v6645 = vmul.f32 %v4131, %v6581
    %v6646 = vmul.f32 %v4136, %v6582
    %v6647 = vmul.f32 %v4218, %v6583
    %v6648 = vmul.f32 %v4223, %v6584
    %v6649 = vmul.f32 %v4305, %v6585
    %v6650 = vmul.f32 %v4310, %v6586
    %v6651 = vmul.f32 %v4392, %v6587
    %v6652 = vmul.f32 %v4397, %v6588
    %v6653 = vmul.f32 %v4479, %v6589
    %v6654 = vmul.f32 %v4484, %v6590
    %v6655 = vmul.f32 %v4566, %v6591
    %v6656 = vmul.f32 %v4571, %v6592
    %v6657 = vmul.f32 %v4653, %v6593
    %v6658 = vmul.f32 %v4658, %v6594
    %v6659 = vmul.f32 %v4740, %v6595
    %v6660 = vmul.f32 %v4745, %v6596
    %v6661 = vmul.f32 %v4827, %v6597
    %v6662 = vmul.f32 %v4832, %v6598
    %v6663 = vmul.f32 %v4914, %v6599
    %v6664 = vmul.f32 %v4919, %v6600
    %v6665 = vmul.f32 %v5001, %v6601
    %v6666 = vmul.f32 %v5006, %v6602
    %v6667 = vmul.f32 %v5088, %v6603
    %v6668 = vmul.f32 %v5093, %v6604
    %v6669 = vmul.f32 %v5175, %v6605
    %v6670 = vmul.f32 %v5180, %v6606
    %v6671 = vmul.f32 %v5262, %v6607
    %v6672 = vmul.f32 %v5267, %v6608
    %v6673 = vmul.f32 %v5349, %v6609
    %v6674 = vmul.f32 %v5354, %v6610
    %v6675 = vmul.f32 %v5436, %v6611
    %v6676 = vmul.f32 %v5441, %v6612
    %v6677 = vmul.f32 %v5523, %v6613
    %v6678 = vmul.f32 %v5528, %v6614
    %v6679 = vmul.f32 %v5610, %v6615
    %v6680 = vmul.f32 %v5615, %v6616
    %v6681 = vmul.f32 %v5697, %v6617
    %v6682 = vmul.f32 %v5702, %v6618
    %v6683 = vmul.f32 %v5784, %v6619
    %v6684 = vmul.f32 %v5789, %v6620
    %v6685 = vmul.f32 %v5871, %v6621
    %v6686 = vmul.f32 %v5876, %v6622
    %v6687 = vmul.f32 %v5958, %v6623
    %v6688 = vmul.f32 %v5963, %v6624
    %v6689 = vmul.f32 %v6045, %v6625
    %v6690 = vmul.f32 %v6050, %v6626
    %v6691 = vmul.f32 %v6132, %v6627
    %v6692 = vmul.f32 %v6137, %v6628
    %v6693 = vmul.f32 %v6219, %v6629
    %v6694 = vmul.f32 %v6224, %v6630
    %v6695 = vmul.f32 %v6306, %v6631
    %v6696 = vmul.f32 %v6311, %v6632
    %v6697 = vmul.f32 %v6393, %v6633
    %v6698 = vmul.f32 %v6398, %v6634
    %v6699 = vmul.f32 %v6480, %v6635
    %v6700 = vmul.f32 %v6485, %v6636
    %v6701 = vmul.f32 %v6567, %v6637
    %v6702 = vmul.f32 %v6572, %v6638
    %6719 = vrot.lane.b32.xlu0 %v6655, 8
    %v6720 = vpop.permute.xlu0 %6719
    %6721 = vrot.lane.b32.xlu0 %v6656, 8
    %v6722 = vpop.permute.xlu0 %6721
    %6723 = vrot.lane.b32.xlu0 %v6657, 8
    %v6724 = vpop.permute.xlu0 %6723
    %6725 = vrot.lane.b32.xlu0 %v6658, 8
    %v6726 = vpop.permute.xlu0 %6725
    %6727 = vrot.lane.b32.xlu0 %v6659, 8
    %v6728 = vpop.permute.xlu0 %6727
    %6729 = vrot.lane.b32.xlu0 %v6660, 8
    %v6730 = vpop.permute.xlu0 %6729
    %6731 = vrot.lane.b32.xlu0 %v6661, 8
    %v6732 = vpop.permute.xlu0 %6731
    %6733 = vrot.lane.b32.xlu0 %v6662, 8
    %v6734 = vpop.permute.xlu0 %6733
    %6735 = vrot.lane.b32.xlu0 %v6663, 8
    %v6736 = vpop.permute.xlu0 %6735
    %6737 = vrot.lane.b32.xlu0 %v6664, 8
    %v6738 = vpop.permute.xlu0 %6737
    %6739 = vrot.lane.b32.xlu0 %v6665, 8
    %v6740 = vpop.permute.xlu0 %6739
    %6741 = vrot.lane.b32.xlu0 %v6666, 8
    %v6742 = vpop.permute.xlu0 %6741
    %6743 = vrot.lane.b32.xlu0 %v6667, 8
    %v6744 = vpop.permute.xlu0 %6743
    %6745 = vrot.lane.b32.xlu0 %v6668, 8
    %v6746 = vpop.permute.xlu0 %6745
    %6747 = vrot.lane.b32.xlu0 %v6669, 8
    %v6748 = vpop.permute.xlu0 %6747
    %6749 = vrot.lane.b32.xlu0 %v6670, 8
    %v6750 = vpop.permute.xlu0 %6749
    %6783 = vrot.lane.b32.xlu0 %v6671, 16
    %v6784 = vpop.permute.xlu0 %6783
    %6785 = vrot.lane.b32.xlu0 %v6672, 16
    %v6786 = vpop.permute.xlu0 %6785
    %6787 = vrot.lane.b32.xlu0 %v6673, 16
    %v6788 = vpop.permute.xlu0 %6787
    %6789 = vrot.lane.b32.xlu0 %v6674, 16
    %v6790 = vpop.permute.xlu0 %6789
    %6791 = vrot.lane.b32.xlu0 %v6675, 16
    %v6792 = vpop.permute.xlu0 %6791
    %6793 = vrot.lane.b32.xlu0 %v6676, 16
    %v6794 = vpop.permute.xlu0 %6793
    %6795 = vrot.lane.b32.xlu0 %v6677, 16
    %v6796 = vpop.permute.xlu0 %6795
    %6797 = vrot.lane.b32.xlu0 %v6678, 16
    %v6798 = vpop.permute.xlu0 %6797
    %6799 = vrot.lane.b32.xlu0 %v6679, 16
    %v6800 = vpop.permute.xlu0 %6799
    %6801 = vrot.lane.b32.xlu0 %v6680, 16
    %v6802 = vpop.permute.xlu0 %6801
    %6803 = vrot.lane.b32.xlu0 %v6681, 16
    %v6804 = vpop.permute.xlu0 %6803
    %6805 = vrot.lane.b32.xlu0 %v6682, 16
    %v6806 = vpop.permute.xlu0 %6805
    %6807 = vrot.lane.b32.xlu0 %v6683, 16
    %v6808 = vpop.permute.xlu0 %6807
    %6809 = vrot.lane.b32.xlu0 %v6684, 16
    %v6810 = vpop.permute.xlu0 %6809
    %6811 = vrot.lane.b32.xlu0 %v6685, 16
    %v6812 = vpop.permute.xlu0 %6811
    %6813 = vrot.lane.b32.xlu0 %v6686, 16
    %v6814 = vpop.permute.xlu0 %6813
    %6847 = vrot.lane.b32.xlu0 %v6687, 24
    %v6848 = vpop.permute.xlu0 %6847
    %6849 = vrot.lane.b32.xlu0 %v6688, 24
    %v6850 = vpop.permute.xlu0 %6849
    %6851 = vrot.lane.b32.xlu0 %v6689, 24
    %v6852 = vpop.permute.xlu0 %6851
    %6853 = vrot.lane.b32.xlu0 %v6690, 24
    %v6854 = vpop.permute.xlu0 %6853
    %6855 = vrot.lane.b32.xlu0 %v6691, 24
    %v6856 = vpop.permute.xlu0 %6855
    %6857 = vrot.lane.b32.xlu0 %v6692, 24
    %v6858 = vpop.permute.xlu0 %6857
    %6859 = vrot.lane.b32.xlu0 %v6693, 24
    %v6860 = vpop.permute.xlu0 %6859
    %6861 = vrot.lane.b32.xlu0 %v6694, 24
    %v6862 = vpop.permute.xlu0 %6861
    %6863 = vrot.lane.b32.xlu0 %v6695, 24
    %v6864 = vpop.permute.xlu0 %6863
    %6865 = vrot.lane.b32.xlu0 %v6696, 24
    %v6866 = vpop.permute.xlu0 %6865
    %6867 = vrot.lane.b32.xlu0 %v6697, 24
    %v6868 = vpop.permute.xlu0 %6867
    %6869 = vrot.lane.b32.xlu0 %v6698, 24
    %v6870 = vpop.permute.xlu0 %6869
    %6871 = vrot.lane.b32.xlu0 %v6699, 24
    %v6872 = vpop.permute.xlu0 %6871
    %6873 = vrot.lane.b32.xlu0 %v6700, 24
    %v6874 = vpop.permute.xlu0 %6873
    %6875 = vrot.lane.b32.xlu0 %v6701, 24
    %v6876 = vpop.permute.xlu0 %6875
    %6877 = vrot.lane.b32.xlu0 %v6702, 24
    %v6878 = vpop.permute.xlu0 %6877
    %v6895 = vsel %vm361, %v6639, %v6720
    %v6896 = vsel %vm361, %v6640, %v6722
    %v6897 = vsel %vm361, %v6641, %v6724
    %v6898 = vsel %vm361, %v6642, %v6726
    %v6899 = vsel %vm361, %v6643, %v6728
    %v6900 = vsel %vm361, %v6644, %v6730
    %v6901 = vsel %vm361, %v6645, %v6732
    %v6902 = vsel %vm361, %v6646, %v6734
    %v6903 = vsel %vm361, %v6647, %v6736
    %v6904 = vsel %vm361, %v6648, %v6738
    %v6905 = vsel %vm361, %v6649, %v6740
    %v6906 = vsel %vm361, %v6650, %v6742
    %v6907 = vsel %vm361, %v6651, %v6744
    %v6908 = vsel %vm361, %v6652, %v6746
    %v6909 = vsel %vm361, %v6653, %v6748
    %v6910 = vsel %vm361, %v6654, %v6750
    %v6911 = vsel %vm3214, %v6895, %v6784
    %v6912 = vsel %vm3214, %v6896, %v6786
    %v6913 = vsel %vm3214, %v6897, %v6788
    %v6914 = vsel %vm3214, %v6898, %v6790
    %v6915 = vsel %vm3214, %v6899, %v6792
    %v6916 = vsel %vm3214, %v6900, %v6794
    %v6917 = vsel %vm3214, %v6901, %v6796
    %v6918 = vsel %vm3214, %v6902, %v6798
    %v6919 = vsel %vm3214, %v6903, %v6800
    %v6920 = vsel %vm3214, %v6904, %v6802
    %v6921 = vsel %vm3214, %v6905, %v6804
    %v6922 = vsel %vm3214, %v6906, %v6806
    %v6923 = vsel %vm3214, %v6907, %v6808
    %v6924 = vsel %vm3214, %v6908, %v6810
    %v6925 = vsel %vm3214, %v6909, %v6812
    %v6926 = vsel %vm3214, %v6910, %v6814
    %vm6927 = vcmask 195584
    %v6928 = vsel %vm6927, %v6911, %v6848
    %v6929 = vsel %vm6927, %v6912, %v6850
    %v6930 = vsel %vm6927, %v6913, %v6852
    %v6931 = vsel %vm6927, %v6914, %v6854
    %v6932 = vsel %vm6927, %v6915, %v6856
    %v6933 = vsel %vm6927, %v6916, %v6858
    %v6934 = vsel %vm6927, %v6917, %v6860
    %v6935 = vsel %vm6927, %v6918, %v6862
    %v6936 = vsel %vm6927, %v6919, %v6864
    %v6937 = vsel %vm6927, %v6920, %v6866
    %v6938 = vsel %vm6927, %v6921, %v6868
    %v6939 = vsel %vm6927, %v6922, %v6870
    %v6940 = vsel %vm6927, %v6923, %v6872
    %v6941 = vsel %vm6927, %v6924, %v6874
    %v6942 = vsel %vm6927, %v6925, %v6876
    %v6943 = vsel %vm6927, %v6926, %v6878
    %v6944 = vld [vmem:[%s3] sm:$0xff]
    %v6945 = vld [vmem:[%s3 + $0x8] sm:$0xff]
    %v6946 = vld [vmem:[%s3 + $0x10] sm:$0xff]
    %v6947 = vld [vmem:[%s3 + $0x18] sm:$0xff]
    %v6948 = vld [vmem:[%s4] sm:$0x1]
    %v6950 = vlaneseq
    %v6951 = vshrl.u32 %v6950, 7
    %v6952 = vsub.s32 0, %v6951
    %v6953 = vrot.slane %v6948, %v6952
    %v6956 = vsel %vm51, %v6928, 0
    %v6959 = vsel %vm51, %v6929, 0
    %v6962 = vsel %vm51, %v6930, 0
    %v6965 = vsel %vm51, %v6931, 0
    %v6968 = vsel %vm51, %v6932, 0
    %v6971 = vsel %vm51, %v6933, 0
    %v6974 = vsel %vm51, %v6934, 0
    %v6977 = vsel %vm51, %v6935, 0
    %v6980 = vsel %vm51, %v6936, 0
    %v6983 = vsel %vm51, %v6937, 0
    %v6986 = vsel %vm51, %v6938, 0
    %v6989 = vsel %vm51, %v6939, 0
    %v6992 = vsel %vm51, %v6940, 0
    %v6995 = vsel %vm51, %v6941, 0
    %v6998 = vsel %vm51, %v6942, 0
    %v7001 = vsel %vm51, %v6943, 0
    %7003 = vmatprep.subr.mxu0 0.0
    %7004 = vmatpush1.msra.mxu0 %v6944
    %7005 = vmatprep.subr.mxu0 0.0
    %7006 = vmatpush1.msra.mxu0 %v6945
    %7007 = vmatprep.subr.mxu0 0.0
    %7008 = vmatpush1.msra.mxu0 %v6946
    %7009 = vmatprep.subr.mxu0 0.0
    %7010 = vmatpush1.msra.mxu0 %v6947
    %7011 = vmatprep.subr.mxu0 0.0
    %7012 = vmatpush1.msra.mxu0 0.0
    %7013 = vmatprep.subr.mxu0 0.0
    %7014 = vmatpush1.msra.mxu0 0.0
    %7015 = vmatprep.subr.mxu0 0.0
    %7016 = vmatpush1.msra.mxu0 0.0
    %7017 = vmatprep.subr.mxu0 0.0
    %7018 = vmatpush1.msra.mxu0 0.0
    %7019 = vmatprep.subr.mxu0 0.0
    %7020 = vmatpush1.msra.mxu0 0.0
    %7021 = vmatprep.subr.mxu0 0.0
    %7022 = vmatpush1.msra.mxu0 0.0
    %7023 = vmatprep.subr.mxu0 0.0
    %7024 = vmatpush1.msra.mxu0 0.0
    %7025 = vmatprep.subr.mxu0 0.0
    %7026 = vmatpush1.msra.mxu0 0.0
    %7027 = vmatprep.subr.mxu0 0.0
    %7028 = vmatpush1.msra.mxu0 0.0
    %7029 = vmatprep.subr.mxu0 0.0
    %7030 = vmatpush1.msra.mxu0 0.0
    %7031 = vmatprep.subr.mxu0 0.0
    %7032 = vmatpush1.msra.mxu0 0.0
    %7033 = vmatprep.subr.mxu0 0.0
    %7034 = vmatpush1.msra.mxu0 0.0
    %7035 = vmatprep.subr.mxu0 0.0
    %7036 = vmatpush1.msra.mxu0 0.0
    %7037 = vmatprep.subr.mxu0 0.0
    %7038 = vmatpush1.msra.mxu0 0.0
    %7039 = vmatprep.subr.mxu0 0.0
    %7040 = vmatpush1.msra.mxu0 0.0
    %7041 = vmatprep.subr.mxu0 0.0
    %7042 = vmatpush1.msra.mxu0 0.0
    %7043 = vmatprep.subr.mxu0 0.0
    %7044 = vmatpush1.msra.mxu0 0.0
    %7045 = vmatprep.subr.mxu0 0.0
    %7046 = vmatpush1.msra.mxu0 0.0
    %7047 = vmatprep.subr.mxu0 0.0
    %7048 = vmatpush1.msra.mxu0 0.0
    %7049 = vmatprep.subr.mxu0 0.0
    %7050 = vmatpush1.msra.mxu0 0.0
    %7051 = vmatprep.subr.mxu0 0.0
    %7052 = vmatpush1.msra.mxu0 0.0
    %7053 = vmatprep.subr.mxu0 0.0
    %7054 = vmatpush1.msra.mxu0 0.0
    %7055 = vmatprep.subr.mxu0 0.0
    %7056 = vmatpush1.msra.mxu0 0.0
    %7057 = vmatprep.subr.mxu0 0.0
    %7058 = vmatpush1.msra.mxu0 0.0
    %7059 = vmatprep.subr.mxu0 0.0
    %7060 = vmatpush1.msra.mxu0 0.0
    %7061 = vmatprep.subr.mxu0 0.0
    %7062 = vmatpush1.msra.mxu0 0.0
    %7063 = vmatprep.subr.mxu0 0.0
    %7064 = vmatpush1.msra.mxu0 0.0
    %7065 = vmatprep.subr.mxu0 0.0
    %7066 = vmatpush1.msra.mxu0 0.0
    %7067 = vmatprep.mubr.f32.mxu0 0.0
    %7068 = vmatmul.mubr.f32.gmra.mrb[0].mxu0 %v6956
    %v7069 = vpop.f32.mrb[0].mxu0
    %v7070 = vadd.f32 %v6953, %v7069
    %v7071 = vpop.f32.mrb[0].mxu0
    %7072 = vmatprep.mubr.f32.mxu0 0.0
    %7073 = vmatmul.mubr.f32.gmra.mrb[0].mxu0 %v6959
    %v7074 = vpop.f32.mrb[0].mxu0
    %v7075 = vadd.f32 %v6953, %v7074
    %v7076 = vpop.f32.mrb[0].mxu0
    %7077 = vmatprep.mubr.f32.mxu0 0.0
    %7078 = vmatmul.mubr.f32.gmra.mrb[0].mxu0 %v6962
    %v7079 = vpop.f32.mrb[0].mxu0
    %v7080 = vadd.f32 %v6953, %v7079
    %v7081 = vpop.f32.mrb[0].mxu0
    %7082 = vmatprep.mubr.f32.mxu0 0.0
    %7083 = vmatmul.mubr.f32.gmra.mrb[0].mxu0 %v6965
    %v7084 = vpop.f32.mrb[0].mxu0
    %v7085 = vadd.f32 %v6953, %v7084
    %v7086 = vpop.f32.mrb[0].mxu0
    %7087 = vmatprep.mubr.f32.mxu0 0.0
    %7088 = vmatmul.mubr.f32.gmra.mrb[0].mxu0 %v6968
    %v7089 = vpop.f32.mrb[0].mxu0
    %v7090 = vadd.f32 %v6953, %v7089
    %v7091 = vpop.f32.mrb[0].mxu0
    %7092 = vmatprep.mubr.f32.mxu0 0.0
    %7093 = vmatmul.mubr.f32.gmra.mrb[0].mxu0 %v6971
    %v7094 = vpop.f32.mrb[0].mxu0
    %v7095 = vadd.f32 %v6953, %v7094
    %v7096 = vpop.f32.mrb[0].mxu0
    %7097 = vmatprep.mubr.f32.mxu0 0.0
    %7098 = vmatmul.mubr.f32.gmra.mrb[0].mxu0 %v6974
    %v7099 = vpop.f32.mrb[0].mxu0
    %v7100 = vadd.f32 %v6953, %v7099
    %v7101 = vpop.f32.mrb[0].mxu0
    %7102 = vmatprep.mubr.f32.mxu0 0.0
    %7103 = vmatmul.mubr.f32.gmra.mrb[0].mxu0 %v6977
    %v7104 = vpop.f32.mrb[0].mxu0
    %v7105 = vadd.f32 %v6953, %v7104
    %v7106 = vpop.f32.mrb[0].mxu0
    %7107 = vmatprep.mubr.f32.mxu0 0.0
    %7108 = vmatmul.mubr.f32.gmra.mrb[0].mxu0 %v6980
    %v7109 = vpop.f32.mrb[0].mxu0
    %v7110 = vadd.f32 %v6953, %v7109
    %v7111 = vpop.f32.mrb[0].mxu0
    %7112 = vmatprep.mubr.f32.mxu0 0.0
    %7113 = vmatmul.mubr.f32.gmra.mrb[0].mxu0 %v6983
    %v7114 = vpop.f32.mrb[0].mxu0
    %v7115 = vadd.f32 %v6953, %v7114
    %v7116 = vpop.f32.mrb[0].mxu0
    %7117 = vmatprep.mubr.f32.mxu0 0.0
    %7118 = vmatmul.mubr.f32.gmra.mrb[0].mxu0 %v6986
    %v7119 = vpop.f32.mrb[0].mxu0
    %v7120 = vadd.f32 %v6953, %v7119
    %v7121 = vpop.f32.mrb[0].mxu0
    %7122 = vmatprep.mubr.f32.mxu0 0.0
    %7123 = vmatmul.mubr.f32.gmra.mrb[0].mxu0 %v6989
    %v7124 = vpop.f32.mrb[0].mxu0
    %v7125 = vadd.f32 %v6953, %v7124
    %v7126 = vpop.f32.mrb[0].mxu0
    %7127 = vmatprep.mubr.f32.mxu0 0.0
    %7128 = vmatmul.mubr.f32.gmra.mrb[0].mxu0 %v6992
    %v7129 = vpop.f32.mrb[0].mxu0
    %v7130 = vadd.f32 %v6953, %v7129
    %v7131 = vpop.f32.mrb[0].mxu0
    %7132 = vmatprep.mubr.f32.mxu0 0.0
    %7133 = vmatmul.mubr.f32.gmra.mrb[0].mxu0 %v6995
    %v7134 = vpop.f32.mrb[0].mxu0
    %v7135 = vadd.f32 %v6953, %v7134
    %v7136 = vpop.f32.mrb[0].mxu0
    %7137 = vmatprep.mubr.f32.mxu0 0.0
    %7138 = vmatmul.mubr.f32.gmra.mrb[0].mxu0 %v6998
    %v7139 = vpop.f32.mrb[0].mxu0
    %v7140 = vadd.f32 %v6953, %v7139
    %v7141 = vpop.f32.mrb[0].mxu0
    %7142 = vmatprep.mubr.f32.mxu0 0.0
    %7143 = vmatmul.mubr.f32.gmra.mrb[0].mxu0 %v7001
    %v7144 = vpop.f32.mrb[0].mxu0
    %v7145 = vadd.f32 %v6953, %v7144
    %v7146 = vpop.f32.mrb[0].mxu0
    %7147 = vdwg.mxu0
    %7148 = vst.msk [vmem:[#allocation2] sm:$0xff] %vm51, %v7070
    %7149 = vst.msk [vmem:[#allocation2 + $0x8] sm:$0xff] %vm51, %v7075
    %7150 = vst.msk [vmem:[#allocation2 + $0x10] sm:$0xff] %vm51, %v7080
    %7151 = vst.msk [vmem:[#allocation2 + $0x18] sm:$0xff] %vm51, %v7085
    %7152 = vst.msk [vmem:[#allocation2 + $0x20] sm:$0xff] %vm51, %v7090
    %7153 = vst.msk [vmem:[#allocation2 + $0x28] sm:$0xff] %vm51, %v7095
    %7154 = vst.msk [vmem:[#allocation2 + $0x30] sm:$0xff] %vm51, %v7100
    %7155 = vst.msk [vmem:[#allocation2 + $0x38] sm:$0xff] %vm51, %v7105
    %7156 = vst.msk [vmem:[#allocation2 + $0x40] sm:$0xff] %vm51, %v7110
    %7157 = vst.msk [vmem:[#allocation2 + $0x48] sm:$0xff] %vm51, %v7115
    %7158 = vst.msk [vmem:[#allocation2 + $0x50] sm:$0xff] %vm51, %v7120
    %7159 = vst.msk [vmem:[#allocation2 + $0x58] sm:$0xff] %vm51, %v7125
    %7160 = vst.msk [vmem:[#allocation2 + $0x60] sm:$0xff] %vm51, %v7130
    %7161 = vst.msk [vmem:[#allocation2 + $0x68] sm:$0xff] %vm51, %v7135
    %7162 = vst.msk [vmem:[#allocation2 + $0x70] sm:$0xff] %vm51, %v7140
    %7163 = vst.msk [vmem:[#allocation2 + $0x78] sm:$0xff] %vm51, %v7145
    // Predicated region
    $region26: #{window_attention_forward.1} parent=1 // pred_check
      _
    $region27: #{window_attention_forward.1} parent=1 // pred_check_branch
      %7165 = sbr.rel (0) target = $region29
    $region28: #{window_attention_forward.1} parent=1 // pred_region
      %s7167 = ssub.s32 2048, 2048
      %7168 = vsyncadd [#allocation3], %s7167
      %s7169 = sshll.u32 [#allocation2], 4
      %s7170 = int_to_ptr.vmem [resolvable:$true] %s7169
      %7175 = dma.vmem_to_hbm [thread:$0]  %s7170, 2048, %s6, [#allocation3], 128, 128, 8
    $region29: #{window_attention_forward.1} parent=1 // pred_fallthru
      _
    // Predicated region
    $region30: #{window_attention_forward.1} parent=1 // pred_check
      _
    $region31: #{window_attention_forward.1} parent=1 // pred_check_branch
      %7177 = sbr.rel (0) target = $region33
    $region32: #{window_attention_forward.1} parent=1 // pred_region
      %7178 = dma.done [#allocation3], 2048
    $region33: #{window_attention_forward.1} parent=1 // pred_fallthru
      _
    %7179 = vsyncpa [#allocation3], 1

</llo_original>
